<compile_context>
chip_gen: v7x
topology: tpu7x:2x2x1
jax: 0.10.0
libtpu: 0.0.40
codegen_flags: <defaults>
</compile_context>

<pallas_src>
import functools

import numpy as np
import jax
import jax.numpy as jnp
from jax import lax
from jax.experimental import pallas as pl
from jax.experimental.pallas import tpu as pltpu


# -----------------------------------------------------------------------------
# Pallas kernel: whole forward pass for one batch tile.
# -----------------------------------------------------------------------------
def ts_cnn_kernel(x_ref, w1_ref, b1_ref, w2_ref, b2_ref, w3_ref, b3_ref,
                  wfc_ref, bfc_ref, o_ref,
                  y1s_ref, p1s_ref, y2s_ref, p2s_ref, *, matmul_dtype):
    f32 = jnp.float32

    def conv_relu(src_ref, w_ref, b_ref):
        # src_ref: (C, Lp, TB), already zero-padded along L (padding=1).
        # w_ref:   (O, K*C) with column index k*C + c  (tap k, input channel c).
        # b_ref:   (O, 1).
        C, Lp, TB = src_ref.shape
        O, KC = w_ref.shape
        K = KC // C
        Lout = Lp - K + 1
        # im2col: stack the K shifted taps along the leading channel axis and
        # contract K*C in one MXU dot (wider contraction, fewer matmul pushes).
        taps = [src_ref[:, pl.ds(k, Lout), :] for k in range(K)]
        xkc = jnp.concatenate(taps, axis=0).astype(matmul_dtype)   # (K*C, Lout, TB)
        w = w_ref[...].astype(matmul_dtype)                        # (O, K*C)
        y = lax.dot_general(w, xkc,
                            dimension_numbers=(((1,), (0,)), ((), ())),
                            preferred_element_type=f32)            # (O, Lout, TB)
        y = y + b_ref[...][:, :, None]                             # (O,1,1) bcast
        return jnp.maximum(y, 0.0)                                 # ReLU in f32

    def maxpool3s2_pad(y, ys_ref, ps_ref):
        # MaxPool1d(kernel=3, stride=2) along the sublane (L) axis.
        # Writes the pooled result zero-padded (padding=1 for the next conv)
        # into ps_ref, so the next conv reads its taps straight from a ref.
        O, Ly, TB = y.shape
        P = (Ly - 3) // 2 + 1
        ys_ref[...] = y
        a = ys_ref[:, pl.ds(0, P, stride=2), :]                    # y[2p]
        b = ys_ref[:, pl.ds(1, P, stride=2), :]                    # y[2p+1]
        c = ys_ref[:, pl.ds(2, P, stride=2), :]                    # y[2p+2]
        pooled = jnp.maximum(jnp.maximum(a, b), c)                 # (O, P, TB)
        zrow = jnp.zeros((O, 1, TB), pooled.dtype)
        ps_ref[:, pl.ds(0, 1), :] = zrow
        ps_ref[:, pl.ds(P + 1, 1), :] = zrow
        ps_ref[:, pl.ds(1, P), :] = pooled

    # Conv1d(C_in -> F1, pad=1) + ReLU   (input already zero-padded in wrapper)
    y1 = conv_relu(x_ref, w1_ref, b1_ref)                          # (F1, L1, TB)
    # MaxPool1d(3, 2)  -> zero-padded input for conv2
    maxpool3s2_pad(y1, y1s_ref, p1s_ref)
    # Conv1d(F1 -> F2, pad=1) + ReLU
    y2 = conv_relu(p1s_ref, w2_ref, b2_ref)                        # (F2, L2, TB)
    # MaxPool1d(3, 2); nn.Dropout(p=0.25) is identity in eval/inference mode.
    maxpool3s2_pad(y2, y2s_ref, p2s_ref)
    # Conv1d(F2 -> F3, pad=1) + ReLU
    y3 = conv_relu(p2s_ref, w3_ref, b3_ref)                        # (F3, L3, TB)
    # AdaptiveMaxPool1d(1) + flatten; Dropout(p=0.25) identity in eval mode.
    feat = jnp.max(y3, axis=1)                                     # (F3, TB)
    # Linear: (NC, F3) x (F3, TB) -> (NC, TB); batch stays on the lane axis.
    logits = lax.dot_general(wfc_ref[...].astype(matmul_dtype),
                             feat.astype(matmul_dtype),
                             dimension_numbers=(((1,), (0,)), ((), ())),
                             preferred_element_type=f32)
    o_ref[...] = logits + bfc_ref[...]                             # (NC,1) bcast


# -----------------------------------------------------------------------------
# One-time parameter re-layout (hoisted out of the forward path).
# -----------------------------------------------------------------------------
def prepare_params(params):
    """PyTorch-shaped params -> kernel-ready layouts.  Do this once."""
    w1, b1, w2, b2, w3, b3, wfc, bfc = params

    def conv_w(w):                        # (O, C, K) -> (O, K*C), col = k*C + c
        O, C, K = w.shape
        return jnp.transpose(w, (0, 2, 1)).reshape(O, K * C)

    def col(b):
        return jnp.reshape(b, (-1, 1))

    return (conv_w(w1), col(b1), conv_w(w2), col(b2), conv_w(w3), col(b3),
            jnp.asarray(wfc), col(bfc))


# -----------------------------------------------------------------------------
# Wrapper: layout glue + pallas_call with a batch grid.
# -----------------------------------------------------------------------------
def ts_cnn_forward(x_ncl, kparams, *, batch_tile=128, matmul_dtype=jnp.float32):
    """x_ncl: (B, C_in, L) float32 (PyTorch NCW).  Returns (B, num_classes)."""
    w1, b1, w2, b2, w3, b3, wfc, bfc = kparams
    B, C_in, L = x_ncl.shape
    NC, F3 = wfc.shape
    F1, K1C = w1.shape
    F2, K2C = w2.shape
    _, K3C = w3.shape
    K1, K2, K3 = K1C // C_in, K2C // F1, K3C // F2

    # Static shape pipeline (padding=1 everywhere, pool kernel=3 stride=2).
    L1 = (L + 2) - K1 + 1
    assert L1 >= 3, "sequence too short for MaxPool1d(3,2) after conv1"
    P1 = (L1 - 3) // 2 + 1
    L2 = (P1 + 2) - K2 + 1
    assert L2 >= 3, "sequence too short for MaxPool1d(3,2) after conv2"
    P2 = (L2 - 3) // 2 + 1
    L3 = (P2 + 2) - K3 + 1
    assert L3 >= 1, "sequence too short for conv3"

    TB = B if B <= batch_tile else batch_tile
    grid = (pl.cdiv(B, TB),)

    # Glue: NCL -> (C, L, B) and zero-pad the length axis once for conv1.
    x_clb = jnp.transpose(x_ncl, (1, 2, 0))
    x_pad = jnp.pad(x_clb, ((0, 0), (1, 1), (0, 0)))               # (C_in, L+2, B)

    # --- VMEM budget for this tile size (double-buffered I/O + scratch). ---
    def nbytes(*shape):
        n = 4
        for d in shape:
            n *= int(d)
        return n

    weight_bytes = sum(int(np.prod(p.shape)) * 4 for p in kparams)
    io_bytes = nbytes(C_in, L + 2, TB) + nbytes(NC, TB)
    scratch_bytes = (nbytes(F1, L1, TB) + nbytes(F1, P1 + 2, TB)
                     + nbytes(F2, L2, TB) + nbytes(F2, P2 + 2, TB))
    live_bytes = 4 * max(nbytes(K1C, L1, TB), nbytes(F1, L1, TB),
                         nbytes(K2C, L2, TB), nbytes(F2, L2, TB),
                         nbytes(K3C, L3, TB), nbytes(F3, L3, TB))
    vmem_limit = 2 * (io_bytes + weight_bytes) + scratch_bytes + live_bytes
    vmem_limit = int(min(max(vmem_limit + (4 << 20), 16 << 20), 64 << 20))

    flops = 2 * B * (K1C * F1 * L1 + K2C * F2 * L2 + K3C * F3 * L3 + F3 * NC)
    bytes_accessed = 4 * (int(np.prod(x_pad.shape))
                          + sum(int(np.prod(p.shape)) for p in kparams)
                          + B * NC)
    cost = pl.CostEstimate(flops=int(flops), transcendentals=0,
                           bytes_accessed=int(bytes_accessed))

    kernel = functools.partial(ts_cnn_kernel, matmul_dtype=matmul_dtype)

    out_t = pl.pallas_call(
        kernel,
        out_shape=jax.ShapeDtypeStruct((NC, B), jnp.float32),
        grid_spec=pltpu.PrefetchScalarGridSpec(
            num_scalar_prefetch=0,
            grid=grid,
            in_specs=[
                pl.BlockSpec((C_in, L + 2, TB), lambda i: (0, 0, i)),   # x tile
                pl.BlockSpec((F1, K1C), lambda i: (0, 0)),              # weights:
                pl.BlockSpec((F1, 1), lambda i: (0, 0)),                # full-extent,
                pl.BlockSpec((F2, K2C), lambda i: (0, 0)),              # VMEM-resident
                pl.BlockSpec((F2, 1), lambda i: (0, 0)),
                pl.BlockSpec((F3, K3C), lambda i: (0, 0)),
                pl.BlockSpec((F3, 1), lambda i: (0, 0)),
                pl.BlockSpec((NC, F3), lambda i: (0, 0)),
                pl.BlockSpec((NC, 1), lambda i: (0, 0)),
            ],
            out_specs=pl.BlockSpec((NC, TB), lambda i: (0, i)),
            scratch_shapes=[
                pltpu.VMEM((F1, L1, TB), jnp.float32),       # conv1 output
                pltpu.VMEM((F1, P1 + 2, TB), jnp.float32),   # padded pool1 output
                pltpu.VMEM((F2, L2, TB), jnp.float32),       # conv2 output
                pltpu.VMEM((F2, P2 + 2, TB), jnp.float32),   # padded pool2 output
            ],
        ),
        compiler_params=pltpu.CompilerParams(
            dimension_semantics=("parallel",),
            vmem_limit_bytes=vmem_limit),
        cost_estimate=cost,
    )(x_pad, w1, b1, w2, b2, w3, b3, wfc, bfc)

    return out_t.T                                                  # (B, NC)


# -----------------------------------------------------------------------------
# Pure-JAX reference (PyTorch semantics) for a correctness cross-check.
# -----------------------------------------------------------------------------
def reference_forward(x, params):
    w1, b1, w2, b2, w3, b3, wfc, bfc = params

    def conv_relu(h, w, b):
        y = lax.conv_general_dilated(h, w, window_strides=(1,), padding=[(1, 1)],
                                     dimension_numbers=("NCH", "OIH", "NCH"))
        return jax.nn.relu(y + b[None, :, None])

    def mp(h):
        return lax.reduce_window(h, -jnp.inf, lax.max,
                                 window_dimensions=(1, 1, 3),
                                 window_strides=(1, 1, 2), padding="VALID")

    h = mp(conv_relu(x, w1, b1))
    h = mp(conv_relu(h, w2, b2))
    h = conv_relu(h, w3, b3)
    feat = jnp.max(h, axis=-1)                                      # (B, F3)
    return feat @ wfc.T + bfc[None, :]


# -----------------------------------------------------------------------------
# Deterministic parameter init (PyTorch-like shapes) + smoke test
# -----------------------------------------------------------------------------
def init_params(key, input_size, num_classes, cfg):
    f1, f2, f3 = cfg["filter1"], cfg["filter2"], cfg["filter3"]
    k1, k2, k3 = cfg["kernel1"], cfg["kernel2"], cfg["kernel3"]
    ks = jax.random.split(key, 8)

    def u(k, shape, fan_in):
        bound = 1.0 / np.sqrt(fan_in)
        return jax.random.uniform(k, shape, jnp.float32, -bound, bound)

    w1 = u(ks[0], (f1, input_size, k1), input_size * k1)
    b1 = u(ks[1], (f1,), input_size * k1)
    w2 = u(ks[2], (f2, f1, k2), f1 * k2)
    b2 = u(ks[3], (f2,), f1 * k2)
    w3 = u(ks[4], (f3, f2, k3), f2 * k3)
    b3 = u(ks[5], (f3,), f2 * k3)
    wfc = u(ks[6], (num_classes, f3), f3)
    bfc = u(ks[7], (num_classes,), f3)
    return (w1, b1, w2, b2, w3, b3, wfc, bfc)


if __name__ == "__main__":
    B, C_in, L = 2, 4, 32
    num_classes = 10
    config = {"filter1": 8, "filter2": 16, "filter3": 32,
              "kernel1": 3, "kernel2": 3, "kernel3": 3}

    key = jax.random.PRNGKey(0)
    kx, kp = jax.random.split(key)
    x = jax.random.normal(kx, (B, C_in, L), jnp.float32)
    params = init_params(kp, C_in, num_classes, config)
    kparams = prepare_params(params)     # one-time weight re-layout (hoisted)

    out = jax.block_until_ready(ts_cnn_forward(x, kparams))
    ref = jax.block_until_ready(reference_forward(x, params))

    assert out.shape == (B, num_classes)
    np.testing.assert_allclose(np.asarray(out), np.asarray(ref), atol=2e-3, rtol=2e-3)

    print("KERNEL_OK")
</pallas_src>

<mosaic_0001>
module attributes {stable_mosaic.version = 11 : i64} {
  func.func @ts_cnn_kernel(%arg0: i32, %arg1: memref<4x34x2xf32, #tpu.memory_space<vmem>>, %arg2: memref<8x12xf32, #tpu.memory_space<vmem>>, %arg3: memref<8x1xf32, #tpu.memory_space<vmem>>, %arg4: memref<16x24xf32, #tpu.memory_space<vmem>>, %arg5: memref<16x1xf32, #tpu.memory_space<vmem>>, %arg6: memref<32x48xf32, #tpu.memory_space<vmem>>, %arg7: memref<32x1xf32, #tpu.memory_space<vmem>>, %arg8: memref<10x32xf32, #tpu.memory_space<vmem>>, %arg9: memref<10x1xf32, #tpu.memory_space<vmem>>, %arg10: memref<10x2xf32, #tpu.memory_space<vmem>>, %arg11: memref<8x32x2xf32, #tpu.memory_space<vmem>>, %arg12: memref<8x17x2xf32, #tpu.memory_space<vmem>>, %arg13: memref<16x15x2xf32, #tpu.memory_space<vmem>>, %arg14: memref<16x9x2xf32, #tpu.memory_space<vmem>>) attributes {dimension_semantics = [#tpu.dimension_semantics<parallel>], iteration_bounds = array<i64: 1>, scalar_prefetch = 0 : i64, scratch_operands = 4 : i64, tpu.core_type = #tpu.core_type<tc>, window_params = [{transform_indices = @transform_0, window_bounds = array<i64: 4, 34, 2>}, {pipeline_mode = #tpu.pipeline_mode<synchronous>, transform_indices = @transform_1, window_bounds = array<i64: 8, 12>}, {pipeline_mode = #tpu.pipeline_mode<synchronous>, transform_indices = @transform_2, window_bounds = array<i64: 8, 1>}, {pipeline_mode = #tpu.pipeline_mode<synchronous>, transform_indices = @transform_3, window_bounds = array<i64: 16, 24>}, {pipeline_mode = #tpu.pipeline_mode<synchronous>, transform_indices = @transform_4, window_bounds = array<i64: 16, 1>}, {pipeline_mode = #tpu.pipeline_mode<synchronous>, transform_indices = @transform_5, window_bounds = array<i64: 32, 48>}, {pipeline_mode = #tpu.pipeline_mode<synchronous>, transform_indices = @transform_6, window_bounds = array<i64: 32, 1>}, {pipeline_mode = #tpu.pipeline_mode<synchronous>, transform_indices = @transform_7, window_bounds = array<i64: 10, 32>}, {pipeline_mode = #tpu.pipeline_mode<synchronous>, transform_indices = @transform_8, window_bounds = array<i64: 10, 1>}, {transform_indices = @transform_9, window_bounds = array<i64: 10, 2>}]} {
    %c0 = arith.constant 0 : index
    %c0_0 = arith.constant 0 : index
    %c0_1 = arith.constant 0 : index
    %0 = vector.load %arg1[%c0, %c0_0, %c0_1] : memref<4x34x2xf32, #tpu.memory_space<vmem>>, vector<4x32x2xf32>
    %c0_2 = arith.constant 0 : index
    %c1 = arith.constant 1 : index
    %c0_3 = arith.constant 0 : index
    %1 = vector.load %arg1[%c0_2, %c1, %c0_3] : memref<4x34x2xf32, #tpu.memory_space<vmem>>, vector<4x32x2xf32>
    %c0_4 = arith.constant 0 : index
    %c2 = arith.constant 2 : index
    %c0_5 = arith.constant 0 : index
    %2 = vector.load %arg1[%c0_4, %c2, %c0_5] : memref<4x34x2xf32, #tpu.memory_space<vmem>>, vector<4x32x2xf32>
    %3 = tpu.concatenate %0, %1, %2 in 0 : vector<4x32x2xf32>, vector<4x32x2xf32>, vector<4x32x2xf32> -> vector<12x32x2xf32>
    %c0_6 = arith.constant 0 : index
    %c0_7 = arith.constant 0 : index
    %4 = vector.load %arg2[%c0_6, %c0_7] : memref<8x12xf32, #tpu.memory_space<vmem>>, vector<8x12xf32>
    %cst = arith.constant dense<0.000000e+00> : vector<8x32x2xf32>
    %5 = tpu.matmul %4, %3, %cst {dimension_numbers = #tpu.dot_dimension_numbers<[1], [0], [0], [1, 2], [0, 0, 1, 1, 1, 2], [], []>} : vector<8x12xf32>, vector<12x32x2xf32>, vector<8x32x2xf32> -> vector<8x32x2xf32>
    %c0_8 = arith.constant 0 : index
    %c0_9 = arith.constant 0 : index
    %6 = vector.load %arg3[%c0_8, %c0_9] : memref<8x1xf32, #tpu.memory_space<vmem>>, vector<8x1xf32>
    %7 = vector.shape_cast %6 : vector<8x1xf32> to vector<8x1x1xf32>
    %8 = vector.broadcast %7 : vector<8x1x1xf32> to vector<8x32x2xf32>
    %9 = arith.addf %5, %8 : vector<8x32x2xf32>
    %cst_10 = arith.constant 0.000000e+00 : f32
    %10 = vector.broadcast %cst_10 : f32 to vector<8x32x2xf32>
    %11 = arith.maximumf %9, %10 : vector<8x32x2xf32>
    %c0_11 = arith.constant 0 : index
    %c0_12 = arith.constant 0 : index
    %c0_13 = arith.constant 0 : index
    %12 = vector.load %arg11[%c0_11, %c0_12, %c0_13] : memref<8x32x2xf32, #tpu.memory_space<vmem>>, vector<8x32x2xf32>
    tpu.vector_store %arg11[%c0_11, %c0_12, %c0_13], %11 {strides = array<i32>} : memref<8x32x2xf32, #tpu.memory_space<vmem>>, vector<8x32x2xf32>,
    %c0_14 = arith.constant 0 : index
    %c0_15 = arith.constant 0 : index
    %c0_16 = arith.constant 0 : index
    %13 = tpu.strided_load %arg11[%c0_14, %c0_15, %c0_16] {strides = array<i32: 1, 2, 1>} : memref<8x32x2xf32, #tpu.memory_space<vmem>>, vector<8x15x2xf32>
    %c0_17 = arith.constant 0 : index
    %c1_18 = arith.constant 1 : index
    %c0_19 = arith.constant 0 : index
    %14 = tpu.strided_load %arg11[%c0_17, %c1_18, %c0_19] {strides = array<i32: 1, 2, 1>} : memref<8x32x2xf32, #tpu.memory_space<vmem>>, vector<8x15x2xf32>
    %c0_20 = arith.constant 0 : index
    %c2_21 = arith.constant 2 : index
    %c0_22 = arith.constant 0 : index
    %15 = tpu.strided_load %arg11[%c0_20, %c2_21, %c0_22] {strides = array<i32: 1, 2, 1>} : memref<8x32x2xf32, #tpu.memory_space<vmem>>, vector<8x15x2xf32>
    %16 = arith.maximumf %13, %14 : vector<8x15x2xf32>
    %17 = arith.maximumf %16, %15 : vector<8x15x2xf32>
    %cst_23 = arith.constant 0.000000e+00 : f32
    %18 = vector.broadcast %cst_23 : f32 to vector<8x1x2xf32>
    %c0_24 = arith.constant 0 : index
    %c0_25 = arith.constant 0 : index
    %c0_26 = arith.constant 0 : index
    %19 = vector.load %arg12[%c0_24, %c0_25, %c0_26] : memref<8x17x2xf32, #tpu.memory_space<vmem>>, vector<8x1x2xf32>
    tpu.vector_store %arg12[%c0_24, %c0_25, %c0_26], %18 {strides = array<i32>} : memref<8x17x2xf32, #tpu.memory_space<vmem>>, vector<8x1x2xf32>,
    %c0_27 = arith.constant 0 : index
    %c16 = arith.constant 16 : index
    %c0_28 = arith.constant 0 : index
    %20 = vector.load %arg12[%c0_27, %c16, %c0_28] : memref<8x17x2xf32, #tpu.memory_space<vmem>>, vector<8x1x2xf32>
    tpu.vector_store %arg12[%c0_27, %c16, %c0_28], %18 {strides = array<i32>} : memref<8x17x2xf32, #tpu.memory_space<vmem>>, vector<8x1x2xf32>,
    %c0_29 = arith.constant 0 : index
    %c1_30 = arith.constant 1 : index
    %c0_31 = arith.constant 0 : index
    %21 = vector.load %arg12[%c0_29, %c1_30, %c0_31] : memref<8x17x2xf32, #tpu.memory_space<vmem>>, vector<8x15x2xf32>
    tpu.vector_store %arg12[%c0_29, %c1_30, %c0_31], %17 {strides = array<i32>} : memref<8x17x2xf32, #tpu.memory_space<vmem>>, vector<8x15x2xf32>,
    %c0_32 = arith.constant 0 : index
    %c0_33 = arith.constant 0 : index
    %c0_34 = arith.constant 0 : index
    %22 = vector.load %arg12[%c0_32, %c0_33, %c0_34] : memref<8x17x2xf32, #tpu.memory_space<vmem>>, vector<8x15x2xf32>
    %c0_35 = arith.constant 0 : index
    %c1_36 = arith.constant 1 : index
    %c0_37 = arith.constant 0 : index
    %23 = vector.load %arg12[%c0_35, %c1_36, %c0_37] : memref<8x17x2xf32, #tpu.memory_space<vmem>>, vector<8x15x2xf32>
    %c0_38 = arith.constant 0 : index
    %c2_39 = arith.constant 2 : index
    %c0_40 = arith.constant 0 : index
    %24 = vector.load %arg12[%c0_38, %c2_39, %c0_40] : memref<8x17x2xf32, #tpu.memory_space<vmem>>, vector<8x15x2xf32>
    %25 = tpu.concatenate %22, %23, %24 in 0 : vector<8x15x2xf32>, vector<8x15x2xf32>, vector<8x15x2xf32> -> vector<24x15x2xf32>
    %c0_41 = arith.constant 0 : index
    %c0_42 = arith.constant 0 : index
    %26 = vector.load %arg4[%c0_41, %c0_42] : memref<16x24xf32, #tpu.memory_space<vmem>>, vector<16x24xf32>
    %cst_43 = arith.constant dense<0.000000e+00> : vector<16x15x2xf32>
    %27 = tpu.matmul %26, %25, %cst_43 {dimension_numbers = #tpu.dot_dimension_numbers<[1], [0], [0], [1, 2], [0, 0, 1, 1, 1, 2], [], []>} : vector<16x24xf32>, vector<24x15x2xf32>, vector<16x15x2xf32> -> vector<16x15x2xf32>
    %c0_44 = arith.constant 0 : index
    %c0_45 = arith.constant 0 : index
    %28 = vector.load %arg5[%c0_44, %c0_45] : memref<16x1xf32, #tpu.memory_space<vmem>>, vector<16x1xf32>
    %29 = vector.shape_cast %28 : vector<16x1xf32> to vector<16x1x1xf32>
    %30 = vector.broadcast %29 : vector<16x1x1xf32> to vector<16x15x2xf32>
    %31 = arith.addf %27, %30 : vector<16x15x2xf32>
    %cst_46 = arith.constant 0.000000e+00 : f32
    %32 = vector.broadcast %cst_46 : f32 to vector<16x15x2xf32>
    %33 = arith.maximumf %31, %32 : vector<16x15x2xf32>
    %c0_47 = arith.constant 0 : index
    %c0_48 = arith.constant 0 : index
    %c0_49 = arith.constant 0 : index
    %34 = vector.load %arg13[%c0_47, %c0_48, %c0_49] : memref<16x15x2xf32, #tpu.memory_space<vmem>>, vector<16x15x2xf32>
    tpu.vector_store %arg13[%c0_47, %c0_48, %c0_49], %33 {strides = array<i32>} : memref<16x15x2xf32, #tpu.memory_space<vmem>>, vector<16x15x2xf32>,
    %c0_50 = arith.constant 0 : index
    %c0_51 = arith.constant 0 : index
    %c0_52 = arith.constant 0 : index
    %35 = tpu.strided_load %arg13[%c0_50, %c0_51, %c0_52] {strides = array<i32: 1, 2, 1>} : memref<16x15x2xf32, #tpu.memory_space<vmem>>, vector<16x7x2xf32>
    %c0_53 = arith.constant 0 : index
    %c1_54 = arith.constant 1 : index
    %c0_55 = arith.constant 0 : index
    %36 = tpu.strided_load %arg13[%c0_53, %c1_54, %c0_55] {strides = array<i32: 1, 2, 1>} : memref<16x15x2xf32, #tpu.memory_space<vmem>>, vector<16x7x2xf32>
    %c0_56 = arith.constant 0 : index
    %c2_57 = arith.constant 2 : index
    %c0_58 = arith.constant 0 : index
    %37 = tpu.strided_load %arg13[%c0_56, %c2_57, %c0_58] {strides = array<i32: 1, 2, 1>} : memref<16x15x2xf32, #tpu.memory_space<vmem>>, vector<16x7x2xf32>
    %38 = arith.maximumf %35, %36 : vector<16x7x2xf32>
    %39 = arith.maximumf %38, %37 : vector<16x7x2xf32>
    %cst_59 = arith.constant 0.000000e+00 : f32
    %40 = vector.broadcast %cst_59 : f32 to vector<16x1x2xf32>
    %c0_60 = arith.constant 0 : index
    %c0_61 = arith.constant 0 : index
    %c0_62 = arith.constant 0 : index
    %41 = vector.load %arg14[%c0_60, %c0_61, %c0_62] : memref<16x9x2xf32, #tpu.memory_space<vmem>>, vector<16x1x2xf32>
    tpu.vector_store %arg14[%c0_60, %c0_61, %c0_62], %40 {strides = array<i32>} : memref<16x9x2xf32, #tpu.memory_space<vmem>>, vector<16x1x2xf32>,
    %c0_63 = arith.constant 0 : index
    %c8 = arith.constant 8 : index
    %c0_64 = arith.constant 0 : index
    %42 = vector.load %arg14[%c0_63, %c8, %c0_64] : memref<16x9x2xf32, #tpu.memory_space<vmem>>, vector<16x1x2xf32>
    tpu.vector_store %arg14[%c0_63, %c8, %c0_64], %40 {strides = array<i32>} : memref<16x9x2xf32, #tpu.memory_space<vmem>>, vector<16x1x2xf32>,
    %c0_65 = arith.constant 0 : index
    %c1_66 = arith.constant 1 : index
    %c0_67 = arith.constant 0 : index
    %43 = vector.load %arg14[%c0_65, %c1_66, %c0_67] : memref<16x9x2xf32, #tpu.memory_space<vmem>>, vector<16x7x2xf32>
    tpu.vector_store %arg14[%c0_65, %c1_66, %c0_67], %39 {strides = array<i32>} : memref<16x9x2xf32, #tpu.memory_space<vmem>>, vector<16x7x2xf32>,
    %c0_68 = arith.constant 0 : index
    %c0_69 = arith.constant 0 : index
    %c0_70 = arith.constant 0 : index
    %44 = vector.load %arg14[%c0_68, %c0_69, %c0_70] : memref<16x9x2xf32, #tpu.memory_space<vmem>>, vector<16x7x2xf32>
    %c0_71 = arith.constant 0 : index
    %c1_72 = arith.constant 1 : index
    %c0_73 = arith.constant 0 : index
    %45 = vector.load %arg14[%c0_71, %c1_72, %c0_73] : memref<16x9x2xf32, #tpu.memory_space<vmem>>, vector<16x7x2xf32>
    %c0_74 = arith.constant 0 : index
    %c2_75 = arith.constant 2 : index
    %c0_76 = arith.constant 0 : index
    %46 = vector.load %arg14[%c0_74, %c2_75, %c0_76] : memref<16x9x2xf32, #tpu.memory_space<vmem>>, vector<16x7x2xf32>
    %47 = tpu.concatenate %44, %45, %46 in 0 : vector<16x7x2xf32>, vector<16x7x2xf32>, vector<16x7x2xf32> -> vector<48x7x2xf32>
    %c0_77 = arith.constant 0 : index
    %c0_78 = arith.constant 0 : index
    %48 = vector.load %arg6[%c0_77, %c0_78] : memref<32x48xf32, #tpu.memory_space<vmem>>, vector<32x48xf32>
    %cst_79 = arith.constant dense<0.000000e+00> : vector<32x7x2xf32>
    %49 = tpu.matmul %48, %47, %cst_79 {dimension_numbers = #tpu.dot_dimension_numbers<[1], [0], [0], [1, 2], [0, 0, 1, 1, 1, 2], [], []>} : vector<32x48xf32>, vector<48x7x2xf32>, vector<32x7x2xf32> -> vector<32x7x2xf32>
    %c0_80 = arith.constant 0 : index
    %c0_81 = arith.constant 0 : index
    %50 = vector.load %arg7[%c0_80, %c0_81] : memref<32x1xf32, #tpu.memory_space<vmem>>, vector<32x1xf32>
    %51 = vector.shape_cast %50 : vector<32x1xf32> to vector<32x1x1xf32>
    %52 = vector.broadcast %51 : vector<32x1x1xf32> to vector<32x7x2xf32>
    %53 = arith.addf %49, %52 : vector<32x7x2xf32>
    %cst_82 = arith.constant 0.000000e+00 : f32
    %54 = vector.broadcast %cst_82 : f32 to vector<32x7x2xf32>
    %55 = arith.maximumf %53, %54 : vector<32x7x2xf32>
    %cst_83 = arith.constant dense<0xFF800000> : vector<32x2xf32>
    %56 = vector.multi_reduction <maximumf>, %55, %cst_83 [1] : vector<32x7x2xf32> to vector<32x2xf32>
    %c0_84 = arith.constant 0 : index
    %c0_85 = arith.constant 0 : index
    %57 = vector.load %arg8[%c0_84, %c0_85] : memref<10x32xf32, #tpu.memory_space<vmem>>, vector<10x32xf32>
    %cst_86 = arith.constant dense<0.000000e+00> : vector<10x2xf32>
    %58 = tpu.matmul %57, %56, %cst_86 {dimension_numbers = #tpu.dot_dimension_numbers<[1], [0], [0], [1], [0, 0, 1, 1], [], []>} : vector<10x32xf32>, vector<32x2xf32>, vector<10x2xf32> -> vector<10x2xf32>
    %c0_87 = arith.constant 0 : index
    %c0_88 = arith.constant 0 : index
    %59 = vector.load %arg9[%c0_87, %c0_88] : memref<10x1xf32, #tpu.memory_space<vmem>>, vector<10x1xf32>
    %60 = vector.broadcast %59 : vector<10x1xf32> to vector<10x2xf32>
    %61 = arith.addf %58, %60 : vector<10x2xf32>
    %c0_89 = arith.constant 0 : index
    %c0_90 = arith.constant 0 : index
    %62 = vector.load %arg10[%c0_89, %c0_90] : memref<10x2xf32, #tpu.memory_space<vmem>>, vector<10x2xf32>
    tpu.vector_store %arg10[%c0_89, %c0_90], %61 {strides = array<i32>} : memref<10x2xf32, #tpu.memory_space<vmem>>, vector<10x2xf32>,
    return
  }
  func.func @transform_0(%arg0: i32) -> (i32, i32, i32) {
    %c0_i32 = arith.constant 0 : i32
    %c0_i32_0 = arith.constant 0 : i32
    %c0_i32_1 = arith.constant 0 : i32
    return %c0_i32, %c0_i32_0, %arg0 : i32, i32, i32
  }
  func.func @transform_1(%arg0: i32) -> (i32, i32) {
    %c0_i32 = arith.constant 0 : i32
    %c0_i32_0 = arith.constant 0 : i32
    %c0_i32_1 = arith.constant 0 : i32
    return %c0_i32, %c0_i32_0 : i32, i32
  }
  func.func @transform_2(%arg0: i32) -> (i32, i32) {
    %c0_i32 = arith.constant 0 : i32
    %c0_i32_0 = arith.constant 0 : i32
    %c0_i32_1 = arith.constant 0 : i32
    return %c0_i32, %c0_i32_0 : i32, i32
  }
  func.func @transform_3(%arg0: i32) -> (i32, i32) {
    %c0_i32 = arith.constant 0 : i32
    %c0_i32_0 = arith.constant 0 : i32
    %c0_i32_1 = arith.constant 0 : i32
    return %c0_i32, %c0_i32_0 : i32, i32
  }
  func.func @transform_4(%arg0: i32) -> (i32, i32) {
    %c0_i32 = arith.constant 0 : i32
    %c0_i32_0 = arith.constant 0 : i32
    %c0_i32_1 = arith.constant 0 : i32
    return %c0_i32, %c0_i32_0 : i32, i32
  }
  func.func @transform_5(%arg0: i32) -> (i32, i32) {
    %c0_i32 = arith.constant 0 : i32
    %c0_i32_0 = arith.constant 0 : i32
    %c0_i32_1 = arith.constant 0 : i32
    return %c0_i32, %c0_i32_0 : i32, i32
  }
  func.func @transform_6(%arg0: i32) -> (i32, i32) {
    %c0_i32 = arith.constant 0 : i32
    %c0_i32_0 = arith.constant 0 : i32
    %c0_i32_1 = arith.constant 0 : i32
    return %c0_i32, %c0_i32_0 : i32, i32
  }
  func.func @transform_7(%arg0: i32) -> (i32, i32) {
    %c0_i32 = arith.constant 0 : i32
    %c0_i32_0 = arith.constant 0 : i32
    %c0_i32_1 = arith.constant 0 : i32
    return %c0_i32, %c0_i32_0 : i32, i32
  }
  func.func @transform_8(%arg0: i32) -> (i32, i32) {
    %c0_i32 = arith.constant 0 : i32
    %c0_i32_0 = arith.constant 0 : i32
    %c0_i32_1 = arith.constant 0 : i32
    return %c0_i32, %c0_i32_0 : i32, i32
  }
  func.func @transform_9(%arg0: i32) -> (i32, i32) {
    %c0_i32 = arith.constant 0 : i32
    %c0_i32_0 = arith.constant 0 : i32
    return %c0_i32, %arg0 : i32, i32
  }
}

</mosaic_0001>

<llo_original>
// kernel: tpu_custom_call.1
$region0: #{tpu_custom_call.1}
  #allocation0 [shape = 'u32[]', space=smem, size = 0x4, offset = 0x4, fixed_abs, tag = 'smem constant byte address 0x4 - core index']
  #allocation1 [shape = 'u32[144,128]{1,0:T(1,128)}', space=vmem, size = 0x12000, scoped, tag = 'internal scratch']
  #allocation2 [shape = 'f32[8,32,2]{2,1,0:T(8,128)}', space=vmem, size = 0x20000, scoped, tag = 'scratch operand']
  #allocation3 [shape = 'f32[8,17,2]{2,1,0:T(8,128)}', space=vmem, size = 0x18000, scoped, tag = 'scratch operand']
  #allocation4 [shape = 'f32[16,15,2]{2,1,0:T(8,128)}', space=vmem, size = 0x20000, scoped, tag = 'scratch operand']
  #allocation5 [shape = 'f32[16,9,2]{2,1,0:T(8,128)}', space=vmem, size = 0x20000, scoped, tag = 'scratch operand']
  %s0 = inlined_call_operand.vmem [shape: f32[4,34,2], index: 0, kind: input, shape index: {}]
  %s1 = inlined_call_operand.vmem [shape: f32[8,12], index: 1, kind: input, shape index: {}]
  %s2 = inlined_call_operand.vmem [shape: f32[8,1], index: 2, kind: input, shape index: {}]
  %s3 = inlined_call_operand.vmem [shape: f32[16,24], index: 3, kind: input, shape index: {}]
  %s4 = inlined_call_operand.vmem [shape: f32[16,1], index: 4, kind: input, shape index: {}]
  %s5 = inlined_call_operand.vmem [shape: f32[32,48], index: 5, kind: input, shape index: {}]
  %s6 = inlined_call_operand.vmem [shape: f32[32,1], index: 6, kind: input, shape index: {}]
  %s7 = inlined_call_operand.vmem [shape: f32[10,32], index: 7, kind: input, shape index: {}]
  %s8 = inlined_call_operand.vmem [shape: f32[10,1], index: 8, kind: input, shape index: {}]
  %s9 = inlined_call_operand.vmem [shape: f32[10,2], index: 9, kind: output, shape index: {}]
  %s10 = sld [smem:[#allocation0]]
  $region46: #{tpu_custom_call.1} parent=0
    _
  %s12 = ssub.s32 1, %s10
  %s13 = scalar_select 0, %s12, %s10
  // Predicated region
  $region2: #{tpu_custom_call.1} parent=0 // pred_check
    _
  $region3: #{tpu_custom_call.1} parent=0 // pred_check_branch
    %15 = sbr.rel (0) target = $region5
  $region4: #{tpu_custom_call.1} parent=0 // pred_region
    _
  $region5: #{tpu_custom_call.1} parent=0 // pred_fallthru
    _
  // Predicated region
  $region6: #{tpu_custom_call.1} parent=0 // pred_check
    _
  $region7: #{tpu_custom_call.1} parent=0 // pred_check_branch
    %17 = sbr.rel (0) target = $region9
  $region8: #{tpu_custom_call.1} parent=0 // pred_region
    _
  $region9: #{tpu_custom_call.1} parent=0 // pred_fallthru
    _
  // Predicated region
  $region10: #{tpu_custom_call.1} parent=0 // pred_check
    _
  $region11: #{tpu_custom_call.1} parent=0 // pred_check_branch
    %19 = sbr.rel (0) target = $region13
  $region12: #{tpu_custom_call.1} parent=0 // pred_region
    _
  $region13: #{tpu_custom_call.1} parent=0 // pred_fallthru
    _
  // Predicated region
  $region14: #{tpu_custom_call.1} parent=0 // pred_check
    _
  $region15: #{tpu_custom_call.1} parent=0 // pred_check_branch
    %21 = sbr.rel (0) target = $region17
  $region16: #{tpu_custom_call.1} parent=0 // pred_region
    _
  $region17: #{tpu_custom_call.1} parent=0 // pred_fallthru
    _
  // Predicated region
  $region18: #{tpu_custom_call.1} parent=0 // pred_check
    _
  $region19: #{tpu_custom_call.1} parent=0 // pred_check_branch
    %23 = sbr.rel (0) target = $region21
  $region20: #{tpu_custom_call.1} parent=0 // pred_region
    _
  $region21: #{tpu_custom_call.1} parent=0 // pred_fallthru
    _
  // Predicated region
  $region22: #{tpu_custom_call.1} parent=0 // pred_check
    _
  $region23: #{tpu_custom_call.1} parent=0 // pred_check_branch
    %25 = sbr.rel (0) target = $region25
  $region24: #{tpu_custom_call.1} parent=0 // pred_region
    _
  $region25: #{tpu_custom_call.1} parent=0 // pred_fallthru
    _
  // Predicated region
  $region26: #{tpu_custom_call.1} parent=0 // pred_check
    _
  $region27: #{tpu_custom_call.1} parent=0 // pred_check_branch
    %27 = sbr.rel (0) target = $region29
  $region28: #{tpu_custom_call.1} parent=0 // pred_region
    _
  $region29: #{tpu_custom_call.1} parent=0 // pred_fallthru
    _
  // Predicated region
  $region30: #{tpu_custom_call.1} parent=0 // pred_check
    _
  $region31: #{tpu_custom_call.1} parent=0 // pred_check_branch
    %29 = sbr.rel (0) target = $region33
  $region32: #{tpu_custom_call.1} parent=0 // pred_region
    _
  $region33: #{tpu_custom_call.1} parent=0 // pred_fallthru
    _
  // Predicated region
  $region34: #{tpu_custom_call.1} parent=0 // pred_check
    _
  $region35: #{tpu_custom_call.1} parent=0 // pred_check_branch
    %31 = sbr.rel (0) target = $region37
  $region36: #{tpu_custom_call.1} parent=0 // pred_region
    _
  $region37: #{tpu_custom_call.1} parent=0 // pred_fallthru
    _
  %v32 = vld [vmem:[%s0] sm:$0xff]
  %v33 = vld [vmem:[%s0 + $0x8] sm:$0xff]
  %v34 = vld [vmem:[%s0 + $0x10] sm:$0xff]
  %v35 = vld [vmem:[%s0 + $0x18] sm:$0xff]
  %v36 = vld [vmem:[%s0 + $0x28] sm:$0xff]
  %v37 = vld [vmem:[%s0 + $0x30] sm:$0xff]
  %v38 = vld [vmem:[%s0 + $0x38] sm:$0xff]
  %v39 = vld [vmem:[%s0 + $0x40] sm:$0xff]
  %v40 = vld [vmem:[%s0 + $0x50] sm:$0xff]
  %v41 = vld [vmem:[%s0 + $0x58] sm:$0xff]
  %v42 = vld [vmem:[%s0 + $0x60] sm:$0xff]
  %v43 = vld [vmem:[%s0 + $0x68] sm:$0xff]
  %v44 = vld [vmem:[%s0 + $0x78] sm:$0xff]
  %v45 = vld [vmem:[%s0 + $0x80] sm:$0xff]
  %v46 = vld [vmem:[%s0 + $0x88] sm:$0xff]
  %v47 = vld [vmem:[%s0 + $0x90] sm:$0xff]
  %v48 = vld [vmem:[%s0 + $0x1] sm:$0xff]
  %v49 = vld [vmem:[%s0 + $0x9] sm:$0xff]
  %v50 = vld [vmem:[%s0 + $0x11] sm:$0xff]
  %v51 = vld [vmem:[%s0 + $0x19] sm:$0xff]
  %v52 = vld [vmem:[%s0 + $0x29] sm:$0xff]
  %v53 = vld [vmem:[%s0 + $0x31] sm:$0xff]
  %v54 = vld [vmem:[%s0 + $0x39] sm:$0xff]
  %v55 = vld [vmem:[%s0 + $0x41] sm:$0xff]
  %v56 = vld [vmem:[%s0 + $0x51] sm:$0xff]
  %v57 = vld [vmem:[%s0 + $0x59] sm:$0xff]
  %v58 = vld [vmem:[%s0 + $0x61] sm:$0xff]
  %v59 = vld [vmem:[%s0 + $0x69] sm:$0xff]
  %v60 = vld [vmem:[%s0 + $0x79] sm:$0xff]
  %v61 = vld [vmem:[%s0 + $0x81] sm:$0xff]
  %v62 = vld [vmem:[%s0 + $0x89] sm:$0xff]
  %v63 = vld [vmem:[%s0 + $0x91] sm:$0xff]
  %v64 = vld [vmem:[%s0 + $0x2] sm:$0xff]
  %v65 = vld [vmem:[%s0 + $0xa] sm:$0xff]
  %v66 = vld [vmem:[%s0 + $0x12] sm:$0xff]
  %v67 = vld [vmem:[%s0 + $0x1a] sm:$0xff]
  %v68 = vld [vmem:[%s0 + $0x2a] sm:$0xff]
  %v69 = vld [vmem:[%s0 + $0x32] sm:$0xff]
  %v70 = vld [vmem:[%s0 + $0x3a] sm:$0xff]
  %v71 = vld [vmem:[%s0 + $0x42] sm:$0xff]
  %v72 = vld [vmem:[%s0 + $0x52] sm:$0xff]
  %v73 = vld [vmem:[%s0 + $0x5a] sm:$0xff]
  %v74 = vld [vmem:[%s0 + $0x62] sm:$0xff]
  %v75 = vld [vmem:[%s0 + $0x6a] sm:$0xff]
  %v76 = vld [vmem:[%s0 + $0x7a] sm:$0xff]
  %v77 = vld [vmem:[%s0 + $0x82] sm:$0xff]
  %v78 = vld [vmem:[%s0 + $0x8a] sm:$0xff]
  %v79 = vld [vmem:[%s0 + $0x92] sm:$0xff]
  %v80 = vld [vmem:[%s1] sm:$0xff]
  %v81 = vld [vmem:[%s2] sm:$0xff]
  %v83 = vcombine.high %v81, %v81
  %v85 = vunpack.c.l.s4 1966171168
  %v86 = vunpack.c.0.s8 %v85
  %v87 = vlaneseq
  %v88 = vshrl.u32 %v87, 7
  %v89 = vsub.s32 %v86, %v88
  %v90 = vrot.slane %v81, %v89
  %v92 = vunpack.c.l.s4 1966171168
  %v93 = vunpack.c.0.s8 %v92
  %v94 = vlaneseq
  %v95 = vshrl.u32 %v94, 7
  %v96 = vsub.s32 %v93, %v95
  %v97 = vrot.slane %v83, %v96
  %v98 = vcombine.high %v90, %v90
  %v99 = vcombine.high %v97, %v97
  %v101 = vunpack.c.l.s4 1966171168
  %v102 = vunpack.c.0.s8 %v101
  %v103 = vlaneseq
  %v104 = vshrl.u32 %v103, 7
  %v105 = vsub.s32 %v102, %v104
  %v106 = vrot.slane %v90, %v105
  %v108 = vunpack.c.l.s4 1966171168
  %v109 = vunpack.c.0.s8 %v108
  %v110 = vlaneseq
  %v111 = vshrl.u32 %v110, 7
  %v112 = vsub.s32 %v109, %v111
  %v113 = vrot.slane %v97, %v112
  %v115 = vunpack.c.l.s4 1966171168
  %v116 = vunpack.c.0.s8 %v115
  %v117 = vlaneseq
  %v118 = vshrl.u32 %v117, 7
  %v119 = vsub.s32 %v116, %v118
  %v120 = vrot.slane %v98, %v119
  %v122 = vunpack.c.l.s4 1966171168
  %v123 = vunpack.c.0.s8 %v122
  %v124 = vlaneseq
  %v125 = vshrl.u32 %v124, 7
  %v126 = vsub.s32 %v123, %v125
  %v127 = vrot.slane %v99, %v126
  %v128 = vcombine.high %v106, %v106
  %v129 = vcombine.high %v113, %v113
  %v130 = vcombine.high %v120, %v120
  %v131 = vcombine.high %v127, %v127
  %v132 = vlaneseq
  %v133 = vshrl.u32 %v132, 7
  %v134 = vsub.s32 0, %v133
  %v135 = vrot.slane %v106, %v134
  %v136 = vlaneseq
  %v137 = vshrl.u32 %v136, 7
  %v138 = vsub.s32 0, %v137
  %v139 = vrot.slane %v120, %v138
  %v140 = vlaneseq
  %v141 = vshrl.u32 %v140, 7
  %v142 = vsub.s32 0, %v141
  %v143 = vrot.slane %v128, %v142
  %v144 = vlaneseq
  %v145 = vshrl.u32 %v144, 7
  %v146 = vsub.s32 0, %v145
  %v147 = vrot.slane %v130, %v146
  %v148 = vlaneseq
  %v149 = vshrl.u32 %v148, 7
  %v150 = vsub.s32 0, %v149
  %v151 = vrot.slane %v113, %v150
  %v152 = vlaneseq
  %v153 = vshrl.u32 %v152, 7
  %v154 = vsub.s32 0, %v153
  %v155 = vrot.slane %v127, %v154
  %v156 = vlaneseq
  %v157 = vshrl.u32 %v156, 7
  %v158 = vsub.s32 0, %v157
  %v159 = vrot.slane %v129, %v158
  %v160 = vlaneseq
  %v161 = vshrl.u32 %v160, 7
  %v162 = vsub.s32 0, %v161
  %v163 = vrot.slane %v131, %v162
  %164 = vset.pattern.permute.xlu0 0
  %165 = vperm.xlu0 %164, %v135
  %v166 = vpop.permute.xlu0 %165
  %168 = vset.pattern.permute.xlu0 0
  %169 = vperm.xlu0 %168, %v139
  %v170 = vpop.permute.xlu0 %169
  %172 = vset.pattern.permute.xlu0 0
  %173 = vperm.xlu0 %172, %v143
  %v174 = vpop.permute.xlu0 %173
  %176 = vset.pattern.permute.xlu0 0
  %177 = vperm.xlu0 %176, %v147
  %v178 = vpop.permute.xlu0 %177
  %180 = vset.pattern.permute.xlu0 0
  %181 = vperm.xlu0 %180, %v151
  %v182 = vpop.permute.xlu0 %181
  %184 = vset.pattern.permute.xlu0 0
  %185 = vperm.xlu0 %184, %v155
  %v186 = vpop.permute.xlu0 %185
  %188 = vset.pattern.permute.xlu0 0
  %189 = vperm.xlu0 %188, %v159
  %v190 = vpop.permute.xlu0 %189
  %192 = vset.pattern.permute.xlu0 0
  %193 = vperm.xlu0 %192, %v163
  %v194 = vpop.permute.xlu0 %193
  %v196 = vcombine.low %v32, %v40
  %v197 = vcombine.high %v32, %v40
  %v199 = vunpack.c.l.s4 1983009808
  %v200 = vunpack.c.0.s8 %v199
  %v201 = vlaneseq
  %v202 = vshrl.u32 %v201, 7
  %v203 = vsub.s32 %v200, %v202
  %v204 = vrot.slane %v196, %v203
  %v206 = vunpack.c.l.s4 1983009808
  %v207 = vunpack.c.0.s8 %v206
  %v208 = vlaneseq
  %v209 = vshrl.u32 %v208, 7
  %v210 = vsub.s32 %v207, %v209
  %v211 = vrot.slane %v197, %v210
  %v212 = vcombine.low %v36, %v44
  %v213 = vcombine.high %v36, %v44
  %v215 = vunpack.c.l.s4 1983009808
  %v216 = vunpack.c.0.s8 %v215
  %v217 = vlaneseq
  %v218 = vshrl.u32 %v217, 7
  %v219 = vsub.s32 %v216, %v218
  %v220 = vrot.slane %v212, %v219
  %v222 = vunpack.c.l.s4 1983009808
  %v223 = vunpack.c.0.s8 %v222
  %v224 = vlaneseq
  %v225 = vshrl.u32 %v224, 7
  %v226 = vsub.s32 %v223, %v225
  %v227 = vrot.slane %v213, %v226
  %v228 = vcombine.low %v48, %v56
  %v229 = vcombine.high %v48, %v56
  %v231 = vunpack.c.l.s4 1983009808
  %v232 = vunpack.c.0.s8 %v231
  %v233 = vlaneseq
  %v234 = vshrl.u32 %v233, 7
  %v235 = vsub.s32 %v232, %v234
  %v236 = vrot.slane %v228, %v235
  %v238 = vunpack.c.l.s4 1983009808
  %v239 = vunpack.c.0.s8 %v238
  %v240 = vlaneseq
  %v241 = vshrl.u32 %v240, 7
  %v242 = vsub.s32 %v239, %v241
  %v243 = vrot.slane %v229, %v242
  %v244 = vcombine.low %v52, %v60
  %v245 = vcombine.high %v52, %v60
  %v247 = vunpack.c.l.s4 1983009808
  %v248 = vunpack.c.0.s8 %v247
  %v249 = vlaneseq
  %v250 = vshrl.u32 %v249, 7
  %v251 = vsub.s32 %v248, %v250
  %v252 = vrot.slane %v244, %v251
  %v254 = vunpack.c.l.s4 1983009808
  %v255 = vunpack.c.0.s8 %v254
  %v256 = vlaneseq
  %v257 = vshrl.u32 %v256, 7
  %v258 = vsub.s32 %v255, %v257
  %v259 = vrot.slane %v245, %v258
  %v260 = vcombine.low %v204, %v220
  %v261 = vcombine.high %v204, %v220
  %v263 = vunpack.c.l.s4 1934713408
  %v264 = vunpack.c.0.s8 %v263
  %v265 = vlaneseq
  %v266 = vshrl.u32 %v265, 7
  %v267 = vsub.s32 %v264, %v266
  %v268 = vrot.slane %v260, %v267
  %v270 = vunpack.c.l.s4 1934713408
  %v271 = vunpack.c.0.s8 %v270
  %v272 = vlaneseq
  %v273 = vshrl.u32 %v272, 7
  %v274 = vsub.s32 %v271, %v273
  %v275 = vrot.slane %v261, %v274
  %v276 = vcombine.low %v211, %v227
  %v277 = vcombine.high %v211, %v227
  %v279 = vunpack.c.l.s4 1934713408
  %v280 = vunpack.c.0.s8 %v279
  %v281 = vlaneseq
  %v282 = vshrl.u32 %v281, 7
  %v283 = vsub.s32 %v280, %v282
  %v284 = vrot.slane %v276, %v283
  %v286 = vunpack.c.l.s4 1934713408
  %v287 = vunpack.c.0.s8 %v286
  %v288 = vlaneseq
  %v289 = vshrl.u32 %v288, 7
  %v290 = vsub.s32 %v287, %v289
  %v291 = vrot.slane %v277, %v290
  %v292 = vcombine.low %v236, %v252
  %v293 = vcombine.high %v236, %v252
  %v295 = vunpack.c.l.s4 1934713408
  %v296 = vunpack.c.0.s8 %v295
  %v297 = vlaneseq
  %v298 = vshrl.u32 %v297, 7
  %v299 = vsub.s32 %v296, %v298
  %v300 = vrot.slane %v292, %v299
  %v302 = vunpack.c.l.s4 1934713408
  %v303 = vunpack.c.0.s8 %v302
  %v304 = vlaneseq
  %v305 = vshrl.u32 %v304, 7
  %v306 = vsub.s32 %v303, %v305
  %v307 = vrot.slane %v293, %v306
  %v308 = vcombine.low %v243, %v259
  %v309 = vcombine.high %v243, %v259
  %v311 = vunpack.c.l.s4 1934713408
  %v312 = vunpack.c.0.s8 %v311
  %v313 = vlaneseq
  %v314 = vshrl.u32 %v313, 7
  %v315 = vsub.s32 %v312, %v314
  %v316 = vrot.slane %v308, %v315
  %v318 = vunpack.c.l.s4 1934713408
  %v319 = vunpack.c.0.s8 %v318
  %v320 = vlaneseq
  %v321 = vshrl.u32 %v320, 7
  %v322 = vsub.s32 %v319, %v321
  %v323 = vrot.slane %v309, %v322
  %v324 = vcombine.low %v268, %v300
  %v325 = vcombine.high %v268, %v300
  %v326 = vcombine.low %v275, %v307
  %v327 = vcombine.high %v275, %v307
  %v328 = vcombine.low %v284, %v316
  %v329 = vcombine.high %v284, %v316
  %v330 = vcombine.low %v291, %v323
  %v331 = vcombine.high %v291, %v323
  %v332 = vcombine.low %v64, %v72
  %v333 = vcombine.high %v64, %v72
  %v335 = vunpack.c.l.s4 1983009808
  %v336 = vunpack.c.0.s8 %v335
  %v337 = vlaneseq
  %v338 = vshrl.u32 %v337, 7
  %v339 = vsub.s32 %v336, %v338
  %v340 = vrot.slane %v332, %v339
  %v342 = vunpack.c.l.s4 1983009808
  %v343 = vunpack.c.0.s8 %v342
  %v344 = vlaneseq
  %v345 = vshrl.u32 %v344, 7
  %v346 = vsub.s32 %v343, %v345
  %v347 = vrot.slane %v333, %v346
  %v348 = vcombine.low %v68, %v76
  %v349 = vcombine.high %v68, %v76
  %v351 = vunpack.c.l.s4 1983009808
  %v352 = vunpack.c.0.s8 %v351
  %v353 = vlaneseq
  %v354 = vshrl.u32 %v353, 7
  %v355 = vsub.s32 %v352, %v354
  %v356 = vrot.slane %v348, %v355
  %v358 = vunpack.c.l.s4 1983009808
  %v359 = vunpack.c.0.s8 %v358
  %v360 = vlaneseq
  %v361 = vshrl.u32 %v360, 7
  %v362 = vsub.s32 %v359, %v361
  %v363 = vrot.slane %v349, %v362
  %v364 = vcombine.low %v340, %v356
  %v365 = vcombine.high %v340, %v356
  %v367 = vunpack.c.l.s4 1934713408
  %v368 = vunpack.c.0.s8 %v367
  %v369 = vlaneseq
  %v370 = vshrl.u32 %v369, 7
  %v371 = vsub.s32 %v368, %v370
  %v372 = vrot.slane %v364, %v371
  %v374 = vunpack.c.l.s4 1934713408
  %v375 = vunpack.c.0.s8 %v374
  %v376 = vlaneseq
  %v377 = vshrl.u32 %v376, 7
  %v378 = vsub.s32 %v375, %v377
  %v379 = vrot.slane %v365, %v378
  %v380 = vcombine.low %v347, %v363
  %v381 = vcombine.high %v347, %v363
  %v383 = vunpack.c.l.s4 1934713408
  %v384 = vunpack.c.0.s8 %v383
  %v385 = vlaneseq
  %v386 = vshrl.u32 %v385, 7
  %v387 = vsub.s32 %v384, %v386
  %v388 = vrot.slane %v380, %v387
  %v390 = vunpack.c.l.s4 1934713408
  %v391 = vunpack.c.0.s8 %v390
  %v392 = vlaneseq
  %v393 = vshrl.u32 %v392, 7
  %v394 = vsub.s32 %v391, %v393
  %v395 = vrot.slane %v381, %v394
  %v396 = vcombine.high %v372, 0.0
  %v397 = vcombine.high %v379, 0.0
  %v398 = vcombine.high %v388, 0.0
  %v399 = vcombine.high %v395, 0.0
  %v400 = vcombine.low %v33, %v41
  %v401 = vcombine.high %v33, %v41
  %v403 = vunpack.c.l.s4 1983009808
  %v404 = vunpack.c.0.s8 %v403
  %v405 = vlaneseq
  %v406 = vshrl.u32 %v405, 7
  %v407 = vsub.s32 %v404, %v406
  %v408 = vrot.slane %v400, %v407
  %v410 = vunpack.c.l.s4 1983009808
  %v411 = vunpack.c.0.s8 %v410
  %v412 = vlaneseq
  %v413 = vshrl.u32 %v412, 7
  %v414 = vsub.s32 %v411, %v413
  %v415 = vrot.slane %v401, %v414
  %v416 = vcombine.low %v37, %v45
  %v417 = vcombine.high %v37, %v45
  %v419 = vunpack.c.l.s4 1983009808
  %v420 = vunpack.c.0.s8 %v419
  %v421 = vlaneseq
  %v422 = vshrl.u32 %v421, 7
  %v423 = vsub.s32 %v420, %v422
  %v424 = vrot.slane %v416, %v423
  %v426 = vunpack.c.l.s4 1983009808
  %v427 = vunpack.c.0.s8 %v426
  %v428 = vlaneseq
  %v429 = vshrl.u32 %v428, 7
  %v430 = vsub.s32 %v427, %v429
  %v431 = vrot.slane %v417, %v430
  %v432 = vcombine.low %v49, %v57
  %v433 = vcombine.high %v49, %v57
  %v435 = vunpack.c.l.s4 1983009808
  %v436 = vunpack.c.0.s8 %v435
  %v437 = vlaneseq
  %v438 = vshrl.u32 %v437, 7
  %v439 = vsub.s32 %v436, %v438
  %v440 = vrot.slane %v432, %v439
  %v442 = vunpack.c.l.s4 1983009808
  %v443 = vunpack.c.0.s8 %v442
  %v444 = vlaneseq
  %v445 = vshrl.u32 %v444, 7
  %v446 = vsub.s32 %v443, %v445
  %v447 = vrot.slane %v433, %v446
  %v448 = vcombine.low %v53, %v61
  %v449 = vcombine.high %v53, %v61
  %v451 = vunpack.c.l.s4 1983009808
  %v452 = vunpack.c.0.s8 %v451
  %v453 = vlaneseq
  %v454 = vshrl.u32 %v453, 7
  %v455 = vsub.s32 %v452, %v454
  %v456 = vrot.slane %v448, %v455
  %v458 = vunpack.c.l.s4 1983009808
  %v459 = vunpack.c.0.s8 %v458
  %v460 = vlaneseq
  %v461 = vshrl.u32 %v460, 7
  %v462 = vsub.s32 %v459, %v461
  %v463 = vrot.slane %v449, %v462
  %v464 = vcombine.low %v408, %v424
  %v465 = vcombine.high %v408, %v424
  %v467 = vunpack.c.l.s4 1934713408
  %v468 = vunpack.c.0.s8 %v467
  %v469 = vlaneseq
  %v470 = vshrl.u32 %v469, 7
  %v471 = vsub.s32 %v468, %v470
  %v472 = vrot.slane %v464, %v471
  %v474 = vunpack.c.l.s4 1934713408
  %v475 = vunpack.c.0.s8 %v474
  %v476 = vlaneseq
  %v477 = vshrl.u32 %v476, 7
  %v478 = vsub.s32 %v475, %v477
  %v479 = vrot.slane %v465, %v478
  %v480 = vcombine.low %v415, %v431
  %v481 = vcombine.high %v415, %v431
  %v483 = vunpack.c.l.s4 1934713408
  %v484 = vunpack.c.0.s8 %v483
  %v485 = vlaneseq
  %v486 = vshrl.u32 %v485, 7
  %v487 = vsub.s32 %v484, %v486
  %v488 = vrot.slane %v480, %v487
  %v490 = vunpack.c.l.s4 1934713408
  %v491 = vunpack.c.0.s8 %v490
  %v492 = vlaneseq
  %v493 = vshrl.u32 %v492, 7
  %v494 = vsub.s32 %v491, %v493
  %v495 = vrot.slane %v481, %v494
  %v496 = vcombine.low %v440, %v456
  %v497 = vcombine.high %v440, %v456
  %v499 = vunpack.c.l.s4 1934713408
  %v500 = vunpack.c.0.s8 %v499
  %v501 = vlaneseq
  %v502 = vshrl.u32 %v501, 7
  %v503 = vsub.s32 %v500, %v502
  %v504 = vrot.slane %v496, %v503
  %v506 = vunpack.c.l.s4 1934713408
  %v507 = vunpack.c.0.s8 %v506
  %v508 = vlaneseq
  %v509 = vshrl.u32 %v508, 7
  %v510 = vsub.s32 %v507, %v509
  %v511 = vrot.slane %v497, %v510
  %v512 = vcombine.low %v447, %v463
  %v513 = vcombine.high %v447, %v463
  %v515 = vunpack.c.l.s4 1934713408
  %v516 = vunpack.c.0.s8 %v515
  %v517 = vlaneseq
  %v518 = vshrl.u32 %v517, 7
  %v519 = vsub.s32 %v516, %v518
  %v520 = vrot.slane %v512, %v519
  %v522 = vunpack.c.l.s4 1934713408
  %v523 = vunpack.c.0.s8 %v522
  %v524 = vlaneseq
  %v525 = vshrl.u32 %v524, 7
  %v526 = vsub.s32 %v523, %v525
  %v527 = vrot.slane %v513, %v526
  %v528 = vcombine.low %v472, %v504
  %v529 = vcombine.high %v472, %v504
  %v530 = vcombine.low %v479, %v511
  %v531 = vcombine.high %v479, %v511
  %v532 = vcombine.low %v488, %v520
  %v533 = vcombine.high %v488, %v520
  %v534 = vcombine.low %v495, %v527
  %v535 = vcombine.high %v495, %v527
  %v536 = vcombine.low %v65, %v73
  %v537 = vcombine.high %v65, %v73
  %v539 = vunpack.c.l.s4 1983009808
  %v540 = vunpack.c.0.s8 %v539
  %v541 = vlaneseq
  %v542 = vshrl.u32 %v541, 7
  %v543 = vsub.s32 %v540, %v542
  %v544 = vrot.slane %v536, %v543
  %v546 = vunpack.c.l.s4 1983009808
  %v547 = vunpack.c.0.s8 %v546
  %v548 = vlaneseq
  %v549 = vshrl.u32 %v548, 7
  %v550 = vsub.s32 %v547, %v549
  %v551 = vrot.slane %v537, %v550
  %v552 = vcombine.low %v69, %v77
  %v553 = vcombine.high %v69, %v77
  %v555 = vunpack.c.l.s4 1983009808
  %v556 = vunpack.c.0.s8 %v555
  %v557 = vlaneseq
  %v558 = vshrl.u32 %v557, 7
  %v559 = vsub.s32 %v556, %v558
  %v560 = vrot.slane %v552, %v559
  %v562 = vunpack.c.l.s4 1983009808
  %v563 = vunpack.c.0.s8 %v562
  %v564 = vlaneseq
  %v565 = vshrl.u32 %v564, 7
  %v566 = vsub.s32 %v563, %v565
  %v567 = vrot.slane %v553, %v566
  %v568 = vcombine.low %v544, %v560
  %v569 = vcombine.high %v544, %v560
  %v571 = vunpack.c.l.s4 1934713408
  %v572 = vunpack.c.0.s8 %v571
  %v573 = vlaneseq
  %v574 = vshrl.u32 %v573, 7
  %v575 = vsub.s32 %v572, %v574
  %v576 = vrot.slane %v568, %v575
  %v578 = vunpack.c.l.s4 1934713408
  %v579 = vunpack.c.0.s8 %v578
  %v580 = vlaneseq
  %v581 = vshrl.u32 %v580, 7
  %v582 = vsub.s32 %v579, %v581
  %v583 = vrot.slane %v569, %v582
  %v584 = vcombine.low %v551, %v567
  %v585 = vcombine.high %v551, %v567
  %v587 = vunpack.c.l.s4 1934713408
  %v588 = vunpack.c.0.s8 %v587
  %v589 = vlaneseq
  %v590 = vshrl.u32 %v589, 7
  %v591 = vsub.s32 %v588, %v590
  %v592 = vrot.slane %v584, %v591
  %v594 = vunpack.c.l.s4 1934713408
  %v595 = vunpack.c.0.s8 %v594
  %v596 = vlaneseq
  %v597 = vshrl.u32 %v596, 7
  %v598 = vsub.s32 %v595, %v597
  %v599 = vrot.slane %v585, %v598
  %v600 = vcombine.high %v576, 0.0
  %v601 = vcombine.high %v583, 0.0
  %v602 = vcombine.high %v592, 0.0
  %v603 = vcombine.high %v599, 0.0
  %v604 = vcombine.low %v34, %v42
  %v605 = vcombine.high %v34, %v42
  %v607 = vunpack.c.l.s4 1983009808
  %v608 = vunpack.c.0.s8 %v607
  %v609 = vlaneseq
  %v610 = vshrl.u32 %v609, 7
  %v611 = vsub.s32 %v608, %v610
  %v612 = vrot.slane %v604, %v611
  %v614 = vunpack.c.l.s4 1983009808
  %v615 = vunpack.c.0.s8 %v614
  %v616 = vlaneseq
  %v617 = vshrl.u32 %v616, 7
  %v618 = vsub.s32 %v615, %v617
  %v619 = vrot.slane %v605, %v618
  %v620 = vcombine.low %v38, %v46
  %v621 = vcombine.high %v38, %v46
  %v623 = vunpack.c.l.s4 1983009808
  %v624 = vunpack.c.0.s8 %v623
  %v625 = vlaneseq
  %v626 = vshrl.u32 %v625, 7
  %v627 = vsub.s32 %v624, %v626
  %v628 = vrot.slane %v620, %v627
  %v630 = vunpack.c.l.s4 1983009808
  %v631 = vunpack.c.0.s8 %v630
  %v632 = vlaneseq
  %v633 = vshrl.u32 %v632, 7
  %v634 = vsub.s32 %v631, %v633
  %v635 = vrot.slane %v621, %v634
  %v636 = vcombine.low %v50, %v58
  %v637 = vcombine.high %v50, %v58
  %v639 = vunpack.c.l.s4 1983009808
  %v640 = vunpack.c.0.s8 %v639
  %v641 = vlaneseq
  %v642 = vshrl.u32 %v641, 7
  %v643 = vsub.s32 %v640, %v642
  %v644 = vrot.slane %v636, %v643
  %v646 = vunpack.c.l.s4 1983009808
  %v647 = vunpack.c.0.s8 %v646
  %v648 = vlaneseq
  %v649 = vshrl.u32 %v648, 7
  %v650 = vsub.s32 %v647, %v649
  %v651 = vrot.slane %v637, %v650
  %v652 = vcombine.low %v54, %v62
  %v653 = vcombine.high %v54, %v62
  %v655 = vunpack.c.l.s4 1983009808
  %v656 = vunpack.c.0.s8 %v655
  %v657 = vlaneseq
  %v658 = vshrl.u32 %v657, 7
  %v659 = vsub.s32 %v656, %v658
  %v660 = vrot.slane %v652, %v659
  %v662 = vunpack.c.l.s4 1983009808
  %v663 = vunpack.c.0.s8 %v662
  %v664 = vlaneseq
  %v665 = vshrl.u32 %v664, 7
  %v666 = vsub.s32 %v663, %v665
  %v667 = vrot.slane %v653, %v666
  %v668 = vcombine.low %v612, %v628
  %v669 = vcombine.high %v612, %v628
  %v671 = vunpack.c.l.s4 1934713408
  %v672 = vunpack.c.0.s8 %v671
  %v673 = vlaneseq
  %v674 = vshrl.u32 %v673, 7
  %v675 = vsub.s32 %v672, %v674
  %v676 = vrot.slane %v668, %v675
  %v678 = vunpack.c.l.s4 1934713408
  %v679 = vunpack.c.0.s8 %v678
  %v680 = vlaneseq
  %v681 = vshrl.u32 %v680, 7
  %v682 = vsub.s32 %v679, %v681
  %v683 = vrot.slane %v669, %v682
  %v684 = vcombine.low %v619, %v635
  %v685 = vcombine.high %v619, %v635
  %v687 = vunpack.c.l.s4 1934713408
  %v688 = vunpack.c.0.s8 %v687
  %v689 = vlaneseq
  %v690 = vshrl.u32 %v689, 7
  %v691 = vsub.s32 %v688, %v690
  %v692 = vrot.slane %v684, %v691
  %v694 = vunpack.c.l.s4 1934713408
  %v695 = vunpack.c.0.s8 %v694
  %v696 = vlaneseq
  %v697 = vshrl.u32 %v696, 7
  %v698 = vsub.s32 %v695, %v697
  %v699 = vrot.slane %v685, %v698
  %v700 = vcombine.low %v644, %v660
  %v701 = vcombine.high %v644, %v660
  %v703 = vunpack.c.l.s4 1934713408
  %v704 = vunpack.c.0.s8 %v703
  %v705 = vlaneseq
  %v706 = vshrl.u32 %v705, 7
  %v707 = vsub.s32 %v704, %v706
  %v708 = vrot.slane %v700, %v707
  %v710 = vunpack.c.l.s4 1934713408
  %v711 = vunpack.c.0.s8 %v710
  %v712 = vlaneseq
  %v713 = vshrl.u32 %v712, 7
  %v714 = vsub.s32 %v711, %v713
  %v715 = vrot.slane %v701, %v714
  %v716 = vcombine.low %v651, %v667
  %v717 = vcombine.high %v651, %v667
  %v719 = vunpack.c.l.s4 1934713408
  %v720 = vunpack.c.0.s8 %v719
  %v721 = vlaneseq
  %v722 = vshrl.u32 %v721, 7
  %v723 = vsub.s32 %v720, %v722
  %v724 = vrot.slane %v716, %v723
  %v726 = vunpack.c.l.s4 1934713408
  %v727 = vunpack.c.0.s8 %v726
  %v728 = vlaneseq
  %v729 = vshrl.u32 %v728, 7
  %v730 = vsub.s32 %v727, %v729
  %v731 = vrot.slane %v717, %v730
  %v732 = vcombine.low %v676, %v708
  %v733 = vcombine.high %v676, %v708
  %v734 = vcombine.low %v683, %v715
  %v735 = vcombine.high %v683, %v715
  %v736 = vcombine.low %v692, %v724
  %v737 = vcombine.high %v692, %v724
  %v738 = vcombine.low %v699, %v731
  %v739 = vcombine.high %v699, %v731
  %v740 = vcombine.low %v66, %v74
  %v741 = vcombine.high %v66, %v74
  %v743 = vunpack.c.l.s4 1983009808
  %v744 = vunpack.c.0.s8 %v743
  %v745 = vlaneseq
  %v746 = vshrl.u32 %v745, 7
  %v747 = vsub.s32 %v744, %v746
  %v748 = vrot.slane %v740, %v747
  %v750 = vunpack.c.l.s4 1983009808
  %v751 = vunpack.c.0.s8 %v750
  %v752 = vlaneseq
  %v753 = vshrl.u32 %v752, 7
  %v754 = vsub.s32 %v751, %v753
  %v755 = vrot.slane %v741, %v754
  %v756 = vcombine.low %v70, %v78
  %v757 = vcombine.high %v70, %v78
  %v759 = vunpack.c.l.s4 1983009808
  %v760 = vunpack.c.0.s8 %v759
  %v761 = vlaneseq
  %v762 = vshrl.u32 %v761, 7
  %v763 = vsub.s32 %v760, %v762
  %v764 = vrot.slane %v756, %v763
  %v766 = vunpack.c.l.s4 1983009808
  %v767 = vunpack.c.0.s8 %v766
  %v768 = vlaneseq
  %v769 = vshrl.u32 %v768, 7
  %v770 = vsub.s32 %v767, %v769
  %v771 = vrot.slane %v757, %v770
  %v772 = vcombine.low %v748, %v764
  %v773 = vcombine.high %v748, %v764
  %v775 = vunpack.c.l.s4 1934713408
  %v776 = vunpack.c.0.s8 %v775
  %v777 = vlaneseq
  %v778 = vshrl.u32 %v777, 7
  %v779 = vsub.s32 %v776, %v778
  %v780 = vrot.slane %v772, %v779
  %v782 = vunpack.c.l.s4 1934713408
  %v783 = vunpack.c.0.s8 %v782
  %v784 = vlaneseq
  %v785 = vshrl.u32 %v784, 7
  %v786 = vsub.s32 %v783, %v785
  %v787 = vrot.slane %v773, %v786
  %v788 = vcombine.low %v755, %v771
  %v789 = vcombine.high %v755, %v771
  %v791 = vunpack.c.l.s4 1934713408
  %v792 = vunpack.c.0.s8 %v791
  %v793 = vlaneseq
  %v794 = vshrl.u32 %v793, 7
  %v795 = vsub.s32 %v792, %v794
  %v796 = vrot.slane %v788, %v795
  %v798 = vunpack.c.l.s4 1934713408
  %v799 = vunpack.c.0.s8 %v798
  %v800 = vlaneseq
  %v801 = vshrl.u32 %v800, 7
  %v802 = vsub.s32 %v799, %v801
  %v803 = vrot.slane %v789, %v802
  %v804 = vcombine.high %v780, 0.0
  %v805 = vcombine.high %v787, 0.0
  %v806 = vcombine.high %v796, 0.0
  %v807 = vcombine.high %v803, 0.0
  %v808 = vcombine.low %v35, %v43
  %v809 = vcombine.high %v35, %v43
  %v811 = vunpack.c.l.s4 1983009808
  %v812 = vunpack.c.0.s8 %v811
  %v813 = vlaneseq
  %v814 = vshrl.u32 %v813, 7
  %v815 = vsub.s32 %v812, %v814
  %v816 = vrot.slane %v808, %v815
  %v818 = vunpack.c.l.s4 1983009808
  %v819 = vunpack.c.0.s8 %v818
  %v820 = vlaneseq
  %v821 = vshrl.u32 %v820, 7
  %v822 = vsub.s32 %v819, %v821
  %v823 = vrot.slane %v809, %v822
  %v824 = vcombine.low %v39, %v47
  %v825 = vcombine.high %v39, %v47
  %v827 = vunpack.c.l.s4 1983009808
  %v828 = vunpack.c.0.s8 %v827
  %v829 = vlaneseq
  %v830 = vshrl.u32 %v829, 7
  %v831 = vsub.s32 %v828, %v830
  %v832 = vrot.slane %v824, %v831
  %v834 = vunpack.c.l.s4 1983009808
  %v835 = vunpack.c.0.s8 %v834
  %v836 = vlaneseq
  %v837 = vshrl.u32 %v836, 7
  %v838 = vsub.s32 %v835, %v837
  %v839 = vrot.slane %v825, %v838
  %v840 = vcombine.low %v51, %v59
  %v841 = vcombine.high %v51, %v59
  %v843 = vunpack.c.l.s4 1983009808
  %v844 = vunpack.c.0.s8 %v843
  %v845 = vlaneseq
  %v846 = vshrl.u32 %v845, 7
  %v847 = vsub.s32 %v844, %v846
  %v848 = vrot.slane %v840, %v847
  %v850 = vunpack.c.l.s4 1983009808
  %v851 = vunpack.c.0.s8 %v850
  %v852 = vlaneseq
  %v853 = vshrl.u32 %v852, 7
  %v854 = vsub.s32 %v851, %v853
  %v855 = vrot.slane %v841, %v854
  %v856 = vcombine.low %v55, %v63
  %v857 = vcombine.high %v55, %v63
  %v859 = vunpack.c.l.s4 1983009808
  %v860 = vunpack.c.0.s8 %v859
  %v861 = vlaneseq
  %v862 = vshrl.u32 %v861, 7
  %v863 = vsub.s32 %v860, %v862
  %v864 = vrot.slane %v856, %v863
  %v866 = vunpack.c.l.s4 1983009808
  %v867 = vunpack.c.0.s8 %v866
  %v868 = vlaneseq
  %v869 = vshrl.u32 %v868, 7
  %v870 = vsub.s32 %v867, %v869
  %v871 = vrot.slane %v857, %v870
  %v872 = vcombine.low %v816, %v832
  %v873 = vcombine.high %v816, %v832
  %v875 = vunpack.c.l.s4 1934713408
  %v876 = vunpack.c.0.s8 %v875
  %v877 = vlaneseq
  %v878 = vshrl.u32 %v877, 7
  %v879 = vsub.s32 %v876, %v878
  %v880 = vrot.slane %v872, %v879
  %v882 = vunpack.c.l.s4 1934713408
  %v883 = vunpack.c.0.s8 %v882
  %v884 = vlaneseq
  %v885 = vshrl.u32 %v884, 7
  %v886 = vsub.s32 %v883, %v885
  %v887 = vrot.slane %v873, %v886
  %v888 = vcombine.low %v823, %v839
  %v889 = vcombine.high %v823, %v839
  %v891 = vunpack.c.l.s4 1934713408
  %v892 = vunpack.c.0.s8 %v891
  %v893 = vlaneseq
  %v894 = vshrl.u32 %v893, 7
  %v895 = vsub.s32 %v892, %v894
  %v896 = vrot.slane %v888, %v895
  %v898 = vunpack.c.l.s4 1934713408
  %v899 = vunpack.c.0.s8 %v898
  %v900 = vlaneseq
  %v901 = vshrl.u32 %v900, 7
  %v902 = vsub.s32 %v899, %v901
  %v903 = vrot.slane %v889, %v902
  %v904 = vcombine.low %v848, %v864
  %v905 = vcombine.high %v848, %v864
  %v907 = vunpack.c.l.s4 1934713408
  %v908 = vunpack.c.0.s8 %v907
  %v909 = vlaneseq
  %v910 = vshrl.u32 %v909, 7
  %v911 = vsub.s32 %v908, %v910
  %v912 = vrot.slane %v904, %v911
  %v914 = vunpack.c.l.s4 1934713408
  %v915 = vunpack.c.0.s8 %v914
  %v916 = vlaneseq
  %v917 = vshrl.u32 %v916, 7
  %v918 = vsub.s32 %v915, %v917
  %v919 = vrot.slane %v905, %v918
  %v920 = vcombine.low %v855, %v871
  %v921 = vcombine.high %v855, %v871
  %v923 = vunpack.c.l.s4 1934713408
  %v924 = vunpack.c.0.s8 %v923
  %v925 = vlaneseq
  %v926 = vshrl.u32 %v925, 7
  %v927 = vsub.s32 %v924, %v926
  %v928 = vrot.slane %v920, %v927
  %v930 = vunpack.c.l.s4 1934713408
  %v931 = vunpack.c.0.s8 %v930
  %v932 = vlaneseq
  %v933 = vshrl.u32 %v932, 7
  %v934 = vsub.s32 %v931, %v933
  %v935 = vrot.slane %v921, %v934
  %v936 = vcombine.low %v880, %v912
  %v937 = vcombine.high %v880, %v912
  %v938 = vcombine.low %v887, %v919
  %v939 = vcombine.high %v887, %v919
  %v940 = vcombine.low %v896, %v928
  %v941 = vcombine.high %v896, %v928
  %v942 = vcombine.low %v903, %v935
  %v943 = vcombine.high %v903, %v935
  %v944 = vcombine.low %v67, %v75
  %v945 = vcombine.high %v67, %v75
  %v947 = vunpack.c.l.s4 1983009808
  %v948 = vunpack.c.0.s8 %v947
  %v949 = vlaneseq
  %v950 = vshrl.u32 %v949, 7
  %v951 = vsub.s32 %v948, %v950
  %v952 = vrot.slane %v944, %v951
  %v954 = vunpack.c.l.s4 1983009808
  %v955 = vunpack.c.0.s8 %v954
  %v956 = vlaneseq
  %v957 = vshrl.u32 %v956, 7
  %v958 = vsub.s32 %v955, %v957
  %v959 = vrot.slane %v945, %v958
  %v960 = vcombine.low %v71, %v79
  %v961 = vcombine.high %v71, %v79
  %v963 = vunpack.c.l.s4 1983009808
  %v964 = vunpack.c.0.s8 %v963
  %v965 = vlaneseq
  %v966 = vshrl.u32 %v965, 7
  %v967 = vsub.s32 %v964, %v966
  %v968 = vrot.slane %v960, %v967
  %v970 = vunpack.c.l.s4 1983009808
  %v971 = vunpack.c.0.s8 %v970
  %v972 = vlaneseq
  %v973 = vshrl.u32 %v972, 7
  %v974 = vsub.s32 %v971, %v973
  %v975 = vrot.slane %v961, %v974
  %v976 = vcombine.low %v952, %v968
  %v977 = vcombine.high %v952, %v968
  %v979 = vunpack.c.l.s4 1934713408
  %v980 = vunpack.c.0.s8 %v979
  %v981 = vlaneseq
  %v982 = vshrl.u32 %v981, 7
  %v983 = vsub.s32 %v980, %v982
  %v984 = vrot.slane %v976, %v983
  %v986 = vunpack.c.l.s4 1934713408
  %v987 = vunpack.c.0.s8 %v986
  %v988 = vlaneseq
  %v989 = vshrl.u32 %v988, 7
  %v990 = vsub.s32 %v987, %v989
  %v991 = vrot.slane %v977, %v990
  %v992 = vcombine.low %v959, %v975
  %v993 = vcombine.high %v959, %v975
  %v995 = vunpack.c.l.s4 1934713408
  %v996 = vunpack.c.0.s8 %v995
  %v997 = vlaneseq
  %v998 = vshrl.u32 %v997, 7
  %v999 = vsub.s32 %v996, %v998
  %v1000 = vrot.slane %v992, %v999
  %v1002 = vunpack.c.l.s4 1934713408
  %v1003 = vunpack.c.0.s8 %v1002
  %v1004 = vlaneseq
  %v1005 = vshrl.u32 %v1004, 7
  %v1006 = vsub.s32 %v1003, %v1005
  %v1007 = vrot.slane %v993, %v1006
  %v1008 = vcombine.high %v984, 0.0
  %v1009 = vcombine.high %v991, 0.0
  %v1010 = vcombine.high %v1000, 0.0
  %v1011 = vcombine.high %v1007, 0.0
  %1014 = vrot.lane.b32.xlu0 %v325, 2
  %v1015 = vpop.permute.xlu0 %1014
  %1016 = vrot.lane.b32.xlu0 %v396, 2
  %v1017 = vpop.permute.xlu0 %1016
  %1022 = vrot.lane.b32.xlu0 %v326, 4
  %v1023 = vpop.permute.xlu0 %1022
  %1024 = vrot.lane.b32.xlu0 %v379, 4
  %v1025 = vpop.permute.xlu0 %1024
  %1030 = vrot.lane.b32.xlu0 %v327, 6
  %v1031 = vpop.permute.xlu0 %1030
  %1032 = vrot.lane.b32.xlu0 %v397, 6
  %v1033 = vpop.permute.xlu0 %1032
  %1038 = vrot.lane.b32.xlu0 %v328, 8
  %v1039 = vpop.permute.xlu0 %1038
  %1040 = vrot.lane.b32.xlu0 %v388, 8
  %v1041 = vpop.permute.xlu0 %1040
  %1046 = vrot.lane.b32.xlu0 %v329, 10
  %v1047 = vpop.permute.xlu0 %1046
  %1048 = vrot.lane.b32.xlu0 %v398, 10
  %v1049 = vpop.permute.xlu0 %1048
  %1054 = vrot.lane.b32.xlu0 %v330, 12
  %v1055 = vpop.permute.xlu0 %1054
  %1056 = vrot.lane.b32.xlu0 %v395, 12
  %v1057 = vpop.permute.xlu0 %1056
  %1062 = vrot.lane.b32.xlu0 %v331, 14
  %v1063 = vpop.permute.xlu0 %1062
  %1064 = vrot.lane.b32.xlu0 %v399, 14
  %v1065 = vpop.permute.xlu0 %1064
  %1070 = vrot.lane.b32.xlu0 %v528, 16
  %v1071 = vpop.permute.xlu0 %1070
  %1072 = vrot.lane.b32.xlu0 %v576, 16
  %v1073 = vpop.permute.xlu0 %1072
  %1078 = vrot.lane.b32.xlu0 %v529, 18
  %v1079 = vpop.permute.xlu0 %1078
  %1080 = vrot.lane.b32.xlu0 %v600, 18
  %v1081 = vpop.permute.xlu0 %1080
  %1086 = vrot.lane.b32.xlu0 %v530, 20
  %v1087 = vpop.permute.xlu0 %1086
  %1088 = vrot.lane.b32.xlu0 %v583, 20
  %v1089 = vpop.permute.xlu0 %1088
  %1094 = vrot.lane.b32.xlu0 %v531, 22
  %v1095 = vpop.permute.xlu0 %1094
  %1096 = vrot.lane.b32.xlu0 %v601, 22
  %v1097 = vpop.permute.xlu0 %1096
  %1102 = vrot.lane.b32.xlu0 %v532, 24
  %v1103 = vpop.permute.xlu0 %1102
  %1104 = vrot.lane.b32.xlu0 %v592, 24
  %v1105 = vpop.permute.xlu0 %1104
  %1110 = vrot.lane.b32.xlu0 %v533, 26
  %v1111 = vpop.permute.xlu0 %1110
  %1112 = vrot.lane.b32.xlu0 %v602, 26
  %v1113 = vpop.permute.xlu0 %1112
  %1118 = vrot.lane.b32.xlu0 %v534, 28
  %v1119 = vpop.permute.xlu0 %1118
  %1120 = vrot.lane.b32.xlu0 %v599, 28
  %v1121 = vpop.permute.xlu0 %1120
  %1126 = vrot.lane.b32.xlu0 %v535, 30
  %v1127 = vpop.permute.xlu0 %1126
  %1128 = vrot.lane.b32.xlu0 %v603, 30
  %v1129 = vpop.permute.xlu0 %1128
  %1134 = vrot.lane.b32.xlu0 %v732, 32
  %v1135 = vpop.permute.xlu0 %1134
  %1136 = vrot.lane.b32.xlu0 %v780, 32
  %v1137 = vpop.permute.xlu0 %1136
  %1142 = vrot.lane.b32.xlu0 %v733, 34
  %v1143 = vpop.permute.xlu0 %1142
  %1144 = vrot.lane.b32.xlu0 %v804, 34
  %v1145 = vpop.permute.xlu0 %1144
  %1150 = vrot.lane.b32.xlu0 %v734, 36
  %v1151 = vpop.permute.xlu0 %1150
  %1152 = vrot.lane.b32.xlu0 %v787, 36
  %v1153 = vpop.permute.xlu0 %1152
  %1158 = vrot.lane.b32.xlu0 %v735, 38
  %v1159 = vpop.permute.xlu0 %1158
  %1160 = vrot.lane.b32.xlu0 %v805, 38
  %v1161 = vpop.permute.xlu0 %1160
  %1166 = vrot.lane.b32.xlu0 %v736, 40
  %v1167 = vpop.permute.xlu0 %1166
  %1168 = vrot.lane.b32.xlu0 %v796, 40
  %v1169 = vpop.permute.xlu0 %1168
  %1174 = vrot.lane.b32.xlu0 %v737, 42
  %v1175 = vpop.permute.xlu0 %1174
  %1176 = vrot.lane.b32.xlu0 %v806, 42
  %v1177 = vpop.permute.xlu0 %1176
  %1182 = vrot.lane.b32.xlu0 %v738, 44
  %v1183 = vpop.permute.xlu0 %1182
  %1184 = vrot.lane.b32.xlu0 %v803, 44
  %v1185 = vpop.permute.xlu0 %1184
  %1190 = vrot.lane.b32.xlu0 %v739, 46
  %v1191 = vpop.permute.xlu0 %1190
  %1192 = vrot.lane.b32.xlu0 %v807, 46
  %v1193 = vpop.permute.xlu0 %1192
  %1198 = vrot.lane.b32.xlu0 %v936, 48
  %v1199 = vpop.permute.xlu0 %1198
  %1200 = vrot.lane.b32.xlu0 %v984, 48
  %v1201 = vpop.permute.xlu0 %1200
  %1206 = vrot.lane.b32.xlu0 %v937, 50
  %v1207 = vpop.permute.xlu0 %1206
  %1208 = vrot.lane.b32.xlu0 %v1008, 50
  %v1209 = vpop.permute.xlu0 %1208
  %1214 = vrot.lane.b32.xlu0 %v938, 52
  %v1215 = vpop.permute.xlu0 %1214
  %1216 = vrot.lane.b32.xlu0 %v991, 52
  %v1217 = vpop.permute.xlu0 %1216
  %1222 = vrot.lane.b32.xlu0 %v939, 54
  %v1223 = vpop.permute.xlu0 %1222
  %1224 = vrot.lane.b32.xlu0 %v1009, 54
  %v1225 = vpop.permute.xlu0 %1224
  %1230 = vrot.lane.b32.xlu0 %v940, 56
  %v1231 = vpop.permute.xlu0 %1230
  %1232 = vrot.lane.b32.xlu0 %v1000, 56
  %v1233 = vpop.permute.xlu0 %1232
  %1238 = vrot.lane.b32.xlu0 %v941, 58
  %v1239 = vpop.permute.xlu0 %1238
  %1240 = vrot.lane.b32.xlu0 %v1010, 58
  %v1241 = vpop.permute.xlu0 %1240
  %1246 = vrot.lane.b32.xlu0 %v942, 60
  %v1247 = vpop.permute.xlu0 %1246
  %1248 = vrot.lane.b32.xlu0 %v1007, 60
  %v1249 = vpop.permute.xlu0 %1248
  %1254 = vrot.lane.b32.xlu0 %v943, 62
  %v1255 = vpop.permute.xlu0 %1254
  %1256 = vrot.lane.b32.xlu0 %v1011, 62
  %v1257 = vpop.permute.xlu0 %1256
  %vm1260 = vcmask 15360
  %v1261 = vsel %vm1260, %v324, %v1015
  %v1262 = vsel %vm1260, %v372, %v1017
  %vm1263 = vcmask 31744
  %v1264 = vsel %vm1263, %v1261, %v1023
  %v1265 = vsel %vm1263, %v1262, %v1025
  %vm1266 = vcmask 48128
  %v1267 = vsel %vm1266, %v1264, %v1031
  %v1268 = vsel %vm1266, %v1265, %v1033
  %vm1269 = vcmask 64512
  %v1270 = vsel %vm1269, %v1267, %v1039
  %v1271 = vsel %vm1269, %v1268, %v1041
  %vm1272 = vcmask 80896
  %v1273 = vsel %vm1272, %v1270, %v1047
  %v1274 = vsel %vm1272, %v1271, %v1049
  %vm1275 = vcmask 97280
  %v1276 = vsel %vm1275, %v1273, %v1055
  %v1277 = vsel %vm1275, %v1274, %v1057
  %vm1278 = vcmask 113664
  %v1279 = vsel %vm1278, %v1276, %v1063
  %v1280 = vsel %vm1278, %v1277, %v1065
  %vm1281 = vcmask 130048
  %v1282 = vsel %vm1281, %v1279, %v1071
  %v1283 = vsel %vm1281, %v1280, %v1073
  %vm1284 = vcmask 146432
  %v1285 = vsel %vm1284, %v1282, %v1079
  %v1286 = vsel %vm1284, %v1283, %v1081
  %vm1287 = vcmask 162816
  %v1288 = vsel %vm1287, %v1285, %v1087
  %v1289 = vsel %vm1287, %v1286, %v1089
  %vm1290 = vcmask 179200
  %v1291 = vsel %vm1290, %v1288, %v1095
  %v1292 = vsel %vm1290, %v1289, %v1097
  %vm1293 = vcmask 195584
  %v1294 = vsel %vm1293, %v1291, %v1103
  %v1295 = vsel %vm1293, %v1292, %v1105
  %vm1296 = vcmask 211968
  %v1297 = vsel %vm1296, %v1294, %v1111
  %v1298 = vsel %vm1296, %v1295, %v1113
  %vm1299 = vcmask 228352
  %v1300 = vsel %vm1299, %v1297, %v1119
  %v1301 = vsel %vm1299, %v1298, %v1121
  %vm1302 = vcmask 244736
  %v1303 = vsel %vm1302, %v1300, %v1127
  %v1304 = vsel %vm1302, %v1301, %v1129
  %vm1305 = vcmask 261120
  %v1306 = vsel %vm1305, %v1303, %v1135
  %v1307 = vsel %vm1305, %v1304, %v1137
  %vm1308 = vcmask 277504
  %v1309 = vsel %vm1308, %v1306, %v1143
  %v1310 = vsel %vm1308, %v1307, %v1145
  %vm1311 = vcmask 293888
  %v1312 = vsel %vm1311, %v1309, %v1151
  %v1313 = vsel %vm1311, %v1310, %v1153
  %vm1314 = vcmask 310272
  %v1315 = vsel %vm1314, %v1312, %v1159
  %v1316 = vsel %vm1314, %v1313, %v1161
  %vm1317 = vcmask 326656
  %v1318 = vsel %vm1317, %v1315, %v1167
  %v1319 = vsel %vm1317, %v1316, %v1169
  %vm1320 = vcmask 343040
  %v1321 = vsel %vm1320, %v1318, %v1175
  %v1322 = vsel %vm1320, %v1319, %v1177
  %vm1323 = vcmask 359424
  %v1324 = vsel %vm1323, %v1321, %v1183
  %v1325 = vsel %vm1323, %v1322, %v1185
  %vm1326 = vcmask 375808
  %v1327 = vsel %vm1326, %v1324, %v1191
  %v1328 = vsel %vm1326, %v1325, %v1193
  %vm1329 = vcmask 392192
  %v1330 = vsel %vm1329, %v1327, %v1199
  %v1331 = vsel %vm1329, %v1328, %v1201
  %vm1332 = vcmask 408576
  %v1333 = vsel %vm1332, %v1330, %v1207
  %v1334 = vsel %vm1332, %v1331, %v1209
  %vm1335 = vcmask 424960
  %v1336 = vsel %vm1335, %v1333, %v1215
  %v1337 = vsel %vm1335, %v1334, %v1217
  %vm1338 = vcmask 441344
  %v1339 = vsel %vm1338, %v1336, %v1223
  %v1340 = vsel %vm1338, %v1337, %v1225
  %vm1341 = vcmask 457728
  %v1342 = vsel %vm1341, %v1339, %v1231
  %v1343 = vsel %vm1341, %v1340, %v1233
  %vm1344 = vcmask 474112
  %v1345 = vsel %vm1344, %v1342, %v1239
  %v1346 = vsel %vm1344, %v1343, %v1241
  %vm1347 = vcmask 490496
  %v1348 = vsel %vm1347, %v1345, %v1247
  %v1349 = vsel %vm1347, %v1346, %v1249
  %vm1350 = vcmask 506880
  %v1351 = vsel %vm1350, %v1348, %v1255
  %v1352 = vsel %vm1350, %v1349, %v1257
  %v1353 = vcombine.low %v166, %v174
  %v1354 = vcombine.high %v166, %v174
  %v1356 = vunpack.c.l.s4 1983009808
  %v1357 = vunpack.c.0.s8 %v1356
  %v1358 = vlaneseq
  %v1359 = vshrl.u32 %v1358, 7
  %v1360 = vsub.s32 %v1357, %v1359
  %v1361 = vrot.slane %v1353, %v1360
  %v1363 = vunpack.c.l.s4 1983009808
  %v1364 = vunpack.c.0.s8 %v1363
  %v1365 = vlaneseq
  %v1366 = vshrl.u32 %v1365, 7
  %v1367 = vsub.s32 %v1364, %v1366
  %v1368 = vrot.slane %v1354, %v1367
  %v1369 = vcombine.low %v170, %v178
  %v1370 = vcombine.high %v170, %v178
  %v1372 = vunpack.c.l.s4 1983009808
  %v1373 = vunpack.c.0.s8 %v1372
  %v1374 = vlaneseq
  %v1375 = vshrl.u32 %v1374, 7
  %v1376 = vsub.s32 %v1373, %v1375
  %v1377 = vrot.slane %v1369, %v1376
  %v1379 = vunpack.c.l.s4 1983009808
  %v1380 = vunpack.c.0.s8 %v1379
  %v1381 = vlaneseq
  %v1382 = vshrl.u32 %v1381, 7
  %v1383 = vsub.s32 %v1380, %v1382
  %v1384 = vrot.slane %v1370, %v1383
  %v1385 = vcombine.low %v182, %v190
  %v1386 = vcombine.high %v182, %v190
  %v1388 = vunpack.c.l.s4 1983009808
  %v1389 = vunpack.c.0.s8 %v1388
  %v1390 = vlaneseq
  %v1391 = vshrl.u32 %v1390, 7
  %v1392 = vsub.s32 %v1389, %v1391
  %v1393 = vrot.slane %v1385, %v1392
  %v1395 = vunpack.c.l.s4 1983009808
  %v1396 = vunpack.c.0.s8 %v1395
  %v1397 = vlaneseq
  %v1398 = vshrl.u32 %v1397, 7
  %v1399 = vsub.s32 %v1396, %v1398
  %v1400 = vrot.slane %v1386, %v1399
  %v1401 = vcombine.low %v186, %v194
  %v1402 = vcombine.high %v186, %v194
  %v1404 = vunpack.c.l.s4 1983009808
  %v1405 = vunpack.c.0.s8 %v1404
  %v1406 = vlaneseq
  %v1407 = vshrl.u32 %v1406, 7
  %v1408 = vsub.s32 %v1405, %v1407
  %v1409 = vrot.slane %v1401, %v1408
  %v1411 = vunpack.c.l.s4 1983009808
  %v1412 = vunpack.c.0.s8 %v1411
  %v1413 = vlaneseq
  %v1414 = vshrl.u32 %v1413, 7
  %v1415 = vsub.s32 %v1412, %v1414
  %v1416 = vrot.slane %v1402, %v1415
  %v1417 = vcombine.low %v1361, %v1377
  %v1418 = vcombine.high %v1361, %v1377
  %v1420 = vunpack.c.l.s4 1934713408
  %v1421 = vunpack.c.0.s8 %v1420
  %v1422 = vlaneseq
  %v1423 = vshrl.u32 %v1422, 7
  %v1424 = vsub.s32 %v1421, %v1423
  %v1425 = vrot.slane %v1417, %v1424
  %v1427 = vunpack.c.l.s4 1934713408
  %v1428 = vunpack.c.0.s8 %v1427
  %v1429 = vlaneseq
  %v1430 = vshrl.u32 %v1429, 7
  %v1431 = vsub.s32 %v1428, %v1430
  %v1432 = vrot.slane %v1418, %v1431
  %v1433 = vcombine.low %v1368, %v1384
  %v1434 = vcombine.high %v1368, %v1384
  %v1436 = vunpack.c.l.s4 1934713408
  %v1437 = vunpack.c.0.s8 %v1436
  %v1438 = vlaneseq
  %v1439 = vshrl.u32 %v1438, 7
  %v1440 = vsub.s32 %v1437, %v1439
  %v1441 = vrot.slane %v1433, %v1440
  %v1443 = vunpack.c.l.s4 1934713408
  %v1444 = vunpack.c.0.s8 %v1443
  %v1445 = vlaneseq
  %v1446 = vshrl.u32 %v1445, 7
  %v1447 = vsub.s32 %v1444, %v1446
  %v1448 = vrot.slane %v1434, %v1447
  %v1449 = vcombine.low %v1393, %v1409
  %v1450 = vcombine.high %v1393, %v1409
  %v1452 = vunpack.c.l.s4 1934713408
  %v1453 = vunpack.c.0.s8 %v1452
  %v1454 = vlaneseq
  %v1455 = vshrl.u32 %v1454, 7
  %v1456 = vsub.s32 %v1453, %v1455
  %v1457 = vrot.slane %v1449, %v1456
  %v1459 = vunpack.c.l.s4 1934713408
  %v1460 = vunpack.c.0.s8 %v1459
  %v1461 = vlaneseq
  %v1462 = vshrl.u32 %v1461, 7
  %v1463 = vsub.s32 %v1460, %v1462
  %v1464 = vrot.slane %v1450, %v1463
  %v1465 = vcombine.low %v1400, %v1416
  %v1466 = vcombine.high %v1400, %v1416
  %v1468 = vunpack.c.l.s4 1934713408
  %v1469 = vunpack.c.0.s8 %v1468
  %v1470 = vlaneseq
  %v1471 = vshrl.u32 %v1470, 7
  %v1472 = vsub.s32 %v1469, %v1471
  %v1473 = vrot.slane %v1465, %v1472
  %v1475 = vunpack.c.l.s4 1934713408
  %v1476 = vunpack.c.0.s8 %v1475
  %v1477 = vlaneseq
  %v1478 = vshrl.u32 %v1477, 7
  %v1479 = vsub.s32 %v1476, %v1478
  %v1480 = vrot.slane %v1466, %v1479
  %v1481 = vcombine.low %v1425, %v1457
  %v1482 = vcombine.high %v1425, %v1457
  %v1483 = vcombine.low %v1432, %v1464
  %v1484 = vcombine.high %v1432, %v1464
  %v1485 = vcombine.low %v1441, %v1473
  %v1486 = vcombine.high %v1441, %v1473
  %v1487 = vcombine.low %v1448, %v1480
  %v1488 = vcombine.high %v1448, %v1480
  %1490 = vrot.lane.b32.xlu0 %v1482, 2
  %v1491 = vpop.permute.xlu0 %1490
  %1494 = vrot.lane.b32.xlu0 %v1483, 4
  %v1495 = vpop.permute.xlu0 %1494
  %1498 = vrot.lane.b32.xlu0 %v1484, 6
  %v1499 = vpop.permute.xlu0 %1498
  %1502 = vrot.lane.b32.xlu0 %v1485, 8
  %v1503 = vpop.permute.xlu0 %1502
  %1506 = vrot.lane.b32.xlu0 %v1486, 10
  %v1507 = vpop.permute.xlu0 %1506
  %1510 = vrot.lane.b32.xlu0 %v1487, 12
  %v1511 = vpop.permute.xlu0 %1510
  %1514 = vrot.lane.b32.xlu0 %v1488, 14
  %v1515 = vpop.permute.xlu0 %1514
  %1518 = vrot.lane.b32.xlu0 %v1481, 16
  %v1519 = vpop.permute.xlu0 %1518
  %1521 = vrot.lane.b32.xlu0 %v1482, 18
  %v1522 = vpop.permute.xlu0 %1521
  %1524 = vrot.lane.b32.xlu0 %v1483, 20
  %v1525 = vpop.permute.xlu0 %1524
  %1527 = vrot.lane.b32.xlu0 %v1484, 22
  %v1528 = vpop.permute.xlu0 %1527
  %1530 = vrot.lane.b32.xlu0 %v1485, 24
  %v1531 = vpop.permute.xlu0 %1530
  %1533 = vrot.lane.b32.xlu0 %v1486, 26
  %v1534 = vpop.permute.xlu0 %1533
  %1536 = vrot.lane.b32.xlu0 %v1487, 28
  %v1537 = vpop.permute.xlu0 %1536
  %1539 = vrot.lane.b32.xlu0 %v1488, 30
  %v1540 = vpop.permute.xlu0 %1539
  %1542 = vrot.lane.b32.xlu0 %v1481, 32
  %v1543 = vpop.permute.xlu0 %1542
  %1545 = vrot.lane.b32.xlu0 %v1482, 34
  %v1546 = vpop.permute.xlu0 %1545
  %1548 = vrot.lane.b32.xlu0 %v1483, 36
  %v1549 = vpop.permute.xlu0 %1548
  %1551 = vrot.lane.b32.xlu0 %v1484, 38
  %v1552 = vpop.permute.xlu0 %1551
  %1554 = vrot.lane.b32.xlu0 %v1485, 40
  %v1555 = vpop.permute.xlu0 %1554
  %1557 = vrot.lane.b32.xlu0 %v1486, 42
  %v1558 = vpop.permute.xlu0 %1557
  %1560 = vrot.lane.b32.xlu0 %v1487, 44
  %v1561 = vpop.permute.xlu0 %1560
  %1563 = vrot.lane.b32.xlu0 %v1488, 46
  %v1564 = vpop.permute.xlu0 %1563
  %1566 = vrot.lane.b32.xlu0 %v1481, 48
  %v1567 = vpop.permute.xlu0 %1566
  %1569 = vrot.lane.b32.xlu0 %v1482, 50
  %v1570 = vpop.permute.xlu0 %1569
  %1572 = vrot.lane.b32.xlu0 %v1483, 52
  %v1573 = vpop.permute.xlu0 %1572
  %1575 = vrot.lane.b32.xlu0 %v1484, 54
  %v1576 = vpop.permute.xlu0 %1575
  %1578 = vrot.lane.b32.xlu0 %v1485, 56
  %v1579 = vpop.permute.xlu0 %1578
  %1581 = vrot.lane.b32.xlu0 %v1486, 58
  %v1582 = vpop.permute.xlu0 %1581
  %1584 = vrot.lane.b32.xlu0 %v1487, 60
  %v1585 = vpop.permute.xlu0 %1584
  %1587 = vrot.lane.b32.xlu0 %v1488, 62
  %v1588 = vpop.permute.xlu0 %1587
  %v1590 = vsel %vm1260, %v1481, %v1491
  %v1591 = vsel %vm1263, %v1590, %v1495
  %v1592 = vsel %vm1266, %v1591, %v1499
  %v1593 = vsel %vm1269, %v1592, %v1503
  %v1594 = vsel %vm1272, %v1593, %v1507
  %v1595 = vsel %vm1275, %v1594, %v1511
  %v1596 = vsel %vm1278, %v1595, %v1515
  %v1597 = vsel %vm1281, %v1596, %v1519
  %v1598 = vsel %vm1284, %v1597, %v1522
  %v1599 = vsel %vm1287, %v1598, %v1525
  %v1600 = vsel %vm1290, %v1599, %v1528
  %v1601 = vsel %vm1293, %v1600, %v1531
  %v1602 = vsel %vm1296, %v1601, %v1534
  %v1603 = vsel %vm1299, %v1602, %v1537
  %v1604 = vsel %vm1302, %v1603, %v1540
  %v1605 = vsel %vm1305, %v1604, %v1543
  %v1606 = vsel %vm1308, %v1605, %v1546
  %v1607 = vsel %vm1311, %v1606, %v1549
  %v1608 = vsel %vm1314, %v1607, %v1552
  %v1609 = vsel %vm1317, %v1608, %v1555
  %v1610 = vsel %vm1320, %v1609, %v1558
  %v1611 = vsel %vm1323, %v1610, %v1561
  %v1612 = vsel %vm1326, %v1611, %v1564
  %v1613 = vsel %vm1329, %v1612, %v1567
  %v1614 = vsel %vm1332, %v1613, %v1570
  %v1615 = vsel %vm1335, %v1614, %v1573
  %v1616 = vsel %vm1338, %v1615, %v1576
  %v1617 = vsel %vm1341, %v1616, %v1579
  %v1618 = vsel %vm1344, %v1617, %v1582
  %v1619 = vsel %vm1347, %v1618, %v1585
  %v1620 = vsel %vm1350, %v1619, %v1588
  %v1622 = vsel %vm1275, %v80, 0
  %vm1624 = vcmask 1043456
  %v1626 = vsel %vm1624, %v1352, 0
  %1628 = vmatprep.subr.mxu0 0.0
  %1629 = vmatpush1.msra.mxu0 %v1351
  %1630 = vmatprep.subr.mxu0 0.0
  %1631 = vmatpush1.msra.mxu0 %v1626
  %1632 = vmatprep.subr.mxu0 0.0
  %1633 = vmatpush1.msra.mxu0 0.0
  %1634 = vmatprep.subr.mxu0 0.0
  %1635 = vmatpush1.msra.mxu0 0.0
  %1636 = vmatprep.subr.mxu0 0.0
  %1637 = vmatpush1.msra.mxu0 0.0
  %1638 = vmatprep.subr.mxu0 0.0
  %1639 = vmatpush1.msra.mxu0 0.0
  %1640 = vmatprep.subr.mxu0 0.0
  %1641 = vmatpush1.msra.mxu0 0.0
  %1642 = vmatprep.subr.mxu0 0.0
  %1643 = vmatpush1.msra.mxu0 0.0
  %1644 = vmatprep.subr.mxu0 0.0
  %1645 = vmatpush1.msra.mxu0 0.0
  %1646 = vmatprep.subr.mxu0 0.0
  %1647 = vmatpush1.msra.mxu0 0.0
  %1648 = vmatprep.subr.mxu0 0.0
  %1649 = vmatpush1.msra.mxu0 0.0
  %1650 = vmatprep.subr.mxu0 0.0
  %1651 = vmatpush1.msra.mxu0 0.0
  %1652 = vmatprep.subr.mxu0 0.0
  %1653 = vmatpush1.msra.mxu0 0.0
  %1654 = vmatprep.subr.mxu0 0.0
  %1655 = vmatpush1.msra.mxu0 0.0
  %1656 = vmatprep.subr.mxu0 0.0
  %1657 = vmatpush1.msra.mxu0 0.0
  %1658 = vmatprep.subr.mxu0 0.0
  %1659 = vmatpush1.msra.mxu0 0.0
  %1660 = vmatprep.subr.mxu0 0.0
  %1661 = vmatpush1.msra.mxu0 0.0
  %1662 = vmatprep.subr.mxu0 0.0
  %1663 = vmatpush1.msra.mxu0 0.0
  %1664 = vmatprep.subr.mxu0 0.0
  %1665 = vmatpush1.msra.mxu0 0.0
  %1666 = vmatprep.subr.mxu0 0.0
  %1667 = vmatpush1.msra.mxu0 0.0
  %1668 = vmatprep.subr.mxu0 0.0
  %1669 = vmatpush1.msra.mxu0 0.0
  %1670 = vmatprep.subr.mxu0 0.0
  %1671 = vmatpush1.msra.mxu0 0.0
  %1672 = vmatprep.subr.mxu0 0.0
  %1673 = vmatpush1.msra.mxu0 0.0
  %1674 = vmatprep.subr.mxu0 0.0
  %1675 = vmatpush1.msra.mxu0 0.0
  %1676 = vmatprep.subr.mxu0 0.0
  %1677 = vmatpush1.msra.mxu0 0.0
  %1678 = vmatprep.subr.mxu0 0.0
  %1679 = vmatpush1.msra.mxu0 0.0
  %1680 = vmatprep.subr.mxu0 0.0
  %1681 = vmatpush1.msra.mxu0 0.0
  %1682 = vmatprep.subr.mxu0 0.0
  %1683 = vmatpush1.msra.mxu0 0.0
  %1684 = vmatprep.subr.mxu0 0.0
  %1685 = vmatpush1.msra.mxu0 0.0
  %1686 = vmatprep.subr.mxu0 0.0
  %1687 = vmatpush1.msra.mxu0 0.0
  %1688 = vmatprep.subr.mxu0 0.0
  %1689 = vmatpush1.msra.mxu0 0.0
  %1690 = vmatprep.subr.mxu0 0.0
  %1691 = vmatpush1.msra.mxu0 0.0
  %1692 = vmatprep.mubr.f32.mxu0 0.0
  %1693 = vmatmul.mubr.f32.gmra.mrb[0].mxu0 %v1622
  %v1694 = vpop.f32.mrb[0].mxu0
  %v1695 = vadd.f32 %v1620, %v1694
  %v1696 = vpop.f32.mrb[0].mxu0
  %1697 = vdwg.mxu0
  %1699 = vrot.lane.b32.xlu0 %v1695, 126
  %v1700 = vpop.permute.xlu0 %1699
  %1702 = vrot.lane.b32.xlu0 %v1695, 124
  %v1703 = vpop.permute.xlu0 %1702
  %1705 = vrot.lane.b32.xlu0 %v1695, 122
  %v1706 = vpop.permute.xlu0 %1705
  %1708 = vrot.lane.b32.xlu0 %v1695, 120
  %v1709 = vpop.permute.xlu0 %1708
  %1711 = vrot.lane.b32.xlu0 %v1695, 118
  %v1712 = vpop.permute.xlu0 %1711
  %1714 = vrot.lane.b32.xlu0 %v1695, 116
  %v1715 = vpop.permute.xlu0 %1714
  %1717 = vrot.lane.b32.xlu0 %v1695, 114
  %v1718 = vpop.permute.xlu0 %1717
  %1720 = vrot.lane.b32.xlu0 %v1695, 112
  %v1721 = vpop.permute.xlu0 %1720
  %1723 = vrot.lane.b32.xlu0 %v1695, 110
  %v1724 = vpop.permute.xlu0 %1723
  %1726 = vrot.lane.b32.xlu0 %v1695, 108
  %v1727 = vpop.permute.xlu0 %1726
  %1729 = vrot.lane.b32.xlu0 %v1695, 106
  %v1730 = vpop.permute.xlu0 %1729
  %1732 = vrot.lane.b32.xlu0 %v1695, 104
  %v1733 = vpop.permute.xlu0 %1732
  %1735 = vrot.lane.b32.xlu0 %v1695, 102
  %v1736 = vpop.permute.xlu0 %1735
  %1738 = vrot.lane.b32.xlu0 %v1695, 100
  %v1739 = vpop.permute.xlu0 %1738
  %1741 = vrot.lane.b32.xlu0 %v1695, 98
  %v1742 = vpop.permute.xlu0 %1741
  %1744 = vrot.lane.b32.xlu0 %v1695, 96
  %v1745 = vpop.permute.xlu0 %1744
  %1747 = vrot.lane.b32.xlu0 %v1695, 94
  %v1748 = vpop.permute.xlu0 %1747
  %1750 = vrot.lane.b32.xlu0 %v1695, 92
  %v1751 = vpop.permute.xlu0 %1750
  %1753 = vrot.lane.b32.xlu0 %v1695, 90
  %v1754 = vpop.permute.xlu0 %1753
  %1756 = vrot.lane.b32.xlu0 %v1695, 88
  %v1757 = vpop.permute.xlu0 %1756
  %1759 = vrot.lane.b32.xlu0 %v1695, 86
  %v1760 = vpop.permute.xlu0 %1759
  %1762 = vrot.lane.b32.xlu0 %v1695, 84
  %v1763 = vpop.permute.xlu0 %1762
  %1765 = vrot.lane.b32.xlu0 %v1695, 82
  %v1766 = vpop.permute.xlu0 %1765
  %1768 = vrot.lane.b32.xlu0 %v1695, 80
  %v1769 = vpop.permute.xlu0 %1768
  %1771 = vrot.lane.b32.xlu0 %v1695, 78
  %v1772 = vpop.permute.xlu0 %1771
  %1774 = vrot.lane.b32.xlu0 %v1695, 76
  %v1775 = vpop.permute.xlu0 %1774
  %1777 = vrot.lane.b32.xlu0 %v1695, 74
  %v1778 = vpop.permute.xlu0 %1777
  %1780 = vrot.lane.b32.xlu0 %v1695, 72
  %v1781 = vpop.permute.xlu0 %1780
  %1783 = vrot.lane.b32.xlu0 %v1695, 70
  %v1784 = vpop.permute.xlu0 %1783
  %1786 = vrot.lane.b32.xlu0 %v1695, 68
  %v1787 = vpop.permute.xlu0 %1786
  %1789 = vrot.lane.b32.xlu0 %v1695, 66
  %v1790 = vpop.permute.xlu0 %1789
  %v1792 = vcombine.low %v1695, %v1703
  %v1793 = vcombine.high %v1695, %v1703
  %v1795 = vunpack.c.l.s4 1983009808
  %v1796 = vunpack.c.0.s8 %v1795
  %v1797 = vlaneseq
  %v1798 = vshrl.u32 %v1797, 7
  %v1799 = vsub.s32 %v1796, %v1798
  %v1800 = vrot.slane %v1792, %v1799
  %v1802 = vunpack.c.l.s4 1983009808
  %v1803 = vunpack.c.0.s8 %v1802
  %v1804 = vlaneseq
  %v1805 = vshrl.u32 %v1804, 7
  %v1806 = vsub.s32 %v1803, %v1805
  %v1807 = vrot.slane %v1793, %v1806
  %v1808 = vcombine.low %v1700, %v1706
  %v1809 = vcombine.high %v1700, %v1706
  %v1811 = vunpack.c.l.s4 1983009808
  %v1812 = vunpack.c.0.s8 %v1811
  %v1813 = vlaneseq
  %v1814 = vshrl.u32 %v1813, 7
  %v1815 = vsub.s32 %v1812, %v1814
  %v1816 = vrot.slane %v1808, %v1815
  %v1818 = vunpack.c.l.s4 1983009808
  %v1819 = vunpack.c.0.s8 %v1818
  %v1820 = vlaneseq
  %v1821 = vshrl.u32 %v1820, 7
  %v1822 = vsub.s32 %v1819, %v1821
  %v1823 = vrot.slane %v1809, %v1822
  %v1824 = vcombine.low %v1709, %v1715
  %v1825 = vcombine.high %v1709, %v1715
  %v1827 = vunpack.c.l.s4 1983009808
  %v1828 = vunpack.c.0.s8 %v1827
  %v1829 = vlaneseq
  %v1830 = vshrl.u32 %v1829, 7
  %v1831 = vsub.s32 %v1828, %v1830
  %v1832 = vrot.slane %v1824, %v1831
  %v1834 = vunpack.c.l.s4 1983009808
  %v1835 = vunpack.c.0.s8 %v1834
  %v1836 = vlaneseq
  %v1837 = vshrl.u32 %v1836, 7
  %v1838 = vsub.s32 %v1835, %v1837
  %v1839 = vrot.slane %v1825, %v1838
  %v1840 = vcombine.low %v1712, %v1718
  %v1841 = vcombine.high %v1712, %v1718
  %v1843 = vunpack.c.l.s4 1983009808
  %v1844 = vunpack.c.0.s8 %v1843
  %v1845 = vlaneseq
  %v1846 = vshrl.u32 %v1845, 7
  %v1847 = vsub.s32 %v1844, %v1846
  %v1848 = vrot.slane %v1840, %v1847
  %v1850 = vunpack.c.l.s4 1983009808
  %v1851 = vunpack.c.0.s8 %v1850
  %v1852 = vlaneseq
  %v1853 = vshrl.u32 %v1852, 7
  %v1854 = vsub.s32 %v1851, %v1853
  %v1855 = vrot.slane %v1841, %v1854
  %v1856 = vcombine.low %v1800, %v1816
  %v1857 = vcombine.high %v1800, %v1816
  %v1859 = vunpack.c.l.s4 1934713408
  %v1860 = vunpack.c.0.s8 %v1859
  %v1861 = vlaneseq
  %v1862 = vshrl.u32 %v1861, 7
  %v1863 = vsub.s32 %v1860, %v1862
  %v1864 = vrot.slane %v1856, %v1863
  %v1866 = vunpack.c.l.s4 1934713408
  %v1867 = vunpack.c.0.s8 %v1866
  %v1868 = vlaneseq
  %v1869 = vshrl.u32 %v1868, 7
  %v1870 = vsub.s32 %v1867, %v1869
  %v1871 = vrot.slane %v1857, %v1870
  %v1872 = vcombine.low %v1807, %v1823
  %v1873 = vcombine.high %v1807, %v1823
  %v1875 = vunpack.c.l.s4 1934713408
  %v1876 = vunpack.c.0.s8 %v1875
  %v1877 = vlaneseq
  %v1878 = vshrl.u32 %v1877, 7
  %v1879 = vsub.s32 %v1876, %v1878
  %v1880 = vrot.slane %v1872, %v1879
  %v1882 = vunpack.c.l.s4 1934713408
  %v1883 = vunpack.c.0.s8 %v1882
  %v1884 = vlaneseq
  %v1885 = vshrl.u32 %v1884, 7
  %v1886 = vsub.s32 %v1883, %v1885
  %v1887 = vrot.slane %v1873, %v1886
  %v1888 = vcombine.low %v1832, %v1848
  %v1889 = vcombine.high %v1832, %v1848
  %v1891 = vunpack.c.l.s4 1934713408
  %v1892 = vunpack.c.0.s8 %v1891
  %v1893 = vlaneseq
  %v1894 = vshrl.u32 %v1893, 7
  %v1895 = vsub.s32 %v1892, %v1894
  %v1896 = vrot.slane %v1888, %v1895
  %v1898 = vunpack.c.l.s4 1934713408
  %v1899 = vunpack.c.0.s8 %v1898
  %v1900 = vlaneseq
  %v1901 = vshrl.u32 %v1900, 7
  %v1902 = vsub.s32 %v1899, %v1901
  %v1903 = vrot.slane %v1889, %v1902
  %v1904 = vcombine.low %v1839, %v1855
  %v1905 = vcombine.high %v1839, %v1855
  %v1907 = vunpack.c.l.s4 1934713408
  %v1908 = vunpack.c.0.s8 %v1907
  %v1909 = vlaneseq
  %v1910 = vshrl.u32 %v1909, 7
  %v1911 = vsub.s32 %v1908, %v1910
  %v1912 = vrot.slane %v1904, %v1911
  %v1914 = vunpack.c.l.s4 1934713408
  %v1915 = vunpack.c.0.s8 %v1914
  %v1916 = vlaneseq
  %v1917 = vshrl.u32 %v1916, 7
  %v1918 = vsub.s32 %v1915, %v1917
  %v1919 = vrot.slane %v1905, %v1918
  %v1920 = vcombine.low %v1864, %v1896
  %v1921 = vcombine.high %v1864, %v1896
  %v1922 = vcombine.low %v1871, %v1903
  %v1923 = vcombine.high %v1871, %v1903
  %v1924 = vcombine.low %v1880, %v1912
  %v1925 = vcombine.high %v1880, %v1912
  %v1926 = vcombine.low %v1887, %v1919
  %v1927 = vcombine.high %v1887, %v1919
  %v1928 = vcombine.low %v1721, %v1727
  %v1929 = vcombine.high %v1721, %v1727
  %v1931 = vunpack.c.l.s4 1983009808
  %v1932 = vunpack.c.0.s8 %v1931
  %v1933 = vlaneseq
  %v1934 = vshrl.u32 %v1933, 7
  %v1935 = vsub.s32 %v1932, %v1934
  %v1936 = vrot.slane %v1928, %v1935
  %v1938 = vunpack.c.l.s4 1983009808
  %v1939 = vunpack.c.0.s8 %v1938
  %v1940 = vlaneseq
  %v1941 = vshrl.u32 %v1940, 7
  %v1942 = vsub.s32 %v1939, %v1941
  %v1943 = vrot.slane %v1929, %v1942
  %v1944 = vcombine.low %v1724, %v1730
  %v1945 = vcombine.high %v1724, %v1730
  %v1947 = vunpack.c.l.s4 1983009808
  %v1948 = vunpack.c.0.s8 %v1947
  %v1949 = vlaneseq
  %v1950 = vshrl.u32 %v1949, 7
  %v1951 = vsub.s32 %v1948, %v1950
  %v1952 = vrot.slane %v1944, %v1951
  %v1954 = vunpack.c.l.s4 1983009808
  %v1955 = vunpack.c.0.s8 %v1954
  %v1956 = vlaneseq
  %v1957 = vshrl.u32 %v1956, 7
  %v1958 = vsub.s32 %v1955, %v1957
  %v1959 = vrot.slane %v1945, %v1958
  %v1960 = vcombine.low %v1733, %v1739
  %v1961 = vcombine.high %v1733, %v1739
  %v1963 = vunpack.c.l.s4 1983009808
  %v1964 = vunpack.c.0.s8 %v1963
  %v1965 = vlaneseq
  %v1966 = vshrl.u32 %v1965, 7
  %v1967 = vsub.s32 %v1964, %v1966
  %v1968 = vrot.slane %v1960, %v1967
  %v1970 = vunpack.c.l.s4 1983009808
  %v1971 = vunpack.c.0.s8 %v1970
  %v1972 = vlaneseq
  %v1973 = vshrl.u32 %v1972, 7
  %v1974 = vsub.s32 %v1971, %v1973
  %v1975 = vrot.slane %v1961, %v1974
  %v1976 = vcombine.low %v1736, %v1742
  %v1977 = vcombine.high %v1736, %v1742
  %v1979 = vunpack.c.l.s4 1983009808
  %v1980 = vunpack.c.0.s8 %v1979
  %v1981 = vlaneseq
  %v1982 = vshrl.u32 %v1981, 7
  %v1983 = vsub.s32 %v1980, %v1982
  %v1984 = vrot.slane %v1976, %v1983
  %v1986 = vunpack.c.l.s4 1983009808
  %v1987 = vunpack.c.0.s8 %v1986
  %v1988 = vlaneseq
  %v1989 = vshrl.u32 %v1988, 7
  %v1990 = vsub.s32 %v1987, %v1989
  %v1991 = vrot.slane %v1977, %v1990
  %v1992 = vcombine.low %v1936, %v1952
  %v1993 = vcombine.high %v1936, %v1952
  %v1995 = vunpack.c.l.s4 1934713408
  %v1996 = vunpack.c.0.s8 %v1995
  %v1997 = vlaneseq
  %v1998 = vshrl.u32 %v1997, 7
  %v1999 = vsub.s32 %v1996, %v1998
  %v2000 = vrot.slane %v1992, %v1999
  %v2002 = vunpack.c.l.s4 1934713408
  %v2003 = vunpack.c.0.s8 %v2002
  %v2004 = vlaneseq
  %v2005 = vshrl.u32 %v2004, 7
  %v2006 = vsub.s32 %v2003, %v2005
  %v2007 = vrot.slane %v1993, %v2006
  %v2008 = vcombine.low %v1943, %v1959
  %v2009 = vcombine.high %v1943, %v1959
  %v2011 = vunpack.c.l.s4 1934713408
  %v2012 = vunpack.c.0.s8 %v2011
  %v2013 = vlaneseq
  %v2014 = vshrl.u32 %v2013, 7
  %v2015 = vsub.s32 %v2012, %v2014
  %v2016 = vrot.slane %v2008, %v2015
  %v2018 = vunpack.c.l.s4 1934713408
  %v2019 = vunpack.c.0.s8 %v2018
  %v2020 = vlaneseq
  %v2021 = vshrl.u32 %v2020, 7
  %v2022 = vsub.s32 %v2019, %v2021
  %v2023 = vrot.slane %v2009, %v2022
  %v2024 = vcombine.low %v1968, %v1984
  %v2025 = vcombine.high %v1968, %v1984
  %v2027 = vunpack.c.l.s4 1934713408
  %v2028 = vunpack.c.0.s8 %v2027
  %v2029 = vlaneseq
  %v2030 = vshrl.u32 %v2029, 7
  %v2031 = vsub.s32 %v2028, %v2030
  %v2032 = vrot.slane %v2024, %v2031
  %v2034 = vunpack.c.l.s4 1934713408
  %v2035 = vunpack.c.0.s8 %v2034
  %v2036 = vlaneseq
  %v2037 = vshrl.u32 %v2036, 7
  %v2038 = vsub.s32 %v2035, %v2037
  %v2039 = vrot.slane %v2025, %v2038
  %v2040 = vcombine.low %v1975, %v1991
  %v2041 = vcombine.high %v1975, %v1991
  %v2043 = vunpack.c.l.s4 1934713408
  %v2044 = vunpack.c.0.s8 %v2043
  %v2045 = vlaneseq
  %v2046 = vshrl.u32 %v2045, 7
  %v2047 = vsub.s32 %v2044, %v2046
  %v2048 = vrot.slane %v2040, %v2047
  %v2050 = vunpack.c.l.s4 1934713408
  %v2051 = vunpack.c.0.s8 %v2050
  %v2052 = vlaneseq
  %v2053 = vshrl.u32 %v2052, 7
  %v2054 = vsub.s32 %v2051, %v2053
  %v2055 = vrot.slane %v2041, %v2054
  %v2056 = vcombine.low %v2000, %v2032
  %v2057 = vcombine.high %v2000, %v2032
  %v2058 = vcombine.low %v2007, %v2039
  %v2059 = vcombine.high %v2007, %v2039
  %v2060 = vcombine.low %v2016, %v2048
  %v2061 = vcombine.high %v2016, %v2048
  %v2062 = vcombine.low %v2023, %v2055
  %v2063 = vcombine.high %v2023, %v2055
  %v2064 = vcombine.low %v1745, %v1751
  %v2065 = vcombine.high %v1745, %v1751
  %v2067 = vunpack.c.l.s4 1983009808
  %v2068 = vunpack.c.0.s8 %v2067
  %v2069 = vlaneseq
  %v2070 = vshrl.u32 %v2069, 7
  %v2071 = vsub.s32 %v2068, %v2070
  %v2072 = vrot.slane %v2064, %v2071
  %v2074 = vunpack.c.l.s4 1983009808
  %v2075 = vunpack.c.0.s8 %v2074
  %v2076 = vlaneseq
  %v2077 = vshrl.u32 %v2076, 7
  %v2078 = vsub.s32 %v2075, %v2077
  %v2079 = vrot.slane %v2065, %v2078
  %v2080 = vcombine.low %v1748, %v1754
  %v2081 = vcombine.high %v1748, %v1754
  %v2083 = vunpack.c.l.s4 1983009808
  %v2084 = vunpack.c.0.s8 %v2083
  %v2085 = vlaneseq
  %v2086 = vshrl.u32 %v2085, 7
  %v2087 = vsub.s32 %v2084, %v2086
  %v2088 = vrot.slane %v2080, %v2087
  %v2090 = vunpack.c.l.s4 1983009808
  %v2091 = vunpack.c.0.s8 %v2090
  %v2092 = vlaneseq
  %v2093 = vshrl.u32 %v2092, 7
  %v2094 = vsub.s32 %v2091, %v2093
  %v2095 = vrot.slane %v2081, %v2094
  %v2096 = vcombine.low %v1757, %v1763
  %v2097 = vcombine.high %v1757, %v1763
  %v2099 = vunpack.c.l.s4 1983009808
  %v2100 = vunpack.c.0.s8 %v2099
  %v2101 = vlaneseq
  %v2102 = vshrl.u32 %v2101, 7
  %v2103 = vsub.s32 %v2100, %v2102
  %v2104 = vrot.slane %v2096, %v2103
  %v2106 = vunpack.c.l.s4 1983009808
  %v2107 = vunpack.c.0.s8 %v2106
  %v2108 = vlaneseq
  %v2109 = vshrl.u32 %v2108, 7
  %v2110 = vsub.s32 %v2107, %v2109
  %v2111 = vrot.slane %v2097, %v2110
  %v2112 = vcombine.low %v1760, %v1766
  %v2113 = vcombine.high %v1760, %v1766
  %v2115 = vunpack.c.l.s4 1983009808
  %v2116 = vunpack.c.0.s8 %v2115
  %v2117 = vlaneseq
  %v2118 = vshrl.u32 %v2117, 7
  %v2119 = vsub.s32 %v2116, %v2118
  %v2120 = vrot.slane %v2112, %v2119
  %v2122 = vunpack.c.l.s4 1983009808
  %v2123 = vunpack.c.0.s8 %v2122
  %v2124 = vlaneseq
  %v2125 = vshrl.u32 %v2124, 7
  %v2126 = vsub.s32 %v2123, %v2125
  %v2127 = vrot.slane %v2113, %v2126
  %v2128 = vcombine.low %v2072, %v2088
  %v2129 = vcombine.high %v2072, %v2088
  %v2131 = vunpack.c.l.s4 1934713408
  %v2132 = vunpack.c.0.s8 %v2131
  %v2133 = vlaneseq
  %v2134 = vshrl.u32 %v2133, 7
  %v2135 = vsub.s32 %v2132, %v2134
  %v2136 = vrot.slane %v2128, %v2135
  %v2138 = vunpack.c.l.s4 1934713408
  %v2139 = vunpack.c.0.s8 %v2138
  %v2140 = vlaneseq
  %v2141 = vshrl.u32 %v2140, 7
  %v2142 = vsub.s32 %v2139, %v2141
  %v2143 = vrot.slane %v2129, %v2142
  %v2144 = vcombine.low %v2079, %v2095
  %v2145 = vcombine.high %v2079, %v2095
  %v2147 = vunpack.c.l.s4 1934713408
  %v2148 = vunpack.c.0.s8 %v2147
  %v2149 = vlaneseq
  %v2150 = vshrl.u32 %v2149, 7
  %v2151 = vsub.s32 %v2148, %v2150
  %v2152 = vrot.slane %v2144, %v2151
  %v2154 = vunpack.c.l.s4 1934713408
  %v2155 = vunpack.c.0.s8 %v2154
  %v2156 = vlaneseq
  %v2157 = vshrl.u32 %v2156, 7
  %v2158 = vsub.s32 %v2155, %v2157
  %v2159 = vrot.slane %v2145, %v2158
  %v2160 = vcombine.low %v2104, %v2120
  %v2161 = vcombine.high %v2104, %v2120
  %v2163 = vunpack.c.l.s4 1934713408
  %v2164 = vunpack.c.0.s8 %v2163
  %v2165 = vlaneseq
  %v2166 = vshrl.u32 %v2165, 7
  %v2167 = vsub.s32 %v2164, %v2166
  %v2168 = vrot.slane %v2160, %v2167
  %v2170 = vunpack.c.l.s4 1934713408
  %v2171 = vunpack.c.0.s8 %v2170
  %v2172 = vlaneseq
  %v2173 = vshrl.u32 %v2172, 7
  %v2174 = vsub.s32 %v2171, %v2173
  %v2175 = vrot.slane %v2161, %v2174
  %v2176 = vcombine.low %v2111, %v2127
  %v2177 = vcombine.high %v2111, %v2127
  %v2179 = vunpack.c.l.s4 1934713408
  %v2180 = vunpack.c.0.s8 %v2179
  %v2181 = vlaneseq
  %v2182 = vshrl.u32 %v2181, 7
  %v2183 = vsub.s32 %v2180, %v2182
  %v2184 = vrot.slane %v2176, %v2183
  %v2186 = vunpack.c.l.s4 1934713408
  %v2187 = vunpack.c.0.s8 %v2186
  %v2188 = vlaneseq
  %v2189 = vshrl.u32 %v2188, 7
  %v2190 = vsub.s32 %v2187, %v2189
  %v2191 = vrot.slane %v2177, %v2190
  %v2192 = vcombine.low %v2136, %v2168
  %v2193 = vcombine.high %v2136, %v2168
  %v2194 = vcombine.low %v2143, %v2175
  %v2195 = vcombine.high %v2143, %v2175
  %v2196 = vcombine.low %v2152, %v2184
  %v2197 = vcombine.high %v2152, %v2184
  %v2198 = vcombine.low %v2159, %v2191
  %v2199 = vcombine.high %v2159, %v2191
  %v2200 = vcombine.low %v1769, %v1775
  %v2201 = vcombine.high %v1769, %v1775
  %v2203 = vunpack.c.l.s4 1983009808
  %v2204 = vunpack.c.0.s8 %v2203
  %v2205 = vlaneseq
  %v2206 = vshrl.u32 %v2205, 7
  %v2207 = vsub.s32 %v2204, %v2206
  %v2208 = vrot.slane %v2200, %v2207
  %v2210 = vunpack.c.l.s4 1983009808
  %v2211 = vunpack.c.0.s8 %v2210
  %v2212 = vlaneseq
  %v2213 = vshrl.u32 %v2212, 7
  %v2214 = vsub.s32 %v2211, %v2213
  %v2215 = vrot.slane %v2201, %v2214
  %v2216 = vcombine.low %v1772, %v1778
  %v2217 = vcombine.high %v1772, %v1778
  %v2219 = vunpack.c.l.s4 1983009808
  %v2220 = vunpack.c.0.s8 %v2219
  %v2221 = vlaneseq
  %v2222 = vshrl.u32 %v2221, 7
  %v2223 = vsub.s32 %v2220, %v2222
  %v2224 = vrot.slane %v2216, %v2223
  %v2226 = vunpack.c.l.s4 1983009808
  %v2227 = vunpack.c.0.s8 %v2226
  %v2228 = vlaneseq
  %v2229 = vshrl.u32 %v2228, 7
  %v2230 = vsub.s32 %v2227, %v2229
  %v2231 = vrot.slane %v2217, %v2230
  %v2232 = vcombine.low %v1781, %v1787
  %v2233 = vcombine.high %v1781, %v1787
  %v2235 = vunpack.c.l.s4 1983009808
  %v2236 = vunpack.c.0.s8 %v2235
  %v2237 = vlaneseq
  %v2238 = vshrl.u32 %v2237, 7
  %v2239 = vsub.s32 %v2236, %v2238
  %v2240 = vrot.slane %v2232, %v2239
  %v2242 = vunpack.c.l.s4 1983009808
  %v2243 = vunpack.c.0.s8 %v2242
  %v2244 = vlaneseq
  %v2245 = vshrl.u32 %v2244, 7
  %v2246 = vsub.s32 %v2243, %v2245
  %v2247 = vrot.slane %v2233, %v2246
  %v2248 = vcombine.low %v1784, %v1790
  %v2249 = vcombine.high %v1784, %v1790
  %v2251 = vunpack.c.l.s4 1983009808
  %v2252 = vunpack.c.0.s8 %v2251
  %v2253 = vlaneseq
  %v2254 = vshrl.u32 %v2253, 7
  %v2255 = vsub.s32 %v2252, %v2254
  %v2256 = vrot.slane %v2248, %v2255
  %v2258 = vunpack.c.l.s4 1983009808
  %v2259 = vunpack.c.0.s8 %v2258
  %v2260 = vlaneseq
  %v2261 = vshrl.u32 %v2260, 7
  %v2262 = vsub.s32 %v2259, %v2261
  %v2263 = vrot.slane %v2249, %v2262
  %v2264 = vcombine.low %v2208, %v2224
  %v2265 = vcombine.high %v2208, %v2224
  %v2267 = vunpack.c.l.s4 1934713408
  %v2268 = vunpack.c.0.s8 %v2267
  %v2269 = vlaneseq
  %v2270 = vshrl.u32 %v2269, 7
  %v2271 = vsub.s32 %v2268, %v2270
  %v2272 = vrot.slane %v2264, %v2271
  %v2274 = vunpack.c.l.s4 1934713408
  %v2275 = vunpack.c.0.s8 %v2274
  %v2276 = vlaneseq
  %v2277 = vshrl.u32 %v2276, 7
  %v2278 = vsub.s32 %v2275, %v2277
  %v2279 = vrot.slane %v2265, %v2278
  %v2280 = vcombine.low %v2215, %v2231
  %v2281 = vcombine.high %v2215, %v2231
  %v2283 = vunpack.c.l.s4 1934713408
  %v2284 = vunpack.c.0.s8 %v2283
  %v2285 = vlaneseq
  %v2286 = vshrl.u32 %v2285, 7
  %v2287 = vsub.s32 %v2284, %v2286
  %v2288 = vrot.slane %v2280, %v2287
  %v2290 = vunpack.c.l.s4 1934713408
  %v2291 = vunpack.c.0.s8 %v2290
  %v2292 = vlaneseq
  %v2293 = vshrl.u32 %v2292, 7
  %v2294 = vsub.s32 %v2291, %v2293
  %v2295 = vrot.slane %v2281, %v2294
  %v2296 = vcombine.low %v2240, %v2256
  %v2297 = vcombine.high %v2240, %v2256
  %v2299 = vunpack.c.l.s4 1934713408
  %v2300 = vunpack.c.0.s8 %v2299
  %v2301 = vlaneseq
  %v2302 = vshrl.u32 %v2301, 7
  %v2303 = vsub.s32 %v2300, %v2302
  %v2304 = vrot.slane %v2296, %v2303
  %v2306 = vunpack.c.l.s4 1934713408
  %v2307 = vunpack.c.0.s8 %v2306
  %v2308 = vlaneseq
  %v2309 = vshrl.u32 %v2308, 7
  %v2310 = vsub.s32 %v2307, %v2309
  %v2311 = vrot.slane %v2297, %v2310
  %v2312 = vcombine.low %v2247, %v2263
  %v2313 = vcombine.high %v2247, %v2263
  %v2315 = vunpack.c.l.s4 1934713408
  %v2316 = vunpack.c.0.s8 %v2315
  %v2317 = vlaneseq
  %v2318 = vshrl.u32 %v2317, 7
  %v2319 = vsub.s32 %v2316, %v2318
  %v2320 = vrot.slane %v2312, %v2319
  %v2322 = vunpack.c.l.s4 1934713408
  %v2323 = vunpack.c.0.s8 %v2322
  %v2324 = vlaneseq
  %v2325 = vshrl.u32 %v2324, 7
  %v2326 = vsub.s32 %v2323, %v2325
  %v2327 = vrot.slane %v2313, %v2326
  %v2328 = vcombine.low %v2272, %v2304
  %v2329 = vcombine.high %v2272, %v2304
  %v2330 = vcombine.low %v2279, %v2311
  %v2331 = vcombine.high %v2279, %v2311
  %v2332 = vcombine.low %v2288, %v2320
  %v2333 = vcombine.high %v2288, %v2320
  %v2334 = vcombine.low %v2295, %v2327
  %v2335 = vcombine.high %v2295, %v2327
  %v2336 = vmax.f32 %v1920, 0.0
  %v2337 = vmax.f32 %v2056, 0.0
  %v2338 = vmax.f32 %v2192, 0.0
  %v2339 = vmax.f32 %v2328, 0.0
  %v2340 = vmax.f32 %v1921, 0.0
  %v2341 = vmax.f32 %v2057, 0.0
  %v2342 = vmax.f32 %v2193, 0.0
  %v2343 = vmax.f32 %v2329, 0.0
  %v2344 = vmax.f32 %v1922, 0.0
  %v2345 = vmax.f32 %v2058, 0.0
  %v2346 = vmax.f32 %v2194, 0.0
  %v2347 = vmax.f32 %v2330, 0.0
  %v2348 = vmax.f32 %v1923, 0.0
  %v2349 = vmax.f32 %v2059, 0.0
  %v2350 = vmax.f32 %v2195, 0.0
  %v2351 = vmax.f32 %v2331, 0.0
  %v2352 = vmax.f32 %v1924, 0.0
  %v2353 = vmax.f32 %v2060, 0.0
  %v2354 = vmax.f32 %v2196, 0.0
  %v2355 = vmax.f32 %v2332, 0.0
  %v2356 = vmax.f32 %v1925, 0.0
  %v2357 = vmax.f32 %v2061, 0.0
  %v2358 = vmax.f32 %v2197, 0.0
  %v2359 = vmax.f32 %v2333, 0.0
  %v2360 = vmax.f32 %v1926, 0.0
  %v2361 = vmax.f32 %v2062, 0.0
  %v2362 = vmax.f32 %v2198, 0.0
  %v2363 = vmax.f32 %v2334, 0.0
  %v2364 = vmax.f32 %v1927, 0.0
  %v2365 = vmax.f32 %v2063, 0.0
  %v2366 = vmax.f32 %v2199, 0.0
  %v2367 = vmax.f32 %v2335, 0.0
  %2368 = vst.msk [vmem:[#allocation2] sm:$0xff] %vm1260, %v2336
  %2369 = vst.msk [vmem:[#allocation2 + $0x8] sm:$0xff] %vm1260, %v2337
  %2370 = vst.msk [vmem:[#allocation2 + $0x10] sm:$0xff] %vm1260, %v2338
  %2371 = vst.msk [vmem:[#allocation2 + $0x18] sm:$0xff] %vm1260, %v2339
  %2372 = vst.msk [vmem:[#allocation2 + $0x20] sm:$0xff] %vm1260, %v2340
  %2373 = vst.msk [vmem:[#allocation2 + $0x28] sm:$0xff] %vm1260, %v2341
  %2374 = vst.msk [vmem:[#allocation2 + $0x30] sm:$0xff] %vm1260, %v2342
  %2375 = vst.msk [vmem:[#allocation2 + $0x38] sm:$0xff] %vm1260, %v2343
  %2376 = vst.msk [vmem:[#allocation2 + $0x40] sm:$0xff] %vm1260, %v2344
  %2377 = vst.msk [vmem:[#allocation2 + $0x48] sm:$0xff] %vm1260, %v2345
  %2378 = vst.msk [vmem:[#allocation2 + $0x50] sm:$0xff] %vm1260, %v2346
  %2379 = vst.msk [vmem:[#allocation2 + $0x58] sm:$0xff] %vm1260, %v2347
  %2380 = vst.msk [vmem:[#allocation2 + $0x60] sm:$0xff] %vm1260, %v2348
  %2381 = vst.msk [vmem:[#allocation2 + $0x68] sm:$0xff] %vm1260, %v2349
  %2382 = vst.msk [vmem:[#allocation2 + $0x70] sm:$0xff] %vm1260, %v2350
  %2383 = vst.msk [vmem:[#allocation2 + $0x78] sm:$0xff] %vm1260, %v2351
  %2384 = vst.msk [vmem:[#allocation2 + $0x80] sm:$0xff] %vm1260, %v2352
  %2385 = vst.msk [vmem:[#allocation2 + $0x88] sm:$0xff] %vm1260, %v2353
  %2386 = vst.msk [vmem:[#allocation2 + $0x90] sm:$0xff] %vm1260, %v2354
  %2387 = vst.msk [vmem:[#allocation2 + $0x98] sm:$0xff] %vm1260, %v2355
  %2388 = vst.msk [vmem:[#allocation2 + $0xa0] sm:$0xff] %vm1260, %v2356
  %2389 = vst.msk [vmem:[#allocation2 + $0xa8] sm:$0xff] %vm1260, %v2357
  %2390 = vst.msk [vmem:[#allocation2 + $0xb0] sm:$0xff] %vm1260, %v2358
  %2391 = vst.msk [vmem:[#allocation2 + $0xb8] sm:$0xff] %vm1260, %v2359
  %2392 = vst.msk [vmem:[#allocation2 + $0xc0] sm:$0xff] %vm1260, %v2360
  %2393 = vst.msk [vmem:[#allocation2 + $0xc8] sm:$0xff] %vm1260, %v2361
  %2394 = vst.msk [vmem:[#allocation2 + $0xd0] sm:$0xff] %vm1260, %v2362
  %2395 = vst.msk [vmem:[#allocation2 + $0xd8] sm:$0xff] %vm1260, %v2363
  %2396 = vst.msk [vmem:[#allocation2 + $0xe0] sm:$0xff] %vm1260, %v2364
  %2397 = vst.msk [vmem:[#allocation2 + $0xe8] sm:$0xff] %vm1260, %v2365
  %2398 = vst.msk [vmem:[#allocation2 + $0xf0] sm:$0xff] %vm1260, %v2366
  %2399 = vst.msk [vmem:[#allocation2 + $0xf8] sm:$0xff] %vm1260, %v2367
  %v2400 = vld [vmem:[#allocation2] ss:$2 sm:$0xff]
  %s2401 = scalar_lea.vmem [#allocation2], 16
  %v2402 = vld [vmem:[%s2401] ss:$2 sm:$0x7f]
  %s2403 = scalar_lea.vmem [#allocation2], 32
  %v2404 = vld [vmem:[%s2403] ss:$2 sm:$0xff]
  %s2405 = scalar_lea.vmem [#allocation2], 48
  %v2406 = vld [vmem:[%s2405] ss:$2 sm:$0x7f]
  %s2407 = scalar_lea.vmem [#allocation2], 64
  %v2408 = vld [vmem:[%s2407] ss:$2 sm:$0xff]
  %s2409 = scalar_lea.vmem [#allocation2], 80
  %v2410 = vld [vmem:[%s2409] ss:$2 sm:$0x7f]
  %s2411 = scalar_lea.vmem [#allocation2], 96
  %v2412 = vld [vmem:[%s2411] ss:$2 sm:$0xff]
  %s2413 = scalar_lea.vmem [#allocation2], 112
  %v2414 = vld [vmem:[%s2413] ss:$2 sm:$0x7f]
  %s2415 = scalar_lea.vmem [#allocation2], 128
  %v2416 = vld [vmem:[%s2415] ss:$2 sm:$0xff]
  %s2417 = scalar_lea.vmem [#allocation2], 144
  %v2418 = vld [vmem:[%s2417] ss:$2 sm:$0x7f]
  %s2419 = scalar_lea.vmem [#allocation2], 160
  %v2420 = vld [vmem:[%s2419] ss:$2 sm:$0xff]
  %s2421 = scalar_lea.vmem [#allocation2], 176
  %v2422 = vld [vmem:[%s2421] ss:$2 sm:$0x7f]
  %s2423 = scalar_lea.vmem [#allocation2], 192
  %v2424 = vld [vmem:[%s2423] ss:$2 sm:$0xff]
  %s2425 = scalar_lea.vmem [#allocation2], 208
  %v2426 = vld [vmem:[%s2425] ss:$2 sm:$0x7f]
  %s2427 = scalar_lea.vmem [#allocation2], 224
  %v2428 = vld [vmem:[%s2427] ss:$2 sm:$0xff]
  %s2429 = scalar_lea.vmem [#allocation2], 240
  %v2430 = vld [vmem:[%s2429] ss:$2 sm:$0x7f]
  %s2431 = scalar_lea.vmem [#allocation2], 1
  %v2432 = vld [vmem:[%s2431] ss:$2 sm:$0xff]
  %s2433 = scalar_lea.vmem [#allocation2], 17
  %v2434 = vld [vmem:[%s2433] ss:$2 sm:$0x7f]
  %s2435 = scalar_lea.vmem [#allocation2], 33
  %v2436 = vld [vmem:[%s2435] ss:$2 sm:$0xff]
  %s2437 = scalar_lea.vmem [#allocation2], 49
  %v2438 = vld [vmem:[%s2437] ss:$2 sm:$0x7f]
  %s2439 = scalar_lea.vmem [#allocation2], 65
  %v2440 = vld [vmem:[%s2439] ss:$2 sm:$0xff]
  %s2441 = scalar_lea.vmem [#allocation2], 81
  %v2442 = vld [vmem:[%s2441] ss:$2 sm:$0x7f]
  %s2443 = scalar_lea.vmem [#allocation2], 97
  %v2444 = vld [vmem:[%s2443] ss:$2 sm:$0xff]
  %s2445 = scalar_lea.vmem [#allocation2], 113
  %v2446 = vld [vmem:[%s2445] ss:$2 sm:$0x7f]
  %s2447 = scalar_lea.vmem [#allocation2], 129
  %v2448 = vld [vmem:[%s2447] ss:$2 sm:$0xff]
  %s2449 = scalar_lea.vmem [#allocation2], 145
  %v2450 = vld [vmem:[%s2449] ss:$2 sm:$0x7f]
  %s2451 = scalar_lea.vmem [#allocation2], 161
  %v2452 = vld [vmem:[%s2451] ss:$2 sm:$0xff]
  %s2453 = scalar_lea.vmem [#allocation2], 177
  %v2454 = vld [vmem:[%s2453] ss:$2 sm:$0x7f]
  %s2455 = scalar_lea.vmem [#allocation2], 193
  %v2456 = vld [vmem:[%s2455] ss:$2 sm:$0xff]
  %s2457 = scalar_lea.vmem [#allocation2], 209
  %v2458 = vld [vmem:[%s2457] ss:$2 sm:$0x7f]
  %s2459 = scalar_lea.vmem [#allocation2], 225
  %v2460 = vld [vmem:[%s2459] ss:$2 sm:$0xff]
  %s2461 = scalar_lea.vmem [#allocation2], 241
  %v2462 = vld [vmem:[%s2461] ss:$2 sm:$0x7f]
  %s2463 = scalar_lea.vmem [#allocation2], 2
  %v2464 = vld [vmem:[%s2463] ss:$2 sm:$0xff]
  %s2465 = scalar_lea.vmem [#allocation2], 18
  %v2466 = vld [vmem:[%s2465] ss:$2 sm:$0x7f]
  %s2467 = scalar_lea.vmem [#allocation2], 34
  %v2468 = vld [vmem:[%s2467] ss:$2 sm:$0xff]
  %s2469 = scalar_lea.vmem [#allocation2], 50
  %v2470 = vld [vmem:[%s2469] ss:$2 sm:$0x7f]
  %s2471 = scalar_lea.vmem [#allocation2], 66
  %v2472 = vld [vmem:[%s2471] ss:$2 sm:$0xff]
  %s2473 = scalar_lea.vmem [#allocation2], 82
  %v2474 = vld [vmem:[%s2473] ss:$2 sm:$0x7f]
  %s2475 = scalar_lea.vmem [#allocation2], 98
  %v2476 = vld [vmem:[%s2475] ss:$2 sm:$0xff]
  %s2477 = scalar_lea.vmem [#allocation2], 114
  %v2478 = vld [vmem:[%s2477] ss:$2 sm:$0x7f]
  %s2479 = scalar_lea.vmem [#allocation2], 130
  %v2480 = vld [vmem:[%s2479] ss:$2 sm:$0xff]
  %s2481 = scalar_lea.vmem [#allocation2], 146
  %v2482 = vld [vmem:[%s2481] ss:$2 sm:$0x7f]
  %s2483 = scalar_lea.vmem [#allocation2], 162
  %v2484 = vld [vmem:[%s2483] ss:$2 sm:$0xff]
  %s2485 = scalar_lea.vmem [#allocation2], 178
  %v2486 = vld [vmem:[%s2485] ss:$2 sm:$0x7f]
  %s2487 = scalar_lea.vmem [#allocation2], 194
  %v2488 = vld [vmem:[%s2487] ss:$2 sm:$0xff]
  %s2489 = scalar_lea.vmem [#allocation2], 210
  %v2490 = vld [vmem:[%s2489] ss:$2 sm:$0x7f]
  %s2491 = scalar_lea.vmem [#allocation2], 226
  %v2492 = vld [vmem:[%s2491] ss:$2 sm:$0xff]
  %s2493 = scalar_lea.vmem [#allocation2], 242
  %v2494 = vld [vmem:[%s2493] ss:$2 sm:$0x7f]
  %v2495 = vmax.f32 %v2400, %v2432
  %v2496 = vmax.f32 %v2402, %v2434
  %v2497 = vmax.f32 %v2404, %v2436
  %v2498 = vmax.f32 %v2406, %v2438
  %v2499 = vmax.f32 %v2408, %v2440
  %v2500 = vmax.f32 %v2410, %v2442
  %v2501 = vmax.f32 %v2412, %v2444
  %v2502 = vmax.f32 %v2414, %v2446
  %v2503 = vmax.f32 %v2416, %v2448
  %v2504 = vmax.f32 %v2418, %v2450
  %v2505 = vmax.f32 %v2420, %v2452
  %v2506 = vmax.f32 %v2422, %v2454
  %v2507 = vmax.f32 %v2424, %v2456
  %v2508 = vmax.f32 %v2426, %v2458
  %v2509 = vmax.f32 %v2428, %v2460
  %v2510 = vmax.f32 %v2430, %v2462
  %v2511 = vmax.f32 %v2495, %v2464
  %v2512 = vmax.f32 %v2496, %v2466
  %v2513 = vmax.f32 %v2497, %v2468
  %v2514 = vmax.f32 %v2498, %v2470
  %v2515 = vmax.f32 %v2499, %v2472
  %v2516 = vmax.f32 %v2500, %v2474
  %v2517 = vmax.f32 %v2501, %v2476
  %v2518 = vmax.f32 %v2502, %v2478
  %v2519 = vmax.f32 %v2503, %v2480
  %v2520 = vmax.f32 %v2504, %v2482
  %v2521 = vmax.f32 %v2505, %v2484
  %v2522 = vmax.f32 %v2506, %v2486
  %v2523 = vmax.f32 %v2507, %v2488
  %v2524 = vmax.f32 %v2508, %v2490
  %v2525 = vmax.f32 %v2509, %v2492
  %v2526 = vmax.f32 %v2510, %v2494
  %vm2527 = vcmask 8192
  %2528 = vst.msk [vmem:[#allocation3] sm:$0x1] %vm2527, 0.0
  %2529 = vst.msk [vmem:[#allocation3 + $0x18] sm:$0x1] %vm2527, 0.0
  %2530 = vst.msk [vmem:[#allocation3 + $0x30] sm:$0x1] %vm2527, 0.0
  %2531 = vst.msk [vmem:[#allocation3 + $0x48] sm:$0x1] %vm2527, 0.0
  %2532 = vst.msk [vmem:[#allocation3 + $0x60] sm:$0x1] %vm2527, 0.0
  %2533 = vst.msk [vmem:[#allocation3 + $0x78] sm:$0x1] %vm2527, 0.0
  %2534 = vst.msk [vmem:[#allocation3 + $0x90] sm:$0x1] %vm2527, 0.0
  %2535 = vst.msk [vmem:[#allocation3 + $0xa8] sm:$0x1] %vm2527, 0.0
  %2536 = vst.msk [vmem:[#allocation3 + $0x10] sm:$0x1] %vm2527, 0.0
  %2537 = vst.msk [vmem:[#allocation3 + $0x28] sm:$0x1] %vm2527, 0.0
  %2538 = vst.msk [vmem:[#allocation3 + $0x40] sm:$0x1] %vm2527, 0.0
  %2539 = vst.msk [vmem:[#allocation3 + $0x58] sm:$0x1] %vm2527, 0.0
  %2540 = vst.msk [vmem:[#allocation3 + $0x70] sm:$0x1] %vm2527, 0.0
  %2541 = vst.msk [vmem:[#allocation3 + $0x88] sm:$0x1] %vm2527, 0.0
  %2542 = vst.msk [vmem:[#allocation3 + $0xa0] sm:$0x1] %vm2527, 0.0
  %2543 = vst.msk [vmem:[#allocation3 + $0xb8] sm:$0x1] %vm2527, 0.0
  %2544 = vst.msk [vmem:[#allocation3 + $0x1] sm:$0xff] %vm1260, %v2511
  %vm2545 = vcmask 14336
  %2546 = vst.msk [vmem:[#allocation3 + $0x9] sm:$0x7f] %vm2545, %v2512
  %2547 = vst.msk [vmem:[#allocation3 + $0x19] sm:$0xff] %vm1260, %v2513
  %2548 = vst.msk [vmem:[#allocation3 + $0x21] sm:$0x7f] %vm2545, %v2514
  %2549 = vst.msk [vmem:[#allocation3 + $0x31] sm:$0xff] %vm1260, %v2515
  %2550 = vst.msk [vmem:[#allocation3 + $0x39] sm:$0x7f] %vm2545, %v2516
  %2551 = vst.msk [vmem:[#allocation3 + $0x49] sm:$0xff] %vm1260, %v2517
  %2552 = vst.msk [vmem:[#allocation3 + $0x51] sm:$0x7f] %vm2545, %v2518
  %2553 = vst.msk [vmem:[#allocation3 + $0x61] sm:$0xff] %vm1260, %v2519
  %2554 = vst.msk [vmem:[#allocation3 + $0x69] sm:$0x7f] %vm2545, %v2520
  %2555 = vst.msk [vmem:[#allocation3 + $0x79] sm:$0xff] %vm1260, %v2521
  %2556 = vst.msk [vmem:[#allocation3 + $0x81] sm:$0x7f] %vm2545, %v2522
  %2557 = vst.msk [vmem:[#allocation3 + $0x91] sm:$0xff] %vm1260, %v2523
  %2558 = vst.msk [vmem:[#allocation3 + $0x99] sm:$0x7f] %vm2545, %v2524
  %2559 = vst.msk [vmem:[#allocation3 + $0xa9] sm:$0xff] %vm1260, %v2525
  %2560 = vst.msk [vmem:[#allocation3 + $0xb1] sm:$0x7f] %vm2545, %v2526
  %v2561 = vld [vmem:[#allocation3] sm:$0xff]
  %v2562 = vld [vmem:[#allocation3 + $0x8] sm:$0x7f]
  %v2563 = vld [vmem:[#allocation3 + $0x18] sm:$0xff]
  %v2564 = vld [vmem:[#allocation3 + $0x20] sm:$0x7f]
  %v2565 = vld [vmem:[#allocation3 + $0x30] sm:$0xff]
  %v2566 = vld [vmem:[#allocation3 + $0x38] sm:$0x7f]
  %v2567 = vld [vmem:[#allocation3 + $0x48] sm:$0xff]
  %v2568 = vld [vmem:[#allocation3 + $0x50] sm:$0x7f]
  %v2569 = vld [vmem:[#allocation3 + $0x60] sm:$0xff]
  %v2570 = vld [vmem:[#allocation3 + $0x68] sm:$0x7f]
  %v2571 = vld [vmem:[#allocation3 + $0x78] sm:$0xff]
  %v2572 = vld [vmem:[#allocation3 + $0x80] sm:$0x7f]
  %v2573 = vld [vmem:[#allocation3 + $0x90] sm:$0xff]
  %v2574 = vld [vmem:[#allocation3 + $0x98] sm:$0x7f]
  %v2575 = vld [vmem:[#allocation3 + $0xa8] sm:$0xff]
  %v2576 = vld [vmem:[#allocation3 + $0xb0] sm:$0x7f]
  %v2577 = vld [vmem:[#allocation3 + $0x1] sm:$0xff]
  %v2578 = vld [vmem:[#allocation3 + $0x9] sm:$0x7f]
  %v2579 = vld [vmem:[#allocation3 + $0x19] sm:$0xff]
  %v2580 = vld [vmem:[#allocation3 + $0x21] sm:$0x7f]
  %v2581 = vld [vmem:[#allocation3 + $0x31] sm:$0xff]
  %v2582 = vld [vmem:[#allocation3 + $0x39] sm:$0x7f]
  %v2583 = vld [vmem:[#allocation3 + $0x49] sm:$0xff]
  %v2584 = vld [vmem:[#allocation3 + $0x51] sm:$0x7f]
  %v2585 = vld [vmem:[#allocation3 + $0x61] sm:$0xff]
  %v2586 = vld [vmem:[#allocation3 + $0x69] sm:$0x7f]
  %v2587 = vld [vmem:[#allocation3 + $0x79] sm:$0xff]
  %v2588 = vld [vmem:[#allocation3 + $0x81] sm:$0x7f]
  %v2589 = vld [vmem:[#allocation3 + $0x91] sm:$0xff]
  %v2590 = vld [vmem:[#allocation3 + $0x99] sm:$0x7f]
  %v2591 = vld [vmem:[#allocation3 + $0xa9] sm:$0xff]
  %v2592 = vld [vmem:[#allocation3 + $0xb1] sm:$0x7f]
  %v2593 = vld [vmem:[#allocation3 + $0x2] sm:$0xff]
  %v2594 = vld [vmem:[#allocation3 + $0xa] sm:$0x7f]
  %v2595 = vld [vmem:[#allocation3 + $0x1a] sm:$0xff]
  %v2596 = vld [vmem:[#allocation3 + $0x22] sm:$0x7f]
  %v2597 = vld [vmem:[#allocation3 + $0x32] sm:$0xff]
  %v2598 = vld [vmem:[#allocation3 + $0x3a] sm:$0x7f]
  %v2599 = vld [vmem:[#allocation3 + $0x4a] sm:$0xff]
  %v2600 = vld [vmem:[#allocation3 + $0x52] sm:$0x7f]
  %v2601 = vld [vmem:[#allocation3 + $0x62] sm:$0xff]
  %v2602 = vld [vmem:[#allocation3 + $0x6a] sm:$0x7f]
  %v2603 = vld [vmem:[#allocation3 + $0x7a] sm:$0xff]
  %v2604 = vld [vmem:[#allocation3 + $0x82] sm:$0x7f]
  %v2605 = vld [vmem:[#allocation3 + $0x92] sm:$0xff]
  %v2606 = vld [vmem:[#allocation3 + $0x9a] sm:$0x7f]
  %v2607 = vld [vmem:[#allocation3 + $0xaa] sm:$0xff]
  %v2608 = vld [vmem:[#allocation3 + $0xb2] sm:$0x7f]
  %v2609 = vld [vmem:[%s3] sm:$0xff]
  %v2610 = vld [vmem:[%s3 + $0x8] sm:$0xff]
  %v2611 = vld [vmem:[%s4] sm:$0xff]
  %v2612 = vld [vmem:[%s4 + $0x8] sm:$0xff]
  %v2615 = vcombine.high %v2611, %v2611
  %v2617 = vunpack.c.l.s4 1966171168
  %v2618 = vunpack.c.0.s8 %v2617
  %v2619 = vlaneseq
  %v2620 = vshrl.u32 %v2619, 7
  %v2621 = vsub.s32 %v2618, %v2620
  %v2622 = vrot.slane %v2611, %v2621
  %v2624 = vunpack.c.l.s4 1966171168
  %v2625 = vunpack.c.0.s8 %v2624
  %v2626 = vlaneseq
  %v2627 = vshrl.u32 %v2626, 7
  %v2628 = vsub.s32 %v2625, %v2627
  %v2629 = vrot.slane %v2615, %v2628
  %v2630 = vcombine.high %v2622, %v2622
  %v2631 = vcombine.high %v2629, %v2629
  %v2633 = vunpack.c.l.s4 1966171168
  %v2634 = vunpack.c.0.s8 %v2633
  %v2635 = vlaneseq
  %v2636 = vshrl.u32 %v2635, 7
  %v2637 = vsub.s32 %v2634, %v2636
  %v2638 = vrot.slane %v2622, %v2637
  %v2640 = vunpack.c.l.s4 1966171168
  %v2641 = vunpack.c.0.s8 %v2640
  %v2642 = vlaneseq
  %v2643 = vshrl.u32 %v2642, 7
  %v2644 = vsub.s32 %v2641, %v2643
  %v2645 = vrot.slane %v2629, %v2644
  %v2647 = vunpack.c.l.s4 1966171168
  %v2648 = vunpack.c.0.s8 %v2647
  %v2649 = vlaneseq
  %v2650 = vshrl.u32 %v2649, 7
  %v2651 = vsub.s32 %v2648, %v2650
  %v2652 = vrot.slane %v2630, %v2651
  %v2654 = vunpack.c.l.s4 1966171168
  %v2655 = vunpack.c.0.s8 %v2654
  %v2656 = vlaneseq
  %v2657 = vshrl.u32 %v2656, 7
  %v2658 = vsub.s32 %v2655, %v2657
  %v2659 = vrot.slane %v2631, %v2658
  %v2660 = vcombine.high %v2638, %v2638
  %v2661 = vcombine.high %v2645, %v2645
  %v2662 = vcombine.high %v2652, %v2652
  %v2663 = vcombine.high %v2659, %v2659
  %v2664 = vcombine.high %v2612, %v2612
  %v2666 = vunpack.c.l.s4 1966171168
  %v2667 = vunpack.c.0.s8 %v2666
  %v2668 = vlaneseq
  %v2669 = vshrl.u32 %v2668, 7
  %v2670 = vsub.s32 %v2667, %v2669
  %v2671 = vrot.slane %v2612, %v2670
  %v2673 = vunpack.c.l.s4 1966171168
  %v2674 = vunpack.c.0.s8 %v2673
  %v2675 = vlaneseq
  %v2676 = vshrl.u32 %v2675, 7
  %v2677 = vsub.s32 %v2674, %v2676
  %v2678 = vrot.slane %v2664, %v2677
  %v2679 = vcombine.high %v2671, %v2671
  %v2680 = vcombine.high %v2678, %v2678
  %v2682 = vunpack.c.l.s4 1966171168
  %v2683 = vunpack.c.0.s8 %v2682
  %v2684 = vlaneseq
  %v2685 = vshrl.u32 %v2684, 7
  %v2686 = vsub.s32 %v2683, %v2685
  %v2687 = vrot.slane %v2671, %v2686
  %v2689 = vunpack.c.l.s4 1966171168
  %v2690 = vunpack.c.0.s8 %v2689
  %v2691 = vlaneseq
  %v2692 = vshrl.u32 %v2691, 7
  %v2693 = vsub.s32 %v2690, %v2692
  %v2694 = vrot.slane %v2678, %v2693
  %v2696 = vunpack.c.l.s4 1966171168
  %v2697 = vunpack.c.0.s8 %v2696
  %v2698 = vlaneseq
  %v2699 = vshrl.u32 %v2698, 7
  %v2700 = vsub.s32 %v2697, %v2699
  %v2701 = vrot.slane %v2679, %v2700
  %v2703 = vunpack.c.l.s4 1966171168
  %v2704 = vunpack.c.0.s8 %v2703
  %v2705 = vlaneseq
  %v2706 = vshrl.u32 %v2705, 7
  %v2707 = vsub.s32 %v2704, %v2706
  %v2708 = vrot.slane %v2680, %v2707
  %v2709 = vcombine.high %v2687, %v2687
  %v2710 = vcombine.high %v2694, %v2694
  %v2711 = vcombine.high %v2701, %v2701
  %v2712 = vcombine.high %v2708, %v2708
  %v2713 = vlaneseq
  %v2714 = vshrl.u32 %v2713, 7
  %v2715 = vsub.s32 0, %v2714
  %v2716 = vrot.slane %v2638, %v2715
  %v2717 = vlaneseq
  %v2718 = vshrl.u32 %v2717, 7
  %v2719 = vsub.s32 0, %v2718
  %v2720 = vrot.slane %v2652, %v2719
  %v2721 = vlaneseq
  %v2722 = vshrl.u32 %v2721, 7
  %v2723 = vsub.s32 0, %v2722
  %v2724 = vrot.slane %v2660, %v2723
  %v2725 = vlaneseq
  %v2726 = vshrl.u32 %v2725, 7
  %v2727 = vsub.s32 0, %v2726
  %v2728 = vrot.slane %v2662, %v2727
  %v2729 = vlaneseq
  %v2730 = vshrl.u32 %v2729, 7
  %v2731 = vsub.s32 0, %v2730
  %v2732 = vrot.slane %v2645, %v2731
  %v2733 = vlaneseq
  %v2734 = vshrl.u32 %v2733, 7
  %v2735 = vsub.s32 0, %v2734
  %v2736 = vrot.slane %v2659, %v2735
  %v2737 = vlaneseq
  %v2738 = vshrl.u32 %v2737, 7
  %v2739 = vsub.s32 0, %v2738
  %v2740 = vrot.slane %v2661, %v2739
  %v2741 = vlaneseq
  %v2742 = vshrl.u32 %v2741, 7
  %v2743 = vsub.s32 0, %v2742
  %v2744 = vrot.slane %v2663, %v2743
  %v2745 = vlaneseq
  %v2746 = vshrl.u32 %v2745, 7
  %v2747 = vsub.s32 0, %v2746
  %v2748 = vrot.slane %v2687, %v2747
  %v2749 = vlaneseq
  %v2750 = vshrl.u32 %v2749, 7
  %v2751 = vsub.s32 0, %v2750
  %v2752 = vrot.slane %v2701, %v2751
  %v2753 = vlaneseq
  %v2754 = vshrl.u32 %v2753, 7
  %v2755 = vsub.s32 0, %v2754
  %v2756 = vrot.slane %v2709, %v2755
  %v2757 = vlaneseq
  %v2758 = vshrl.u32 %v2757, 7
  %v2759 = vsub.s32 0, %v2758
  %v2760 = vrot.slane %v2711, %v2759
  %v2761 = vlaneseq
  %v2762 = vshrl.u32 %v2761, 7
  %v2763 = vsub.s32 0, %v2762
  %v2764 = vrot.slane %v2694, %v2763
  %v2765 = vlaneseq
  %v2766 = vshrl.u32 %v2765, 7
  %v2767 = vsub.s32 0, %v2766
  %v2768 = vrot.slane %v2708, %v2767
  %v2769 = vlaneseq
  %v2770 = vshrl.u32 %v2769, 7
  %v2771 = vsub.s32 0, %v2770
  %v2772 = vrot.slane %v2710, %v2771
  %v2773 = vlaneseq
  %v2774 = vshrl.u32 %v2773, 7
  %v2775 = vsub.s32 0, %v2774
  %v2776 = vrot.slane %v2712, %v2775
  %2777 = vset.pattern.permute.xlu0 0
  %2778 = vperm.xlu0 %2777, %v2716
  %v2779 = vpop.permute.xlu0 %2778
  %2781 = vset.pattern.permute.xlu0 0
  %2782 = vperm.xlu0 %2781, %v2720
  %v2783 = vpop.permute.xlu0 %2782
  %2785 = vset.pattern.permute.xlu0 0
  %2786 = vperm.xlu0 %2785, %v2724
  %v2787 = vpop.permute.xlu0 %2786
  %2789 = vset.pattern.permute.xlu0 0
  %2790 = vperm.xlu0 %2789, %v2728
  %v2791 = vpop.permute.xlu0 %2790
  %2793 = vset.pattern.permute.xlu0 0
  %2794 = vperm.xlu0 %2793, %v2732
  %v2795 = vpop.permute.xlu0 %2794
  %2797 = vset.pattern.permute.xlu0 0
  %2798 = vperm.xlu0 %2797, %v2736
  %v2799 = vpop.permute.xlu0 %2798
  %2801 = vset.pattern.permute.xlu0 0
  %2802 = vperm.xlu0 %2801, %v2740
  %v2803 = vpop.permute.xlu0 %2802
  %2805 = vset.pattern.permute.xlu0 0
  %2806 = vperm.xlu0 %2805, %v2744
  %v2807 = vpop.permute.xlu0 %2806
  %2809 = vset.pattern.permute.xlu0 0
  %2810 = vperm.xlu0 %2809, %v2748
  %v2811 = vpop.permute.xlu0 %2810
  %2813 = vset.pattern.permute.xlu0 0
  %2814 = vperm.xlu0 %2813, %v2752
  %v2815 = vpop.permute.xlu0 %2814
  %2817 = vset.pattern.permute.xlu0 0
  %2818 = vperm.xlu0 %2817, %v2756
  %v2819 = vpop.permute.xlu0 %2818
  %2821 = vset.pattern.permute.xlu0 0
  %2822 = vperm.xlu0 %2821, %v2760
  %v2823 = vpop.permute.xlu0 %2822
  %2825 = vset.pattern.permute.xlu0 0
  %2826 = vperm.xlu0 %2825, %v2764
  %v2827 = vpop.permute.xlu0 %2826
  %2829 = vset.pattern.permute.xlu0 0
  %2830 = vperm.xlu0 %2829, %v2768
  %v2831 = vpop.permute.xlu0 %2830
  %2833 = vset.pattern.permute.xlu0 0
  %2834 = vperm.xlu0 %2833, %v2772
  %v2835 = vpop.permute.xlu0 %2834
  %2837 = vset.pattern.permute.xlu0 0
  %2838 = vperm.xlu0 %2837, %v2776
  %v2839 = vpop.permute.xlu0 %2838
  %v2841 = vcombine.low %v2561, %v2565
  %v2842 = vcombine.high %v2561, %v2565
  %v2844 = vunpack.c.l.s4 1983009808
  %v2845 = vunpack.c.0.s8 %v2844
  %v2846 = vlaneseq
  %v2847 = vshrl.u32 %v2846, 7
  %v2848 = vsub.s32 %v2845, %v2847
  %v2849 = vrot.slane %v2841, %v2848
  %v2851 = vunpack.c.l.s4 1983009808
  %v2852 = vunpack.c.0.s8 %v2851
  %v2853 = vlaneseq
  %v2854 = vshrl.u32 %v2853, 7
  %v2855 = vsub.s32 %v2852, %v2854
  %v2856 = vrot.slane %v2842, %v2855
  %v2857 = vcombine.low %v2563, %v2567
  %v2858 = vcombine.high %v2563, %v2567
  %v2860 = vunpack.c.l.s4 1983009808
  %v2861 = vunpack.c.0.s8 %v2860
  %v2862 = vlaneseq
  %v2863 = vshrl.u32 %v2862, 7
  %v2864 = vsub.s32 %v2861, %v2863
  %v2865 = vrot.slane %v2857, %v2864
  %v2867 = vunpack.c.l.s4 1983009808
  %v2868 = vunpack.c.0.s8 %v2867
  %v2869 = vlaneseq
  %v2870 = vshrl.u32 %v2869, 7
  %v2871 = vsub.s32 %v2868, %v2870
  %v2872 = vrot.slane %v2858, %v2871
  %v2873 = vcombine.low %v2569, %v2573
  %v2874 = vcombine.high %v2569, %v2573
  %v2876 = vunpack.c.l.s4 1983009808
  %v2877 = vunpack.c.0.s8 %v2876
  %v2878 = vlaneseq
  %v2879 = vshrl.u32 %v2878, 7
  %v2880 = vsub.s32 %v2877, %v2879
  %v2881 = vrot.slane %v2873, %v2880
  %v2883 = vunpack.c.l.s4 1983009808
  %v2884 = vunpack.c.0.s8 %v2883
  %v2885 = vlaneseq
  %v2886 = vshrl.u32 %v2885, 7
  %v2887 = vsub.s32 %v2884, %v2886
  %v2888 = vrot.slane %v2874, %v2887
  %v2889 = vcombine.low %v2571, %v2575
  %v2890 = vcombine.high %v2571, %v2575
  %v2892 = vunpack.c.l.s4 1983009808
  %v2893 = vunpack.c.0.s8 %v2892
  %v2894 = vlaneseq
  %v2895 = vshrl.u32 %v2894, 7
  %v2896 = vsub.s32 %v2893, %v2895
  %v2897 = vrot.slane %v2889, %v2896
  %v2899 = vunpack.c.l.s4 1983009808
  %v2900 = vunpack.c.0.s8 %v2899
  %v2901 = vlaneseq
  %v2902 = vshrl.u32 %v2901, 7
  %v2903 = vsub.s32 %v2900, %v2902
  %v2904 = vrot.slane %v2890, %v2903
  %v2905 = vcombine.low %v2849, %v2865
  %v2906 = vcombine.high %v2849, %v2865
  %v2908 = vunpack.c.l.s4 1934713408
  %v2909 = vunpack.c.0.s8 %v2908
  %v2910 = vlaneseq
  %v2911 = vshrl.u32 %v2910, 7
  %v2912 = vsub.s32 %v2909, %v2911
  %v2913 = vrot.slane %v2905, %v2912
  %v2915 = vunpack.c.l.s4 1934713408
  %v2916 = vunpack.c.0.s8 %v2915
  %v2917 = vlaneseq
  %v2918 = vshrl.u32 %v2917, 7
  %v2919 = vsub.s32 %v2916, %v2918
  %v2920 = vrot.slane %v2906, %v2919
  %v2921 = vcombine.low %v2856, %v2872
  %v2922 = vcombine.high %v2856, %v2872
  %v2924 = vunpack.c.l.s4 1934713408
  %v2925 = vunpack.c.0.s8 %v2924
  %v2926 = vlaneseq
  %v2927 = vshrl.u32 %v2926, 7
  %v2928 = vsub.s32 %v2925, %v2927
  %v2929 = vrot.slane %v2921, %v2928
  %v2931 = vunpack.c.l.s4 1934713408
  %v2932 = vunpack.c.0.s8 %v2931
  %v2933 = vlaneseq
  %v2934 = vshrl.u32 %v2933, 7
  %v2935 = vsub.s32 %v2932, %v2934
  %v2936 = vrot.slane %v2922, %v2935
  %v2937 = vcombine.low %v2881, %v2897
  %v2938 = vcombine.high %v2881, %v2897
  %v2940 = vunpack.c.l.s4 1934713408
  %v2941 = vunpack.c.0.s8 %v2940
  %v2942 = vlaneseq
  %v2943 = vshrl.u32 %v2942, 7
  %v2944 = vsub.s32 %v2941, %v2943
  %v2945 = vrot.slane %v2937, %v2944
  %v2947 = vunpack.c.l.s4 1934713408
  %v2948 = vunpack.c.0.s8 %v2947
  %v2949 = vlaneseq
  %v2950 = vshrl.u32 %v2949, 7
  %v2951 = vsub.s32 %v2948, %v2950
  %v2952 = vrot.slane %v2938, %v2951
  %v2953 = vcombine.low %v2888, %v2904
  %v2954 = vcombine.high %v2888, %v2904
  %v2956 = vunpack.c.l.s4 1934713408
  %v2957 = vunpack.c.0.s8 %v2956
  %v2958 = vlaneseq
  %v2959 = vshrl.u32 %v2958, 7
  %v2960 = vsub.s32 %v2957, %v2959
  %v2961 = vrot.slane %v2953, %v2960
  %v2963 = vunpack.c.l.s4 1934713408
  %v2964 = vunpack.c.0.s8 %v2963
  %v2965 = vlaneseq
  %v2966 = vshrl.u32 %v2965, 7
  %v2967 = vsub.s32 %v2964, %v2966
  %v2968 = vrot.slane %v2954, %v2967
  %v2969 = vcombine.low %v2913, %v2945
  %v2970 = vcombine.high %v2913, %v2945
  %v2971 = vcombine.low %v2920, %v2952
  %v2972 = vcombine.high %v2920, %v2952
  %v2973 = vcombine.low %v2929, %v2961
  %v2974 = vcombine.high %v2929, %v2961
  %v2975 = vcombine.low %v2936, %v2968
  %v2976 = vcombine.high %v2936, %v2968
  %v2977 = vcombine.low %v2577, %v2581
  %v2978 = vcombine.high %v2577, %v2581
  %v2980 = vunpack.c.l.s4 1983009808
  %v2981 = vunpack.c.0.s8 %v2980
  %v2982 = vlaneseq
  %v2983 = vshrl.u32 %v2982, 7
  %v2984 = vsub.s32 %v2981, %v2983
  %v2985 = vrot.slane %v2977, %v2984
  %v2987 = vunpack.c.l.s4 1983009808
  %v2988 = vunpack.c.0.s8 %v2987
  %v2989 = vlaneseq
  %v2990 = vshrl.u32 %v2989, 7
  %v2991 = vsub.s32 %v2988, %v2990
  %v2992 = vrot.slane %v2978, %v2991
  %v2993 = vcombine.low %v2579, %v2583
  %v2994 = vcombine.high %v2579, %v2583
  %v2996 = vunpack.c.l.s4 1983009808
  %v2997 = vunpack.c.0.s8 %v2996
  %v2998 = vlaneseq
  %v2999 = vshrl.u32 %v2998, 7
  %v3000 = vsub.s32 %v2997, %v2999
  %v3001 = vrot.slane %v2993, %v3000
  %v3003 = vunpack.c.l.s4 1983009808
  %v3004 = vunpack.c.0.s8 %v3003
  %v3005 = vlaneseq
  %v3006 = vshrl.u32 %v3005, 7
  %v3007 = vsub.s32 %v3004, %v3006
  %v3008 = vrot.slane %v2994, %v3007
  %v3009 = vcombine.low %v2585, %v2589
  %v3010 = vcombine.high %v2585, %v2589
  %v3012 = vunpack.c.l.s4 1983009808
  %v3013 = vunpack.c.0.s8 %v3012
  %v3014 = vlaneseq
  %v3015 = vshrl.u32 %v3014, 7
  %v3016 = vsub.s32 %v3013, %v3015
  %v3017 = vrot.slane %v3009, %v3016
  %v3019 = vunpack.c.l.s4 1983009808
  %v3020 = vunpack.c.0.s8 %v3019
  %v3021 = vlaneseq
  %v3022 = vshrl.u32 %v3021, 7
  %v3023 = vsub.s32 %v3020, %v3022
  %v3024 = vrot.slane %v3010, %v3023
  %v3025 = vcombine.low %v2587, %v2591
  %v3026 = vcombine.high %v2587, %v2591
  %v3028 = vunpack.c.l.s4 1983009808
  %v3029 = vunpack.c.0.s8 %v3028
  %v3030 = vlaneseq
  %v3031 = vshrl.u32 %v3030, 7
  %v3032 = vsub.s32 %v3029, %v3031
  %v3033 = vrot.slane %v3025, %v3032
  %v3035 = vunpack.c.l.s4 1983009808
  %v3036 = vunpack.c.0.s8 %v3035
  %v3037 = vlaneseq
  %v3038 = vshrl.u32 %v3037, 7
  %v3039 = vsub.s32 %v3036, %v3038
  %v3040 = vrot.slane %v3026, %v3039
  %v3041 = vcombine.low %v2985, %v3001
  %v3042 = vcombine.high %v2985, %v3001
  %v3044 = vunpack.c.l.s4 1934713408
  %v3045 = vunpack.c.0.s8 %v3044
  %v3046 = vlaneseq
  %v3047 = vshrl.u32 %v3046, 7
  %v3048 = vsub.s32 %v3045, %v3047
  %v3049 = vrot.slane %v3041, %v3048
  %v3051 = vunpack.c.l.s4 1934713408
  %v3052 = vunpack.c.0.s8 %v3051
  %v3053 = vlaneseq
  %v3054 = vshrl.u32 %v3053, 7
  %v3055 = vsub.s32 %v3052, %v3054
  %v3056 = vrot.slane %v3042, %v3055
  %v3057 = vcombine.low %v2992, %v3008
  %v3058 = vcombine.high %v2992, %v3008
  %v3060 = vunpack.c.l.s4 1934713408
  %v3061 = vunpack.c.0.s8 %v3060
  %v3062 = vlaneseq
  %v3063 = vshrl.u32 %v3062, 7
  %v3064 = vsub.s32 %v3061, %v3063
  %v3065 = vrot.slane %v3057, %v3064
  %v3067 = vunpack.c.l.s4 1934713408
  %v3068 = vunpack.c.0.s8 %v3067
  %v3069 = vlaneseq
  %v3070 = vshrl.u32 %v3069, 7
  %v3071 = vsub.s32 %v3068, %v3070
  %v3072 = vrot.slane %v3058, %v3071
  %v3073 = vcombine.low %v3017, %v3033
  %v3074 = vcombine.high %v3017, %v3033
  %v3076 = vunpack.c.l.s4 1934713408
  %v3077 = vunpack.c.0.s8 %v3076
  %v3078 = vlaneseq
  %v3079 = vshrl.u32 %v3078, 7
  %v3080 = vsub.s32 %v3077, %v3079
  %v3081 = vrot.slane %v3073, %v3080
  %v3083 = vunpack.c.l.s4 1934713408
  %v3084 = vunpack.c.0.s8 %v3083
  %v3085 = vlaneseq
  %v3086 = vshrl.u32 %v3085, 7
  %v3087 = vsub.s32 %v3084, %v3086
  %v3088 = vrot.slane %v3074, %v3087
  %v3089 = vcombine.low %v3024, %v3040
  %v3090 = vcombine.high %v3024, %v3040
  %v3092 = vunpack.c.l.s4 1934713408
  %v3093 = vunpack.c.0.s8 %v3092
  %v3094 = vlaneseq
  %v3095 = vshrl.u32 %v3094, 7
  %v3096 = vsub.s32 %v3093, %v3095
  %v3097 = vrot.slane %v3089, %v3096
  %v3099 = vunpack.c.l.s4 1934713408
  %v3100 = vunpack.c.0.s8 %v3099
  %v3101 = vlaneseq
  %v3102 = vshrl.u32 %v3101, 7
  %v3103 = vsub.s32 %v3100, %v3102
  %v3104 = vrot.slane %v3090, %v3103
  %v3105 = vcombine.low %v3049, %v3081
  %v3106 = vcombine.high %v3049, %v3081
  %v3107 = vcombine.low %v3056, %v3088
  %v3108 = vcombine.high %v3056, %v3088
  %v3109 = vcombine.low %v3065, %v3097
  %v3110 = vcombine.high %v3065, %v3097
  %v3111 = vcombine.low %v3072, %v3104
  %v3112 = vcombine.high %v3072, %v3104
  %v3113 = vcombine.low %v2593, %v2597
  %v3114 = vcombine.high %v2593, %v2597
  %v3116 = vunpack.c.l.s4 1983009808
  %v3117 = vunpack.c.0.s8 %v3116
  %v3118 = vlaneseq
  %v3119 = vshrl.u32 %v3118, 7
  %v3120 = vsub.s32 %v3117, %v3119
  %v3121 = vrot.slane %v3113, %v3120
  %v3123 = vunpack.c.l.s4 1983009808
  %v3124 = vunpack.c.0.s8 %v3123
  %v3125 = vlaneseq
  %v3126 = vshrl.u32 %v3125, 7
  %v3127 = vsub.s32 %v3124, %v3126
  %v3128 = vrot.slane %v3114, %v3127
  %v3129 = vcombine.low %v2595, %v2599
  %v3130 = vcombine.high %v2595, %v2599
  %v3132 = vunpack.c.l.s4 1983009808
  %v3133 = vunpack.c.0.s8 %v3132
  %v3134 = vlaneseq
  %v3135 = vshrl.u32 %v3134, 7
  %v3136 = vsub.s32 %v3133, %v3135
  %v3137 = vrot.slane %v3129, %v3136
  %v3139 = vunpack.c.l.s4 1983009808
  %v3140 = vunpack.c.0.s8 %v3139
  %v3141 = vlaneseq
  %v3142 = vshrl.u32 %v3141, 7
  %v3143 = vsub.s32 %v3140, %v3142
  %v3144 = vrot.slane %v3130, %v3143
  %v3145 = vcombine.low %v2601, %v2605
  %v3146 = vcombine.high %v2601, %v2605
  %v3148 = vunpack.c.l.s4 1983009808
  %v3149 = vunpack.c.0.s8 %v3148
  %v3150 = vlaneseq
  %v3151 = vshrl.u32 %v3150, 7
  %v3152 = vsub.s32 %v3149, %v3151
  %v3153 = vrot.slane %v3145, %v3152
  %v3155 = vunpack.c.l.s4 1983009808
  %v3156 = vunpack.c.0.s8 %v3155
  %v3157 = vlaneseq
  %v3158 = vshrl.u32 %v3157, 7
  %v3159 = vsub.s32 %v3156, %v3158
  %v3160 = vrot.slane %v3146, %v3159
  %v3161 = vcombine.low %v2603, %v2607
  %v3162 = vcombine.high %v2603, %v2607
  %v3164 = vunpack.c.l.s4 1983009808
  %v3165 = vunpack.c.0.s8 %v3164
  %v3166 = vlaneseq
  %v3167 = vshrl.u32 %v3166, 7
  %v3168 = vsub.s32 %v3165, %v3167
  %v3169 = vrot.slane %v3161, %v3168
  %v3171 = vunpack.c.l.s4 1983009808
  %v3172 = vunpack.c.0.s8 %v3171
  %v3173 = vlaneseq
  %v3174 = vshrl.u32 %v3173, 7
  %v3175 = vsub.s32 %v3172, %v3174
  %v3176 = vrot.slane %v3162, %v3175
  %v3177 = vcombine.low %v3121, %v3137
  %v3178 = vcombine.high %v3121, %v3137
  %v3180 = vunpack.c.l.s4 1934713408
  %v3181 = vunpack.c.0.s8 %v3180
  %v3182 = vlaneseq
  %v3183 = vshrl.u32 %v3182, 7
  %v3184 = vsub.s32 %v3181, %v3183
  %v3185 = vrot.slane %v3177, %v3184
  %v3187 = vunpack.c.l.s4 1934713408
  %v3188 = vunpack.c.0.s8 %v3187
  %v3189 = vlaneseq
  %v3190 = vshrl.u32 %v3189, 7
  %v3191 = vsub.s32 %v3188, %v3190
  %v3192 = vrot.slane %v3178, %v3191
  %v3193 = vcombine.low %v3128, %v3144
  %v3194 = vcombine.high %v3128, %v3144
  %v3196 = vunpack.c.l.s4 1934713408
  %v3197 = vunpack.c.0.s8 %v3196
  %v3198 = vlaneseq
  %v3199 = vshrl.u32 %v3198, 7
  %v3200 = vsub.s32 %v3197, %v3199
  %v3201 = vrot.slane %v3193, %v3200
  %v3203 = vunpack.c.l.s4 1934713408
  %v3204 = vunpack.c.0.s8 %v3203
  %v3205 = vlaneseq
  %v3206 = vshrl.u32 %v3205, 7
  %v3207 = vsub.s32 %v3204, %v3206
  %v3208 = vrot.slane %v3194, %v3207
  %v3209 = vcombine.low %v3153, %v3169
  %v3210 = vcombine.high %v3153, %v3169
  %v3212 = vunpack.c.l.s4 1934713408
  %v3213 = vunpack.c.0.s8 %v3212
  %v3214 = vlaneseq
  %v3215 = vshrl.u32 %v3214, 7
  %v3216 = vsub.s32 %v3213, %v3215
  %v3217 = vrot.slane %v3209, %v3216
  %v3219 = vunpack.c.l.s4 1934713408
  %v3220 = vunpack.c.0.s8 %v3219
  %v3221 = vlaneseq
  %v3222 = vshrl.u32 %v3221, 7
  %v3223 = vsub.s32 %v3220, %v3222
  %v3224 = vrot.slane %v3210, %v3223
  %v3225 = vcombine.low %v3160, %v3176
  %v3226 = vcombine.high %v3160, %v3176
  %v3228 = vunpack.c.l.s4 1934713408
  %v3229 = vunpack.c.0.s8 %v3228
  %v3230 = vlaneseq
  %v3231 = vshrl.u32 %v3230, 7
  %v3232 = vsub.s32 %v3229, %v3231
  %v3233 = vrot.slane %v3225, %v3232
  %v3235 = vunpack.c.l.s4 1934713408
  %v3236 = vunpack.c.0.s8 %v3235
  %v3237 = vlaneseq
  %v3238 = vshrl.u32 %v3237, 7
  %v3239 = vsub.s32 %v3236, %v3238
  %v3240 = vrot.slane %v3226, %v3239
  %v3241 = vcombine.low %v3185, %v3217
  %v3242 = vcombine.high %v3185, %v3217
  %v3243 = vcombine.low %v3192, %v3224
  %v3244 = vcombine.high %v3192, %v3224
  %v3245 = vcombine.low %v3201, %v3233
  %v3246 = vcombine.high %v3201, %v3233
  %v3247 = vcombine.low %v3208, %v3240
  %v3248 = vcombine.high %v3208, %v3240
  %v3249 = vcombine.low %v2562, %v2566
  %v3250 = vcombine.high %v2562, %v2566
  %v3252 = vunpack.c.l.s4 1983009808
  %v3253 = vunpack.c.0.s8 %v3252
  %v3254 = vlaneseq
  %v3255 = vshrl.u32 %v3254, 7
  %v3256 = vsub.s32 %v3253, %v3255
  %v3257 = vrot.slane %v3249, %v3256
  %v3259 = vunpack.c.l.s4 1983009808
  %v3260 = vunpack.c.0.s8 %v3259
  %v3261 = vlaneseq
  %v3262 = vshrl.u32 %v3261, 7
  %v3263 = vsub.s32 %v3260, %v3262
  %v3264 = vrot.slane %v3250, %v3263
  %v3265 = vcombine.low %v2564, %v2568
  %v3266 = vcombine.high %v2564, %v2568
  %v3268 = vunpack.c.l.s4 1983009808
  %v3269 = vunpack.c.0.s8 %v3268
  %v3270 = vlaneseq
  %v3271 = vshrl.u32 %v3270, 7
  %v3272 = vsub.s32 %v3269, %v3271
  %v3273 = vrot.slane %v3265, %v3272
  %v3275 = vunpack.c.l.s4 1983009808
  %v3276 = vunpack.c.0.s8 %v3275
  %v3277 = vlaneseq
  %v3278 = vshrl.u32 %v3277, 7
  %v3279 = vsub.s32 %v3276, %v3278
  %v3280 = vrot.slane %v3266, %v3279
  %v3281 = vcombine.low %v2570, %v2574
  %v3282 = vcombine.high %v2570, %v2574
  %v3284 = vunpack.c.l.s4 1983009808
  %v3285 = vunpack.c.0.s8 %v3284
  %v3286 = vlaneseq
  %v3287 = vshrl.u32 %v3286, 7
  %v3288 = vsub.s32 %v3285, %v3287
  %v3289 = vrot.slane %v3281, %v3288
  %v3291 = vunpack.c.l.s4 1983009808
  %v3292 = vunpack.c.0.s8 %v3291
  %v3293 = vlaneseq
  %v3294 = vshrl.u32 %v3293, 7
  %v3295 = vsub.s32 %v3292, %v3294
  %v3296 = vrot.slane %v3282, %v3295
  %v3297 = vcombine.low %v2572, %v2576
  %v3298 = vcombine.high %v2572, %v2576
  %v3300 = vunpack.c.l.s4 1983009808
  %v3301 = vunpack.c.0.s8 %v3300
  %v3302 = vlaneseq
  %v3303 = vshrl.u32 %v3302, 7
  %v3304 = vsub.s32 %v3301, %v3303
  %v3305 = vrot.slane %v3297, %v3304
  %v3307 = vunpack.c.l.s4 1983009808
  %v3308 = vunpack.c.0.s8 %v3307
  %v3309 = vlaneseq
  %v3310 = vshrl.u32 %v3309, 7
  %v3311 = vsub.s32 %v3308, %v3310
  %v3312 = vrot.slane %v3298, %v3311
  %v3313 = vcombine.low %v3257, %v3273
  %v3314 = vcombine.high %v3257, %v3273
  %v3316 = vunpack.c.l.s4 1934713408
  %v3317 = vunpack.c.0.s8 %v3316
  %v3318 = vlaneseq
  %v3319 = vshrl.u32 %v3318, 7
  %v3320 = vsub.s32 %v3317, %v3319
  %v3321 = vrot.slane %v3313, %v3320
  %v3323 = vunpack.c.l.s4 1934713408
  %v3324 = vunpack.c.0.s8 %v3323
  %v3325 = vlaneseq
  %v3326 = vshrl.u32 %v3325, 7
  %v3327 = vsub.s32 %v3324, %v3326
  %v3328 = vrot.slane %v3314, %v3327
  %v3329 = vcombine.low %v3264, %v3280
  %v3330 = vcombine.high %v3264, %v3280
  %v3332 = vunpack.c.l.s4 1934713408
  %v3333 = vunpack.c.0.s8 %v3332
  %v3334 = vlaneseq
  %v3335 = vshrl.u32 %v3334, 7
  %v3336 = vsub.s32 %v3333, %v3335
  %v3337 = vrot.slane %v3329, %v3336
  %v3339 = vunpack.c.l.s4 1934713408
  %v3340 = vunpack.c.0.s8 %v3339
  %v3341 = vlaneseq
  %v3342 = vshrl.u32 %v3341, 7
  %v3343 = vsub.s32 %v3340, %v3342
  %v3344 = vrot.slane %v3330, %v3343
  %v3345 = vcombine.low %v3289, %v3305
  %v3346 = vcombine.high %v3289, %v3305
  %v3348 = vunpack.c.l.s4 1934713408
  %v3349 = vunpack.c.0.s8 %v3348
  %v3350 = vlaneseq
  %v3351 = vshrl.u32 %v3350, 7
  %v3352 = vsub.s32 %v3349, %v3351
  %v3353 = vrot.slane %v3345, %v3352
  %v3355 = vunpack.c.l.s4 1934713408
  %v3356 = vunpack.c.0.s8 %v3355
  %v3357 = vlaneseq
  %v3358 = vshrl.u32 %v3357, 7
  %v3359 = vsub.s32 %v3356, %v3358
  %v3360 = vrot.slane %v3346, %v3359
  %v3361 = vcombine.low %v3296, %v3312
  %v3362 = vcombine.high %v3296, %v3312
  %v3364 = vunpack.c.l.s4 1934713408
  %v3365 = vunpack.c.0.s8 %v3364
  %v3366 = vlaneseq
  %v3367 = vshrl.u32 %v3366, 7
  %v3368 = vsub.s32 %v3365, %v3367
  %v3369 = vrot.slane %v3361, %v3368
  %v3371 = vunpack.c.l.s4 1934713408
  %v3372 = vunpack.c.0.s8 %v3371
  %v3373 = vlaneseq
  %v3374 = vshrl.u32 %v3373, 7
  %v3375 = vsub.s32 %v3372, %v3374
  %v3376 = vrot.slane %v3362, %v3375
  %v3377 = vcombine.low %v3321, %v3353
  %v3378 = vcombine.high %v3321, %v3353
  %v3379 = vcombine.low %v3328, %v3360
  %v3380 = vcombine.high %v3328, %v3360
  %v3381 = vcombine.low %v3337, %v3369
  %v3382 = vcombine.high %v3337, %v3369
  %v3383 = vcombine.low %v3344, %v3376
  %v3384 = vcombine.low %v2578, %v2582
  %v3385 = vcombine.high %v2578, %v2582
  %v3387 = vunpack.c.l.s4 1983009808
  %v3388 = vunpack.c.0.s8 %v3387
  %v3389 = vlaneseq
  %v3390 = vshrl.u32 %v3389, 7
  %v3391 = vsub.s32 %v3388, %v3390
  %v3392 = vrot.slane %v3384, %v3391
  %v3394 = vunpack.c.l.s4 1983009808
  %v3395 = vunpack.c.0.s8 %v3394
  %v3396 = vlaneseq
  %v3397 = vshrl.u32 %v3396, 7
  %v3398 = vsub.s32 %v3395, %v3397
  %v3399 = vrot.slane %v3385, %v3398
  %v3400 = vcombine.low %v2580, %v2584
  %v3401 = vcombine.high %v2580, %v2584
  %v3403 = vunpack.c.l.s4 1983009808
  %v3404 = vunpack.c.0.s8 %v3403
  %v3405 = vlaneseq
  %v3406 = vshrl.u32 %v3405, 7
  %v3407 = vsub.s32 %v3404, %v3406
  %v3408 = vrot.slane %v3400, %v3407
  %v3410 = vunpack.c.l.s4 1983009808
  %v3411 = vunpack.c.0.s8 %v3410
  %v3412 = vlaneseq
  %v3413 = vshrl.u32 %v3412, 7
  %v3414 = vsub.s32 %v3411, %v3413
  %v3415 = vrot.slane %v3401, %v3414
  %v3416 = vcombine.low %v2586, %v2590
  %v3417 = vcombine.high %v2586, %v2590
  %v3419 = vunpack.c.l.s4 1983009808
  %v3420 = vunpack.c.0.s8 %v3419
  %v3421 = vlaneseq
  %v3422 = vshrl.u32 %v3421, 7
  %v3423 = vsub.s32 %v3420, %v3422
  %v3424 = vrot.slane %v3416, %v3423
  %v3426 = vunpack.c.l.s4 1983009808
  %v3427 = vunpack.c.0.s8 %v3426
  %v3428 = vlaneseq
  %v3429 = vshrl.u32 %v3428, 7
  %v3430 = vsub.s32 %v3427, %v3429
  %v3431 = vrot.slane %v3417, %v3430
  %v3432 = vcombine.low %v2588, %v2592
  %v3433 = vcombine.high %v2588, %v2592
  %v3435 = vunpack.c.l.s4 1983009808
  %v3436 = vunpack.c.0.s8 %v3435
  %v3437 = vlaneseq
  %v3438 = vshrl.u32 %v3437, 7
  %v3439 = vsub.s32 %v3436, %v3438
  %v3440 = vrot.slane %v3432, %v3439
  %v3442 = vunpack.c.l.s4 1983009808
  %v3443 = vunpack.c.0.s8 %v3442
  %v3444 = vlaneseq
  %v3445 = vshrl.u32 %v3444, 7
  %v3446 = vsub.s32 %v3443, %v3445
  %v3447 = vrot.slane %v3433, %v3446
  %v3448 = vcombine.low %v3392, %v3408
  %v3449 = vcombine.high %v3392, %v3408
  %v3451 = vunpack.c.l.s4 1934713408
  %v3452 = vunpack.c.0.s8 %v3451
  %v3453 = vlaneseq
  %v3454 = vshrl.u32 %v3453, 7
  %v3455 = vsub.s32 %v3452, %v3454
  %v3456 = vrot.slane %v3448, %v3455
  %v3458 = vunpack.c.l.s4 1934713408
  %v3459 = vunpack.c.0.s8 %v3458
  %v3460 = vlaneseq
  %v3461 = vshrl.u32 %v3460, 7
  %v3462 = vsub.s32 %v3459, %v3461
  %v3463 = vrot.slane %v3449, %v3462
  %v3464 = vcombine.low %v3399, %v3415
  %v3465 = vcombine.high %v3399, %v3415
  %v3467 = vunpack.c.l.s4 1934713408
  %v3468 = vunpack.c.0.s8 %v3467
  %v3469 = vlaneseq
  %v3470 = vshrl.u32 %v3469, 7
  %v3471 = vsub.s32 %v3468, %v3470
  %v3472 = vrot.slane %v3464, %v3471
  %v3474 = vunpack.c.l.s4 1934713408
  %v3475 = vunpack.c.0.s8 %v3474
  %v3476 = vlaneseq
  %v3477 = vshrl.u32 %v3476, 7
  %v3478 = vsub.s32 %v3475, %v3477
  %v3479 = vrot.slane %v3465, %v3478
  %v3480 = vcombine.low %v3424, %v3440
  %v3481 = vcombine.high %v3424, %v3440
  %v3483 = vunpack.c.l.s4 1934713408
  %v3484 = vunpack.c.0.s8 %v3483
  %v3485 = vlaneseq
  %v3486 = vshrl.u32 %v3485, 7
  %v3487 = vsub.s32 %v3484, %v3486
  %v3488 = vrot.slane %v3480, %v3487
  %v3490 = vunpack.c.l.s4 1934713408
  %v3491 = vunpack.c.0.s8 %v3490
  %v3492 = vlaneseq
  %v3493 = vshrl.u32 %v3492, 7
  %v3494 = vsub.s32 %v3491, %v3493
  %v3495 = vrot.slane %v3481, %v3494
  %v3496 = vcombine.low %v3431, %v3447
  %v3497 = vcombine.high %v3431, %v3447
  %v3499 = vunpack.c.l.s4 1934713408
  %v3500 = vunpack.c.0.s8 %v3499
  %v3501 = vlaneseq
  %v3502 = vshrl.u32 %v3501, 7
  %v3503 = vsub.s32 %v3500, %v3502
  %v3504 = vrot.slane %v3496, %v3503
  %v3506 = vunpack.c.l.s4 1934713408
  %v3507 = vunpack.c.0.s8 %v3506
  %v3508 = vlaneseq
  %v3509 = vshrl.u32 %v3508, 7
  %v3510 = vsub.s32 %v3507, %v3509
  %v3511 = vrot.slane %v3497, %v3510
  %v3512 = vcombine.low %v3456, %v3488
  %v3513 = vcombine.high %v3456, %v3488
  %v3514 = vcombine.low %v3463, %v3495
  %v3515 = vcombine.high %v3463, %v3495
  %v3516 = vcombine.low %v3472, %v3504
  %v3517 = vcombine.high %v3472, %v3504
  %v3518 = vcombine.low %v3479, %v3511
  %v3519 = vcombine.low %v2594, %v2598
  %v3520 = vcombine.high %v2594, %v2598
  %v3522 = vunpack.c.l.s4 1983009808
  %v3523 = vunpack.c.0.s8 %v3522
  %v3524 = vlaneseq
  %v3525 = vshrl.u32 %v3524, 7
  %v3526 = vsub.s32 %v3523, %v3525
  %v3527 = vrot.slane %v3519, %v3526
  %v3529 = vunpack.c.l.s4 1983009808
  %v3530 = vunpack.c.0.s8 %v3529
  %v3531 = vlaneseq
  %v3532 = vshrl.u32 %v3531, 7
  %v3533 = vsub.s32 %v3530, %v3532
  %v3534 = vrot.slane %v3520, %v3533
  %v3535 = vcombine.low %v2596, %v2600
  %v3536 = vcombine.high %v2596, %v2600
  %v3538 = vunpack.c.l.s4 1983009808
  %v3539 = vunpack.c.0.s8 %v3538
  %v3540 = vlaneseq
  %v3541 = vshrl.u32 %v3540, 7
  %v3542 = vsub.s32 %v3539, %v3541
  %v3543 = vrot.slane %v3535, %v3542
  %v3545 = vunpack.c.l.s4 1983009808
  %v3546 = vunpack.c.0.s8 %v3545
  %v3547 = vlaneseq
  %v3548 = vshrl.u32 %v3547, 7
  %v3549 = vsub.s32 %v3546, %v3548
  %v3550 = vrot.slane %v3536, %v3549
  %v3551 = vcombine.low %v2602, %v2606
  %v3552 = vcombine.high %v2602, %v2606
  %v3554 = vunpack.c.l.s4 1983009808
  %v3555 = vunpack.c.0.s8 %v3554
  %v3556 = vlaneseq
  %v3557 = vshrl.u32 %v3556, 7
  %v3558 = vsub.s32 %v3555, %v3557
  %v3559 = vrot.slane %v3551, %v3558
  %v3561 = vunpack.c.l.s4 1983009808
  %v3562 = vunpack.c.0.s8 %v3561
  %v3563 = vlaneseq
  %v3564 = vshrl.u32 %v3563, 7
  %v3565 = vsub.s32 %v3562, %v3564
  %v3566 = vrot.slane %v3552, %v3565
  %v3567 = vcombine.low %v2604, %v2608
  %v3568 = vcombine.high %v2604, %v2608
  %v3570 = vunpack.c.l.s4 1983009808
  %v3571 = vunpack.c.0.s8 %v3570
  %v3572 = vlaneseq
  %v3573 = vshrl.u32 %v3572, 7
  %v3574 = vsub.s32 %v3571, %v3573
  %v3575 = vrot.slane %v3567, %v3574
  %v3577 = vunpack.c.l.s4 1983009808
  %v3578 = vunpack.c.0.s8 %v3577
  %v3579 = vlaneseq
  %v3580 = vshrl.u32 %v3579, 7
  %v3581 = vsub.s32 %v3578, %v3580
  %v3582 = vrot.slane %v3568, %v3581
  %v3583 = vcombine.low %v3527, %v3543
  %v3584 = vcombine.high %v3527, %v3543
  %v3586 = vunpack.c.l.s4 1934713408
  %v3587 = vunpack.c.0.s8 %v3586
  %v3588 = vlaneseq
  %v3589 = vshrl.u32 %v3588, 7
  %v3590 = vsub.s32 %v3587, %v3589
  %v3591 = vrot.slane %v3583, %v3590
  %v3593 = vunpack.c.l.s4 1934713408
  %v3594 = vunpack.c.0.s8 %v3593
  %v3595 = vlaneseq
  %v3596 = vshrl.u32 %v3595, 7
  %v3597 = vsub.s32 %v3594, %v3596
  %v3598 = vrot.slane %v3584, %v3597
  %v3599 = vcombine.low %v3534, %v3550
  %v3600 = vcombine.high %v3534, %v3550
  %v3602 = vunpack.c.l.s4 1934713408
  %v3603 = vunpack.c.0.s8 %v3602
  %v3604 = vlaneseq
  %v3605 = vshrl.u32 %v3604, 7
  %v3606 = vsub.s32 %v3603, %v3605
  %v3607 = vrot.slane %v3599, %v3606
  %v3609 = vunpack.c.l.s4 1934713408
  %v3610 = vunpack.c.0.s8 %v3609
  %v3611 = vlaneseq
  %v3612 = vshrl.u32 %v3611, 7
  %v3613 = vsub.s32 %v3610, %v3612
  %v3614 = vrot.slane %v3600, %v3613
  %v3615 = vcombine.low %v3559, %v3575
  %v3616 = vcombine.high %v3559, %v3575
  %v3618 = vunpack.c.l.s4 1934713408
  %v3619 = vunpack.c.0.s8 %v3618
  %v3620 = vlaneseq
  %v3621 = vshrl.u32 %v3620, 7
  %v3622 = vsub.s32 %v3619, %v3621
  %v3623 = vrot.slane %v3615, %v3622
  %v3625 = vunpack.c.l.s4 1934713408
  %v3626 = vunpack.c.0.s8 %v3625
  %v3627 = vlaneseq
  %v3628 = vshrl.u32 %v3627, 7
  %v3629 = vsub.s32 %v3626, %v3628
  %v3630 = vrot.slane %v3616, %v3629
  %v3631 = vcombine.low %v3566, %v3582
  %v3632 = vcombine.high %v3566, %v3582
  %v3634 = vunpack.c.l.s4 1934713408
  %v3635 = vunpack.c.0.s8 %v3634
  %v3636 = vlaneseq
  %v3637 = vshrl.u32 %v3636, 7
  %v3638 = vsub.s32 %v3635, %v3637
  %v3639 = vrot.slane %v3631, %v3638
  %v3641 = vunpack.c.l.s4 1934713408
  %v3642 = vunpack.c.0.s8 %v3641
  %v3643 = vlaneseq
  %v3644 = vshrl.u32 %v3643, 7
  %v3645 = vsub.s32 %v3642, %v3644
  %v3646 = vrot.slane %v3632, %v3645
  %v3647 = vcombine.low %v3591, %v3623
  %v3648 = vcombine.high %v3591, %v3623
  %v3649 = vcombine.low %v3598, %v3630
  %v3650 = vcombine.high %v3598, %v3630
  %v3651 = vcombine.low %v3607, %v3639
  %v3652 = vcombine.high %v3607, %v3639
  %v3653 = vcombine.low %v3614, %v3646
  %3657 = vrot.lane.b32.xlu0 %v2970, 2
  %v3658 = vpop.permute.xlu0 %3657
  %3659 = vrot.lane.b32.xlu0 %v3106, 2
  %v3660 = vpop.permute.xlu0 %3659
  %3661 = vrot.lane.b32.xlu0 %v3242, 2
  %v3662 = vpop.permute.xlu0 %3661
  %3669 = vrot.lane.b32.xlu0 %v2971, 4
  %v3670 = vpop.permute.xlu0 %3669
  %3671 = vrot.lane.b32.xlu0 %v3107, 4
  %v3672 = vpop.permute.xlu0 %3671
  %3673 = vrot.lane.b32.xlu0 %v3243, 4
  %v3674 = vpop.permute.xlu0 %3673
  %3681 = vrot.lane.b32.xlu0 %v2972, 6
  %v3682 = vpop.permute.xlu0 %3681
  %3683 = vrot.lane.b32.xlu0 %v3108, 6
  %v3684 = vpop.permute.xlu0 %3683
  %3685 = vrot.lane.b32.xlu0 %v3244, 6
  %v3686 = vpop.permute.xlu0 %3685
  %3693 = vrot.lane.b32.xlu0 %v2973, 8
  %v3694 = vpop.permute.xlu0 %3693
  %3695 = vrot.lane.b32.xlu0 %v3109, 8
  %v3696 = vpop.permute.xlu0 %3695
  %3697 = vrot.lane.b32.xlu0 %v3245, 8
  %v3698 = vpop.permute.xlu0 %3697
  %3705 = vrot.lane.b32.xlu0 %v2974, 10
  %v3706 = vpop.permute.xlu0 %3705
  %3707 = vrot.lane.b32.xlu0 %v3110, 10
  %v3708 = vpop.permute.xlu0 %3707
  %3709 = vrot.lane.b32.xlu0 %v3246, 10
  %v3710 = vpop.permute.xlu0 %3709
  %3717 = vrot.lane.b32.xlu0 %v2975, 12
  %v3718 = vpop.permute.xlu0 %3717
  %3719 = vrot.lane.b32.xlu0 %v3111, 12
  %v3720 = vpop.permute.xlu0 %3719
  %3721 = vrot.lane.b32.xlu0 %v3247, 12
  %v3722 = vpop.permute.xlu0 %3721
  %3729 = vrot.lane.b32.xlu0 %v2976, 14
  %v3730 = vpop.permute.xlu0 %3729
  %3731 = vrot.lane.b32.xlu0 %v3112, 14
  %v3732 = vpop.permute.xlu0 %3731
  %3733 = vrot.lane.b32.xlu0 %v3248, 14
  %v3734 = vpop.permute.xlu0 %3733
  %3741 = vrot.lane.b32.xlu0 %v3377, 16
  %v3742 = vpop.permute.xlu0 %3741
  %3743 = vrot.lane.b32.xlu0 %v3512, 16
  %v3744 = vpop.permute.xlu0 %3743
  %3745 = vrot.lane.b32.xlu0 %v3647, 16
  %v3746 = vpop.permute.xlu0 %3745
  %3753 = vrot.lane.b32.xlu0 %v3378, 18
  %v3754 = vpop.permute.xlu0 %3753
  %3755 = vrot.lane.b32.xlu0 %v3513, 18
  %v3756 = vpop.permute.xlu0 %3755
  %3757 = vrot.lane.b32.xlu0 %v3648, 18
  %v3758 = vpop.permute.xlu0 %3757
  %3765 = vrot.lane.b32.xlu0 %v3379, 20
  %v3766 = vpop.permute.xlu0 %3765
  %3767 = vrot.lane.b32.xlu0 %v3514, 20
  %v3768 = vpop.permute.xlu0 %3767
  %3769 = vrot.lane.b32.xlu0 %v3649, 20
  %v3770 = vpop.permute.xlu0 %3769
  %3777 = vrot.lane.b32.xlu0 %v3380, 22
  %v3778 = vpop.permute.xlu0 %3777
  %3779 = vrot.lane.b32.xlu0 %v3515, 22
  %v3780 = vpop.permute.xlu0 %3779
  %3781 = vrot.lane.b32.xlu0 %v3650, 22
  %v3782 = vpop.permute.xlu0 %3781
  %3789 = vrot.lane.b32.xlu0 %v3381, 24
  %v3790 = vpop.permute.xlu0 %3789
  %3791 = vrot.lane.b32.xlu0 %v3516, 24
  %v3792 = vpop.permute.xlu0 %3791
  %3793 = vrot.lane.b32.xlu0 %v3651, 24
  %v3794 = vpop.permute.xlu0 %3793
  %3801 = vrot.lane.b32.xlu0 %v3382, 26
  %v3802 = vpop.permute.xlu0 %3801
  %3803 = vrot.lane.b32.xlu0 %v3517, 26
  %v3804 = vpop.permute.xlu0 %3803
  %3805 = vrot.lane.b32.xlu0 %v3652, 26
  %v3806 = vpop.permute.xlu0 %3805
  %3813 = vrot.lane.b32.xlu0 %v3383, 28
  %v3814 = vpop.permute.xlu0 %3813
  %3815 = vrot.lane.b32.xlu0 %v3518, 28
  %v3816 = vpop.permute.xlu0 %3815
  %3817 = vrot.lane.b32.xlu0 %v3653, 28
  %v3818 = vpop.permute.xlu0 %3817
  %v3822 = vsel %vm1260, %v2969, %v3658
  %v3823 = vsel %vm1260, %v3105, %v3660
  %v3824 = vsel %vm1260, %v3241, %v3662
  %v3825 = vsel %vm1263, %v3822, %v3670
  %v3826 = vsel %vm1263, %v3823, %v3672
  %v3827 = vsel %vm1263, %v3824, %v3674
  %v3828 = vsel %vm1266, %v3825, %v3682
  %v3829 = vsel %vm1266, %v3826, %v3684
  %v3830 = vsel %vm1266, %v3827, %v3686
  %v3831 = vsel %vm1269, %v3828, %v3694
  %v3832 = vsel %vm1269, %v3829, %v3696
  %v3833 = vsel %vm1269, %v3830, %v3698
  %v3834 = vsel %vm1272, %v3831, %v3706
  %v3835 = vsel %vm1272, %v3832, %v3708
  %v3836 = vsel %vm1272, %v3833, %v3710
  %v3837 = vsel %vm1275, %v3834, %v3718
  %v3838 = vsel %vm1275, %v3835, %v3720
  %v3839 = vsel %vm1275, %v3836, %v3722
  %v3840 = vsel %vm1278, %v3837, %v3730
  %v3841 = vsel %vm1278, %v3838, %v3732
  %v3842 = vsel %vm1278, %v3839, %v3734
  %v3843 = vsel %vm1281, %v3840, %v3742
  %v3844 = vsel %vm1281, %v3841, %v3744
  %v3845 = vsel %vm1281, %v3842, %v3746
  %v3846 = vsel %vm1284, %v3843, %v3754
  %v3847 = vsel %vm1284, %v3844, %v3756
  %v3848 = vsel %vm1284, %v3845, %v3758
  %v3849 = vsel %vm1287, %v3846, %v3766
  %v3850 = vsel %vm1287, %v3847, %v3768
  %v3851 = vsel %vm1287, %v3848, %v3770
  %v3852 = vsel %vm1290, %v3849, %v3778
  %v3853 = vsel %vm1290, %v3850, %v3780
  %v3854 = vsel %vm1290, %v3851, %v3782
  %v3855 = vsel %vm1293, %v3852, %v3790
  %v3856 = vsel %vm1293, %v3853, %v3792
  %v3857 = vsel %vm1293, %v3854, %v3794
  %v3858 = vsel %vm1296, %v3855, %v3802
  %v3859 = vsel %vm1296, %v3856, %v3804
  %v3860 = vsel %vm1296, %v3857, %v3806
  %v3861 = vsel %vm1299, %v3858, %v3814
  %v3862 = vsel %vm1299, %v3859, %v3816
  %v3863 = vsel %vm1299, %v3860, %v3818
  %v3864 = vcombine.low %v2779, %v2787
  %v3865 = vcombine.high %v2779, %v2787
  %v3867 = vunpack.c.l.s4 1983009808
  %v3868 = vunpack.c.0.s8 %v3867
  %v3869 = vlaneseq
  %v3870 = vshrl.u32 %v3869, 7
  %v3871 = vsub.s32 %v3868, %v3870
  %v3872 = vrot.slane %v3864, %v3871
  %v3874 = vunpack.c.l.s4 1983009808
  %v3875 = vunpack.c.0.s8 %v3874
  %v3876 = vlaneseq
  %v3877 = vshrl.u32 %v3876, 7
  %v3878 = vsub.s32 %v3875, %v3877
  %v3879 = vrot.slane %v3865, %v3878
  %v3880 = vcombine.low %v2783, %v2791
  %v3881 = vcombine.high %v2783, %v2791
  %v3883 = vunpack.c.l.s4 1983009808
  %v3884 = vunpack.c.0.s8 %v3883
  %v3885 = vlaneseq
  %v3886 = vshrl.u32 %v3885, 7
  %v3887 = vsub.s32 %v3884, %v3886
  %v3888 = vrot.slane %v3880, %v3887
  %v3890 = vunpack.c.l.s4 1983009808
  %v3891 = vunpack.c.0.s8 %v3890
  %v3892 = vlaneseq
  %v3893 = vshrl.u32 %v3892, 7
  %v3894 = vsub.s32 %v3891, %v3893
  %v3895 = vrot.slane %v3881, %v3894
  %v3896 = vcombine.low %v2795, %v2803
  %v3897 = vcombine.high %v2795, %v2803
  %v3899 = vunpack.c.l.s4 1983009808
  %v3900 = vunpack.c.0.s8 %v3899
  %v3901 = vlaneseq
  %v3902 = vshrl.u32 %v3901, 7
  %v3903 = vsub.s32 %v3900, %v3902
  %v3904 = vrot.slane %v3896, %v3903
  %v3906 = vunpack.c.l.s4 1983009808
  %v3907 = vunpack.c.0.s8 %v3906
  %v3908 = vlaneseq
  %v3909 = vshrl.u32 %v3908, 7
  %v3910 = vsub.s32 %v3907, %v3909
  %v3911 = vrot.slane %v3897, %v3910
  %v3912 = vcombine.low %v2799, %v2807
  %v3913 = vcombine.high %v2799, %v2807
  %v3915 = vunpack.c.l.s4 1983009808
  %v3916 = vunpack.c.0.s8 %v3915
  %v3917 = vlaneseq
  %v3918 = vshrl.u32 %v3917, 7
  %v3919 = vsub.s32 %v3916, %v3918
  %v3920 = vrot.slane %v3912, %v3919
  %v3922 = vunpack.c.l.s4 1983009808
  %v3923 = vunpack.c.0.s8 %v3922
  %v3924 = vlaneseq
  %v3925 = vshrl.u32 %v3924, 7
  %v3926 = vsub.s32 %v3923, %v3925
  %v3927 = vrot.slane %v3913, %v3926
  %v3928 = vcombine.low %v3872, %v3888
  %v3929 = vcombine.high %v3872, %v3888
  %v3931 = vunpack.c.l.s4 1934713408
  %v3932 = vunpack.c.0.s8 %v3931
  %v3933 = vlaneseq
  %v3934 = vshrl.u32 %v3933, 7
  %v3935 = vsub.s32 %v3932, %v3934
  %v3936 = vrot.slane %v3928, %v3935
  %v3938 = vunpack.c.l.s4 1934713408
  %v3939 = vunpack.c.0.s8 %v3938
  %v3940 = vlaneseq
  %v3941 = vshrl.u32 %v3940, 7
  %v3942 = vsub.s32 %v3939, %v3941
  %v3943 = vrot.slane %v3929, %v3942
  %v3944 = vcombine.low %v3879, %v3895
  %v3945 = vcombine.high %v3879, %v3895
  %v3947 = vunpack.c.l.s4 1934713408
  %v3948 = vunpack.c.0.s8 %v3947
  %v3949 = vlaneseq
  %v3950 = vshrl.u32 %v3949, 7
  %v3951 = vsub.s32 %v3948, %v3950
  %v3952 = vrot.slane %v3944, %v3951
  %v3954 = vunpack.c.l.s4 1934713408
  %v3955 = vunpack.c.0.s8 %v3954
  %v3956 = vlaneseq
  %v3957 = vshrl.u32 %v3956, 7
  %v3958 = vsub.s32 %v3955, %v3957
  %v3959 = vrot.slane %v3945, %v3958
  %v3960 = vcombine.low %v3904, %v3920
  %v3961 = vcombine.high %v3904, %v3920
  %v3963 = vunpack.c.l.s4 1934713408
  %v3964 = vunpack.c.0.s8 %v3963
  %v3965 = vlaneseq
  %v3966 = vshrl.u32 %v3965, 7
  %v3967 = vsub.s32 %v3964, %v3966
  %v3968 = vrot.slane %v3960, %v3967
  %v3970 = vunpack.c.l.s4 1934713408
  %v3971 = vunpack.c.0.s8 %v3970
  %v3972 = vlaneseq
  %v3973 = vshrl.u32 %v3972, 7
  %v3974 = vsub.s32 %v3971, %v3973
  %v3975 = vrot.slane %v3961, %v3974
  %v3976 = vcombine.low %v3911, %v3927
  %v3977 = vcombine.high %v3911, %v3927
  %v3979 = vunpack.c.l.s4 1934713408
  %v3980 = vunpack.c.0.s8 %v3979
  %v3981 = vlaneseq
  %v3982 = vshrl.u32 %v3981, 7
  %v3983 = vsub.s32 %v3980, %v3982
  %v3984 = vrot.slane %v3976, %v3983
  %v3986 = vunpack.c.l.s4 1934713408
  %v3987 = vunpack.c.0.s8 %v3986
  %v3988 = vlaneseq
  %v3989 = vshrl.u32 %v3988, 7
  %v3990 = vsub.s32 %v3987, %v3989
  %v3991 = vrot.slane %v3977, %v3990
  %v3992 = vcombine.low %v3936, %v3968
  %v3993 = vcombine.high %v3936, %v3968
  %v3994 = vcombine.low %v3943, %v3975
  %v3995 = vcombine.high %v3943, %v3975
  %v3996 = vcombine.low %v3952, %v3984
  %v3997 = vcombine.high %v3952, %v3984
  %v3998 = vcombine.low %v3959, %v3991
  %v3999 = vcombine.low %v2811, %v2819
  %v4000 = vcombine.high %v2811, %v2819
  %v4002 = vunpack.c.l.s4 1983009808
  %v4003 = vunpack.c.0.s8 %v4002
  %v4004 = vlaneseq
  %v4005 = vshrl.u32 %v4004, 7
  %v4006 = vsub.s32 %v4003, %v4005
  %v4007 = vrot.slane %v3999, %v4006
  %v4009 = vunpack.c.l.s4 1983009808
  %v4010 = vunpack.c.0.s8 %v4009
  %v4011 = vlaneseq
  %v4012 = vshrl.u32 %v4011, 7
  %v4013 = vsub.s32 %v4010, %v4012
  %v4014 = vrot.slane %v4000, %v4013
  %v4015 = vcombine.low %v2815, %v2823
  %v4016 = vcombine.high %v2815, %v2823
  %v4018 = vunpack.c.l.s4 1983009808
  %v4019 = vunpack.c.0.s8 %v4018
  %v4020 = vlaneseq
  %v4021 = vshrl.u32 %v4020, 7
  %v4022 = vsub.s32 %v4019, %v4021
  %v4023 = vrot.slane %v4015, %v4022
  %v4025 = vunpack.c.l.s4 1983009808
  %v4026 = vunpack.c.0.s8 %v4025
  %v4027 = vlaneseq
  %v4028 = vshrl.u32 %v4027, 7
  %v4029 = vsub.s32 %v4026, %v4028
  %v4030 = vrot.slane %v4016, %v4029
  %v4031 = vcombine.low %v2827, %v2835
  %v4032 = vcombine.high %v2827, %v2835
  %v4034 = vunpack.c.l.s4 1983009808
  %v4035 = vunpack.c.0.s8 %v4034
  %v4036 = vlaneseq
  %v4037 = vshrl.u32 %v4036, 7
  %v4038 = vsub.s32 %v4035, %v4037
  %v4039 = vrot.slane %v4031, %v4038
  %v4041 = vunpack.c.l.s4 1983009808
  %v4042 = vunpack.c.0.s8 %v4041
  %v4043 = vlaneseq
  %v4044 = vshrl.u32 %v4043, 7
  %v4045 = vsub.s32 %v4042, %v4044
  %v4046 = vrot.slane %v4032, %v4045
  %v4047 = vcombine.low %v2831, %v2839
  %v4048 = vcombine.high %v2831, %v2839
  %v4050 = vunpack.c.l.s4 1983009808
  %v4051 = vunpack.c.0.s8 %v4050
  %v4052 = vlaneseq
  %v4053 = vshrl.u32 %v4052, 7
  %v4054 = vsub.s32 %v4051, %v4053
  %v4055 = vrot.slane %v4047, %v4054
  %v4057 = vunpack.c.l.s4 1983009808
  %v4058 = vunpack.c.0.s8 %v4057
  %v4059 = vlaneseq
  %v4060 = vshrl.u32 %v4059, 7
  %v4061 = vsub.s32 %v4058, %v4060
  %v4062 = vrot.slane %v4048, %v4061
  %v4063 = vcombine.low %v4007, %v4023
  %v4064 = vcombine.high %v4007, %v4023
  %v4066 = vunpack.c.l.s4 1934713408
  %v4067 = vunpack.c.0.s8 %v4066
  %v4068 = vlaneseq
  %v4069 = vshrl.u32 %v4068, 7
  %v4070 = vsub.s32 %v4067, %v4069
  %v4071 = vrot.slane %v4063, %v4070
  %v4073 = vunpack.c.l.s4 1934713408
  %v4074 = vunpack.c.0.s8 %v4073
  %v4075 = vlaneseq
  %v4076 = vshrl.u32 %v4075, 7
  %v4077 = vsub.s32 %v4074, %v4076
  %v4078 = vrot.slane %v4064, %v4077
  %v4079 = vcombine.low %v4014, %v4030
  %v4080 = vcombine.high %v4014, %v4030
  %v4082 = vunpack.c.l.s4 1934713408
  %v4083 = vunpack.c.0.s8 %v4082
  %v4084 = vlaneseq
  %v4085 = vshrl.u32 %v4084, 7
  %v4086 = vsub.s32 %v4083, %v4085
  %v4087 = vrot.slane %v4079, %v4086
  %v4089 = vunpack.c.l.s4 1934713408
  %v4090 = vunpack.c.0.s8 %v4089
  %v4091 = vlaneseq
  %v4092 = vshrl.u32 %v4091, 7
  %v4093 = vsub.s32 %v4090, %v4092
  %v4094 = vrot.slane %v4080, %v4093
  %v4095 = vcombine.low %v4039, %v4055
  %v4096 = vcombine.high %v4039, %v4055
  %v4098 = vunpack.c.l.s4 1934713408
  %v4099 = vunpack.c.0.s8 %v4098
  %v4100 = vlaneseq
  %v4101 = vshrl.u32 %v4100, 7
  %v4102 = vsub.s32 %v4099, %v4101
  %v4103 = vrot.slane %v4095, %v4102
  %v4105 = vunpack.c.l.s4 1934713408
  %v4106 = vunpack.c.0.s8 %v4105
  %v4107 = vlaneseq
  %v4108 = vshrl.u32 %v4107, 7
  %v4109 = vsub.s32 %v4106, %v4108
  %v4110 = vrot.slane %v4096, %v4109
  %v4111 = vcombine.low %v4046, %v4062
  %v4112 = vcombine.high %v4046, %v4062
  %v4114 = vunpack.c.l.s4 1934713408
  %v4115 = vunpack.c.0.s8 %v4114
  %v4116 = vlaneseq
  %v4117 = vshrl.u32 %v4116, 7
  %v4118 = vsub.s32 %v4115, %v4117
  %v4119 = vrot.slane %v4111, %v4118
  %v4121 = vunpack.c.l.s4 1934713408
  %v4122 = vunpack.c.0.s8 %v4121
  %v4123 = vlaneseq
  %v4124 = vshrl.u32 %v4123, 7
  %v4125 = vsub.s32 %v4122, %v4124
  %v4126 = vrot.slane %v4112, %v4125
  %v4127 = vcombine.low %v4071, %v4103
  %v4128 = vcombine.high %v4071, %v4103
  %v4129 = vcombine.low %v4078, %v4110
  %v4130 = vcombine.high %v4078, %v4110
  %v4131 = vcombine.low %v4087, %v4119
  %v4132 = vcombine.high %v4087, %v4119
  %v4133 = vcombine.low %v4094, %v4126
  %4136 = vrot.lane.b32.xlu0 %v3993, 2
  %v4137 = vpop.permute.xlu0 %4136
  %4138 = vrot.lane.b32.xlu0 %v4128, 2
  %v4139 = vpop.permute.xlu0 %4138
  %4144 = vrot.lane.b32.xlu0 %v3994, 4
  %v4145 = vpop.permute.xlu0 %4144
  %4146 = vrot.lane.b32.xlu0 %v4129, 4
  %v4147 = vpop.permute.xlu0 %4146
  %4152 = vrot.lane.b32.xlu0 %v3995, 6
  %v4153 = vpop.permute.xlu0 %4152
  %4154 = vrot.lane.b32.xlu0 %v4130, 6
  %v4155 = vpop.permute.xlu0 %4154
  %4160 = vrot.lane.b32.xlu0 %v3996, 8
  %v4161 = vpop.permute.xlu0 %4160
  %4162 = vrot.lane.b32.xlu0 %v4131, 8
  %v4163 = vpop.permute.xlu0 %4162
  %4168 = vrot.lane.b32.xlu0 %v3997, 10
  %v4169 = vpop.permute.xlu0 %4168
  %4170 = vrot.lane.b32.xlu0 %v4132, 10
  %v4171 = vpop.permute.xlu0 %4170
  %4176 = vrot.lane.b32.xlu0 %v3998, 12
  %v4177 = vpop.permute.xlu0 %4176
  %4178 = vrot.lane.b32.xlu0 %v4133, 12
  %v4179 = vpop.permute.xlu0 %4178
  %4183 = vrot.lane.b32.xlu0 0.0, 14
  %v4184 = vpop.permute.xlu0 %4183
  %4188 = vrot.lane.b32.xlu0 %v3992, 16
  %v4189 = vpop.permute.xlu0 %4188
  %4190 = vrot.lane.b32.xlu0 %v4127, 16
  %v4191 = vpop.permute.xlu0 %4190
  %4194 = vrot.lane.b32.xlu0 %v3993, 18
  %v4195 = vpop.permute.xlu0 %4194
  %4196 = vrot.lane.b32.xlu0 %v4128, 18
  %v4197 = vpop.permute.xlu0 %4196
  %4200 = vrot.lane.b32.xlu0 %v3994, 20
  %v4201 = vpop.permute.xlu0 %4200
  %4202 = vrot.lane.b32.xlu0 %v4129, 20
  %v4203 = vpop.permute.xlu0 %4202
  %4206 = vrot.lane.b32.xlu0 %v3995, 22
  %v4207 = vpop.permute.xlu0 %4206
  %4208 = vrot.lane.b32.xlu0 %v4130, 22
  %v4209 = vpop.permute.xlu0 %4208
  %4212 = vrot.lane.b32.xlu0 %v3996, 24
  %v4213 = vpop.permute.xlu0 %4212
  %4214 = vrot.lane.b32.xlu0 %v4131, 24
  %v4215 = vpop.permute.xlu0 %4214
  %4218 = vrot.lane.b32.xlu0 %v3997, 26
  %v4219 = vpop.permute.xlu0 %4218
  %4220 = vrot.lane.b32.xlu0 %v4132, 26
  %v4221 = vpop.permute.xlu0 %4220
  %4224 = vrot.lane.b32.xlu0 %v3998, 28
  %v4225 = vpop.permute.xlu0 %4224
  %4226 = vrot.lane.b32.xlu0 %v4133, 28
  %v4227 = vpop.permute.xlu0 %4226
  %v4230 = vsel %vm1260, %v3992, %v4137
  %v4231 = vsel %vm1260, %v4127, %v4139
  %v4232 = vsel %vm1263, %v4230, %v4145
  %v4233 = vsel %vm1263, %v4231, %v4147
  %v4234 = vsel %vm1266, %v4232, %v4153
  %v4235 = vsel %vm1266, %v4233, %v4155
  %v4236 = vsel %vm1269, %v4234, %v4161
  %v4237 = vsel %vm1269, %v4235, %v4163
  %v4238 = vsel %vm1272, %v4236, %v4169
  %v4239 = vsel %vm1272, %v4237, %v4171
  %v4240 = vsel %vm1275, %v4238, %v4177
  %v4241 = vsel %vm1275, %v4239, %v4179
  %v4242 = vsel %vm1278, %v4240, %v4184
  %v4243 = vsel %vm1278, %v4241, %v4184
  %v4244 = vsel %vm1281, %v4242, %v4189
  %v4245 = vsel %vm1281, %v4243, %v4191
  %v4246 = vsel %vm1284, %v4244, %v4195
  %v4247 = vsel %vm1284, %v4245, %v4197
  %v4248 = vsel %vm1287, %v4246, %v4201
  %v4249 = vsel %vm1287, %v4247, %v4203
  %v4250 = vsel %vm1290, %v4248, %v4207
  %v4251 = vsel %vm1290, %v4249, %v4209
  %v4252 = vsel %vm1293, %v4250, %v4213
  %v4253 = vsel %vm1293, %v4251, %v4215
  %v4254 = vsel %vm1296, %v4252, %v4219
  %v4255 = vsel %vm1296, %v4253, %v4221
  %v4256 = vsel %vm1299, %v4254, %v4225
  %v4257 = vsel %vm1299, %v4255, %v4227
  %v4259 = vsel %vm1293, %v2609, 0
  %v4262 = vsel %vm1293, %v2610, 0
  %4264 = vmatprep.subr.mxu0 0.0
  %4265 = vmatpush1.msra.mxu0 %v3861
  %4266 = vmatprep.subr.mxu0 0.0
  %4267 = vmatpush1.msra.mxu0 %v3862
  %4268 = vmatprep.subr.mxu0 0.0
  %4269 = vmatpush1.msra.mxu0 %v3863
  %4270 = vmatprep.subr.mxu0 0.0
  %4271 = vmatpush1.msra.mxu0 0.0
  %4272 = vmatprep.subr.mxu0 0.0
  %4273 = vmatpush1.msra.mxu0 0.0
  %4274 = vmatprep.subr.mxu0 0.0
  %4275 = vmatpush1.msra.mxu0 0.0
  %4276 = vmatprep.subr.mxu0 0.0
  %4277 = vmatpush1.msra.mxu0 0.0
  %4278 = vmatprep.subr.mxu0 0.0
  %4279 = vmatpush1.msra.mxu0 0.0
  %4280 = vmatprep.subr.mxu0 0.0
  %4281 = vmatpush1.msra.mxu0 0.0
  %4282 = vmatprep.subr.mxu0 0.0
  %4283 = vmatpush1.msra.mxu0 0.0
  %4284 = vmatprep.subr.mxu0 0.0
  %4285 = vmatpush1.msra.mxu0 0.0
  %4286 = vmatprep.subr.mxu0 0.0
  %4287 = vmatpush1.msra.mxu0 0.0
  %4288 = vmatprep.subr.mxu0 0.0
  %4289 = vmatpush1.msra.mxu0 0.0
  %4290 = vmatprep.subr.mxu0 0.0
  %4291 = vmatpush1.msra.mxu0 0.0
  %4292 = vmatprep.subr.mxu0 0.0
  %4293 = vmatpush1.msra.mxu0 0.0
  %4294 = vmatprep.subr.mxu0 0.0
  %4295 = vmatpush1.msra.mxu0 0.0
  %4296 = vmatprep.subr.mxu0 0.0
  %4297 = vmatpush1.msra.mxu0 0.0
  %4298 = vmatprep.subr.mxu0 0.0
  %4299 = vmatpush1.msra.mxu0 0.0
  %4300 = vmatprep.subr.mxu0 0.0
  %4301 = vmatpush1.msra.mxu0 0.0
  %4302 = vmatprep.subr.mxu0 0.0
  %4303 = vmatpush1.msra.mxu0 0.0
  %4304 = vmatprep.subr.mxu0 0.0
  %4305 = vmatpush1.msra.mxu0 0.0
  %4306 = vmatprep.subr.mxu0 0.0
  %4307 = vmatpush1.msra.mxu0 0.0
  %4308 = vmatprep.subr.mxu0 0.0
  %4309 = vmatpush1.msra.mxu0 0.0
  %4310 = vmatprep.subr.mxu0 0.0
  %4311 = vmatpush1.msra.mxu0 0.0
  %4312 = vmatprep.subr.mxu0 0.0
  %4313 = vmatpush1.msra.mxu0 0.0
  %4314 = vmatprep.subr.mxu0 0.0
  %4315 = vmatpush1.msra.mxu0 0.0
  %4316 = vmatprep.subr.mxu0 0.0
  %4317 = vmatpush1.msra.mxu0 0.0
  %4318 = vmatprep.subr.mxu0 0.0
  %4319 = vmatpush1.msra.mxu0 0.0
  %4320 = vmatprep.subr.mxu0 0.0
  %4321 = vmatpush1.msra.mxu0 0.0
  %4322 = vmatprep.subr.mxu0 0.0
  %4323 = vmatpush1.msra.mxu0 0.0
  %4324 = vmatprep.subr.mxu0 0.0
  %4325 = vmatpush1.msra.mxu0 0.0
  %4326 = vmatprep.subr.mxu0 0.0
  %4327 = vmatpush1.msra.mxu0 0.0
  %4328 = vmatprep.mubr.f32.mxu0 0.0
  %4329 = vmatmul.mubr.f32.gmra.mrb[0].mxu0 %v4259
  %v4330 = vpop.f32.mrb[0].mxu0
  %v4331 = vadd.f32 %v4256, %v4330
  %v4332 = vpop.f32.mrb[0].mxu0
  %4333 = vmatprep.mubr.f32.mxu0 0.0
  %4334 = vmatmul.mubr.f32.gmra.mrb[0].mxu0 %v4262
  %v4335 = vpop.f32.mrb[0].mxu0
  %v4336 = vadd.f32 %v4257, %v4335
  %v4337 = vpop.f32.mrb[0].mxu0
  %4338 = vdwg.mxu0
  %4341 = vrot.lane.b32.xlu0 %v4331, 126
  %v4342 = vpop.permute.xlu0 %4341
  %4343 = vrot.lane.b32.xlu0 %v4336, 126
  %v4344 = vpop.permute.xlu0 %4343
  %4347 = vrot.lane.b32.xlu0 %v4331, 124
  %v4348 = vpop.permute.xlu0 %4347
  %4349 = vrot.lane.b32.xlu0 %v4336, 124
  %v4350 = vpop.permute.xlu0 %4349
  %4353 = vrot.lane.b32.xlu0 %v4331, 122
  %v4354 = vpop.permute.xlu0 %4353
  %4355 = vrot.lane.b32.xlu0 %v4336, 122
  %v4356 = vpop.permute.xlu0 %4355
  %4359 = vrot.lane.b32.xlu0 %v4331, 120
  %v4360 = vpop.permute.xlu0 %4359
  %4361 = vrot.lane.b32.xlu0 %v4336, 120
  %v4362 = vpop.permute.xlu0 %4361
  %4365 = vrot.lane.b32.xlu0 %v4331, 118
  %v4366 = vpop.permute.xlu0 %4365
  %4367 = vrot.lane.b32.xlu0 %v4336, 118
  %v4368 = vpop.permute.xlu0 %4367
  %4371 = vrot.lane.b32.xlu0 %v4331, 116
  %v4372 = vpop.permute.xlu0 %4371
  %4373 = vrot.lane.b32.xlu0 %v4336, 116
  %v4374 = vpop.permute.xlu0 %4373
  %4377 = vrot.lane.b32.xlu0 %v4331, 114
  %v4378 = vpop.permute.xlu0 %4377
  %4379 = vrot.lane.b32.xlu0 %v4336, 114
  %v4380 = vpop.permute.xlu0 %4379
  %4383 = vrot.lane.b32.xlu0 %v4331, 112
  %v4384 = vpop.permute.xlu0 %4383
  %4385 = vrot.lane.b32.xlu0 %v4336, 112
  %v4386 = vpop.permute.xlu0 %4385
  %4389 = vrot.lane.b32.xlu0 %v4331, 110
  %v4390 = vpop.permute.xlu0 %4389
  %4391 = vrot.lane.b32.xlu0 %v4336, 110
  %v4392 = vpop.permute.xlu0 %4391
  %4395 = vrot.lane.b32.xlu0 %v4331, 108
  %v4396 = vpop.permute.xlu0 %4395
  %4397 = vrot.lane.b32.xlu0 %v4336, 108
  %v4398 = vpop.permute.xlu0 %4397
  %4401 = vrot.lane.b32.xlu0 %v4331, 106
  %v4402 = vpop.permute.xlu0 %4401
  %4403 = vrot.lane.b32.xlu0 %v4336, 106
  %v4404 = vpop.permute.xlu0 %4403
  %4407 = vrot.lane.b32.xlu0 %v4331, 104
  %v4408 = vpop.permute.xlu0 %4407
  %4409 = vrot.lane.b32.xlu0 %v4336, 104
  %v4410 = vpop.permute.xlu0 %4409
  %4413 = vrot.lane.b32.xlu0 %v4331, 102
  %v4414 = vpop.permute.xlu0 %4413
  %4415 = vrot.lane.b32.xlu0 %v4336, 102
  %v4416 = vpop.permute.xlu0 %4415
  %4419 = vrot.lane.b32.xlu0 %v4331, 100
  %v4420 = vpop.permute.xlu0 %4419
  %4421 = vrot.lane.b32.xlu0 %v4336, 100
  %v4422 = vpop.permute.xlu0 %4421
  %v4425 = vcombine.low %v4331, %v4348
  %v4426 = vcombine.high %v4331, %v4348
  %v4428 = vunpack.c.l.s4 1983009808
  %v4429 = vunpack.c.0.s8 %v4428
  %v4430 = vlaneseq
  %v4431 = vshrl.u32 %v4430, 7
  %v4432 = vsub.s32 %v4429, %v4431
  %v4433 = vrot.slane %v4425, %v4432
  %v4435 = vunpack.c.l.s4 1983009808
  %v4436 = vunpack.c.0.s8 %v4435
  %v4437 = vlaneseq
  %v4438 = vshrl.u32 %v4437, 7
  %v4439 = vsub.s32 %v4436, %v4438
  %v4440 = vrot.slane %v4426, %v4439
  %v4441 = vcombine.low %v4342, %v4354
  %v4442 = vcombine.high %v4342, %v4354
  %v4444 = vunpack.c.l.s4 1983009808
  %v4445 = vunpack.c.0.s8 %v4444
  %v4446 = vlaneseq
  %v4447 = vshrl.u32 %v4446, 7
  %v4448 = vsub.s32 %v4445, %v4447
  %v4449 = vrot.slane %v4441, %v4448
  %v4451 = vunpack.c.l.s4 1983009808
  %v4452 = vunpack.c.0.s8 %v4451
  %v4453 = vlaneseq
  %v4454 = vshrl.u32 %v4453, 7
  %v4455 = vsub.s32 %v4452, %v4454
  %v4456 = vrot.slane %v4442, %v4455
  %v4457 = vcombine.low %v4360, %v4372
  %v4458 = vcombine.high %v4360, %v4372
  %v4460 = vunpack.c.l.s4 1983009808
  %v4461 = vunpack.c.0.s8 %v4460
  %v4462 = vlaneseq
  %v4463 = vshrl.u32 %v4462, 7
  %v4464 = vsub.s32 %v4461, %v4463
  %v4465 = vrot.slane %v4457, %v4464
  %v4467 = vunpack.c.l.s4 1983009808
  %v4468 = vunpack.c.0.s8 %v4467
  %v4469 = vlaneseq
  %v4470 = vshrl.u32 %v4469, 7
  %v4471 = vsub.s32 %v4468, %v4470
  %v4472 = vrot.slane %v4458, %v4471
  %v4473 = vcombine.low %v4366, %v4378
  %v4474 = vcombine.high %v4366, %v4378
  %v4476 = vunpack.c.l.s4 1983009808
  %v4477 = vunpack.c.0.s8 %v4476
  %v4478 = vlaneseq
  %v4479 = vshrl.u32 %v4478, 7
  %v4480 = vsub.s32 %v4477, %v4479
  %v4481 = vrot.slane %v4473, %v4480
  %v4483 = vunpack.c.l.s4 1983009808
  %v4484 = vunpack.c.0.s8 %v4483
  %v4485 = vlaneseq
  %v4486 = vshrl.u32 %v4485, 7
  %v4487 = vsub.s32 %v4484, %v4486
  %v4488 = vrot.slane %v4474, %v4487
  %v4489 = vcombine.low %v4433, %v4449
  %v4490 = vcombine.high %v4433, %v4449
  %v4492 = vunpack.c.l.s4 1934713408
  %v4493 = vunpack.c.0.s8 %v4492
  %v4494 = vlaneseq
  %v4495 = vshrl.u32 %v4494, 7
  %v4496 = vsub.s32 %v4493, %v4495
  %v4497 = vrot.slane %v4489, %v4496
  %v4499 = vunpack.c.l.s4 1934713408
  %v4500 = vunpack.c.0.s8 %v4499
  %v4501 = vlaneseq
  %v4502 = vshrl.u32 %v4501, 7
  %v4503 = vsub.s32 %v4500, %v4502
  %v4504 = vrot.slane %v4490, %v4503
  %v4505 = vcombine.low %v4440, %v4456
  %v4506 = vcombine.high %v4440, %v4456
  %v4508 = vunpack.c.l.s4 1934713408
  %v4509 = vunpack.c.0.s8 %v4508
  %v4510 = vlaneseq
  %v4511 = vshrl.u32 %v4510, 7
  %v4512 = vsub.s32 %v4509, %v4511
  %v4513 = vrot.slane %v4505, %v4512
  %v4515 = vunpack.c.l.s4 1934713408
  %v4516 = vunpack.c.0.s8 %v4515
  %v4517 = vlaneseq
  %v4518 = vshrl.u32 %v4517, 7
  %v4519 = vsub.s32 %v4516, %v4518
  %v4520 = vrot.slane %v4506, %v4519
  %v4521 = vcombine.low %v4465, %v4481
  %v4522 = vcombine.high %v4465, %v4481
  %v4524 = vunpack.c.l.s4 1934713408
  %v4525 = vunpack.c.0.s8 %v4524
  %v4526 = vlaneseq
  %v4527 = vshrl.u32 %v4526, 7
  %v4528 = vsub.s32 %v4525, %v4527
  %v4529 = vrot.slane %v4521, %v4528
  %v4531 = vunpack.c.l.s4 1934713408
  %v4532 = vunpack.c.0.s8 %v4531
  %v4533 = vlaneseq
  %v4534 = vshrl.u32 %v4533, 7
  %v4535 = vsub.s32 %v4532, %v4534
  %v4536 = vrot.slane %v4522, %v4535
  %v4537 = vcombine.low %v4472, %v4488
  %v4538 = vcombine.high %v4472, %v4488
  %v4540 = vunpack.c.l.s4 1934713408
  %v4541 = vunpack.c.0.s8 %v4540
  %v4542 = vlaneseq
  %v4543 = vshrl.u32 %v4542, 7
  %v4544 = vsub.s32 %v4541, %v4543
  %v4545 = vrot.slane %v4537, %v4544
  %v4547 = vunpack.c.l.s4 1934713408
  %v4548 = vunpack.c.0.s8 %v4547
  %v4549 = vlaneseq
  %v4550 = vshrl.u32 %v4549, 7
  %v4551 = vsub.s32 %v4548, %v4550
  %v4552 = vrot.slane %v4538, %v4551
  %v4553 = vcombine.low %v4497, %v4529
  %v4554 = vcombine.high %v4497, %v4529
  %v4555 = vcombine.low %v4504, %v4536
  %v4556 = vcombine.high %v4504, %v4536
  %v4557 = vcombine.low %v4513, %v4545
  %v4558 = vcombine.high %v4513, %v4545
  %v4559 = vcombine.low %v4520, %v4552
  %v4560 = vcombine.high %v4520, %v4552
  %v4561 = vcombine.low %v4384, %v4396
  %v4562 = vcombine.high %v4384, %v4396
  %v4564 = vunpack.c.l.s4 1983009808
  %v4565 = vunpack.c.0.s8 %v4564
  %v4566 = vlaneseq
  %v4567 = vshrl.u32 %v4566, 7
  %v4568 = vsub.s32 %v4565, %v4567
  %v4569 = vrot.slane %v4561, %v4568
  %v4571 = vunpack.c.l.s4 1983009808
  %v4572 = vunpack.c.0.s8 %v4571
  %v4573 = vlaneseq
  %v4574 = vshrl.u32 %v4573, 7
  %v4575 = vsub.s32 %v4572, %v4574
  %v4576 = vrot.slane %v4562, %v4575
  %v4577 = vcombine.low %v4390, %v4402
  %v4578 = vcombine.high %v4390, %v4402
  %v4580 = vunpack.c.l.s4 1983009808
  %v4581 = vunpack.c.0.s8 %v4580
  %v4582 = vlaneseq
  %v4583 = vshrl.u32 %v4582, 7
  %v4584 = vsub.s32 %v4581, %v4583
  %v4585 = vrot.slane %v4577, %v4584
  %v4587 = vunpack.c.l.s4 1983009808
  %v4588 = vunpack.c.0.s8 %v4587
  %v4589 = vlaneseq
  %v4590 = vshrl.u32 %v4589, 7
  %v4591 = vsub.s32 %v4588, %v4590
  %v4592 = vrot.slane %v4578, %v4591
  %v4593 = vcombine.low %v4408, %v4420
  %v4594 = vcombine.high %v4408, %v4420
  %v4596 = vunpack.c.l.s4 1983009808
  %v4597 = vunpack.c.0.s8 %v4596
  %v4598 = vlaneseq
  %v4599 = vshrl.u32 %v4598, 7
  %v4600 = vsub.s32 %v4597, %v4599
  %v4601 = vrot.slane %v4593, %v4600
  %v4603 = vunpack.c.l.s4 1983009808
  %v4604 = vunpack.c.0.s8 %v4603
  %v4605 = vlaneseq
  %v4606 = vshrl.u32 %v4605, 7
  %v4607 = vsub.s32 %v4604, %v4606
  %v4608 = vrot.slane %v4594, %v4607
  %v4609 = vcombine.high %v4414, 0.0
  %v4611 = vunpack.c.l.s4 1983009808
  %v4612 = vunpack.c.0.s8 %v4611
  %v4613 = vlaneseq
  %v4614 = vshrl.u32 %v4613, 7
  %v4615 = vsub.s32 %v4612, %v4614
  %v4616 = vrot.slane %v4414, %v4615
  %v4618 = vunpack.c.l.s4 1983009808
  %v4619 = vunpack.c.0.s8 %v4618
  %v4620 = vlaneseq
  %v4621 = vshrl.u32 %v4620, 7
  %v4622 = vsub.s32 %v4619, %v4621
  %v4623 = vrot.slane %v4609, %v4622
  %v4624 = vcombine.low %v4569, %v4585
  %v4625 = vcombine.high %v4569, %v4585
  %v4627 = vunpack.c.l.s4 1934713408
  %v4628 = vunpack.c.0.s8 %v4627
  %v4629 = vlaneseq
  %v4630 = vshrl.u32 %v4629, 7
  %v4631 = vsub.s32 %v4628, %v4630
  %v4632 = vrot.slane %v4624, %v4631
  %v4634 = vunpack.c.l.s4 1934713408
  %v4635 = vunpack.c.0.s8 %v4634
  %v4636 = vlaneseq
  %v4637 = vshrl.u32 %v4636, 7
  %v4638 = vsub.s32 %v4635, %v4637
  %v4639 = vrot.slane %v4625, %v4638
  %v4640 = vcombine.low %v4576, %v4592
  %v4641 = vcombine.high %v4576, %v4592
  %v4643 = vunpack.c.l.s4 1934713408
  %v4644 = vunpack.c.0.s8 %v4643
  %v4645 = vlaneseq
  %v4646 = vshrl.u32 %v4645, 7
  %v4647 = vsub.s32 %v4644, %v4646
  %v4648 = vrot.slane %v4640, %v4647
  %v4650 = vunpack.c.l.s4 1934713408
  %v4651 = vunpack.c.0.s8 %v4650
  %v4652 = vlaneseq
  %v4653 = vshrl.u32 %v4652, 7
  %v4654 = vsub.s32 %v4651, %v4653
  %v4655 = vrot.slane %v4641, %v4654
  %v4656 = vcombine.low %v4601, %v4616
  %v4657 = vcombine.high %v4601, %v4616
  %v4659 = vunpack.c.l.s4 1934713408
  %v4660 = vunpack.c.0.s8 %v4659
  %v4661 = vlaneseq
  %v4662 = vshrl.u32 %v4661, 7
  %v4663 = vsub.s32 %v4660, %v4662
  %v4664 = vrot.slane %v4656, %v4663
  %v4666 = vunpack.c.l.s4 1934713408
  %v4667 = vunpack.c.0.s8 %v4666
  %v4668 = vlaneseq
  %v4669 = vshrl.u32 %v4668, 7
  %v4670 = vsub.s32 %v4667, %v4669
  %v4671 = vrot.slane %v4657, %v4670
  %v4672 = vcombine.low %v4608, %v4623
  %v4673 = vcombine.high %v4608, %v4623
  %v4675 = vunpack.c.l.s4 1934713408
  %v4676 = vunpack.c.0.s8 %v4675
  %v4677 = vlaneseq
  %v4678 = vshrl.u32 %v4677, 7
  %v4679 = vsub.s32 %v4676, %v4678
  %v4680 = vrot.slane %v4672, %v4679
  %v4682 = vunpack.c.l.s4 1934713408
  %v4683 = vunpack.c.0.s8 %v4682
  %v4684 = vlaneseq
  %v4685 = vshrl.u32 %v4684, 7
  %v4686 = vsub.s32 %v4683, %v4685
  %v4687 = vrot.slane %v4673, %v4686
  %v4688 = vcombine.low %v4632, %v4664
  %v4689 = vcombine.high %v4632, %v4664
  %v4690 = vcombine.low %v4639, %v4671
  %v4691 = vcombine.high %v4639, %v4671
  %v4692 = vcombine.low %v4648, %v4680
  %v4693 = vcombine.high %v4648, %v4680
  %v4694 = vcombine.low %v4655, %v4687
  %v4695 = vcombine.high %v4655, %v4687
  %v4696 = vcombine.low %v4336, %v4350
  %v4697 = vcombine.high %v4336, %v4350
  %v4699 = vunpack.c.l.s4 1983009808
  %v4700 = vunpack.c.0.s8 %v4699
  %v4701 = vlaneseq
  %v4702 = vshrl.u32 %v4701, 7
  %v4703 = vsub.s32 %v4700, %v4702
  %v4704 = vrot.slane %v4696, %v4703
  %v4706 = vunpack.c.l.s4 1983009808
  %v4707 = vunpack.c.0.s8 %v4706
  %v4708 = vlaneseq
  %v4709 = vshrl.u32 %v4708, 7
  %v4710 = vsub.s32 %v4707, %v4709
  %v4711 = vrot.slane %v4697, %v4710
  %v4712 = vcombine.low %v4344, %v4356
  %v4713 = vcombine.high %v4344, %v4356
  %v4715 = vunpack.c.l.s4 1983009808
  %v4716 = vunpack.c.0.s8 %v4715
  %v4717 = vlaneseq
  %v4718 = vshrl.u32 %v4717, 7
  %v4719 = vsub.s32 %v4716, %v4718
  %v4720 = vrot.slane %v4712, %v4719
  %v4722 = vunpack.c.l.s4 1983009808
  %v4723 = vunpack.c.0.s8 %v4722
  %v4724 = vlaneseq
  %v4725 = vshrl.u32 %v4724, 7
  %v4726 = vsub.s32 %v4723, %v4725
  %v4727 = vrot.slane %v4713, %v4726
  %v4728 = vcombine.low %v4362, %v4374
  %v4729 = vcombine.high %v4362, %v4374
  %v4731 = vunpack.c.l.s4 1983009808
  %v4732 = vunpack.c.0.s8 %v4731
  %v4733 = vlaneseq
  %v4734 = vshrl.u32 %v4733, 7
  %v4735 = vsub.s32 %v4732, %v4734
  %v4736 = vrot.slane %v4728, %v4735
  %v4738 = vunpack.c.l.s4 1983009808
  %v4739 = vunpack.c.0.s8 %v4738
  %v4740 = vlaneseq
  %v4741 = vshrl.u32 %v4740, 7
  %v4742 = vsub.s32 %v4739, %v4741
  %v4743 = vrot.slane %v4729, %v4742
  %v4744 = vcombine.low %v4368, %v4380
  %v4745 = vcombine.high %v4368, %v4380
  %v4747 = vunpack.c.l.s4 1983009808
  %v4748 = vunpack.c.0.s8 %v4747
  %v4749 = vlaneseq
  %v4750 = vshrl.u32 %v4749, 7
  %v4751 = vsub.s32 %v4748, %v4750
  %v4752 = vrot.slane %v4744, %v4751
  %v4754 = vunpack.c.l.s4 1983009808
  %v4755 = vunpack.c.0.s8 %v4754
  %v4756 = vlaneseq
  %v4757 = vshrl.u32 %v4756, 7
  %v4758 = vsub.s32 %v4755, %v4757
  %v4759 = vrot.slane %v4745, %v4758
  %v4760 = vcombine.low %v4704, %v4720
  %v4761 = vcombine.high %v4704, %v4720
  %v4763 = vunpack.c.l.s4 1934713408
  %v4764 = vunpack.c.0.s8 %v4763
  %v4765 = vlaneseq
  %v4766 = vshrl.u32 %v4765, 7
  %v4767 = vsub.s32 %v4764, %v4766
  %v4768 = vrot.slane %v4760, %v4767
  %v4770 = vunpack.c.l.s4 1934713408
  %v4771 = vunpack.c.0.s8 %v4770
  %v4772 = vlaneseq
  %v4773 = vshrl.u32 %v4772, 7
  %v4774 = vsub.s32 %v4771, %v4773
  %v4775 = vrot.slane %v4761, %v4774
  %v4776 = vcombine.low %v4711, %v4727
  %v4777 = vcombine.high %v4711, %v4727
  %v4779 = vunpack.c.l.s4 1934713408
  %v4780 = vunpack.c.0.s8 %v4779
  %v4781 = vlaneseq
  %v4782 = vshrl.u32 %v4781, 7
  %v4783 = vsub.s32 %v4780, %v4782
  %v4784 = vrot.slane %v4776, %v4783
  %v4786 = vunpack.c.l.s4 1934713408
  %v4787 = vunpack.c.0.s8 %v4786
  %v4788 = vlaneseq
  %v4789 = vshrl.u32 %v4788, 7
  %v4790 = vsub.s32 %v4787, %v4789
  %v4791 = vrot.slane %v4777, %v4790
  %v4792 = vcombine.low %v4736, %v4752
  %v4793 = vcombine.high %v4736, %v4752
  %v4795 = vunpack.c.l.s4 1934713408
  %v4796 = vunpack.c.0.s8 %v4795
  %v4797 = vlaneseq
  %v4798 = vshrl.u32 %v4797, 7
  %v4799 = vsub.s32 %v4796, %v4798
  %v4800 = vrot.slane %v4792, %v4799
  %v4802 = vunpack.c.l.s4 1934713408
  %v4803 = vunpack.c.0.s8 %v4802
  %v4804 = vlaneseq
  %v4805 = vshrl.u32 %v4804, 7
  %v4806 = vsub.s32 %v4803, %v4805
  %v4807 = vrot.slane %v4793, %v4806
  %v4808 = vcombine.low %v4743, %v4759
  %v4809 = vcombine.high %v4743, %v4759
  %v4811 = vunpack.c.l.s4 1934713408
  %v4812 = vunpack.c.0.s8 %v4811
  %v4813 = vlaneseq
  %v4814 = vshrl.u32 %v4813, 7
  %v4815 = vsub.s32 %v4812, %v4814
  %v4816 = vrot.slane %v4808, %v4815
  %v4818 = vunpack.c.l.s4 1934713408
  %v4819 = vunpack.c.0.s8 %v4818
  %v4820 = vlaneseq
  %v4821 = vshrl.u32 %v4820, 7
  %v4822 = vsub.s32 %v4819, %v4821
  %v4823 = vrot.slane %v4809, %v4822
  %v4824 = vcombine.low %v4768, %v4800
  %v4825 = vcombine.high %v4768, %v4800
  %v4826 = vcombine.low %v4775, %v4807
  %v4827 = vcombine.high %v4775, %v4807
  %v4828 = vcombine.low %v4784, %v4816
  %v4829 = vcombine.high %v4784, %v4816
  %v4830 = vcombine.low %v4791, %v4823
  %v4831 = vcombine.high %v4791, %v4823
  %v4832 = vcombine.low %v4386, %v4398
  %v4833 = vcombine.high %v4386, %v4398
  %v4835 = vunpack.c.l.s4 1983009808
  %v4836 = vunpack.c.0.s8 %v4835
  %v4837 = vlaneseq
  %v4838 = vshrl.u32 %v4837, 7
  %v4839 = vsub.s32 %v4836, %v4838
  %v4840 = vrot.slane %v4832, %v4839
  %v4842 = vunpack.c.l.s4 1983009808
  %v4843 = vunpack.c.0.s8 %v4842
  %v4844 = vlaneseq
  %v4845 = vshrl.u32 %v4844, 7
  %v4846 = vsub.s32 %v4843, %v4845
  %v4847 = vrot.slane %v4833, %v4846
  %v4848 = vcombine.low %v4392, %v4404
  %v4849 = vcombine.high %v4392, %v4404
  %v4851 = vunpack.c.l.s4 1983009808
  %v4852 = vunpack.c.0.s8 %v4851
  %v4853 = vlaneseq
  %v4854 = vshrl.u32 %v4853, 7
  %v4855 = vsub.s32 %v4852, %v4854
  %v4856 = vrot.slane %v4848, %v4855
  %v4858 = vunpack.c.l.s4 1983009808
  %v4859 = vunpack.c.0.s8 %v4858
  %v4860 = vlaneseq
  %v4861 = vshrl.u32 %v4860, 7
  %v4862 = vsub.s32 %v4859, %v4861
  %v4863 = vrot.slane %v4849, %v4862
  %v4864 = vcombine.low %v4410, %v4422
  %v4865 = vcombine.high %v4410, %v4422
  %v4867 = vunpack.c.l.s4 1983009808
  %v4868 = vunpack.c.0.s8 %v4867
  %v4869 = vlaneseq
  %v4870 = vshrl.u32 %v4869, 7
  %v4871 = vsub.s32 %v4868, %v4870
  %v4872 = vrot.slane %v4864, %v4871
  %v4874 = vunpack.c.l.s4 1983009808
  %v4875 = vunpack.c.0.s8 %v4874
  %v4876 = vlaneseq
  %v4877 = vshrl.u32 %v4876, 7
  %v4878 = vsub.s32 %v4875, %v4877
  %v4879 = vrot.slane %v4865, %v4878
  %v4880 = vcombine.high %v4416, 0.0
  %v4882 = vunpack.c.l.s4 1983009808
  %v4883 = vunpack.c.0.s8 %v4882
  %v4884 = vlaneseq
  %v4885 = vshrl.u32 %v4884, 7
  %v4886 = vsub.s32 %v4883, %v4885
  %v4887 = vrot.slane %v4416, %v4886
  %v4889 = vunpack.c.l.s4 1983009808
  %v4890 = vunpack.c.0.s8 %v4889
  %v4891 = vlaneseq
  %v4892 = vshrl.u32 %v4891, 7
  %v4893 = vsub.s32 %v4890, %v4892
  %v4894 = vrot.slane %v4880, %v4893
  %v4895 = vcombine.low %v4840, %v4856
  %v4896 = vcombine.high %v4840, %v4856
  %v4898 = vunpack.c.l.s4 1934713408
  %v4899 = vunpack.c.0.s8 %v4898
  %v4900 = vlaneseq
  %v4901 = vshrl.u32 %v4900, 7
  %v4902 = vsub.s32 %v4899, %v4901
  %v4903 = vrot.slane %v4895, %v4902
  %v4905 = vunpack.c.l.s4 1934713408
  %v4906 = vunpack.c.0.s8 %v4905
  %v4907 = vlaneseq
  %v4908 = vshrl.u32 %v4907, 7
  %v4909 = vsub.s32 %v4906, %v4908
  %v4910 = vrot.slane %v4896, %v4909
  %v4911 = vcombine.low %v4847, %v4863
  %v4912 = vcombine.high %v4847, %v4863
  %v4914 = vunpack.c.l.s4 1934713408
  %v4915 = vunpack.c.0.s8 %v4914
  %v4916 = vlaneseq
  %v4917 = vshrl.u32 %v4916, 7
  %v4918 = vsub.s32 %v4915, %v4917
  %v4919 = vrot.slane %v4911, %v4918
  %v4921 = vunpack.c.l.s4 1934713408
  %v4922 = vunpack.c.0.s8 %v4921
  %v4923 = vlaneseq
  %v4924 = vshrl.u32 %v4923, 7
  %v4925 = vsub.s32 %v4922, %v4924
  %v4926 = vrot.slane %v4912, %v4925
  %v4927 = vcombine.low %v4872, %v4887
  %v4928 = vcombine.high %v4872, %v4887
  %v4930 = vunpack.c.l.s4 1934713408
  %v4931 = vunpack.c.0.s8 %v4930
  %v4932 = vlaneseq
  %v4933 = vshrl.u32 %v4932, 7
  %v4934 = vsub.s32 %v4931, %v4933
  %v4935 = vrot.slane %v4927, %v4934
  %v4937 = vunpack.c.l.s4 1934713408
  %v4938 = vunpack.c.0.s8 %v4937
  %v4939 = vlaneseq
  %v4940 = vshrl.u32 %v4939, 7
  %v4941 = vsub.s32 %v4938, %v4940
  %v4942 = vrot.slane %v4928, %v4941
  %v4943 = vcombine.low %v4879, %v4894
  %v4944 = vcombine.high %v4879, %v4894
  %v4946 = vunpack.c.l.s4 1934713408
  %v4947 = vunpack.c.0.s8 %v4946
  %v4948 = vlaneseq
  %v4949 = vshrl.u32 %v4948, 7
  %v4950 = vsub.s32 %v4947, %v4949
  %v4951 = vrot.slane %v4943, %v4950
  %v4953 = vunpack.c.l.s4 1934713408
  %v4954 = vunpack.c.0.s8 %v4953
  %v4955 = vlaneseq
  %v4956 = vshrl.u32 %v4955, 7
  %v4957 = vsub.s32 %v4954, %v4956
  %v4958 = vrot.slane %v4944, %v4957
  %v4959 = vcombine.low %v4903, %v4935
  %v4960 = vcombine.high %v4903, %v4935
  %v4961 = vcombine.low %v4910, %v4942
  %v4962 = vcombine.high %v4910, %v4942
  %v4963 = vcombine.low %v4919, %v4951
  %v4964 = vcombine.high %v4919, %v4951
  %v4965 = vcombine.low %v4926, %v4958
  %v4966 = vcombine.high %v4926, %v4958
  %v4967 = vmax.f32 %v4553, 0.0
  %v4968 = vmax.f32 %v4688, 0.0
  %v4969 = vmax.f32 %v4554, 0.0
  %v4970 = vmax.f32 %v4689, 0.0
  %v4971 = vmax.f32 %v4555, 0.0
  %v4972 = vmax.f32 %v4690, 0.0
  %v4973 = vmax.f32 %v4556, 0.0
  %v4974 = vmax.f32 %v4691, 0.0
  %v4975 = vmax.f32 %v4557, 0.0
  %v4976 = vmax.f32 %v4692, 0.0
  %v4977 = vmax.f32 %v4558, 0.0
  %v4978 = vmax.f32 %v4693, 0.0
  %v4979 = vmax.f32 %v4559, 0.0
  %v4980 = vmax.f32 %v4694, 0.0
  %v4981 = vmax.f32 %v4560, 0.0
  %v4982 = vmax.f32 %v4695, 0.0
  %v4983 = vmax.f32 %v4824, 0.0
  %v4984 = vmax.f32 %v4959, 0.0
  %v4985 = vmax.f32 %v4825, 0.0
  %v4986 = vmax.f32 %v4960, 0.0
  %v4987 = vmax.f32 %v4826, 0.0
  %v4988 = vmax.f32 %v4961, 0.0
  %v4989 = vmax.f32 %v4827, 0.0
  %v4990 = vmax.f32 %v4962, 0.0
  %v4991 = vmax.f32 %v4828, 0.0
  %v4992 = vmax.f32 %v4963, 0.0
  %v4993 = vmax.f32 %v4829, 0.0
  %v4994 = vmax.f32 %v4964, 0.0
  %v4995 = vmax.f32 %v4830, 0.0
  %v4996 = vmax.f32 %v4965, 0.0
  %v4997 = vmax.f32 %v4831, 0.0
  %v4998 = vmax.f32 %v4966, 0.0
  %4999 = vst.msk [vmem:[#allocation4] sm:$0xff] %vm1260, %v4967
  %5000 = vst.msk [vmem:[#allocation4 + $0x8] sm:$0x7f] %vm2545, %v4968
  %5001 = vst.msk [vmem:[#allocation4 + $0x10] sm:$0xff] %vm1260, %v4969
  %5002 = vst.msk [vmem:[#allocation4 + $0x18] sm:$0x7f] %vm2545, %v4970
  %5003 = vst.msk [vmem:[#allocation4 + $0x20] sm:$0xff] %vm1260, %v4971
  %5004 = vst.msk [vmem:[#allocation4 + $0x28] sm:$0x7f] %vm2545, %v4972
  %5005 = vst.msk [vmem:[#allocation4 + $0x30] sm:$0xff] %vm1260, %v4973
  %5006 = vst.msk [vmem:[#allocation4 + $0x38] sm:$0x7f] %vm2545, %v4974
  %5007 = vst.msk [vmem:[#allocation4 + $0x40] sm:$0xff] %vm1260, %v4975
  %5008 = vst.msk [vmem:[#allocation4 + $0x48] sm:$0x7f] %vm2545, %v4976
  %5009 = vst.msk [vmem:[#allocation4 + $0x50] sm:$0xff] %vm1260, %v4977
  %5010 = vst.msk [vmem:[#allocation4 + $0x58] sm:$0x7f] %vm2545, %v4978
  %5011 = vst.msk [vmem:[#allocation4 + $0x60] sm:$0xff] %vm1260, %v4979
  %5012 = vst.msk [vmem:[#allocation4 + $0x68] sm:$0x7f] %vm2545, %v4980
  %5013 = vst.msk [vmem:[#allocation4 + $0x70] sm:$0xff] %vm1260, %v4981
  %5014 = vst.msk [vmem:[#allocation4 + $0x78] sm:$0x7f] %vm2545, %v4982
  %5015 = vst.msk [vmem:[#allocation4 + $0x80] sm:$0xff] %vm1260, %v4983
  %5016 = vst.msk [vmem:[#allocation4 + $0x88] sm:$0x7f] %vm2545, %v4984
  %5017 = vst.msk [vmem:[#allocation4 + $0x90] sm:$0xff] %vm1260, %v4985
  %5018 = vst.msk [vmem:[#allocation4 + $0x98] sm:$0x7f] %vm2545, %v4986
  %5019 = vst.msk [vmem:[#allocation4 + $0xa0] sm:$0xff] %vm1260, %v4987
  %5020 = vst.msk [vmem:[#allocation4 + $0xa8] sm:$0x7f] %vm2545, %v4988
  %5021 = vst.msk [vmem:[#allocation4 + $0xb0] sm:$0xff] %vm1260, %v4989
  %5022 = vst.msk [vmem:[#allocation4 + $0xb8] sm:$0x7f] %vm2545, %v4990
  %5023 = vst.msk [vmem:[#allocation4 + $0xc0] sm:$0xff] %vm1260, %v4991
  %5024 = vst.msk [vmem:[#allocation4 + $0xc8] sm:$0x7f] %vm2545, %v4992
  %5025 = vst.msk [vmem:[#allocation4 + $0xd0] sm:$0xff] %vm1260, %v4993
  %5026 = vst.msk [vmem:[#allocation4 + $0xd8] sm:$0x7f] %vm2545, %v4994
  %5027 = vst.msk [vmem:[#allocation4 + $0xe0] sm:$0xff] %vm1260, %v4995
  %5028 = vst.msk [vmem:[#allocation4 + $0xe8] sm:$0x7f] %vm2545, %v4996
  %5029 = vst.msk [vmem:[#allocation4 + $0xf0] sm:$0xff] %vm1260, %v4997
  %5030 = vst.msk [vmem:[#allocation4 + $0xf8] sm:$0x7f] %vm2545, %v4998
  %v5031 = vld [vmem:[#allocation4] ss:$2 sm:$0x7f]
  %s5032 = scalar_lea.vmem [#allocation4], 16
  %v5033 = vld [vmem:[%s5032] ss:$2 sm:$0x7f]
  %s5034 = scalar_lea.vmem [#allocation4], 32
  %v5035 = vld [vmem:[%s5034] ss:$2 sm:$0x7f]
  %s5036 = scalar_lea.vmem [#allocation4], 48
  %v5037 = vld [vmem:[%s5036] ss:$2 sm:$0x7f]
  %s5038 = scalar_lea.vmem [#allocation4], 64
  %v5039 = vld [vmem:[%s5038] ss:$2 sm:$0x7f]
  %s5040 = scalar_lea.vmem [#allocation4], 80
  %v5041 = vld [vmem:[%s5040] ss:$2 sm:$0x7f]
  %s5042 = scalar_lea.vmem [#allocation4], 96
  %v5043 = vld [vmem:[%s5042] ss:$2 sm:$0x7f]
  %s5044 = scalar_lea.vmem [#allocation4], 112
  %v5045 = vld [vmem:[%s5044] ss:$2 sm:$0x7f]
  %s5046 = scalar_lea.vmem [#allocation4], 128
  %v5047 = vld [vmem:[%s5046] ss:$2 sm:$0x7f]
  %s5048 = scalar_lea.vmem [#allocation4], 144
  %v5049 = vld [vmem:[%s5048] ss:$2 sm:$0x7f]
  %s5050 = scalar_lea.vmem [#allocation4], 160
  %v5051 = vld [vmem:[%s5050] ss:$2 sm:$0x7f]
  %s5052 = scalar_lea.vmem [#allocation4], 176
  %v5053 = vld [vmem:[%s5052] ss:$2 sm:$0x7f]
  %s5054 = scalar_lea.vmem [#allocation4], 192
  %v5055 = vld [vmem:[%s5054] ss:$2 sm:$0x7f]
  %s5056 = scalar_lea.vmem [#allocation4], 208
  %v5057 = vld [vmem:[%s5056] ss:$2 sm:$0x7f]
  %s5058 = scalar_lea.vmem [#allocation4], 224
  %v5059 = vld [vmem:[%s5058] ss:$2 sm:$0x7f]
  %s5060 = scalar_lea.vmem [#allocation4], 240
  %v5061 = vld [vmem:[%s5060] ss:$2 sm:$0x7f]
  %s5062 = scalar_lea.vmem [#allocation4], 1
  %v5063 = vld [vmem:[%s5062] ss:$2 sm:$0x7f]
  %s5064 = scalar_lea.vmem [#allocation4], 17
  %v5065 = vld [vmem:[%s5064] ss:$2 sm:$0x7f]
  %s5066 = scalar_lea.vmem [#allocation4], 33
  %v5067 = vld [vmem:[%s5066] ss:$2 sm:$0x7f]
  %s5068 = scalar_lea.vmem [#allocation4], 49
  %v5069 = vld [vmem:[%s5068] ss:$2 sm:$0x7f]
  %s5070 = scalar_lea.vmem [#allocation4], 65
  %v5071 = vld [vmem:[%s5070] ss:$2 sm:$0x7f]
  %s5072 = scalar_lea.vmem [#allocation4], 81
  %v5073 = vld [vmem:[%s5072] ss:$2 sm:$0x7f]
  %s5074 = scalar_lea.vmem [#allocation4], 97
  %v5075 = vld [vmem:[%s5074] ss:$2 sm:$0x7f]
  %s5076 = scalar_lea.vmem [#allocation4], 113
  %v5077 = vld [vmem:[%s5076] ss:$2 sm:$0x7f]
  %s5078 = scalar_lea.vmem [#allocation4], 129
  %v5079 = vld [vmem:[%s5078] ss:$2 sm:$0x7f]
  %s5080 = scalar_lea.vmem [#allocation4], 145
  %v5081 = vld [vmem:[%s5080] ss:$2 sm:$0x7f]
  %s5082 = scalar_lea.vmem [#allocation4], 161
  %v5083 = vld [vmem:[%s5082] ss:$2 sm:$0x7f]
  %s5084 = scalar_lea.vmem [#allocation4], 177
  %v5085 = vld [vmem:[%s5084] ss:$2 sm:$0x7f]
  %s5086 = scalar_lea.vmem [#allocation4], 193
  %v5087 = vld [vmem:[%s5086] ss:$2 sm:$0x7f]
  %s5088 = scalar_lea.vmem [#allocation4], 209
  %v5089 = vld [vmem:[%s5088] ss:$2 sm:$0x7f]
  %s5090 = scalar_lea.vmem [#allocation4], 225
  %v5091 = vld [vmem:[%s5090] ss:$2 sm:$0x7f]
  %s5092 = scalar_lea.vmem [#allocation4], 241
  %v5093 = vld [vmem:[%s5092] ss:$2 sm:$0x7f]
  %s5094 = scalar_lea.vmem [#allocation4], 2
  %v5095 = vld [vmem:[%s5094] ss:$2 sm:$0x7f]
  %s5096 = scalar_lea.vmem [#allocation4], 18
  %v5097 = vld [vmem:[%s5096] ss:$2 sm:$0x7f]
  %s5098 = scalar_lea.vmem [#allocation4], 34
  %v5099 = vld [vmem:[%s5098] ss:$2 sm:$0x7f]
  %s5100 = scalar_lea.vmem [#allocation4], 50
  %v5101 = vld [vmem:[%s5100] ss:$2 sm:$0x7f]
  %s5102 = scalar_lea.vmem [#allocation4], 66
  %v5103 = vld [vmem:[%s5102] ss:$2 sm:$0x7f]
  %s5104 = scalar_lea.vmem [#allocation4], 82
  %v5105 = vld [vmem:[%s5104] ss:$2 sm:$0x7f]
  %s5106 = scalar_lea.vmem [#allocation4], 98
  %v5107 = vld [vmem:[%s5106] ss:$2 sm:$0x7f]
  %s5108 = scalar_lea.vmem [#allocation4], 114
  %v5109 = vld [vmem:[%s5108] ss:$2 sm:$0x7f]
  %s5110 = scalar_lea.vmem [#allocation4], 130
  %v5111 = vld [vmem:[%s5110] ss:$2 sm:$0x7f]
  %s5112 = scalar_lea.vmem [#allocation4], 146
  %v5113 = vld [vmem:[%s5112] ss:$2 sm:$0x7f]
  %s5114 = scalar_lea.vmem [#allocation4], 162
  %v5115 = vld [vmem:[%s5114] ss:$2 sm:$0x7f]
  %s5116 = scalar_lea.vmem [#allocation4], 178
  %v5117 = vld [vmem:[%s5116] ss:$2 sm:$0x7f]
  %s5118 = scalar_lea.vmem [#allocation4], 194
  %v5119 = vld [vmem:[%s5118] ss:$2 sm:$0x7f]
  %s5120 = scalar_lea.vmem [#allocation4], 210
  %v5121 = vld [vmem:[%s5120] ss:$2 sm:$0x7f]
  %s5122 = scalar_lea.vmem [#allocation4], 226
  %v5123 = vld [vmem:[%s5122] ss:$2 sm:$0x7f]
  %s5124 = scalar_lea.vmem [#allocation4], 242
  %v5125 = vld [vmem:[%s5124] ss:$2 sm:$0x7f]
  %v5126 = vmax.f32 %v5031, %v5063
  %v5127 = vmax.f32 %v5033, %v5065
  %v5128 = vmax.f32 %v5035, %v5067
  %v5129 = vmax.f32 %v5037, %v5069
  %v5130 = vmax.f32 %v5039, %v5071
  %v5131 = vmax.f32 %v5041, %v5073
  %v5132 = vmax.f32 %v5043, %v5075
  %v5133 = vmax.f32 %v5045, %v5077
  %v5134 = vmax.f32 %v5047, %v5079
  %v5135 = vmax.f32 %v5049, %v5081
  %v5136 = vmax.f32 %v5051, %v5083
  %v5137 = vmax.f32 %v5053, %v5085
  %v5138 = vmax.f32 %v5055, %v5087
  %v5139 = vmax.f32 %v5057, %v5089
  %v5140 = vmax.f32 %v5059, %v5091
  %v5141 = vmax.f32 %v5061, %v5093
  %v5142 = vmax.f32 %v5126, %v5095
  %v5143 = vmax.f32 %v5127, %v5097
  %v5144 = vmax.f32 %v5128, %v5099
  %v5145 = vmax.f32 %v5129, %v5101
  %v5146 = vmax.f32 %v5130, %v5103
  %v5147 = vmax.f32 %v5131, %v5105
  %v5148 = vmax.f32 %v5132, %v5107
  %v5149 = vmax.f32 %v5133, %v5109
  %v5150 = vmax.f32 %v5134, %v5111
  %v5151 = vmax.f32 %v5135, %v5113
  %v5152 = vmax.f32 %v5136, %v5115
  %v5153 = vmax.f32 %v5137, %v5117
  %v5154 = vmax.f32 %v5138, %v5119
  %v5155 = vmax.f32 %v5139, %v5121
  %v5156 = vmax.f32 %v5140, %v5123
  %v5157 = vmax.f32 %v5141, %v5125
  %5158 = vst.msk [vmem:[#allocation5] sm:$0x1] %vm2527, 0.0
  %5159 = vst.msk [vmem:[#allocation5 + $0x10] sm:$0x1] %vm2527, 0.0
  %5160 = vst.msk [vmem:[#allocation5 + $0x20] sm:$0x1] %vm2527, 0.0
  %5161 = vst.msk [vmem:[#allocation5 + $0x30] sm:$0x1] %vm2527, 0.0
  %5162 = vst.msk [vmem:[#allocation5 + $0x40] sm:$0x1] %vm2527, 0.0
  %5163 = vst.msk [vmem:[#allocation5 + $0x50] sm:$0x1] %vm2527, 0.0
  %5164 = vst.msk [vmem:[#allocation5 + $0x60] sm:$0x1] %vm2527, 0.0
  %5165 = vst.msk [vmem:[#allocation5 + $0x70] sm:$0x1] %vm2527, 0.0
  %5166 = vst.msk [vmem:[#allocation5 + $0x80] sm:$0x1] %vm2527, 0.0
  %5167 = vst.msk [vmem:[#allocation5 + $0x90] sm:$0x1] %vm2527, 0.0
  %5168 = vst.msk [vmem:[#allocation5 + $0xa0] sm:$0x1] %vm2527, 0.0
  %5169 = vst.msk [vmem:[#allocation5 + $0xb0] sm:$0x1] %vm2527, 0.0
  %5170 = vst.msk [vmem:[#allocation5 + $0xc0] sm:$0x1] %vm2527, 0.0
  %5171 = vst.msk [vmem:[#allocation5 + $0xd0] sm:$0x1] %vm2527, 0.0
  %5172 = vst.msk [vmem:[#allocation5 + $0xe0] sm:$0x1] %vm2527, 0.0
  %5173 = vst.msk [vmem:[#allocation5 + $0xf0] sm:$0x1] %vm2527, 0.0
  %5174 = vst.msk [vmem:[#allocation5 + $0x8] sm:$0x1] %vm2527, 0.0
  %5175 = vst.msk [vmem:[#allocation5 + $0x18] sm:$0x1] %vm2527, 0.0
  %5176 = vst.msk [vmem:[#allocation5 + $0x28] sm:$0x1] %vm2527, 0.0
  %5177 = vst.msk [vmem:[#allocation5 + $0x38] sm:$0x1] %vm2527, 0.0
  %5178 = vst.msk [vmem:[#allocation5 + $0x48] sm:$0x1] %vm2527, 0.0
  %5179 = vst.msk [vmem:[#allocation5 + $0x58] sm:$0x1] %vm2527, 0.0
  %5180 = vst.msk [vmem:[#allocation5 + $0x68] sm:$0x1] %vm2527, 0.0
  %5181 = vst.msk [vmem:[#allocation5 + $0x78] sm:$0x1] %vm2527, 0.0
  %5182 = vst.msk [vmem:[#allocation5 + $0x88] sm:$0x1] %vm2527, 0.0
  %5183 = vst.msk [vmem:[#allocation5 + $0x98] sm:$0x1] %vm2527, 0.0
  %5184 = vst.msk [vmem:[#allocation5 + $0xa8] sm:$0x1] %vm2527, 0.0
  %5185 = vst.msk [vmem:[#allocation5 + $0xb8] sm:$0x1] %vm2527, 0.0
  %5186 = vst.msk [vmem:[#allocation5 + $0xc8] sm:$0x1] %vm2527, 0.0
  %5187 = vst.msk [vmem:[#allocation5 + $0xd8] sm:$0x1] %vm2527, 0.0
  %5188 = vst.msk [vmem:[#allocation5 + $0xe8] sm:$0x1] %vm2527, 0.0
  %5189 = vst.msk [vmem:[#allocation5 + $0xf8] sm:$0x1] %vm2527, 0.0
  %5190 = vst.msk [vmem:[#allocation5 + $0x1] sm:$0x7f] %vm2545, %v5142
  %5191 = vst.msk [vmem:[#allocation5 + $0x11] sm:$0x7f] %vm2545, %v5143
  %5192 = vst.msk [vmem:[#allocation5 + $0x21] sm:$0x7f] %vm2545, %v5144
  %5193 = vst.msk [vmem:[#allocation5 + $0x31] sm:$0x7f] %vm2545, %v5145
  %5194 = vst.msk [vmem:[#allocation5 + $0x41] sm:$0x7f] %vm2545, %v5146
  %5195 = vst.msk [vmem:[#allocation5 + $0x51] sm:$0x7f] %vm2545, %v5147
  %5196 = vst.msk [vmem:[#allocation5 + $0x61] sm:$0x7f] %vm2545, %v5148
  %5197 = vst.msk [vmem:[#allocation5 + $0x71] sm:$0x7f] %vm2545, %v5149
  %5198 = vst.msk [vmem:[#allocation5 + $0x81] sm:$0x7f] %vm2545, %v5150
  %5199 = vst.msk [vmem:[#allocation5 + $0x91] sm:$0x7f] %vm2545, %v5151
  %5200 = vst.msk [vmem:[#allocation5 + $0xa1] sm:$0x7f] %vm2545, %v5152
  %5201 = vst.msk [vmem:[#allocation5 + $0xb1] sm:$0x7f] %vm2545, %v5153
  %5202 = vst.msk [vmem:[#allocation5 + $0xc1] sm:$0x7f] %vm2545, %v5154
  %5203 = vst.msk [vmem:[#allocation5 + $0xd1] sm:$0x7f] %vm2545, %v5155
  %5204 = vst.msk [vmem:[#allocation5 + $0xe1] sm:$0x7f] %vm2545, %v5156
  %5205 = vst.msk [vmem:[#allocation5 + $0xf1] sm:$0x7f] %vm2545, %v5157
  %v5206 = vld [vmem:[#allocation5] sm:$0x7f]
  %v5207 = vld [vmem:[#allocation5 + $0x10] sm:$0x7f]
  %v5208 = vld [vmem:[#allocation5 + $0x20] sm:$0x7f]
  %v5209 = vld [vmem:[#allocation5 + $0x30] sm:$0x7f]
  %v5210 = vld [vmem:[#allocation5 + $0x40] sm:$0x7f]
  %v5211 = vld [vmem:[#allocation5 + $0x50] sm:$0x7f]
  %v5212 = vld [vmem:[#allocation5 + $0x60] sm:$0x7f]
  %v5213 = vld [vmem:[#allocation5 + $0x70] sm:$0x7f]
  %v5214 = vld [vmem:[#allocation5 + $0x80] sm:$0x7f]
  %v5215 = vld [vmem:[#allocation5 + $0x90] sm:$0x7f]
  %v5216 = vld [vmem:[#allocation5 + $0xa0] sm:$0x7f]
  %v5217 = vld [vmem:[#allocation5 + $0xb0] sm:$0x7f]
  %v5218 = vld [vmem:[#allocation5 + $0xc0] sm:$0x7f]
  %v5219 = vld [vmem:[#allocation5 + $0xd0] sm:$0x7f]
  %v5220 = vld [vmem:[#allocation5 + $0xe0] sm:$0x7f]
  %v5221 = vld [vmem:[#allocation5 + $0xf0] sm:$0x7f]
  %v5222 = vld [vmem:[#allocation5 + $0x1] sm:$0x7f]
  %v5223 = vld [vmem:[#allocation5 + $0x11] sm:$0x7f]
  %v5224 = vld [vmem:[#allocation5 + $0x21] sm:$0x7f]
  %v5225 = vld [vmem:[#allocation5 + $0x31] sm:$0x7f]
  %v5226 = vld [vmem:[#allocation5 + $0x41] sm:$0x7f]
  %v5227 = vld [vmem:[#allocation5 + $0x51] sm:$0x7f]
  %v5228 = vld [vmem:[#allocation5 + $0x61] sm:$0x7f]
  %v5229 = vld [vmem:[#allocation5 + $0x71] sm:$0x7f]
  %v5230 = vld [vmem:[#allocation5 + $0x81] sm:$0x7f]
  %v5231 = vld [vmem:[#allocation5 + $0x91] sm:$0x7f]
  %v5232 = vld [vmem:[#allocation5 + $0xa1] sm:$0x7f]
  %v5233 = vld [vmem:[#allocation5 + $0xb1] sm:$0x7f]
  %v5234 = vld [vmem:[#allocation5 + $0xc1] sm:$0x7f]
  %v5235 = vld [vmem:[#allocation5 + $0xd1] sm:$0x7f]
  %v5236 = vld [vmem:[#allocation5 + $0xe1] sm:$0x7f]
  %v5237 = vld [vmem:[#allocation5 + $0xf1] sm:$0x7f]
  %v5238 = vld [vmem:[#allocation5 + $0x2] sm:$0x7f]
  %v5239 = vld [vmem:[#allocation5 + $0x12] sm:$0x7f]
  %v5240 = vld [vmem:[#allocation5 + $0x22] sm:$0x7f]
  %v5241 = vld [vmem:[#allocation5 + $0x32] sm:$0x7f]
  %v5242 = vld [vmem:[#allocation5 + $0x42] sm:$0x7f]
  %v5243 = vld [vmem:[#allocation5 + $0x52] sm:$0x7f]
  %v5244 = vld [vmem:[#allocation5 + $0x62] sm:$0x7f]
  %v5245 = vld [vmem:[#allocation5 + $0x72] sm:$0x7f]
  %v5246 = vld [vmem:[#allocation5 + $0x82] sm:$0x7f]
  %v5247 = vld [vmem:[#allocation5 + $0x92] sm:$0x7f]
  %v5248 = vld [vmem:[#allocation5 + $0xa2] sm:$0x7f]
  %v5249 = vld [vmem:[#allocation5 + $0xb2] sm:$0x7f]
  %v5250 = vld [vmem:[#allocation5 + $0xc2] sm:$0x7f]
  %v5251 = vld [vmem:[#allocation5 + $0xd2] sm:$0x7f]
  %v5252 = vld [vmem:[#allocation5 + $0xe2] sm:$0x7f]
  %v5253 = vld [vmem:[#allocation5 + $0xf2] sm:$0x7f]
  %v5254 = vld [vmem:[%s5] sm:$0xff]
  %v5255 = vld [vmem:[%s5 + $0x8] sm:$0xff]
  %v5256 = vld [vmem:[%s5 + $0x10] sm:$0xff]
  %v5257 = vld [vmem:[%s5 + $0x18] sm:$0xff]
  %v5258 = vld [vmem:[%s6] sm:$0xff]
  %v5259 = vld [vmem:[%s6 + $0x8] sm:$0xff]
  %v5260 = vld [vmem:[%s6 + $0x10] sm:$0xff]
  %v5261 = vld [vmem:[%s6 + $0x18] sm:$0xff]
  %v5266 = vcombine.high %v5258, %v5258
  %v5268 = vunpack.c.l.s4 1966171168
  %v5269 = vunpack.c.0.s8 %v5268
  %v5270 = vlaneseq
  %v5271 = vshrl.u32 %v5270, 7
  %v5272 = vsub.s32 %v5269, %v5271
  %v5273 = vrot.slane %v5258, %v5272
  %v5275 = vunpack.c.l.s4 1966171168
  %v5276 = vunpack.c.0.s8 %v5275
  %v5277 = vlaneseq
  %v5278 = vshrl.u32 %v5277, 7
  %v5279 = vsub.s32 %v5276, %v5278
  %v5280 = vrot.slane %v5266, %v5279
  %v5281 = vcombine.high %v5273, %v5273
  %v5282 = vcombine.high %v5280, %v5280
  %v5284 = vunpack.c.l.s4 1966171168
  %v5285 = vunpack.c.0.s8 %v5284
  %v5286 = vlaneseq
  %v5287 = vshrl.u32 %v5286, 7
  %v5288 = vsub.s32 %v5285, %v5287
  %v5289 = vrot.slane %v5273, %v5288
  %v5291 = vunpack.c.l.s4 1966171168
  %v5292 = vunpack.c.0.s8 %v5291
  %v5293 = vlaneseq
  %v5294 = vshrl.u32 %v5293, 7
  %v5295 = vsub.s32 %v5292, %v5294
  %v5296 = vrot.slane %v5280, %v5295
  %v5298 = vunpack.c.l.s4 1966171168
  %v5299 = vunpack.c.0.s8 %v5298
  %v5300 = vlaneseq
  %v5301 = vshrl.u32 %v5300, 7
  %v5302 = vsub.s32 %v5299, %v5301
  %v5303 = vrot.slane %v5281, %v5302
  %v5305 = vunpack.c.l.s4 1966171168
  %v5306 = vunpack.c.0.s8 %v5305
  %v5307 = vlaneseq
  %v5308 = vshrl.u32 %v5307, 7
  %v5309 = vsub.s32 %v5306, %v5308
  %v5310 = vrot.slane %v5282, %v5309
  %v5311 = vcombine.high %v5289, %v5289
  %v5312 = vcombine.high %v5296, %v5296
  %v5313 = vcombine.high %v5303, %v5303
  %v5314 = vcombine.high %v5310, %v5310
  %v5315 = vcombine.high %v5259, %v5259
  %v5317 = vunpack.c.l.s4 1966171168
  %v5318 = vunpack.c.0.s8 %v5317
  %v5319 = vlaneseq
  %v5320 = vshrl.u32 %v5319, 7
  %v5321 = vsub.s32 %v5318, %v5320
  %v5322 = vrot.slane %v5259, %v5321
  %v5324 = vunpack.c.l.s4 1966171168
  %v5325 = vunpack.c.0.s8 %v5324
  %v5326 = vlaneseq
  %v5327 = vshrl.u32 %v5326, 7
  %v5328 = vsub.s32 %v5325, %v5327
  %v5329 = vrot.slane %v5315, %v5328
  %v5330 = vcombine.high %v5322, %v5322
  %v5331 = vcombine.high %v5329, %v5329
  %v5333 = vunpack.c.l.s4 1966171168
  %v5334 = vunpack.c.0.s8 %v5333
  %v5335 = vlaneseq
  %v5336 = vshrl.u32 %v5335, 7
  %v5337 = vsub.s32 %v5334, %v5336
  %v5338 = vrot.slane %v5322, %v5337
  %v5340 = vunpack.c.l.s4 1966171168
  %v5341 = vunpack.c.0.s8 %v5340
  %v5342 = vlaneseq
  %v5343 = vshrl.u32 %v5342, 7
  %v5344 = vsub.s32 %v5341, %v5343
  %v5345 = vrot.slane %v5329, %v5344
  %v5347 = vunpack.c.l.s4 1966171168
  %v5348 = vunpack.c.0.s8 %v5347
  %v5349 = vlaneseq
  %v5350 = vshrl.u32 %v5349, 7
  %v5351 = vsub.s32 %v5348, %v5350
  %v5352 = vrot.slane %v5330, %v5351
  %v5354 = vunpack.c.l.s4 1966171168
  %v5355 = vunpack.c.0.s8 %v5354
  %v5356 = vlaneseq
  %v5357 = vshrl.u32 %v5356, 7
  %v5358 = vsub.s32 %v5355, %v5357
  %v5359 = vrot.slane %v5331, %v5358
  %v5360 = vcombine.high %v5338, %v5338
  %v5361 = vcombine.high %v5345, %v5345
  %v5362 = vcombine.high %v5352, %v5352
  %v5363 = vcombine.high %v5359, %v5359
  %v5364 = vcombine.high %v5260, %v5260
  %v5366 = vunpack.c.l.s4 1966171168
  %v5367 = vunpack.c.0.s8 %v5366
  %v5368 = vlaneseq
  %v5369 = vshrl.u32 %v5368, 7
  %v5370 = vsub.s32 %v5367, %v5369
  %v5371 = vrot.slane %v5260, %v5370
  %v5373 = vunpack.c.l.s4 1966171168
  %v5374 = vunpack.c.0.s8 %v5373
  %v5375 = vlaneseq
  %v5376 = vshrl.u32 %v5375, 7
  %v5377 = vsub.s32 %v5374, %v5376
  %v5378 = vrot.slane %v5364, %v5377
  %v5379 = vcombine.high %v5371, %v5371
  %v5380 = vcombine.high %v5378, %v5378
  %v5382 = vunpack.c.l.s4 1966171168
  %v5383 = vunpack.c.0.s8 %v5382
  %v5384 = vlaneseq
  %v5385 = vshrl.u32 %v5384, 7
  %v5386 = vsub.s32 %v5383, %v5385
  %v5387 = vrot.slane %v5371, %v5386
  %v5389 = vunpack.c.l.s4 1966171168
  %v5390 = vunpack.c.0.s8 %v5389
  %v5391 = vlaneseq
  %v5392 = vshrl.u32 %v5391, 7
  %v5393 = vsub.s32 %v5390, %v5392
  %v5394 = vrot.slane %v5378, %v5393
  %v5396 = vunpack.c.l.s4 1966171168
  %v5397 = vunpack.c.0.s8 %v5396
  %v5398 = vlaneseq
  %v5399 = vshrl.u32 %v5398, 7
  %v5400 = vsub.s32 %v5397, %v5399
  %v5401 = vrot.slane %v5379, %v5400
  %v5403 = vunpack.c.l.s4 1966171168
  %v5404 = vunpack.c.0.s8 %v5403
  %v5405 = vlaneseq
  %v5406 = vshrl.u32 %v5405, 7
  %v5407 = vsub.s32 %v5404, %v5406
  %v5408 = vrot.slane %v5380, %v5407
  %v5409 = vcombine.high %v5387, %v5387
  %v5410 = vcombine.high %v5394, %v5394
  %v5411 = vcombine.high %v5401, %v5401
  %v5412 = vcombine.high %v5408, %v5408
  %v5413 = vcombine.high %v5261, %v5261
  %v5415 = vunpack.c.l.s4 1966171168
  %v5416 = vunpack.c.0.s8 %v5415
  %v5417 = vlaneseq
  %v5418 = vshrl.u32 %v5417, 7
  %v5419 = vsub.s32 %v5416, %v5418
  %v5420 = vrot.slane %v5261, %v5419
  %v5422 = vunpack.c.l.s4 1966171168
  %v5423 = vunpack.c.0.s8 %v5422
  %v5424 = vlaneseq
  %v5425 = vshrl.u32 %v5424, 7
  %v5426 = vsub.s32 %v5423, %v5425
  %v5427 = vrot.slane %v5413, %v5426
  %v5428 = vcombine.high %v5420, %v5420
  %v5429 = vcombine.high %v5427, %v5427
  %v5431 = vunpack.c.l.s4 1966171168
  %v5432 = vunpack.c.0.s8 %v5431
  %v5433 = vlaneseq
  %v5434 = vshrl.u32 %v5433, 7
  %v5435 = vsub.s32 %v5432, %v5434
  %v5436 = vrot.slane %v5420, %v5435
  %v5438 = vunpack.c.l.s4 1966171168
  %v5439 = vunpack.c.0.s8 %v5438
  %v5440 = vlaneseq
  %v5441 = vshrl.u32 %v5440, 7
  %v5442 = vsub.s32 %v5439, %v5441
  %v5443 = vrot.slane %v5427, %v5442
  %v5445 = vunpack.c.l.s4 1966171168
  %v5446 = vunpack.c.0.s8 %v5445
  %v5447 = vlaneseq
  %v5448 = vshrl.u32 %v5447, 7
  %v5449 = vsub.s32 %v5446, %v5448
  %v5450 = vrot.slane %v5428, %v5449
  %v5452 = vunpack.c.l.s4 1966171168
  %v5453 = vunpack.c.0.s8 %v5452
  %v5454 = vlaneseq
  %v5455 = vshrl.u32 %v5454, 7
  %v5456 = vsub.s32 %v5453, %v5455
  %v5457 = vrot.slane %v5429, %v5456
  %v5458 = vcombine.high %v5436, %v5436
  %v5459 = vcombine.high %v5443, %v5443
  %v5460 = vcombine.high %v5450, %v5450
  %v5461 = vcombine.high %v5457, %v5457
  %v5462 = vlaneseq
  %v5463 = vshrl.u32 %v5462, 7
  %v5464 = vsub.s32 0, %v5463
  %v5465 = vrot.slane %v5289, %v5464
  %v5466 = vlaneseq
  %v5467 = vshrl.u32 %v5466, 7
  %v5468 = vsub.s32 0, %v5467
  %v5469 = vrot.slane %v5303, %v5468
  %v5470 = vlaneseq
  %v5471 = vshrl.u32 %v5470, 7
  %v5472 = vsub.s32 0, %v5471
  %v5473 = vrot.slane %v5311, %v5472
  %v5474 = vlaneseq
  %v5475 = vshrl.u32 %v5474, 7
  %v5476 = vsub.s32 0, %v5475
  %v5477 = vrot.slane %v5313, %v5476
  %v5478 = vlaneseq
  %v5479 = vshrl.u32 %v5478, 7
  %v5480 = vsub.s32 0, %v5479
  %v5481 = vrot.slane %v5296, %v5480
  %v5482 = vlaneseq
  %v5483 = vshrl.u32 %v5482, 7
  %v5484 = vsub.s32 0, %v5483
  %v5485 = vrot.slane %v5310, %v5484
  %v5486 = vlaneseq
  %v5487 = vshrl.u32 %v5486, 7
  %v5488 = vsub.s32 0, %v5487
  %v5489 = vrot.slane %v5312, %v5488
  %v5490 = vlaneseq
  %v5491 = vshrl.u32 %v5490, 7
  %v5492 = vsub.s32 0, %v5491
  %v5493 = vrot.slane %v5314, %v5492
  %v5494 = vlaneseq
  %v5495 = vshrl.u32 %v5494, 7
  %v5496 = vsub.s32 0, %v5495
  %v5497 = vrot.slane %v5338, %v5496
  %v5498 = vlaneseq
  %v5499 = vshrl.u32 %v5498, 7
  %v5500 = vsub.s32 0, %v5499
  %v5501 = vrot.slane %v5352, %v5500
  %v5502 = vlaneseq
  %v5503 = vshrl.u32 %v5502, 7
  %v5504 = vsub.s32 0, %v5503
  %v5505 = vrot.slane %v5360, %v5504
  %v5506 = vlaneseq
  %v5507 = vshrl.u32 %v5506, 7
  %v5508 = vsub.s32 0, %v5507
  %v5509 = vrot.slane %v5362, %v5508
  %v5510 = vlaneseq
  %v5511 = vshrl.u32 %v5510, 7
  %v5512 = vsub.s32 0, %v5511
  %v5513 = vrot.slane %v5345, %v5512
  %v5514 = vlaneseq
  %v5515 = vshrl.u32 %v5514, 7
  %v5516 = vsub.s32 0, %v5515
  %v5517 = vrot.slane %v5359, %v5516
  %v5518 = vlaneseq
  %v5519 = vshrl.u32 %v5518, 7
  %v5520 = vsub.s32 0, %v5519
  %v5521 = vrot.slane %v5361, %v5520
  %v5522 = vlaneseq
  %v5523 = vshrl.u32 %v5522, 7
  %v5524 = vsub.s32 0, %v5523
  %v5525 = vrot.slane %v5363, %v5524
  %v5526 = vlaneseq
  %v5527 = vshrl.u32 %v5526, 7
  %v5528 = vsub.s32 0, %v5527
  %v5529 = vrot.slane %v5387, %v5528
  %v5530 = vlaneseq
  %v5531 = vshrl.u32 %v5530, 7
  %v5532 = vsub.s32 0, %v5531
  %v5533 = vrot.slane %v5401, %v5532
  %v5534 = vlaneseq
  %v5535 = vshrl.u32 %v5534, 7
  %v5536 = vsub.s32 0, %v5535
  %v5537 = vrot.slane %v5409, %v5536
  %v5538 = vlaneseq
  %v5539 = vshrl.u32 %v5538, 7
  %v5540 = vsub.s32 0, %v5539
  %v5541 = vrot.slane %v5411, %v5540
  %v5542 = vlaneseq
  %v5543 = vshrl.u32 %v5542, 7
  %v5544 = vsub.s32 0, %v5543
  %v5545 = vrot.slane %v5394, %v5544
  %v5546 = vlaneseq
  %v5547 = vshrl.u32 %v5546, 7
  %v5548 = vsub.s32 0, %v5547
  %v5549 = vrot.slane %v5408, %v5548
  %v5550 = vlaneseq
  %v5551 = vshrl.u32 %v5550, 7
  %v5552 = vsub.s32 0, %v5551
  %v5553 = vrot.slane %v5410, %v5552
  %v5554 = vlaneseq
  %v5555 = vshrl.u32 %v5554, 7
  %v5556 = vsub.s32 0, %v5555
  %v5557 = vrot.slane %v5412, %v5556
  %v5558 = vlaneseq
  %v5559 = vshrl.u32 %v5558, 7
  %v5560 = vsub.s32 0, %v5559
  %v5561 = vrot.slane %v5436, %v5560
  %v5562 = vlaneseq
  %v5563 = vshrl.u32 %v5562, 7
  %v5564 = vsub.s32 0, %v5563
  %v5565 = vrot.slane %v5450, %v5564
  %v5566 = vlaneseq
  %v5567 = vshrl.u32 %v5566, 7
  %v5568 = vsub.s32 0, %v5567
  %v5569 = vrot.slane %v5458, %v5568
  %v5570 = vlaneseq
  %v5571 = vshrl.u32 %v5570, 7
  %v5572 = vsub.s32 0, %v5571
  %v5573 = vrot.slane %v5460, %v5572
  %v5574 = vlaneseq
  %v5575 = vshrl.u32 %v5574, 7
  %v5576 = vsub.s32 0, %v5575
  %v5577 = vrot.slane %v5443, %v5576
  %v5578 = vlaneseq
  %v5579 = vshrl.u32 %v5578, 7
  %v5580 = vsub.s32 0, %v5579
  %v5581 = vrot.slane %v5457, %v5580
  %v5582 = vlaneseq
  %v5583 = vshrl.u32 %v5582, 7
  %v5584 = vsub.s32 0, %v5583
  %v5585 = vrot.slane %v5459, %v5584
  %v5586 = vlaneseq
  %v5587 = vshrl.u32 %v5586, 7
  %v5588 = vsub.s32 0, %v5587
  %v5589 = vrot.slane %v5461, %v5588
  %5590 = vset.pattern.permute.xlu0 0
  %5591 = vperm.xlu0 %5590, %v5465
  %v5592 = vpop.permute.xlu0 %5591
  %5594 = vset.pattern.permute.xlu0 0
  %5595 = vperm.xlu0 %5594, %v5469
  %v5596 = vpop.permute.xlu0 %5595
  %5598 = vset.pattern.permute.xlu0 0
  %5599 = vperm.xlu0 %5598, %v5473
  %v5600 = vpop.permute.xlu0 %5599
  %5602 = vset.pattern.permute.xlu0 0
  %5603 = vperm.xlu0 %5602, %v5477
  %v5604 = vpop.permute.xlu0 %5603
  %5606 = vset.pattern.permute.xlu0 0
  %5607 = vperm.xlu0 %5606, %v5481
  %v5608 = vpop.permute.xlu0 %5607
  %5610 = vset.pattern.permute.xlu0 0
  %5611 = vperm.xlu0 %5610, %v5485
  %v5612 = vpop.permute.xlu0 %5611
  %5614 = vset.pattern.permute.xlu0 0
  %5615 = vperm.xlu0 %5614, %v5489
  %v5616 = vpop.permute.xlu0 %5615
  %5618 = vset.pattern.permute.xlu0 0
  %5619 = vperm.xlu0 %5618, %v5493
  %v5620 = vpop.permute.xlu0 %5619
  %5622 = vset.pattern.permute.xlu0 0
  %5623 = vperm.xlu0 %5622, %v5497
  %v5624 = vpop.permute.xlu0 %5623
  %5626 = vset.pattern.permute.xlu0 0
  %5627 = vperm.xlu0 %5626, %v5501
  %v5628 = vpop.permute.xlu0 %5627
  %5630 = vset.pattern.permute.xlu0 0
  %5631 = vperm.xlu0 %5630, %v5505
  %v5632 = vpop.permute.xlu0 %5631
  %5634 = vset.pattern.permute.xlu0 0
  %5635 = vperm.xlu0 %5634, %v5509
  %v5636 = vpop.permute.xlu0 %5635
  %5638 = vset.pattern.permute.xlu0 0
  %5639 = vperm.xlu0 %5638, %v5513
  %v5640 = vpop.permute.xlu0 %5639
  %5642 = vset.pattern.permute.xlu0 0
  %5643 = vperm.xlu0 %5642, %v5517
  %v5644 = vpop.permute.xlu0 %5643
  %5646 = vset.pattern.permute.xlu0 0
  %5647 = vperm.xlu0 %5646, %v5521
  %v5648 = vpop.permute.xlu0 %5647
  %5650 = vset.pattern.permute.xlu0 0
  %5651 = vperm.xlu0 %5650, %v5525
  %v5652 = vpop.permute.xlu0 %5651
  %5654 = vset.pattern.permute.xlu0 0
  %5655 = vperm.xlu0 %5654, %v5529
  %v5656 = vpop.permute.xlu0 %5655
  %5658 = vset.pattern.permute.xlu0 0
  %5659 = vperm.xlu0 %5658, %v5533
  %v5660 = vpop.permute.xlu0 %5659
  %5662 = vset.pattern.permute.xlu0 0
  %5663 = vperm.xlu0 %5662, %v5537
  %v5664 = vpop.permute.xlu0 %5663
  %5666 = vset.pattern.permute.xlu0 0
  %5667 = vperm.xlu0 %5666, %v5541
  %v5668 = vpop.permute.xlu0 %5667
  %5670 = vset.pattern.permute.xlu0 0
  %5671 = vperm.xlu0 %5670, %v5545
  %v5672 = vpop.permute.xlu0 %5671
  %5674 = vset.pattern.permute.xlu0 0
  %5675 = vperm.xlu0 %5674, %v5549
  %v5676 = vpop.permute.xlu0 %5675
  %5678 = vset.pattern.permute.xlu0 0
  %5679 = vperm.xlu0 %5678, %v5553
  %v5680 = vpop.permute.xlu0 %5679
  %5682 = vset.pattern.permute.xlu0 0
  %5683 = vperm.xlu0 %5682, %v5557
  %v5684 = vpop.permute.xlu0 %5683
  %5686 = vset.pattern.permute.xlu0 0
  %5687 = vperm.xlu0 %5686, %v5561
  %v5688 = vpop.permute.xlu0 %5687
  %5690 = vset.pattern.permute.xlu0 0
  %5691 = vperm.xlu0 %5690, %v5565
  %v5692 = vpop.permute.xlu0 %5691
  %5694 = vset.pattern.permute.xlu0 0
  %5695 = vperm.xlu0 %5694, %v5569
  %v5696 = vpop.permute.xlu0 %5695
  %5698 = vset.pattern.permute.xlu0 0
  %5699 = vperm.xlu0 %5698, %v5573
  %v5700 = vpop.permute.xlu0 %5699
  %5702 = vset.pattern.permute.xlu0 0
  %5703 = vperm.xlu0 %5702, %v5577
  %v5704 = vpop.permute.xlu0 %5703
  %5706 = vset.pattern.permute.xlu0 0
  %5707 = vperm.xlu0 %5706, %v5581
  %v5708 = vpop.permute.xlu0 %5707
  %5710 = vset.pattern.permute.xlu0 0
  %5711 = vperm.xlu0 %5710, %v5585
  %v5712 = vpop.permute.xlu0 %5711
  %5714 = vset.pattern.permute.xlu0 0
  %5715 = vperm.xlu0 %5714, %v5589
  %v5716 = vpop.permute.xlu0 %5715
  %v5718 = vcombine.low %v5206, %v5208
  %v5719 = vcombine.high %v5206, %v5208
  %v5721 = vunpack.c.l.s4 1983009808
  %v5722 = vunpack.c.0.s8 %v5721
  %v5723 = vlaneseq
  %v5724 = vshrl.u32 %v5723, 7
  %v5725 = vsub.s32 %v5722, %v5724
  %v5726 = vrot.slane %v5718, %v5725
  %v5728 = vunpack.c.l.s4 1983009808
  %v5729 = vunpack.c.0.s8 %v5728
  %v5730 = vlaneseq
  %v5731 = vshrl.u32 %v5730, 7
  %v5732 = vsub.s32 %v5729, %v5731
  %v5733 = vrot.slane %v5719, %v5732
  %v5734 = vcombine.low %v5207, %v5209
  %v5735 = vcombine.high %v5207, %v5209
  %v5737 = vunpack.c.l.s4 1983009808
  %v5738 = vunpack.c.0.s8 %v5737
  %v5739 = vlaneseq
  %v5740 = vshrl.u32 %v5739, 7
  %v5741 = vsub.s32 %v5738, %v5740
  %v5742 = vrot.slane %v5734, %v5741
  %v5744 = vunpack.c.l.s4 1983009808
  %v5745 = vunpack.c.0.s8 %v5744
  %v5746 = vlaneseq
  %v5747 = vshrl.u32 %v5746, 7
  %v5748 = vsub.s32 %v5745, %v5747
  %v5749 = vrot.slane %v5735, %v5748
  %v5750 = vcombine.low %v5210, %v5212
  %v5751 = vcombine.high %v5210, %v5212
  %v5753 = vunpack.c.l.s4 1983009808
  %v5754 = vunpack.c.0.s8 %v5753
  %v5755 = vlaneseq
  %v5756 = vshrl.u32 %v5755, 7
  %v5757 = vsub.s32 %v5754, %v5756
  %v5758 = vrot.slane %v5750, %v5757
  %v5760 = vunpack.c.l.s4 1983009808
  %v5761 = vunpack.c.0.s8 %v5760
  %v5762 = vlaneseq
  %v5763 = vshrl.u32 %v5762, 7
  %v5764 = vsub.s32 %v5761, %v5763
  %v5765 = vrot.slane %v5751, %v5764
  %v5766 = vcombine.low %v5211, %v5213
  %v5767 = vcombine.high %v5211, %v5213
  %v5769 = vunpack.c.l.s4 1983009808
  %v5770 = vunpack.c.0.s8 %v5769
  %v5771 = vlaneseq
  %v5772 = vshrl.u32 %v5771, 7
  %v5773 = vsub.s32 %v5770, %v5772
  %v5774 = vrot.slane %v5766, %v5773
  %v5776 = vunpack.c.l.s4 1983009808
  %v5777 = vunpack.c.0.s8 %v5776
  %v5778 = vlaneseq
  %v5779 = vshrl.u32 %v5778, 7
  %v5780 = vsub.s32 %v5777, %v5779
  %v5781 = vrot.slane %v5767, %v5780
  %v5782 = vcombine.low %v5726, %v5742
  %v5783 = vcombine.high %v5726, %v5742
  %v5785 = vunpack.c.l.s4 1934713408
  %v5786 = vunpack.c.0.s8 %v5785
  %v5787 = vlaneseq
  %v5788 = vshrl.u32 %v5787, 7
  %v5789 = vsub.s32 %v5786, %v5788
  %v5790 = vrot.slane %v5782, %v5789
  %v5792 = vunpack.c.l.s4 1934713408
  %v5793 = vunpack.c.0.s8 %v5792
  %v5794 = vlaneseq
  %v5795 = vshrl.u32 %v5794, 7
  %v5796 = vsub.s32 %v5793, %v5795
  %v5797 = vrot.slane %v5783, %v5796
  %v5798 = vcombine.low %v5733, %v5749
  %v5799 = vcombine.high %v5733, %v5749
  %v5801 = vunpack.c.l.s4 1934713408
  %v5802 = vunpack.c.0.s8 %v5801
  %v5803 = vlaneseq
  %v5804 = vshrl.u32 %v5803, 7
  %v5805 = vsub.s32 %v5802, %v5804
  %v5806 = vrot.slane %v5798, %v5805
  %v5808 = vunpack.c.l.s4 1934713408
  %v5809 = vunpack.c.0.s8 %v5808
  %v5810 = vlaneseq
  %v5811 = vshrl.u32 %v5810, 7
  %v5812 = vsub.s32 %v5809, %v5811
  %v5813 = vrot.slane %v5799, %v5812
  %v5814 = vcombine.low %v5758, %v5774
  %v5815 = vcombine.high %v5758, %v5774
  %v5817 = vunpack.c.l.s4 1934713408
  %v5818 = vunpack.c.0.s8 %v5817
  %v5819 = vlaneseq
  %v5820 = vshrl.u32 %v5819, 7
  %v5821 = vsub.s32 %v5818, %v5820
  %v5822 = vrot.slane %v5814, %v5821
  %v5824 = vunpack.c.l.s4 1934713408
  %v5825 = vunpack.c.0.s8 %v5824
  %v5826 = vlaneseq
  %v5827 = vshrl.u32 %v5826, 7
  %v5828 = vsub.s32 %v5825, %v5827
  %v5829 = vrot.slane %v5815, %v5828
  %v5830 = vcombine.low %v5765, %v5781
  %v5831 = vcombine.high %v5765, %v5781
  %v5833 = vunpack.c.l.s4 1934713408
  %v5834 = vunpack.c.0.s8 %v5833
  %v5835 = vlaneseq
  %v5836 = vshrl.u32 %v5835, 7
  %v5837 = vsub.s32 %v5834, %v5836
  %v5838 = vrot.slane %v5830, %v5837
  %v5840 = vunpack.c.l.s4 1934713408
  %v5841 = vunpack.c.0.s8 %v5840
  %v5842 = vlaneseq
  %v5843 = vshrl.u32 %v5842, 7
  %v5844 = vsub.s32 %v5841, %v5843
  %v5845 = vrot.slane %v5831, %v5844
  %v5846 = vcombine.low %v5790, %v5822
  %v5847 = vcombine.high %v5790, %v5822
  %v5848 = vcombine.low %v5797, %v5829
  %v5849 = vcombine.high %v5797, %v5829
  %v5850 = vcombine.low %v5806, %v5838
  %v5851 = vcombine.high %v5806, %v5838
  %v5852 = vcombine.low %v5813, %v5845
  %v5853 = vcombine.low %v5214, %v5216
  %v5854 = vcombine.high %v5214, %v5216
  %v5856 = vunpack.c.l.s4 1983009808
  %v5857 = vunpack.c.0.s8 %v5856
  %v5858 = vlaneseq
  %v5859 = vshrl.u32 %v5858, 7
  %v5860 = vsub.s32 %v5857, %v5859
  %v5861 = vrot.slane %v5853, %v5860
  %v5863 = vunpack.c.l.s4 1983009808
  %v5864 = vunpack.c.0.s8 %v5863
  %v5865 = vlaneseq
  %v5866 = vshrl.u32 %v5865, 7
  %v5867 = vsub.s32 %v5864, %v5866
  %v5868 = vrot.slane %v5854, %v5867
  %v5869 = vcombine.low %v5215, %v5217
  %v5870 = vcombine.high %v5215, %v5217
  %v5872 = vunpack.c.l.s4 1983009808
  %v5873 = vunpack.c.0.s8 %v5872
  %v5874 = vlaneseq
  %v5875 = vshrl.u32 %v5874, 7
  %v5876 = vsub.s32 %v5873, %v5875
  %v5877 = vrot.slane %v5869, %v5876
  %v5879 = vunpack.c.l.s4 1983009808
  %v5880 = vunpack.c.0.s8 %v5879
  %v5881 = vlaneseq
  %v5882 = vshrl.u32 %v5881, 7
  %v5883 = vsub.s32 %v5880, %v5882
  %v5884 = vrot.slane %v5870, %v5883
  %v5885 = vcombine.low %v5218, %v5220
  %v5886 = vcombine.high %v5218, %v5220
  %v5888 = vunpack.c.l.s4 1983009808
  %v5889 = vunpack.c.0.s8 %v5888
  %v5890 = vlaneseq
  %v5891 = vshrl.u32 %v5890, 7
  %v5892 = vsub.s32 %v5889, %v5891
  %v5893 = vrot.slane %v5885, %v5892
  %v5895 = vunpack.c.l.s4 1983009808
  %v5896 = vunpack.c.0.s8 %v5895
  %v5897 = vlaneseq
  %v5898 = vshrl.u32 %v5897, 7
  %v5899 = vsub.s32 %v5896, %v5898
  %v5900 = vrot.slane %v5886, %v5899
  %v5901 = vcombine.low %v5219, %v5221
  %v5902 = vcombine.high %v5219, %v5221
  %v5904 = vunpack.c.l.s4 1983009808
  %v5905 = vunpack.c.0.s8 %v5904
  %v5906 = vlaneseq
  %v5907 = vshrl.u32 %v5906, 7
  %v5908 = vsub.s32 %v5905, %v5907
  %v5909 = vrot.slane %v5901, %v5908
  %v5911 = vunpack.c.l.s4 1983009808
  %v5912 = vunpack.c.0.s8 %v5911
  %v5913 = vlaneseq
  %v5914 = vshrl.u32 %v5913, 7
  %v5915 = vsub.s32 %v5912, %v5914
  %v5916 = vrot.slane %v5902, %v5915
  %v5917 = vcombine.low %v5861, %v5877
  %v5918 = vcombine.high %v5861, %v5877
  %v5920 = vunpack.c.l.s4 1934713408
  %v5921 = vunpack.c.0.s8 %v5920
  %v5922 = vlaneseq
  %v5923 = vshrl.u32 %v5922, 7
  %v5924 = vsub.s32 %v5921, %v5923
  %v5925 = vrot.slane %v5917, %v5924
  %v5927 = vunpack.c.l.s4 1934713408
  %v5928 = vunpack.c.0.s8 %v5927
  %v5929 = vlaneseq
  %v5930 = vshrl.u32 %v5929, 7
  %v5931 = vsub.s32 %v5928, %v5930
  %v5932 = vrot.slane %v5918, %v5931
  %v5933 = vcombine.low %v5868, %v5884
  %v5934 = vcombine.high %v5868, %v5884
  %v5936 = vunpack.c.l.s4 1934713408
  %v5937 = vunpack.c.0.s8 %v5936
  %v5938 = vlaneseq
  %v5939 = vshrl.u32 %v5938, 7
  %v5940 = vsub.s32 %v5937, %v5939
  %v5941 = vrot.slane %v5933, %v5940
  %v5943 = vunpack.c.l.s4 1934713408
  %v5944 = vunpack.c.0.s8 %v5943
  %v5945 = vlaneseq
  %v5946 = vshrl.u32 %v5945, 7
  %v5947 = vsub.s32 %v5944, %v5946
  %v5948 = vrot.slane %v5934, %v5947
  %v5949 = vcombine.low %v5893, %v5909
  %v5950 = vcombine.high %v5893, %v5909
  %v5952 = vunpack.c.l.s4 1934713408
  %v5953 = vunpack.c.0.s8 %v5952
  %v5954 = vlaneseq
  %v5955 = vshrl.u32 %v5954, 7
  %v5956 = vsub.s32 %v5953, %v5955
  %v5957 = vrot.slane %v5949, %v5956
  %v5959 = vunpack.c.l.s4 1934713408
  %v5960 = vunpack.c.0.s8 %v5959
  %v5961 = vlaneseq
  %v5962 = vshrl.u32 %v5961, 7
  %v5963 = vsub.s32 %v5960, %v5962
  %v5964 = vrot.slane %v5950, %v5963
  %v5965 = vcombine.low %v5900, %v5916
  %v5966 = vcombine.high %v5900, %v5916
  %v5968 = vunpack.c.l.s4 1934713408
  %v5969 = vunpack.c.0.s8 %v5968
  %v5970 = vlaneseq
  %v5971 = vshrl.u32 %v5970, 7
  %v5972 = vsub.s32 %v5969, %v5971
  %v5973 = vrot.slane %v5965, %v5972
  %v5975 = vunpack.c.l.s4 1934713408
  %v5976 = vunpack.c.0.s8 %v5975
  %v5977 = vlaneseq
  %v5978 = vshrl.u32 %v5977, 7
  %v5979 = vsub.s32 %v5976, %v5978
  %v5980 = vrot.slane %v5966, %v5979
  %v5981 = vcombine.low %v5925, %v5957
  %v5982 = vcombine.high %v5925, %v5957
  %v5983 = vcombine.low %v5932, %v5964
  %v5984 = vcombine.high %v5932, %v5964
  %v5985 = vcombine.low %v5941, %v5973
  %v5986 = vcombine.high %v5941, %v5973
  %v5987 = vcombine.low %v5948, %v5980
  %v5988 = vcombine.low %v5222, %v5224
  %v5989 = vcombine.high %v5222, %v5224
  %v5991 = vunpack.c.l.s4 1983009808
  %v5992 = vunpack.c.0.s8 %v5991
  %v5993 = vlaneseq
  %v5994 = vshrl.u32 %v5993, 7
  %v5995 = vsub.s32 %v5992, %v5994
  %v5996 = vrot.slane %v5988, %v5995
  %v5998 = vunpack.c.l.s4 1983009808
  %v5999 = vunpack.c.0.s8 %v5998
  %v6000 = vlaneseq
  %v6001 = vshrl.u32 %v6000, 7
  %v6002 = vsub.s32 %v5999, %v6001
  %v6003 = vrot.slane %v5989, %v6002
  %v6004 = vcombine.low %v5223, %v5225
  %v6005 = vcombine.high %v5223, %v5225
  %v6007 = vunpack.c.l.s4 1983009808
  %v6008 = vunpack.c.0.s8 %v6007
  %v6009 = vlaneseq
  %v6010 = vshrl.u32 %v6009, 7
  %v6011 = vsub.s32 %v6008, %v6010
  %v6012 = vrot.slane %v6004, %v6011
  %v6014 = vunpack.c.l.s4 1983009808
  %v6015 = vunpack.c.0.s8 %v6014
  %v6016 = vlaneseq
  %v6017 = vshrl.u32 %v6016, 7
  %v6018 = vsub.s32 %v6015, %v6017
  %v6019 = vrot.slane %v6005, %v6018
  %v6020 = vcombine.low %v5226, %v5228
  %v6021 = vcombine.high %v5226, %v5228
  %v6023 = vunpack.c.l.s4 1983009808
  %v6024 = vunpack.c.0.s8 %v6023
  %v6025 = vlaneseq
  %v6026 = vshrl.u32 %v6025, 7
  %v6027 = vsub.s32 %v6024, %v6026
  %v6028 = vrot.slane %v6020, %v6027
  %v6030 = vunpack.c.l.s4 1983009808
  %v6031 = vunpack.c.0.s8 %v6030
  %v6032 = vlaneseq
  %v6033 = vshrl.u32 %v6032, 7
  %v6034 = vsub.s32 %v6031, %v6033
  %v6035 = vrot.slane %v6021, %v6034
  %v6036 = vcombine.low %v5227, %v5229
  %v6037 = vcombine.high %v5227, %v5229
  %v6039 = vunpack.c.l.s4 1983009808
  %v6040 = vunpack.c.0.s8 %v6039
  %v6041 = vlaneseq
  %v6042 = vshrl.u32 %v6041, 7
  %v6043 = vsub.s32 %v6040, %v6042
  %v6044 = vrot.slane %v6036, %v6043
  %v6046 = vunpack.c.l.s4 1983009808
  %v6047 = vunpack.c.0.s8 %v6046
  %v6048 = vlaneseq
  %v6049 = vshrl.u32 %v6048, 7
  %v6050 = vsub.s32 %v6047, %v6049
  %v6051 = vrot.slane %v6037, %v6050
  %v6052 = vcombine.low %v5996, %v6012
  %v6053 = vcombine.high %v5996, %v6012
  %v6055 = vunpack.c.l.s4 1934713408
  %v6056 = vunpack.c.0.s8 %v6055
  %v6057 = vlaneseq
  %v6058 = vshrl.u32 %v6057, 7
  %v6059 = vsub.s32 %v6056, %v6058
  %v6060 = vrot.slane %v6052, %v6059
  %v6062 = vunpack.c.l.s4 1934713408
  %v6063 = vunpack.c.0.s8 %v6062
  %v6064 = vlaneseq
  %v6065 = vshrl.u32 %v6064, 7
  %v6066 = vsub.s32 %v6063, %v6065
  %v6067 = vrot.slane %v6053, %v6066
  %v6068 = vcombine.low %v6003, %v6019
  %v6069 = vcombine.high %v6003, %v6019
  %v6071 = vunpack.c.l.s4 1934713408
  %v6072 = vunpack.c.0.s8 %v6071
  %v6073 = vlaneseq
  %v6074 = vshrl.u32 %v6073, 7
  %v6075 = vsub.s32 %v6072, %v6074
  %v6076 = vrot.slane %v6068, %v6075
  %v6078 = vunpack.c.l.s4 1934713408
  %v6079 = vunpack.c.0.s8 %v6078
  %v6080 = vlaneseq
  %v6081 = vshrl.u32 %v6080, 7
  %v6082 = vsub.s32 %v6079, %v6081
  %v6083 = vrot.slane %v6069, %v6082
  %v6084 = vcombine.low %v6028, %v6044
  %v6085 = vcombine.high %v6028, %v6044
  %v6087 = vunpack.c.l.s4 1934713408
  %v6088 = vunpack.c.0.s8 %v6087
  %v6089 = vlaneseq
  %v6090 = vshrl.u32 %v6089, 7
  %v6091 = vsub.s32 %v6088, %v6090
  %v6092 = vrot.slane %v6084, %v6091
  %v6094 = vunpack.c.l.s4 1934713408
  %v6095 = vunpack.c.0.s8 %v6094
  %v6096 = vlaneseq
  %v6097 = vshrl.u32 %v6096, 7
  %v6098 = vsub.s32 %v6095, %v6097
  %v6099 = vrot.slane %v6085, %v6098
  %v6100 = vcombine.low %v6035, %v6051
  %v6101 = vcombine.high %v6035, %v6051
  %v6103 = vunpack.c.l.s4 1934713408
  %v6104 = vunpack.c.0.s8 %v6103
  %v6105 = vlaneseq
  %v6106 = vshrl.u32 %v6105, 7
  %v6107 = vsub.s32 %v6104, %v6106
  %v6108 = vrot.slane %v6100, %v6107
  %v6110 = vunpack.c.l.s4 1934713408
  %v6111 = vunpack.c.0.s8 %v6110
  %v6112 = vlaneseq
  %v6113 = vshrl.u32 %v6112, 7
  %v6114 = vsub.s32 %v6111, %v6113
  %v6115 = vrot.slane %v6101, %v6114
  %v6116 = vcombine.low %v6060, %v6092
  %v6117 = vcombine.high %v6060, %v6092
  %v6118 = vcombine.low %v6067, %v6099
  %v6119 = vcombine.high %v6067, %v6099
  %v6120 = vcombine.low %v6076, %v6108
  %v6121 = vcombine.high %v6076, %v6108
  %v6122 = vcombine.low %v6083, %v6115
  %v6123 = vcombine.low %v5230, %v5232
  %v6124 = vcombine.high %v5230, %v5232
  %v6126 = vunpack.c.l.s4 1983009808
  %v6127 = vunpack.c.0.s8 %v6126
  %v6128 = vlaneseq
  %v6129 = vshrl.u32 %v6128, 7
  %v6130 = vsub.s32 %v6127, %v6129
  %v6131 = vrot.slane %v6123, %v6130
  %v6133 = vunpack.c.l.s4 1983009808
  %v6134 = vunpack.c.0.s8 %v6133
  %v6135 = vlaneseq
  %v6136 = vshrl.u32 %v6135, 7
  %v6137 = vsub.s32 %v6134, %v6136
  %v6138 = vrot.slane %v6124, %v6137
  %v6139 = vcombine.low %v5231, %v5233
  %v6140 = vcombine.high %v5231, %v5233
  %v6142 = vunpack.c.l.s4 1983009808
  %v6143 = vunpack.c.0.s8 %v6142
  %v6144 = vlaneseq
  %v6145 = vshrl.u32 %v6144, 7
  %v6146 = vsub.s32 %v6143, %v6145
  %v6147 = vrot.slane %v6139, %v6146
  %v6149 = vunpack.c.l.s4 1983009808
  %v6150 = vunpack.c.0.s8 %v6149
  %v6151 = vlaneseq
  %v6152 = vshrl.u32 %v6151, 7
  %v6153 = vsub.s32 %v6150, %v6152
  %v6154 = vrot.slane %v6140, %v6153
  %v6155 = vcombine.low %v5234, %v5236
  %v6156 = vcombine.high %v5234, %v5236
  %v6158 = vunpack.c.l.s4 1983009808
  %v6159 = vunpack.c.0.s8 %v6158
  %v6160 = vlaneseq
  %v6161 = vshrl.u32 %v6160, 7
  %v6162 = vsub.s32 %v6159, %v6161
  %v6163 = vrot.slane %v6155, %v6162
  %v6165 = vunpack.c.l.s4 1983009808
  %v6166 = vunpack.c.0.s8 %v6165
  %v6167 = vlaneseq
  %v6168 = vshrl.u32 %v6167, 7
  %v6169 = vsub.s32 %v6166, %v6168
  %v6170 = vrot.slane %v6156, %v6169
  %v6171 = vcombine.low %v5235, %v5237
  %v6172 = vcombine.high %v5235, %v5237
  %v6174 = vunpack.c.l.s4 1983009808
  %v6175 = vunpack.c.0.s8 %v6174
  %v6176 = vlaneseq
  %v6177 = vshrl.u32 %v6176, 7
  %v6178 = vsub.s32 %v6175, %v6177
  %v6179 = vrot.slane %v6171, %v6178
  %v6181 = vunpack.c.l.s4 1983009808
  %v6182 = vunpack.c.0.s8 %v6181
  %v6183 = vlaneseq
  %v6184 = vshrl.u32 %v6183, 7
  %v6185 = vsub.s32 %v6182, %v6184
  %v6186 = vrot.slane %v6172, %v6185
  %v6187 = vcombine.low %v6131, %v6147
  %v6188 = vcombine.high %v6131, %v6147
  %v6190 = vunpack.c.l.s4 1934713408
  %v6191 = vunpack.c.0.s8 %v6190
  %v6192 = vlaneseq
  %v6193 = vshrl.u32 %v6192, 7
  %v6194 = vsub.s32 %v6191, %v6193
  %v6195 = vrot.slane %v6187, %v6194
  %v6197 = vunpack.c.l.s4 1934713408
  %v6198 = vunpack.c.0.s8 %v6197
  %v6199 = vlaneseq
  %v6200 = vshrl.u32 %v6199, 7
  %v6201 = vsub.s32 %v6198, %v6200
  %v6202 = vrot.slane %v6188, %v6201
  %v6203 = vcombine.low %v6138, %v6154
  %v6204 = vcombine.high %v6138, %v6154
  %v6206 = vunpack.c.l.s4 1934713408
  %v6207 = vunpack.c.0.s8 %v6206
  %v6208 = vlaneseq
  %v6209 = vshrl.u32 %v6208, 7
  %v6210 = vsub.s32 %v6207, %v6209
  %v6211 = vrot.slane %v6203, %v6210
  %v6213 = vunpack.c.l.s4 1934713408
  %v6214 = vunpack.c.0.s8 %v6213
  %v6215 = vlaneseq
  %v6216 = vshrl.u32 %v6215, 7
  %v6217 = vsub.s32 %v6214, %v6216
  %v6218 = vrot.slane %v6204, %v6217
  %v6219 = vcombine.low %v6163, %v6179
  %v6220 = vcombine.high %v6163, %v6179
  %v6222 = vunpack.c.l.s4 1934713408
  %v6223 = vunpack.c.0.s8 %v6222
  %v6224 = vlaneseq
  %v6225 = vshrl.u32 %v6224, 7
  %v6226 = vsub.s32 %v6223, %v6225
  %v6227 = vrot.slane %v6219, %v6226
  %v6229 = vunpack.c.l.s4 1934713408
  %v6230 = vunpack.c.0.s8 %v6229
  %v6231 = vlaneseq
  %v6232 = vshrl.u32 %v6231, 7
  %v6233 = vsub.s32 %v6230, %v6232
  %v6234 = vrot.slane %v6220, %v6233
  %v6235 = vcombine.low %v6170, %v6186
  %v6236 = vcombine.high %v6170, %v6186
  %v6238 = vunpack.c.l.s4 1934713408
  %v6239 = vunpack.c.0.s8 %v6238
  %v6240 = vlaneseq
  %v6241 = vshrl.u32 %v6240, 7
  %v6242 = vsub.s32 %v6239, %v6241
  %v6243 = vrot.slane %v6235, %v6242
  %v6245 = vunpack.c.l.s4 1934713408
  %v6246 = vunpack.c.0.s8 %v6245
  %v6247 = vlaneseq
  %v6248 = vshrl.u32 %v6247, 7
  %v6249 = vsub.s32 %v6246, %v6248
  %v6250 = vrot.slane %v6236, %v6249
  %v6251 = vcombine.low %v6195, %v6227
  %v6252 = vcombine.high %v6195, %v6227
  %v6253 = vcombine.low %v6202, %v6234
  %v6254 = vcombine.high %v6202, %v6234
  %v6255 = vcombine.low %v6211, %v6243
  %v6256 = vcombine.high %v6211, %v6243
  %v6257 = vcombine.low %v6218, %v6250
  %v6258 = vcombine.low %v5238, %v5240
  %v6259 = vcombine.high %v5238, %v5240
  %v6261 = vunpack.c.l.s4 1983009808
  %v6262 = vunpack.c.0.s8 %v6261
  %v6263 = vlaneseq
  %v6264 = vshrl.u32 %v6263, 7
  %v6265 = vsub.s32 %v6262, %v6264
  %v6266 = vrot.slane %v6258, %v6265
  %v6268 = vunpack.c.l.s4 1983009808
  %v6269 = vunpack.c.0.s8 %v6268
  %v6270 = vlaneseq
  %v6271 = vshrl.u32 %v6270, 7
  %v6272 = vsub.s32 %v6269, %v6271
  %v6273 = vrot.slane %v6259, %v6272
  %v6274 = vcombine.low %v5239, %v5241
  %v6275 = vcombine.high %v5239, %v5241
  %v6277 = vunpack.c.l.s4 1983009808
  %v6278 = vunpack.c.0.s8 %v6277
  %v6279 = vlaneseq
  %v6280 = vshrl.u32 %v6279, 7
  %v6281 = vsub.s32 %v6278, %v6280
  %v6282 = vrot.slane %v6274, %v6281
  %v6284 = vunpack.c.l.s4 1983009808
  %v6285 = vunpack.c.0.s8 %v6284
  %v6286 = vlaneseq
  %v6287 = vshrl.u32 %v6286, 7
  %v6288 = vsub.s32 %v6285, %v6287
  %v6289 = vrot.slane %v6275, %v6288
  %v6290 = vcombine.low %v5242, %v5244
  %v6291 = vcombine.high %v5242, %v5244
  %v6293 = vunpack.c.l.s4 1983009808
  %v6294 = vunpack.c.0.s8 %v6293
  %v6295 = vlaneseq
  %v6296 = vshrl.u32 %v6295, 7
  %v6297 = vsub.s32 %v6294, %v6296
  %v6298 = vrot.slane %v6290, %v6297
  %v6300 = vunpack.c.l.s4 1983009808
  %v6301 = vunpack.c.0.s8 %v6300
  %v6302 = vlaneseq
  %v6303 = vshrl.u32 %v6302, 7
  %v6304 = vsub.s32 %v6301, %v6303
  %v6305 = vrot.slane %v6291, %v6304
  %v6306 = vcombine.low %v5243, %v5245
  %v6307 = vcombine.high %v5243, %v5245
  %v6309 = vunpack.c.l.s4 1983009808
  %v6310 = vunpack.c.0.s8 %v6309
  %v6311 = vlaneseq
  %v6312 = vshrl.u32 %v6311, 7
  %v6313 = vsub.s32 %v6310, %v6312
  %v6314 = vrot.slane %v6306, %v6313
  %v6316 = vunpack.c.l.s4 1983009808
  %v6317 = vunpack.c.0.s8 %v6316
  %v6318 = vlaneseq
  %v6319 = vshrl.u32 %v6318, 7
  %v6320 = vsub.s32 %v6317, %v6319
  %v6321 = vrot.slane %v6307, %v6320
  %v6322 = vcombine.low %v6266, %v6282
  %v6323 = vcombine.high %v6266, %v6282
  %v6325 = vunpack.c.l.s4 1934713408
  %v6326 = vunpack.c.0.s8 %v6325
  %v6327 = vlaneseq
  %v6328 = vshrl.u32 %v6327, 7
  %v6329 = vsub.s32 %v6326, %v6328
  %v6330 = vrot.slane %v6322, %v6329
  %v6332 = vunpack.c.l.s4 1934713408
  %v6333 = vunpack.c.0.s8 %v6332
  %v6334 = vlaneseq
  %v6335 = vshrl.u32 %v6334, 7
  %v6336 = vsub.s32 %v6333, %v6335
  %v6337 = vrot.slane %v6323, %v6336
  %v6338 = vcombine.low %v6273, %v6289
  %v6339 = vcombine.high %v6273, %v6289
  %v6341 = vunpack.c.l.s4 1934713408
  %v6342 = vunpack.c.0.s8 %v6341
  %v6343 = vlaneseq
  %v6344 = vshrl.u32 %v6343, 7
  %v6345 = vsub.s32 %v6342, %v6344
  %v6346 = vrot.slane %v6338, %v6345
  %v6348 = vunpack.c.l.s4 1934713408
  %v6349 = vunpack.c.0.s8 %v6348
  %v6350 = vlaneseq
  %v6351 = vshrl.u32 %v6350, 7
  %v6352 = vsub.s32 %v6349, %v6351
  %v6353 = vrot.slane %v6339, %v6352
  %v6354 = vcombine.low %v6298, %v6314
  %v6355 = vcombine.high %v6298, %v6314
  %v6357 = vunpack.c.l.s4 1934713408
  %v6358 = vunpack.c.0.s8 %v6357
  %v6359 = vlaneseq
  %v6360 = vshrl.u32 %v6359, 7
  %v6361 = vsub.s32 %v6358, %v6360
  %v6362 = vrot.slane %v6354, %v6361
  %v6364 = vunpack.c.l.s4 1934713408
  %v6365 = vunpack.c.0.s8 %v6364
  %v6366 = vlaneseq
  %v6367 = vshrl.u32 %v6366, 7
  %v6368 = vsub.s32 %v6365, %v6367
  %v6369 = vrot.slane %v6355, %v6368
  %v6370 = vcombine.low %v6305, %v6321
  %v6371 = vcombine.high %v6305, %v6321
  %v6373 = vunpack.c.l.s4 1934713408
  %v6374 = vunpack.c.0.s8 %v6373
  %v6375 = vlaneseq
  %v6376 = vshrl.u32 %v6375, 7
  %v6377 = vsub.s32 %v6374, %v6376
  %v6378 = vrot.slane %v6370, %v6377
  %v6380 = vunpack.c.l.s4 1934713408
  %v6381 = vunpack.c.0.s8 %v6380
  %v6382 = vlaneseq
  %v6383 = vshrl.u32 %v6382, 7
  %v6384 = vsub.s32 %v6381, %v6383
  %v6385 = vrot.slane %v6371, %v6384
  %v6386 = vcombine.low %v6330, %v6362
  %v6387 = vcombine.high %v6330, %v6362
  %v6388 = vcombine.low %v6337, %v6369
  %v6389 = vcombine.high %v6337, %v6369
  %v6390 = vcombine.low %v6346, %v6378
  %v6391 = vcombine.high %v6346, %v6378
  %v6392 = vcombine.low %v6353, %v6385
  %v6393 = vcombine.low %v5246, %v5248
  %v6394 = vcombine.high %v5246, %v5248
  %v6396 = vunpack.c.l.s4 1983009808
  %v6397 = vunpack.c.0.s8 %v6396
  %v6398 = vlaneseq
  %v6399 = vshrl.u32 %v6398, 7
  %v6400 = vsub.s32 %v6397, %v6399
  %v6401 = vrot.slane %v6393, %v6400
  %v6403 = vunpack.c.l.s4 1983009808
  %v6404 = vunpack.c.0.s8 %v6403
  %v6405 = vlaneseq
  %v6406 = vshrl.u32 %v6405, 7
  %v6407 = vsub.s32 %v6404, %v6406
  %v6408 = vrot.slane %v6394, %v6407
  %v6409 = vcombine.low %v5247, %v5249
  %v6410 = vcombine.high %v5247, %v5249
  %v6412 = vunpack.c.l.s4 1983009808
  %v6413 = vunpack.c.0.s8 %v6412
  %v6414 = vlaneseq
  %v6415 = vshrl.u32 %v6414, 7
  %v6416 = vsub.s32 %v6413, %v6415
  %v6417 = vrot.slane %v6409, %v6416
  %v6419 = vunpack.c.l.s4 1983009808
  %v6420 = vunpack.c.0.s8 %v6419
  %v6421 = vlaneseq
  %v6422 = vshrl.u32 %v6421, 7
  %v6423 = vsub.s32 %v6420, %v6422
  %v6424 = vrot.slane %v6410, %v6423
  %v6425 = vcombine.low %v5250, %v5252
  %v6426 = vcombine.high %v5250, %v5252
  %v6428 = vunpack.c.l.s4 1983009808
  %v6429 = vunpack.c.0.s8 %v6428
  %v6430 = vlaneseq
  %v6431 = vshrl.u32 %v6430, 7
  %v6432 = vsub.s32 %v6429, %v6431
  %v6433 = vrot.slane %v6425, %v6432
  %v6435 = vunpack.c.l.s4 1983009808
  %v6436 = vunpack.c.0.s8 %v6435
  %v6437 = vlaneseq
  %v6438 = vshrl.u32 %v6437, 7
  %v6439 = vsub.s32 %v6436, %v6438
  %v6440 = vrot.slane %v6426, %v6439
  %v6441 = vcombine.low %v5251, %v5253
  %v6442 = vcombine.high %v5251, %v5253
  %v6444 = vunpack.c.l.s4 1983009808
  %v6445 = vunpack.c.0.s8 %v6444
  %v6446 = vlaneseq
  %v6447 = vshrl.u32 %v6446, 7
  %v6448 = vsub.s32 %v6445, %v6447
  %v6449 = vrot.slane %v6441, %v6448
  %v6451 = vunpack.c.l.s4 1983009808
  %v6452 = vunpack.c.0.s8 %v6451
  %v6453 = vlaneseq
  %v6454 = vshrl.u32 %v6453, 7
  %v6455 = vsub.s32 %v6452, %v6454
  %v6456 = vrot.slane %v6442, %v6455
  %v6457 = vcombine.low %v6401, %v6417
  %v6458 = vcombine.high %v6401, %v6417
  %v6460 = vunpack.c.l.s4 1934713408
  %v6461 = vunpack.c.0.s8 %v6460
  %v6462 = vlaneseq
  %v6463 = vshrl.u32 %v6462, 7
  %v6464 = vsub.s32 %v6461, %v6463
  %v6465 = vrot.slane %v6457, %v6464
  %v6467 = vunpack.c.l.s4 1934713408
  %v6468 = vunpack.c.0.s8 %v6467
  %v6469 = vlaneseq
  %v6470 = vshrl.u32 %v6469, 7
  %v6471 = vsub.s32 %v6468, %v6470
  %v6472 = vrot.slane %v6458, %v6471
  %v6473 = vcombine.low %v6408, %v6424
  %v6474 = vcombine.high %v6408, %v6424
  %v6476 = vunpack.c.l.s4 1934713408
  %v6477 = vunpack.c.0.s8 %v6476
  %v6478 = vlaneseq
  %v6479 = vshrl.u32 %v6478, 7
  %v6480 = vsub.s32 %v6477, %v6479
  %v6481 = vrot.slane %v6473, %v6480
  %v6483 = vunpack.c.l.s4 1934713408
  %v6484 = vunpack.c.0.s8 %v6483
  %v6485 = vlaneseq
  %v6486 = vshrl.u32 %v6485, 7
  %v6487 = vsub.s32 %v6484, %v6486
  %v6488 = vrot.slane %v6474, %v6487
  %v6489 = vcombine.low %v6433, %v6449
  %v6490 = vcombine.high %v6433, %v6449
  %v6492 = vunpack.c.l.s4 1934713408
  %v6493 = vunpack.c.0.s8 %v6492
  %v6494 = vlaneseq
  %v6495 = vshrl.u32 %v6494, 7
  %v6496 = vsub.s32 %v6493, %v6495
  %v6497 = vrot.slane %v6489, %v6496
  %v6499 = vunpack.c.l.s4 1934713408
  %v6500 = vunpack.c.0.s8 %v6499
  %v6501 = vlaneseq
  %v6502 = vshrl.u32 %v6501, 7
  %v6503 = vsub.s32 %v6500, %v6502
  %v6504 = vrot.slane %v6490, %v6503
  %v6505 = vcombine.low %v6440, %v6456
  %v6506 = vcombine.high %v6440, %v6456
  %v6508 = vunpack.c.l.s4 1934713408
  %v6509 = vunpack.c.0.s8 %v6508
  %v6510 = vlaneseq
  %v6511 = vshrl.u32 %v6510, 7
  %v6512 = vsub.s32 %v6509, %v6511
  %v6513 = vrot.slane %v6505, %v6512
  %v6515 = vunpack.c.l.s4 1934713408
  %v6516 = vunpack.c.0.s8 %v6515
  %v6517 = vlaneseq
  %v6518 = vshrl.u32 %v6517, 7
  %v6519 = vsub.s32 %v6516, %v6518
  %v6520 = vrot.slane %v6506, %v6519
  %v6521 = vcombine.low %v6465, %v6497
  %v6522 = vcombine.high %v6465, %v6497
  %v6523 = vcombine.low %v6472, %v6504
  %v6524 = vcombine.high %v6472, %v6504
  %v6525 = vcombine.low %v6481, %v6513
  %v6526 = vcombine.high %v6481, %v6513
  %v6527 = vcombine.low %v6488, %v6520
  %6534 = vrot.lane.b32.xlu0 %v5847, 2
  %v6535 = vpop.permute.xlu0 %6534
  %6536 = vrot.lane.b32.xlu0 %v5982, 2
  %v6537 = vpop.permute.xlu0 %6536
  %6538 = vrot.lane.b32.xlu0 %v6117, 2
  %v6539 = vpop.permute.xlu0 %6538
  %6540 = vrot.lane.b32.xlu0 %v6252, 2
  %v6541 = vpop.permute.xlu0 %6540
  %6542 = vrot.lane.b32.xlu0 %v6387, 2
  %v6543 = vpop.permute.xlu0 %6542
  %6544 = vrot.lane.b32.xlu0 %v6522, 2
  %v6545 = vpop.permute.xlu0 %6544
  %6558 = vrot.lane.b32.xlu0 %v5848, 4
  %v6559 = vpop.permute.xlu0 %6558
  %6560 = vrot.lane.b32.xlu0 %v5983, 4
  %v6561 = vpop.permute.xlu0 %6560
  %6562 = vrot.lane.b32.xlu0 %v6118, 4
  %v6563 = vpop.permute.xlu0 %6562
  %6564 = vrot.lane.b32.xlu0 %v6253, 4
  %v6565 = vpop.permute.xlu0 %6564
  %6566 = vrot.lane.b32.xlu0 %v6388, 4
  %v6567 = vpop.permute.xlu0 %6566
  %6568 = vrot.lane.b32.xlu0 %v6523, 4
  %v6569 = vpop.permute.xlu0 %6568
  %6582 = vrot.lane.b32.xlu0 %v5849, 6
  %v6583 = vpop.permute.xlu0 %6582
  %6584 = vrot.lane.b32.xlu0 %v5984, 6
  %v6585 = vpop.permute.xlu0 %6584
  %6586 = vrot.lane.b32.xlu0 %v6119, 6
  %v6587 = vpop.permute.xlu0 %6586
  %6588 = vrot.lane.b32.xlu0 %v6254, 6
  %v6589 = vpop.permute.xlu0 %6588
  %6590 = vrot.lane.b32.xlu0 %v6389, 6
  %v6591 = vpop.permute.xlu0 %6590
  %6592 = vrot.lane.b32.xlu0 %v6524, 6
  %v6593 = vpop.permute.xlu0 %6592
  %6606 = vrot.lane.b32.xlu0 %v5850, 8
  %v6607 = vpop.permute.xlu0 %6606
  %6608 = vrot.lane.b32.xlu0 %v5985, 8
  %v6609 = vpop.permute.xlu0 %6608
  %6610 = vrot.lane.b32.xlu0 %v6120, 8
  %v6611 = vpop.permute.xlu0 %6610
  %6612 = vrot.lane.b32.xlu0 %v6255, 8
  %v6613 = vpop.permute.xlu0 %6612
  %6614 = vrot.lane.b32.xlu0 %v6390, 8
  %v6615 = vpop.permute.xlu0 %6614
  %6616 = vrot.lane.b32.xlu0 %v6525, 8
  %v6617 = vpop.permute.xlu0 %6616
  %6630 = vrot.lane.b32.xlu0 %v5851, 10
  %v6631 = vpop.permute.xlu0 %6630
  %6632 = vrot.lane.b32.xlu0 %v5986, 10
  %v6633 = vpop.permute.xlu0 %6632
  %6634 = vrot.lane.b32.xlu0 %v6121, 10
  %v6635 = vpop.permute.xlu0 %6634
  %6636 = vrot.lane.b32.xlu0 %v6256, 10
  %v6637 = vpop.permute.xlu0 %6636
  %6638 = vrot.lane.b32.xlu0 %v6391, 10
  %v6639 = vpop.permute.xlu0 %6638
  %6640 = vrot.lane.b32.xlu0 %v6526, 10
  %v6641 = vpop.permute.xlu0 %6640
  %6654 = vrot.lane.b32.xlu0 %v5852, 12
  %v6655 = vpop.permute.xlu0 %6654
  %6656 = vrot.lane.b32.xlu0 %v5987, 12
  %v6657 = vpop.permute.xlu0 %6656
  %6658 = vrot.lane.b32.xlu0 %v6122, 12
  %v6659 = vpop.permute.xlu0 %6658
  %6660 = vrot.lane.b32.xlu0 %v6257, 12
  %v6661 = vpop.permute.xlu0 %6660
  %6662 = vrot.lane.b32.xlu0 %v6392, 12
  %v6663 = vpop.permute.xlu0 %6662
  %6664 = vrot.lane.b32.xlu0 %v6527, 12
  %v6665 = vpop.permute.xlu0 %6664
  %v6672 = vsel %vm1260, %v5846, %v6535
  %v6673 = vsel %vm1260, %v5981, %v6537
  %v6674 = vsel %vm1260, %v6116, %v6539
  %v6675 = vsel %vm1260, %v6251, %v6541
  %v6676 = vsel %vm1260, %v6386, %v6543
  %v6677 = vsel %vm1260, %v6521, %v6545
  %v6678 = vsel %vm1263, %v6672, %v6559
  %v6679 = vsel %vm1263, %v6673, %v6561
  %v6680 = vsel %vm1263, %v6674, %v6563
  %v6681 = vsel %vm1263, %v6675, %v6565
  %v6682 = vsel %vm1263, %v6676, %v6567
  %v6683 = vsel %vm1263, %v6677, %v6569
  %v6684 = vsel %vm1266, %v6678, %v6583
  %v6685 = vsel %vm1266, %v6679, %v6585
  %v6686 = vsel %vm1266, %v6680, %v6587
  %v6687 = vsel %vm1266, %v6681, %v6589
  %v6688 = vsel %vm1266, %v6682, %v6591
  %v6689 = vsel %vm1266, %v6683, %v6593
  %v6690 = vsel %vm1269, %v6684, %v6607
  %v6691 = vsel %vm1269, %v6685, %v6609
  %v6692 = vsel %vm1269, %v6686, %v6611
  %v6693 = vsel %vm1269, %v6687, %v6613
  %v6694 = vsel %vm1269, %v6688, %v6615
  %v6695 = vsel %vm1269, %v6689, %v6617
  %v6696 = vsel %vm1272, %v6690, %v6631
  %v6697 = vsel %vm1272, %v6691, %v6633
  %v6698 = vsel %vm1272, %v6692, %v6635
  %v6699 = vsel %vm1272, %v6693, %v6637
  %v6700 = vsel %vm1272, %v6694, %v6639
  %v6701 = vsel %vm1272, %v6695, %v6641
  %v6702 = vsel %vm1275, %v6696, %v6655
  %v6703 = vsel %vm1275, %v6697, %v6657
  %v6704 = vsel %vm1275, %v6698, %v6659
  %v6705 = vsel %vm1275, %v6699, %v6661
  %v6706 = vsel %vm1275, %v6700, %v6663
  %v6707 = vsel %vm1275, %v6701, %v6665
  %v6708 = vcombine.low %v5592, %v5600
  %v6709 = vcombine.high %v5592, %v5600
  %v6711 = vunpack.c.l.s4 1983009808
  %v6712 = vunpack.c.0.s8 %v6711
  %v6713 = vlaneseq
  %v6714 = vshrl.u32 %v6713, 7
  %v6715 = vsub.s32 %v6712, %v6714
  %v6716 = vrot.slane %v6708, %v6715
  %v6718 = vunpack.c.l.s4 1983009808
  %v6719 = vunpack.c.0.s8 %v6718
  %v6720 = vlaneseq
  %v6721 = vshrl.u32 %v6720, 7
  %v6722 = vsub.s32 %v6719, %v6721
  %v6723 = vrot.slane %v6709, %v6722
  %v6724 = vcombine.low %v5596, %v5604
  %v6725 = vcombine.high %v5596, %v5604
  %v6727 = vunpack.c.l.s4 1983009808
  %v6728 = vunpack.c.0.s8 %v6727
  %v6729 = vlaneseq
  %v6730 = vshrl.u32 %v6729, 7
  %v6731 = vsub.s32 %v6728, %v6730
  %v6732 = vrot.slane %v6724, %v6731
  %v6734 = vunpack.c.l.s4 1983009808
  %v6735 = vunpack.c.0.s8 %v6734
  %v6736 = vlaneseq
  %v6737 = vshrl.u32 %v6736, 7
  %v6738 = vsub.s32 %v6735, %v6737
  %v6739 = vrot.slane %v6725, %v6738
  %v6740 = vcombine.low %v5608, %v5616
  %v6741 = vcombine.high %v5608, %v5616
  %v6743 = vunpack.c.l.s4 1983009808
  %v6744 = vunpack.c.0.s8 %v6743
  %v6745 = vlaneseq
  %v6746 = vshrl.u32 %v6745, 7
  %v6747 = vsub.s32 %v6744, %v6746
  %v6748 = vrot.slane %v6740, %v6747
  %v6750 = vunpack.c.l.s4 1983009808
  %v6751 = vunpack.c.0.s8 %v6750
  %v6752 = vlaneseq
  %v6753 = vshrl.u32 %v6752, 7
  %v6754 = vsub.s32 %v6751, %v6753
  %v6755 = vrot.slane %v6741, %v6754
  %v6756 = vcombine.low %v5612, %v5620
  %v6757 = vcombine.high %v5612, %v5620
  %v6759 = vunpack.c.l.s4 1983009808
  %v6760 = vunpack.c.0.s8 %v6759
  %v6761 = vlaneseq
  %v6762 = vshrl.u32 %v6761, 7
  %v6763 = vsub.s32 %v6760, %v6762
  %v6764 = vrot.slane %v6756, %v6763
  %v6766 = vunpack.c.l.s4 1983009808
  %v6767 = vunpack.c.0.s8 %v6766
  %v6768 = vlaneseq
  %v6769 = vshrl.u32 %v6768, 7
  %v6770 = vsub.s32 %v6767, %v6769
  %v6771 = vrot.slane %v6757, %v6770
  %v6772 = vcombine.low %v6716, %v6732
  %v6773 = vcombine.high %v6716, %v6732
  %v6775 = vunpack.c.l.s4 1934713408
  %v6776 = vunpack.c.0.s8 %v6775
  %v6777 = vlaneseq
  %v6778 = vshrl.u32 %v6777, 7
  %v6779 = vsub.s32 %v6776, %v6778
  %v6780 = vrot.slane %v6772, %v6779
  %v6782 = vunpack.c.l.s4 1934713408
  %v6783 = vunpack.c.0.s8 %v6782
  %v6784 = vlaneseq
  %v6785 = vshrl.u32 %v6784, 7
  %v6786 = vsub.s32 %v6783, %v6785
  %v6787 = vrot.slane %v6773, %v6786
  %v6788 = vcombine.low %v6723, %v6739
  %v6789 = vcombine.high %v6723, %v6739
  %v6791 = vunpack.c.l.s4 1934713408
  %v6792 = vunpack.c.0.s8 %v6791
  %v6793 = vlaneseq
  %v6794 = vshrl.u32 %v6793, 7
  %v6795 = vsub.s32 %v6792, %v6794
  %v6796 = vrot.slane %v6788, %v6795
  %v6798 = vunpack.c.l.s4 1934713408
  %v6799 = vunpack.c.0.s8 %v6798
  %v6800 = vlaneseq
  %v6801 = vshrl.u32 %v6800, 7
  %v6802 = vsub.s32 %v6799, %v6801
  %v6803 = vrot.slane %v6789, %v6802
  %v6804 = vcombine.low %v6748, %v6764
  %v6805 = vcombine.high %v6748, %v6764
  %v6807 = vunpack.c.l.s4 1934713408
  %v6808 = vunpack.c.0.s8 %v6807
  %v6809 = vlaneseq
  %v6810 = vshrl.u32 %v6809, 7
  %v6811 = vsub.s32 %v6808, %v6810
  %v6812 = vrot.slane %v6804, %v6811
  %v6814 = vunpack.c.l.s4 1934713408
  %v6815 = vunpack.c.0.s8 %v6814
  %v6816 = vlaneseq
  %v6817 = vshrl.u32 %v6816, 7
  %v6818 = vsub.s32 %v6815, %v6817
  %v6819 = vrot.slane %v6805, %v6818
  %v6820 = vcombine.low %v6755, %v6771
  %v6821 = vcombine.high %v6755, %v6771
  %v6823 = vunpack.c.l.s4 1934713408
  %v6824 = vunpack.c.0.s8 %v6823
  %v6825 = vlaneseq
  %v6826 = vshrl.u32 %v6825, 7
  %v6827 = vsub.s32 %v6824, %v6826
  %v6828 = vrot.slane %v6820, %v6827
  %v6830 = vunpack.c.l.s4 1934713408
  %v6831 = vunpack.c.0.s8 %v6830
  %v6832 = vlaneseq
  %v6833 = vshrl.u32 %v6832, 7
  %v6834 = vsub.s32 %v6831, %v6833
  %v6835 = vrot.slane %v6821, %v6834
  %v6836 = vcombine.low %v6780, %v6812
  %v6837 = vcombine.high %v6780, %v6812
  %v6838 = vcombine.low %v6787, %v6819
  %v6839 = vcombine.high %v6787, %v6819
  %v6840 = vcombine.low %v6796, %v6828
  %v6841 = vcombine.high %v6796, %v6828
  %v6842 = vcombine.low %v6803, %v6835
  %v6843 = vcombine.low %v5624, %v5632
  %v6844 = vcombine.high %v5624, %v5632
  %v6846 = vunpack.c.l.s4 1983009808
  %v6847 = vunpack.c.0.s8 %v6846
  %v6848 = vlaneseq
  %v6849 = vshrl.u32 %v6848, 7
  %v6850 = vsub.s32 %v6847, %v6849
  %v6851 = vrot.slane %v6843, %v6850
  %v6853 = vunpack.c.l.s4 1983009808
  %v6854 = vunpack.c.0.s8 %v6853
  %v6855 = vlaneseq
  %v6856 = vshrl.u32 %v6855, 7
  %v6857 = vsub.s32 %v6854, %v6856
  %v6858 = vrot.slane %v6844, %v6857
  %v6859 = vcombine.low %v5628, %v5636
  %v6860 = vcombine.high %v5628, %v5636
  %v6862 = vunpack.c.l.s4 1983009808
  %v6863 = vunpack.c.0.s8 %v6862
  %v6864 = vlaneseq
  %v6865 = vshrl.u32 %v6864, 7
  %v6866 = vsub.s32 %v6863, %v6865
  %v6867 = vrot.slane %v6859, %v6866
  %v6869 = vunpack.c.l.s4 1983009808
  %v6870 = vunpack.c.0.s8 %v6869
  %v6871 = vlaneseq
  %v6872 = vshrl.u32 %v6871, 7
  %v6873 = vsub.s32 %v6870, %v6872
  %v6874 = vrot.slane %v6860, %v6873
  %v6875 = vcombine.low %v5640, %v5648
  %v6876 = vcombine.high %v5640, %v5648
  %v6878 = vunpack.c.l.s4 1983009808
  %v6879 = vunpack.c.0.s8 %v6878
  %v6880 = vlaneseq
  %v6881 = vshrl.u32 %v6880, 7
  %v6882 = vsub.s32 %v6879, %v6881
  %v6883 = vrot.slane %v6875, %v6882
  %v6885 = vunpack.c.l.s4 1983009808
  %v6886 = vunpack.c.0.s8 %v6885
  %v6887 = vlaneseq
  %v6888 = vshrl.u32 %v6887, 7
  %v6889 = vsub.s32 %v6886, %v6888
  %v6890 = vrot.slane %v6876, %v6889
  %v6891 = vcombine.low %v5644, %v5652
  %v6892 = vcombine.high %v5644, %v5652
  %v6894 = vunpack.c.l.s4 1983009808
  %v6895 = vunpack.c.0.s8 %v6894
  %v6896 = vlaneseq
  %v6897 = vshrl.u32 %v6896, 7
  %v6898 = vsub.s32 %v6895, %v6897
  %v6899 = vrot.slane %v6891, %v6898
  %v6901 = vunpack.c.l.s4 1983009808
  %v6902 = vunpack.c.0.s8 %v6901
  %v6903 = vlaneseq
  %v6904 = vshrl.u32 %v6903, 7
  %v6905 = vsub.s32 %v6902, %v6904
  %v6906 = vrot.slane %v6892, %v6905
  %v6907 = vcombine.low %v6851, %v6867
  %v6908 = vcombine.high %v6851, %v6867
  %v6910 = vunpack.c.l.s4 1934713408
  %v6911 = vunpack.c.0.s8 %v6910
  %v6912 = vlaneseq
  %v6913 = vshrl.u32 %v6912, 7
  %v6914 = vsub.s32 %v6911, %v6913
  %v6915 = vrot.slane %v6907, %v6914
  %v6917 = vunpack.c.l.s4 1934713408
  %v6918 = vunpack.c.0.s8 %v6917
  %v6919 = vlaneseq
  %v6920 = vshrl.u32 %v6919, 7
  %v6921 = vsub.s32 %v6918, %v6920
  %v6922 = vrot.slane %v6908, %v6921
  %v6923 = vcombine.low %v6858, %v6874
  %v6924 = vcombine.high %v6858, %v6874
  %v6926 = vunpack.c.l.s4 1934713408
  %v6927 = vunpack.c.0.s8 %v6926
  %v6928 = vlaneseq
  %v6929 = vshrl.u32 %v6928, 7
  %v6930 = vsub.s32 %v6927, %v6929
  %v6931 = vrot.slane %v6923, %v6930
  %v6933 = vunpack.c.l.s4 1934713408
  %v6934 = vunpack.c.0.s8 %v6933
  %v6935 = vlaneseq
  %v6936 = vshrl.u32 %v6935, 7
  %v6937 = vsub.s32 %v6934, %v6936
  %v6938 = vrot.slane %v6924, %v6937
  %v6939 = vcombine.low %v6883, %v6899
  %v6940 = vcombine.high %v6883, %v6899
  %v6942 = vunpack.c.l.s4 1934713408
  %v6943 = vunpack.c.0.s8 %v6942
  %v6944 = vlaneseq
  %v6945 = vshrl.u32 %v6944, 7
  %v6946 = vsub.s32 %v6943, %v6945
  %v6947 = vrot.slane %v6939, %v6946
  %v6949 = vunpack.c.l.s4 1934713408
  %v6950 = vunpack.c.0.s8 %v6949
  %v6951 = vlaneseq
  %v6952 = vshrl.u32 %v6951, 7
  %v6953 = vsub.s32 %v6950, %v6952
  %v6954 = vrot.slane %v6940, %v6953
  %v6955 = vcombine.low %v6890, %v6906
  %v6956 = vcombine.high %v6890, %v6906
  %v6958 = vunpack.c.l.s4 1934713408
  %v6959 = vunpack.c.0.s8 %v6958
  %v6960 = vlaneseq
  %v6961 = vshrl.u32 %v6960, 7
  %v6962 = vsub.s32 %v6959, %v6961
  %v6963 = vrot.slane %v6955, %v6962
  %v6965 = vunpack.c.l.s4 1934713408
  %v6966 = vunpack.c.0.s8 %v6965
  %v6967 = vlaneseq
  %v6968 = vshrl.u32 %v6967, 7
  %v6969 = vsub.s32 %v6966, %v6968
  %v6970 = vrot.slane %v6956, %v6969
  %v6971 = vcombine.low %v6915, %v6947
  %v6972 = vcombine.high %v6915, %v6947
  %v6973 = vcombine.low %v6922, %v6954
  %v6974 = vcombine.high %v6922, %v6954
  %v6975 = vcombine.low %v6931, %v6963
  %v6976 = vcombine.high %v6931, %v6963
  %v6977 = vcombine.low %v6938, %v6970
  %v6978 = vcombine.low %v5656, %v5664
  %v6979 = vcombine.high %v5656, %v5664
  %v6981 = vunpack.c.l.s4 1983009808
  %v6982 = vunpack.c.0.s8 %v6981
  %v6983 = vlaneseq
  %v6984 = vshrl.u32 %v6983, 7
  %v6985 = vsub.s32 %v6982, %v6984
  %v6986 = vrot.slane %v6978, %v6985
  %v6988 = vunpack.c.l.s4 1983009808
  %v6989 = vunpack.c.0.s8 %v6988
  %v6990 = vlaneseq
  %v6991 = vshrl.u32 %v6990, 7
  %v6992 = vsub.s32 %v6989, %v6991
  %v6993 = vrot.slane %v6979, %v6992
  %v6994 = vcombine.low %v5660, %v5668
  %v6995 = vcombine.high %v5660, %v5668
  %v6997 = vunpack.c.l.s4 1983009808
  %v6998 = vunpack.c.0.s8 %v6997
  %v6999 = vlaneseq
  %v7000 = vshrl.u32 %v6999, 7
  %v7001 = vsub.s32 %v6998, %v7000
  %v7002 = vrot.slane %v6994, %v7001
  %v7004 = vunpack.c.l.s4 1983009808
  %v7005 = vunpack.c.0.s8 %v7004
  %v7006 = vlaneseq
  %v7007 = vshrl.u32 %v7006, 7
  %v7008 = vsub.s32 %v7005, %v7007
  %v7009 = vrot.slane %v6995, %v7008
  %v7010 = vcombine.low %v5672, %v5680
  %v7011 = vcombine.high %v5672, %v5680
  %v7013 = vunpack.c.l.s4 1983009808
  %v7014 = vunpack.c.0.s8 %v7013
  %v7015 = vlaneseq
  %v7016 = vshrl.u32 %v7015, 7
  %v7017 = vsub.s32 %v7014, %v7016
  %v7018 = vrot.slane %v7010, %v7017
  %v7020 = vunpack.c.l.s4 1983009808
  %v7021 = vunpack.c.0.s8 %v7020
  %v7022 = vlaneseq
  %v7023 = vshrl.u32 %v7022, 7
  %v7024 = vsub.s32 %v7021, %v7023
  %v7025 = vrot.slane %v7011, %v7024
  %v7026 = vcombine.low %v5676, %v5684
  %v7027 = vcombine.high %v5676, %v5684
  %v7029 = vunpack.c.l.s4 1983009808
  %v7030 = vunpack.c.0.s8 %v7029
  %v7031 = vlaneseq
  %v7032 = vshrl.u32 %v7031, 7
  %v7033 = vsub.s32 %v7030, %v7032
  %v7034 = vrot.slane %v7026, %v7033
  %v7036 = vunpack.c.l.s4 1983009808
  %v7037 = vunpack.c.0.s8 %v7036
  %v7038 = vlaneseq
  %v7039 = vshrl.u32 %v7038, 7
  %v7040 = vsub.s32 %v7037, %v7039
  %v7041 = vrot.slane %v7027, %v7040
  %v7042 = vcombine.low %v6986, %v7002
  %v7043 = vcombine.high %v6986, %v7002
  %v7045 = vunpack.c.l.s4 1934713408
  %v7046 = vunpack.c.0.s8 %v7045
  %v7047 = vlaneseq
  %v7048 = vshrl.u32 %v7047, 7
  %v7049 = vsub.s32 %v7046, %v7048
  %v7050 = vrot.slane %v7042, %v7049
  %v7052 = vunpack.c.l.s4 1934713408
  %v7053 = vunpack.c.0.s8 %v7052
  %v7054 = vlaneseq
  %v7055 = vshrl.u32 %v7054, 7
  %v7056 = vsub.s32 %v7053, %v7055
  %v7057 = vrot.slane %v7043, %v7056
  %v7058 = vcombine.low %v6993, %v7009
  %v7059 = vcombine.high %v6993, %v7009
  %v7061 = vunpack.c.l.s4 1934713408
  %v7062 = vunpack.c.0.s8 %v7061
  %v7063 = vlaneseq
  %v7064 = vshrl.u32 %v7063, 7
  %v7065 = vsub.s32 %v7062, %v7064
  %v7066 = vrot.slane %v7058, %v7065
  %v7068 = vunpack.c.l.s4 1934713408
  %v7069 = vunpack.c.0.s8 %v7068
  %v7070 = vlaneseq
  %v7071 = vshrl.u32 %v7070, 7
  %v7072 = vsub.s32 %v7069, %v7071
  %v7073 = vrot.slane %v7059, %v7072
  %v7074 = vcombine.low %v7018, %v7034
  %v7075 = vcombine.high %v7018, %v7034
  %v7077 = vunpack.c.l.s4 1934713408
  %v7078 = vunpack.c.0.s8 %v7077
  %v7079 = vlaneseq
  %v7080 = vshrl.u32 %v7079, 7
  %v7081 = vsub.s32 %v7078, %v7080
  %v7082 = vrot.slane %v7074, %v7081
  %v7084 = vunpack.c.l.s4 1934713408
  %v7085 = vunpack.c.0.s8 %v7084
  %v7086 = vlaneseq
  %v7087 = vshrl.u32 %v7086, 7
  %v7088 = vsub.s32 %v7085, %v7087
  %v7089 = vrot.slane %v7075, %v7088
  %v7090 = vcombine.low %v7025, %v7041
  %v7091 = vcombine.high %v7025, %v7041
  %v7093 = vunpack.c.l.s4 1934713408
  %v7094 = vunpack.c.0.s8 %v7093
  %v7095 = vlaneseq
  %v7096 = vshrl.u32 %v7095, 7
  %v7097 = vsub.s32 %v7094, %v7096
  %v7098 = vrot.slane %v7090, %v7097
  %v7100 = vunpack.c.l.s4 1934713408
  %v7101 = vunpack.c.0.s8 %v7100
  %v7102 = vlaneseq
  %v7103 = vshrl.u32 %v7102, 7
  %v7104 = vsub.s32 %v7101, %v7103
  %v7105 = vrot.slane %v7091, %v7104
  %v7106 = vcombine.low %v7050, %v7082
  %v7107 = vcombine.high %v7050, %v7082
  %v7108 = vcombine.low %v7057, %v7089
  %v7109 = vcombine.high %v7057, %v7089
  %v7110 = vcombine.low %v7066, %v7098
  %v7111 = vcombine.high %v7066, %v7098
  %v7112 = vcombine.low %v7073, %v7105
  %v7113 = vcombine.low %v5688, %v5696
  %v7114 = vcombine.high %v5688, %v5696
  %v7116 = vunpack.c.l.s4 1983009808
  %v7117 = vunpack.c.0.s8 %v7116
  %v7118 = vlaneseq
  %v7119 = vshrl.u32 %v7118, 7
  %v7120 = vsub.s32 %v7117, %v7119
  %v7121 = vrot.slane %v7113, %v7120
  %v7123 = vunpack.c.l.s4 1983009808
  %v7124 = vunpack.c.0.s8 %v7123
  %v7125 = vlaneseq
  %v7126 = vshrl.u32 %v7125, 7
  %v7127 = vsub.s32 %v7124, %v7126
  %v7128 = vrot.slane %v7114, %v7127
  %v7129 = vcombine.low %v5692, %v5700
  %v7130 = vcombine.high %v5692, %v5700
  %v7132 = vunpack.c.l.s4 1983009808
  %v7133 = vunpack.c.0.s8 %v7132
  %v7134 = vlaneseq
  %v7135 = vshrl.u32 %v7134, 7
  %v7136 = vsub.s32 %v7133, %v7135
  %v7137 = vrot.slane %v7129, %v7136
  %v7139 = vunpack.c.l.s4 1983009808
  %v7140 = vunpack.c.0.s8 %v7139
  %v7141 = vlaneseq
  %v7142 = vshrl.u32 %v7141, 7
  %v7143 = vsub.s32 %v7140, %v7142
  %v7144 = vrot.slane %v7130, %v7143
  %v7145 = vcombine.low %v5704, %v5712
  %v7146 = vcombine.high %v5704, %v5712
  %v7148 = vunpack.c.l.s4 1983009808
  %v7149 = vunpack.c.0.s8 %v7148
  %v7150 = vlaneseq
  %v7151 = vshrl.u32 %v7150, 7
  %v7152 = vsub.s32 %v7149, %v7151
  %v7153 = vrot.slane %v7145, %v7152
  %v7155 = vunpack.c.l.s4 1983009808
  %v7156 = vunpack.c.0.s8 %v7155
  %v7157 = vlaneseq
  %v7158 = vshrl.u32 %v7157, 7
  %v7159 = vsub.s32 %v7156, %v7158
  %v7160 = vrot.slane %v7146, %v7159
  %v7161 = vcombine.low %v5708, %v5716
  %v7162 = vcombine.high %v5708, %v5716
  %v7164 = vunpack.c.l.s4 1983009808
  %v7165 = vunpack.c.0.s8 %v7164
  %v7166 = vlaneseq
  %v7167 = vshrl.u32 %v7166, 7
  %v7168 = vsub.s32 %v7165, %v7167
  %v7169 = vrot.slane %v7161, %v7168
  %v7171 = vunpack.c.l.s4 1983009808
  %v7172 = vunpack.c.0.s8 %v7171
  %v7173 = vlaneseq
  %v7174 = vshrl.u32 %v7173, 7
  %v7175 = vsub.s32 %v7172, %v7174
  %v7176 = vrot.slane %v7162, %v7175
  %v7177 = vcombine.low %v7121, %v7137
  %v7178 = vcombine.high %v7121, %v7137
  %v7180 = vunpack.c.l.s4 1934713408
  %v7181 = vunpack.c.0.s8 %v7180
  %v7182 = vlaneseq
  %v7183 = vshrl.u32 %v7182, 7
  %v7184 = vsub.s32 %v7181, %v7183
  %v7185 = vrot.slane %v7177, %v7184
  %v7187 = vunpack.c.l.s4 1934713408
  %v7188 = vunpack.c.0.s8 %v7187
  %v7189 = vlaneseq
  %v7190 = vshrl.u32 %v7189, 7
  %v7191 = vsub.s32 %v7188, %v7190
  %v7192 = vrot.slane %v7178, %v7191
  %v7193 = vcombine.low %v7128, %v7144
  %v7194 = vcombine.high %v7128, %v7144
  %v7196 = vunpack.c.l.s4 1934713408
  %v7197 = vunpack.c.0.s8 %v7196
  %v7198 = vlaneseq
  %v7199 = vshrl.u32 %v7198, 7
  %v7200 = vsub.s32 %v7197, %v7199
  %v7201 = vrot.slane %v7193, %v7200
  %v7203 = vunpack.c.l.s4 1934713408
  %v7204 = vunpack.c.0.s8 %v7203
  %v7205 = vlaneseq
  %v7206 = vshrl.u32 %v7205, 7
  %v7207 = vsub.s32 %v7204, %v7206
  %v7208 = vrot.slane %v7194, %v7207
  %v7209 = vcombine.low %v7153, %v7169
  %v7210 = vcombine.high %v7153, %v7169
  %v7212 = vunpack.c.l.s4 1934713408
  %v7213 = vunpack.c.0.s8 %v7212
  %v7214 = vlaneseq
  %v7215 = vshrl.u32 %v7214, 7
  %v7216 = vsub.s32 %v7213, %v7215
  %v7217 = vrot.slane %v7209, %v7216
  %v7219 = vunpack.c.l.s4 1934713408
  %v7220 = vunpack.c.0.s8 %v7219
  %v7221 = vlaneseq
  %v7222 = vshrl.u32 %v7221, 7
  %v7223 = vsub.s32 %v7220, %v7222
  %v7224 = vrot.slane %v7210, %v7223
  %v7225 = vcombine.low %v7160, %v7176
  %v7226 = vcombine.high %v7160, %v7176
  %v7228 = vunpack.c.l.s4 1934713408
  %v7229 = vunpack.c.0.s8 %v7228
  %v7230 = vlaneseq
  %v7231 = vshrl.u32 %v7230, 7
  %v7232 = vsub.s32 %v7229, %v7231
  %v7233 = vrot.slane %v7225, %v7232
  %v7235 = vunpack.c.l.s4 1934713408
  %v7236 = vunpack.c.0.s8 %v7235
  %v7237 = vlaneseq
  %v7238 = vshrl.u32 %v7237, 7
  %v7239 = vsub.s32 %v7236, %v7238
  %v7240 = vrot.slane %v7226, %v7239
  %v7241 = vcombine.low %v7185, %v7217
  %v7242 = vcombine.high %v7185, %v7217
  %v7243 = vcombine.low %v7192, %v7224
  %v7244 = vcombine.high %v7192, %v7224
  %v7245 = vcombine.low %v7201, %v7233
  %v7246 = vcombine.high %v7201, %v7233
  %v7247 = vcombine.low %v7208, %v7240
  %7252 = vrot.lane.b32.xlu0 %v6837, 2
  %v7253 = vpop.permute.xlu0 %7252
  %7254 = vrot.lane.b32.xlu0 %v6972, 2
  %v7255 = vpop.permute.xlu0 %7254
  %7256 = vrot.lane.b32.xlu0 %v7107, 2
  %v7257 = vpop.permute.xlu0 %7256
  %7258 = vrot.lane.b32.xlu0 %v7242, 2
  %v7259 = vpop.permute.xlu0 %7258
  %7268 = vrot.lane.b32.xlu0 %v6838, 4
  %v7269 = vpop.permute.xlu0 %7268
  %7270 = vrot.lane.b32.xlu0 %v6973, 4
  %v7271 = vpop.permute.xlu0 %7270
  %7272 = vrot.lane.b32.xlu0 %v7108, 4
  %v7273 = vpop.permute.xlu0 %7272
  %7274 = vrot.lane.b32.xlu0 %v7243, 4
  %v7275 = vpop.permute.xlu0 %7274
  %7284 = vrot.lane.b32.xlu0 %v6839, 6
  %v7285 = vpop.permute.xlu0 %7284
  %7286 = vrot.lane.b32.xlu0 %v6974, 6
  %v7287 = vpop.permute.xlu0 %7286
  %7288 = vrot.lane.b32.xlu0 %v7109, 6
  %v7289 = vpop.permute.xlu0 %7288
  %7290 = vrot.lane.b32.xlu0 %v7244, 6
  %v7291 = vpop.permute.xlu0 %7290
  %7300 = vrot.lane.b32.xlu0 %v6840, 8
  %v7301 = vpop.permute.xlu0 %7300
  %7302 = vrot.lane.b32.xlu0 %v6975, 8
  %v7303 = vpop.permute.xlu0 %7302
  %7304 = vrot.lane.b32.xlu0 %v7110, 8
  %v7305 = vpop.permute.xlu0 %7304
  %7306 = vrot.lane.b32.xlu0 %v7245, 8
  %v7307 = vpop.permute.xlu0 %7306
  %7316 = vrot.lane.b32.xlu0 %v6841, 10
  %v7317 = vpop.permute.xlu0 %7316
  %7318 = vrot.lane.b32.xlu0 %v6976, 10
  %v7319 = vpop.permute.xlu0 %7318
  %7320 = vrot.lane.b32.xlu0 %v7111, 10
  %v7321 = vpop.permute.xlu0 %7320
  %7322 = vrot.lane.b32.xlu0 %v7246, 10
  %v7323 = vpop.permute.xlu0 %7322
  %7332 = vrot.lane.b32.xlu0 %v6842, 12
  %v7333 = vpop.permute.xlu0 %7332
  %7334 = vrot.lane.b32.xlu0 %v6977, 12
  %v7335 = vpop.permute.xlu0 %7334
  %7336 = vrot.lane.b32.xlu0 %v7112, 12
  %v7337 = vpop.permute.xlu0 %7336
  %7338 = vrot.lane.b32.xlu0 %v7247, 12
  %v7339 = vpop.permute.xlu0 %7338
  %v7344 = vsel %vm1260, %v6836, %v7253
  %v7345 = vsel %vm1260, %v6971, %v7255
  %v7346 = vsel %vm1260, %v7106, %v7257
  %v7347 = vsel %vm1260, %v7241, %v7259
  %v7348 = vsel %vm1263, %v7344, %v7269
  %v7349 = vsel %vm1263, %v7345, %v7271
  %v7350 = vsel %vm1263, %v7346, %v7273
  %v7351 = vsel %vm1263, %v7347, %v7275
  %v7352 = vsel %vm1266, %v7348, %v7285
  %v7353 = vsel %vm1266, %v7349, %v7287
  %v7354 = vsel %vm1266, %v7350, %v7289
  %v7355 = vsel %vm1266, %v7351, %v7291
  %v7356 = vsel %vm1269, %v7352, %v7301
  %v7357 = vsel %vm1269, %v7353, %v7303
  %v7358 = vsel %vm1269, %v7354, %v7305
  %v7359 = vsel %vm1269, %v7355, %v7307
  %v7360 = vsel %vm1272, %v7356, %v7317
  %v7361 = vsel %vm1272, %v7357, %v7319
  %v7362 = vsel %vm1272, %v7358, %v7321
  %v7363 = vsel %vm1272, %v7359, %v7323
  %v7364 = vsel %vm1275, %v7360, %v7333
  %v7365 = vsel %vm1275, %v7361, %v7335
  %v7366 = vsel %vm1275, %v7362, %v7337
  %v7367 = vsel %vm1275, %v7363, %v7339
  %v7369 = vsel %vm1329, %v5254, 0
  %v7372 = vsel %vm1329, %v5255, 0
  %v7375 = vsel %vm1329, %v5256, 0
  %v7378 = vsel %vm1329, %v5257, 0
  %7380 = vmatprep.subr.mxu0 0.0
  %7381 = vmatpush1.msra.mxu0 %v6702
  %7382 = vmatprep.subr.mxu0 0.0
  %7383 = vmatpush1.msra.mxu0 %v6703
  %7384 = vmatprep.subr.mxu0 0.0
  %7385 = vmatpush1.msra.mxu0 %v6704
  %7386 = vmatprep.subr.mxu0 0.0
  %7387 = vmatpush1.msra.mxu0 %v6705
  %7388 = vmatprep.subr.mxu0 0.0
  %7389 = vmatpush1.msra.mxu0 %v6706
  %7390 = vmatprep.subr.mxu0 0.0
  %7391 = vmatpush1.msra.mxu0 %v6707
  %7392 = vmatprep.subr.mxu0 0.0
  %7393 = vmatpush1.msra.mxu0 0.0
  %7394 = vmatprep.subr.mxu0 0.0
  %7395 = vmatpush1.msra.mxu0 0.0
  %7396 = vmatprep.subr.mxu0 0.0
  %7397 = vmatpush1.msra.mxu0 0.0
  %7398 = vmatprep.subr.mxu0 0.0
  %7399 = vmatpush1.msra.mxu0 0.0
  %7400 = vmatprep.subr.mxu0 0.0
  %7401 = vmatpush1.msra.mxu0 0.0
  %7402 = vmatprep.subr.mxu0 0.0
  %7403 = vmatpush1.msra.mxu0 0.0
  %7404 = vmatprep.subr.mxu0 0.0
  %7405 = vmatpush1.msra.mxu0 0.0
  %7406 = vmatprep.subr.mxu0 0.0
  %7407 = vmatpush1.msra.mxu0 0.0
  %7408 = vmatprep.subr.mxu0 0.0
  %7409 = vmatpush1.msra.mxu0 0.0
  %7410 = vmatprep.subr.mxu0 0.0
  %7411 = vmatpush1.msra.mxu0 0.0
  %7412 = vmatprep.subr.mxu0 0.0
  %7413 = vmatpush1.msra.mxu0 0.0
  %7414 = vmatprep.subr.mxu0 0.0
  %7415 = vmatpush1.msra.mxu0 0.0
  %7416 = vmatprep.subr.mxu0 0.0
  %7417 = vmatpush1.msra.mxu0 0.0
  %7418 = vmatprep.subr.mxu0 0.0
  %7419 = vmatpush1.msra.mxu0 0.0
  %7420 = vmatprep.subr.mxu0 0.0
  %7421 = vmatpush1.msra.mxu0 0.0
  %7422 = vmatprep.subr.mxu0 0.0
  %7423 = vmatpush1.msra.mxu0 0.0
  %7424 = vmatprep.subr.mxu0 0.0
  %7425 = vmatpush1.msra.mxu0 0.0
  %7426 = vmatprep.subr.mxu0 0.0
  %7427 = vmatpush1.msra.mxu0 0.0
  %7428 = vmatprep.subr.mxu0 0.0
  %7429 = vmatpush1.msra.mxu0 0.0
  %7430 = vmatprep.subr.mxu0 0.0
  %7431 = vmatpush1.msra.mxu0 0.0
  %7432 = vmatprep.subr.mxu0 0.0
  %7433 = vmatpush1.msra.mxu0 0.0
  %7434 = vmatprep.subr.mxu0 0.0
  %7435 = vmatpush1.msra.mxu0 0.0
  %7436 = vmatprep.subr.mxu0 0.0
  %7437 = vmatpush1.msra.mxu0 0.0
  %7438 = vmatprep.subr.mxu0 0.0
  %7439 = vmatpush1.msra.mxu0 0.0
  %7440 = vmatprep.subr.mxu0 0.0
  %7441 = vmatpush1.msra.mxu0 0.0
  %7442 = vmatprep.subr.mxu0 0.0
  %7443 = vmatpush1.msra.mxu0 0.0
  %7444 = vmatprep.mubr.f32.mxu0 0.0
  %7445 = vmatmul.mubr.f32.gmra.mrb[0].mxu0 %v7369
  %v7446 = vpop.f32.mrb[0].mxu0
  %v7447 = vadd.f32 %v7364, %v7446
  %v7448 = vpop.f32.mrb[0].mxu0
  %7449 = vmatprep.mubr.f32.mxu0 0.0
  %7450 = vmatmul.mubr.f32.gmra.mrb[0].mxu0 %v7372
  %v7451 = vpop.f32.mrb[0].mxu0
  %v7452 = vadd.f32 %v7365, %v7451
  %v7453 = vpop.f32.mrb[0].mxu0
  %7454 = vmatprep.mubr.f32.mxu0 0.0
  %7455 = vmatmul.mubr.f32.gmra.mrb[0].mxu0 %v7375
  %v7456 = vpop.f32.mrb[0].mxu0
  %v7457 = vadd.f32 %v7366, %v7456
  %v7458 = vpop.f32.mrb[0].mxu0
  %7459 = vmatprep.mubr.f32.mxu0 0.0
  %7460 = vmatmul.mubr.f32.gmra.mrb[0].mxu0 %v7378
  %v7461 = vpop.f32.mrb[0].mxu0
  %v7462 = vadd.f32 %v7367, %v7461
  %v7463 = vpop.f32.mrb[0].mxu0
  %7464 = vdwg.mxu0
  %7469 = vrot.lane.b32.xlu0 %v7447, 126
  %v7470 = vpop.permute.xlu0 %7469
  %7471 = vrot.lane.b32.xlu0 %v7452, 126
  %v7472 = vpop.permute.xlu0 %7471
  %7473 = vrot.lane.b32.xlu0 %v7457, 126
  %v7474 = vpop.permute.xlu0 %7473
  %7475 = vrot.lane.b32.xlu0 %v7462, 126
  %v7476 = vpop.permute.xlu0 %7475
  %7481 = vrot.lane.b32.xlu0 %v7447, 124
  %v7482 = vpop.permute.xlu0 %7481
  %7483 = vrot.lane.b32.xlu0 %v7452, 124
  %v7484 = vpop.permute.xlu0 %7483
  %7485 = vrot.lane.b32.xlu0 %v7457, 124
  %v7486 = vpop.permute.xlu0 %7485
  %7487 = vrot.lane.b32.xlu0 %v7462, 124
  %v7488 = vpop.permute.xlu0 %7487
  %7493 = vrot.lane.b32.xlu0 %v7447, 122
  %v7494 = vpop.permute.xlu0 %7493
  %7495 = vrot.lane.b32.xlu0 %v7452, 122
  %v7496 = vpop.permute.xlu0 %7495
  %7497 = vrot.lane.b32.xlu0 %v7457, 122
  %v7498 = vpop.permute.xlu0 %7497
  %7499 = vrot.lane.b32.xlu0 %v7462, 122
  %v7500 = vpop.permute.xlu0 %7499
  %7505 = vrot.lane.b32.xlu0 %v7447, 120
  %v7506 = vpop.permute.xlu0 %7505
  %7507 = vrot.lane.b32.xlu0 %v7452, 120
  %v7508 = vpop.permute.xlu0 %7507
  %7509 = vrot.lane.b32.xlu0 %v7457, 120
  %v7510 = vpop.permute.xlu0 %7509
  %7511 = vrot.lane.b32.xlu0 %v7462, 120
  %v7512 = vpop.permute.xlu0 %7511
  %7517 = vrot.lane.b32.xlu0 %v7447, 118
  %v7518 = vpop.permute.xlu0 %7517
  %7519 = vrot.lane.b32.xlu0 %v7452, 118
  %v7520 = vpop.permute.xlu0 %7519
  %7521 = vrot.lane.b32.xlu0 %v7457, 118
  %v7522 = vpop.permute.xlu0 %7521
  %7523 = vrot.lane.b32.xlu0 %v7462, 118
  %v7524 = vpop.permute.xlu0 %7523
  %7529 = vrot.lane.b32.xlu0 %v7447, 116
  %v7530 = vpop.permute.xlu0 %7529
  %7531 = vrot.lane.b32.xlu0 %v7452, 116
  %v7532 = vpop.permute.xlu0 %7531
  %7533 = vrot.lane.b32.xlu0 %v7457, 116
  %v7534 = vpop.permute.xlu0 %7533
  %7535 = vrot.lane.b32.xlu0 %v7462, 116
  %v7536 = vpop.permute.xlu0 %7535
  %v7541 = vcombine.low %v7447, %v7482
  %v7542 = vcombine.high %v7447, %v7482
  %v7544 = vunpack.c.l.s4 1983009808
  %v7545 = vunpack.c.0.s8 %v7544
  %v7546 = vlaneseq
  %v7547 = vshrl.u32 %v7546, 7
  %v7548 = vsub.s32 %v7545, %v7547
  %v7549 = vrot.slane %v7541, %v7548
  %v7551 = vunpack.c.l.s4 1983009808
  %v7552 = vunpack.c.0.s8 %v7551
  %v7553 = vlaneseq
  %v7554 = vshrl.u32 %v7553, 7
  %v7555 = vsub.s32 %v7552, %v7554
  %v7556 = vrot.slane %v7542, %v7555
  %v7557 = vcombine.low %v7470, %v7494
  %v7558 = vcombine.high %v7470, %v7494
  %v7560 = vunpack.c.l.s4 1983009808
  %v7561 = vunpack.c.0.s8 %v7560
  %v7562 = vlaneseq
  %v7563 = vshrl.u32 %v7562, 7
  %v7564 = vsub.s32 %v7561, %v7563
  %v7565 = vrot.slane %v7557, %v7564
  %v7567 = vunpack.c.l.s4 1983009808
  %v7568 = vunpack.c.0.s8 %v7567
  %v7569 = vlaneseq
  %v7570 = vshrl.u32 %v7569, 7
  %v7571 = vsub.s32 %v7568, %v7570
  %v7572 = vrot.slane %v7558, %v7571
  %v7573 = vcombine.low %v7506, %v7530
  %v7574 = vcombine.high %v7506, %v7530
  %v7576 = vunpack.c.l.s4 1983009808
  %v7577 = vunpack.c.0.s8 %v7576
  %v7578 = vlaneseq
  %v7579 = vshrl.u32 %v7578, 7
  %v7580 = vsub.s32 %v7577, %v7579
  %v7581 = vrot.slane %v7573, %v7580
  %v7583 = vunpack.c.l.s4 1983009808
  %v7584 = vunpack.c.0.s8 %v7583
  %v7585 = vlaneseq
  %v7586 = vshrl.u32 %v7585, 7
  %v7587 = vsub.s32 %v7584, %v7586
  %v7588 = vrot.slane %v7574, %v7587
  %v7589 = vcombine.high %v7518, 0.0
  %v7591 = vunpack.c.l.s4 1983009808
  %v7592 = vunpack.c.0.s8 %v7591
  %v7593 = vlaneseq
  %v7594 = vshrl.u32 %v7593, 7
  %v7595 = vsub.s32 %v7592, %v7594
  %v7596 = vrot.slane %v7518, %v7595
  %v7598 = vunpack.c.l.s4 1983009808
  %v7599 = vunpack.c.0.s8 %v7598
  %v7600 = vlaneseq
  %v7601 = vshrl.u32 %v7600, 7
  %v7602 = vsub.s32 %v7599, %v7601
  %v7603 = vrot.slane %v7589, %v7602
  %v7604 = vcombine.low %v7549, %v7565
  %v7605 = vcombine.high %v7549, %v7565
  %v7607 = vunpack.c.l.s4 1934713408
  %v7608 = vunpack.c.0.s8 %v7607
  %v7609 = vlaneseq
  %v7610 = vshrl.u32 %v7609, 7
  %v7611 = vsub.s32 %v7608, %v7610
  %v7612 = vrot.slane %v7604, %v7611
  %v7614 = vunpack.c.l.s4 1934713408
  %v7615 = vunpack.c.0.s8 %v7614
  %v7616 = vlaneseq
  %v7617 = vshrl.u32 %v7616, 7
  %v7618 = vsub.s32 %v7615, %v7617
  %v7619 = vrot.slane %v7605, %v7618
  %v7620 = vcombine.low %v7556, %v7572
  %v7621 = vcombine.high %v7556, %v7572
  %v7623 = vunpack.c.l.s4 1934713408
  %v7624 = vunpack.c.0.s8 %v7623
  %v7625 = vlaneseq
  %v7626 = vshrl.u32 %v7625, 7
  %v7627 = vsub.s32 %v7624, %v7626
  %v7628 = vrot.slane %v7620, %v7627
  %v7630 = vunpack.c.l.s4 1934713408
  %v7631 = vunpack.c.0.s8 %v7630
  %v7632 = vlaneseq
  %v7633 = vshrl.u32 %v7632, 7
  %v7634 = vsub.s32 %v7631, %v7633
  %v7635 = vrot.slane %v7621, %v7634
  %v7636 = vcombine.low %v7581, %v7596
  %v7637 = vcombine.high %v7581, %v7596
  %v7639 = vunpack.c.l.s4 1934713408
  %v7640 = vunpack.c.0.s8 %v7639
  %v7641 = vlaneseq
  %v7642 = vshrl.u32 %v7641, 7
  %v7643 = vsub.s32 %v7640, %v7642
  %v7644 = vrot.slane %v7636, %v7643
  %v7646 = vunpack.c.l.s4 1934713408
  %v7647 = vunpack.c.0.s8 %v7646
  %v7648 = vlaneseq
  %v7649 = vshrl.u32 %v7648, 7
  %v7650 = vsub.s32 %v7647, %v7649
  %v7651 = vrot.slane %v7637, %v7650
  %v7652 = vcombine.low %v7588, %v7603
  %v7653 = vcombine.high %v7588, %v7603
  %v7655 = vunpack.c.l.s4 1934713408
  %v7656 = vunpack.c.0.s8 %v7655
  %v7657 = vlaneseq
  %v7658 = vshrl.u32 %v7657, 7
  %v7659 = vsub.s32 %v7656, %v7658
  %v7660 = vrot.slane %v7652, %v7659
  %v7662 = vunpack.c.l.s4 1934713408
  %v7663 = vunpack.c.0.s8 %v7662
  %v7664 = vlaneseq
  %v7665 = vshrl.u32 %v7664, 7
  %v7666 = vsub.s32 %v7663, %v7665
  %v7667 = vrot.slane %v7653, %v7666
  %v7668 = vcombine.low %v7612, %v7644
  %v7669 = vcombine.high %v7612, %v7644
  %v7670 = vcombine.low %v7619, %v7651
  %v7671 = vcombine.high %v7619, %v7651
  %v7672 = vcombine.low %v7628, %v7660
  %v7673 = vcombine.high %v7628, %v7660
  %v7674 = vcombine.low %v7635, %v7667
  %v7675 = vcombine.high %v7635, %v7667
  %v7676 = vcombine.low %v7452, %v7484
  %v7677 = vcombine.high %v7452, %v7484
  %v7679 = vunpack.c.l.s4 1983009808
  %v7680 = vunpack.c.0.s8 %v7679
  %v7681 = vlaneseq
  %v7682 = vshrl.u32 %v7681, 7
  %v7683 = vsub.s32 %v7680, %v7682
  %v7684 = vrot.slane %v7676, %v7683
  %v7686 = vunpack.c.l.s4 1983009808
  %v7687 = vunpack.c.0.s8 %v7686
  %v7688 = vlaneseq
  %v7689 = vshrl.u32 %v7688, 7
  %v7690 = vsub.s32 %v7687, %v7689
  %v7691 = vrot.slane %v7677, %v7690
  %v7692 = vcombine.low %v7472, %v7496
  %v7693 = vcombine.high %v7472, %v7496
  %v7695 = vunpack.c.l.s4 1983009808
  %v7696 = vunpack.c.0.s8 %v7695
  %v7697 = vlaneseq
  %v7698 = vshrl.u32 %v7697, 7
  %v7699 = vsub.s32 %v7696, %v7698
  %v7700 = vrot.slane %v7692, %v7699
  %v7702 = vunpack.c.l.s4 1983009808
  %v7703 = vunpack.c.0.s8 %v7702
  %v7704 = vlaneseq
  %v7705 = vshrl.u32 %v7704, 7
  %v7706 = vsub.s32 %v7703, %v7705
  %v7707 = vrot.slane %v7693, %v7706
  %v7708 = vcombine.low %v7508, %v7532
  %v7709 = vcombine.high %v7508, %v7532
  %v7711 = vunpack.c.l.s4 1983009808
  %v7712 = vunpack.c.0.s8 %v7711
  %v7713 = vlaneseq
  %v7714 = vshrl.u32 %v7713, 7
  %v7715 = vsub.s32 %v7712, %v7714
  %v7716 = vrot.slane %v7708, %v7715
  %v7718 = vunpack.c.l.s4 1983009808
  %v7719 = vunpack.c.0.s8 %v7718
  %v7720 = vlaneseq
  %v7721 = vshrl.u32 %v7720, 7
  %v7722 = vsub.s32 %v7719, %v7721
  %v7723 = vrot.slane %v7709, %v7722
  %v7724 = vcombine.high %v7520, 0.0
  %v7726 = vunpack.c.l.s4 1983009808
  %v7727 = vunpack.c.0.s8 %v7726
  %v7728 = vlaneseq
  %v7729 = vshrl.u32 %v7728, 7
  %v7730 = vsub.s32 %v7727, %v7729
  %v7731 = vrot.slane %v7520, %v7730
  %v7733 = vunpack.c.l.s4 1983009808
  %v7734 = vunpack.c.0.s8 %v7733
  %v7735 = vlaneseq
  %v7736 = vshrl.u32 %v7735, 7
  %v7737 = vsub.s32 %v7734, %v7736
  %v7738 = vrot.slane %v7724, %v7737
  %v7739 = vcombine.low %v7684, %v7700
  %v7740 = vcombine.high %v7684, %v7700
  %v7742 = vunpack.c.l.s4 1934713408
  %v7743 = vunpack.c.0.s8 %v7742
  %v7744 = vlaneseq
  %v7745 = vshrl.u32 %v7744, 7
  %v7746 = vsub.s32 %v7743, %v7745
  %v7747 = vrot.slane %v7739, %v7746
  %v7749 = vunpack.c.l.s4 1934713408
  %v7750 = vunpack.c.0.s8 %v7749
  %v7751 = vlaneseq
  %v7752 = vshrl.u32 %v7751, 7
  %v7753 = vsub.s32 %v7750, %v7752
  %v7754 = vrot.slane %v7740, %v7753
  %v7755 = vcombine.low %v7691, %v7707
  %v7756 = vcombine.high %v7691, %v7707
  %v7758 = vunpack.c.l.s4 1934713408
  %v7759 = vunpack.c.0.s8 %v7758
  %v7760 = vlaneseq
  %v7761 = vshrl.u32 %v7760, 7
  %v7762 = vsub.s32 %v7759, %v7761
  %v7763 = vrot.slane %v7755, %v7762
  %v7765 = vunpack.c.l.s4 1934713408
  %v7766 = vunpack.c.0.s8 %v7765
  %v7767 = vlaneseq
  %v7768 = vshrl.u32 %v7767, 7
  %v7769 = vsub.s32 %v7766, %v7768
  %v7770 = vrot.slane %v7756, %v7769
  %v7771 = vcombine.low %v7716, %v7731
  %v7772 = vcombine.high %v7716, %v7731
  %v7774 = vunpack.c.l.s4 1934713408
  %v7775 = vunpack.c.0.s8 %v7774
  %v7776 = vlaneseq
  %v7777 = vshrl.u32 %v7776, 7
  %v7778 = vsub.s32 %v7775, %v7777
  %v7779 = vrot.slane %v7771, %v7778
  %v7781 = vunpack.c.l.s4 1934713408
  %v7782 = vunpack.c.0.s8 %v7781
  %v7783 = vlaneseq
  %v7784 = vshrl.u32 %v7783, 7
  %v7785 = vsub.s32 %v7782, %v7784
  %v7786 = vrot.slane %v7772, %v7785
  %v7787 = vcombine.low %v7723, %v7738
  %v7788 = vcombine.high %v7723, %v7738
  %v7790 = vunpack.c.l.s4 1934713408
  %v7791 = vunpack.c.0.s8 %v7790
  %v7792 = vlaneseq
  %v7793 = vshrl.u32 %v7792, 7
  %v7794 = vsub.s32 %v7791, %v7793
  %v7795 = vrot.slane %v7787, %v7794
  %v7797 = vunpack.c.l.s4 1934713408
  %v7798 = vunpack.c.0.s8 %v7797
  %v7799 = vlaneseq
  %v7800 = vshrl.u32 %v7799, 7
  %v7801 = vsub.s32 %v7798, %v7800
  %v7802 = vrot.slane %v7788, %v7801
  %v7803 = vcombine.low %v7747, %v7779
  %v7804 = vcombine.high %v7747, %v7779
  %v7805 = vcombine.low %v7754, %v7786
  %v7806 = vcombine.high %v7754, %v7786
  %v7807 = vcombine.low %v7763, %v7795
  %v7808 = vcombine.high %v7763, %v7795
  %v7809 = vcombine.low %v7770, %v7802
  %v7810 = vcombine.high %v7770, %v7802
  %v7811 = vcombine.low %v7457, %v7486
  %v7812 = vcombine.high %v7457, %v7486
  %v7814 = vunpack.c.l.s4 1983009808
  %v7815 = vunpack.c.0.s8 %v7814
  %v7816 = vlaneseq
  %v7817 = vshrl.u32 %v7816, 7
  %v7818 = vsub.s32 %v7815, %v7817
  %v7819 = vrot.slane %v7811, %v7818
  %v7821 = vunpack.c.l.s4 1983009808
  %v7822 = vunpack.c.0.s8 %v7821
  %v7823 = vlaneseq
  %v7824 = vshrl.u32 %v7823, 7
  %v7825 = vsub.s32 %v7822, %v7824
  %v7826 = vrot.slane %v7812, %v7825
  %v7827 = vcombine.low %v7474, %v7498
  %v7828 = vcombine.high %v7474, %v7498
  %v7830 = vunpack.c.l.s4 1983009808
  %v7831 = vunpack.c.0.s8 %v7830
  %v7832 = vlaneseq
  %v7833 = vshrl.u32 %v7832, 7
  %v7834 = vsub.s32 %v7831, %v7833
  %v7835 = vrot.slane %v7827, %v7834
  %v7837 = vunpack.c.l.s4 1983009808
  %v7838 = vunpack.c.0.s8 %v7837
  %v7839 = vlaneseq
  %v7840 = vshrl.u32 %v7839, 7
  %v7841 = vsub.s32 %v7838, %v7840
  %v7842 = vrot.slane %v7828, %v7841
  %v7843 = vcombine.low %v7510, %v7534
  %v7844 = vcombine.high %v7510, %v7534
  %v7846 = vunpack.c.l.s4 1983009808
  %v7847 = vunpack.c.0.s8 %v7846
  %v7848 = vlaneseq
  %v7849 = vshrl.u32 %v7848, 7
  %v7850 = vsub.s32 %v7847, %v7849
  %v7851 = vrot.slane %v7843, %v7850
  %v7853 = vunpack.c.l.s4 1983009808
  %v7854 = vunpack.c.0.s8 %v7853
  %v7855 = vlaneseq
  %v7856 = vshrl.u32 %v7855, 7
  %v7857 = vsub.s32 %v7854, %v7856
  %v7858 = vrot.slane %v7844, %v7857
  %v7859 = vcombine.high %v7522, 0.0
  %v7861 = vunpack.c.l.s4 1983009808
  %v7862 = vunpack.c.0.s8 %v7861
  %v7863 = vlaneseq
  %v7864 = vshrl.u32 %v7863, 7
  %v7865 = vsub.s32 %v7862, %v7864
  %v7866 = vrot.slane %v7522, %v7865
  %v7868 = vunpack.c.l.s4 1983009808
  %v7869 = vunpack.c.0.s8 %v7868
  %v7870 = vlaneseq
  %v7871 = vshrl.u32 %v7870, 7
  %v7872 = vsub.s32 %v7869, %v7871
  %v7873 = vrot.slane %v7859, %v7872
  %v7874 = vcombine.low %v7819, %v7835
  %v7875 = vcombine.high %v7819, %v7835
  %v7877 = vunpack.c.l.s4 1934713408
  %v7878 = vunpack.c.0.s8 %v7877
  %v7879 = vlaneseq
  %v7880 = vshrl.u32 %v7879, 7
  %v7881 = vsub.s32 %v7878, %v7880
  %v7882 = vrot.slane %v7874, %v7881
  %v7884 = vunpack.c.l.s4 1934713408
  %v7885 = vunpack.c.0.s8 %v7884
  %v7886 = vlaneseq
  %v7887 = vshrl.u32 %v7886, 7
  %v7888 = vsub.s32 %v7885, %v7887
  %v7889 = vrot.slane %v7875, %v7888
  %v7890 = vcombine.low %v7826, %v7842
  %v7891 = vcombine.high %v7826, %v7842
  %v7893 = vunpack.c.l.s4 1934713408
  %v7894 = vunpack.c.0.s8 %v7893
  %v7895 = vlaneseq
  %v7896 = vshrl.u32 %v7895, 7
  %v7897 = vsub.s32 %v7894, %v7896
  %v7898 = vrot.slane %v7890, %v7897
  %v7900 = vunpack.c.l.s4 1934713408
  %v7901 = vunpack.c.0.s8 %v7900
  %v7902 = vlaneseq
  %v7903 = vshrl.u32 %v7902, 7
  %v7904 = vsub.s32 %v7901, %v7903
  %v7905 = vrot.slane %v7891, %v7904
  %v7906 = vcombine.low %v7851, %v7866
  %v7907 = vcombine.high %v7851, %v7866
  %v7909 = vunpack.c.l.s4 1934713408
  %v7910 = vunpack.c.0.s8 %v7909
  %v7911 = vlaneseq
  %v7912 = vshrl.u32 %v7911, 7
  %v7913 = vsub.s32 %v7910, %v7912
  %v7914 = vrot.slane %v7906, %v7913
  %v7916 = vunpack.c.l.s4 1934713408
  %v7917 = vunpack.c.0.s8 %v7916
  %v7918 = vlaneseq
  %v7919 = vshrl.u32 %v7918, 7
  %v7920 = vsub.s32 %v7917, %v7919
  %v7921 = vrot.slane %v7907, %v7920
  %v7922 = vcombine.low %v7858, %v7873
  %v7923 = vcombine.high %v7858, %v7873
  %v7925 = vunpack.c.l.s4 1934713408
  %v7926 = vunpack.c.0.s8 %v7925
  %v7927 = vlaneseq
  %v7928 = vshrl.u32 %v7927, 7
  %v7929 = vsub.s32 %v7926, %v7928
  %v7930 = vrot.slane %v7922, %v7929
  %v7932 = vunpack.c.l.s4 1934713408
  %v7933 = vunpack.c.0.s8 %v7932
  %v7934 = vlaneseq
  %v7935 = vshrl.u32 %v7934, 7
  %v7936 = vsub.s32 %v7933, %v7935
  %v7937 = vrot.slane %v7923, %v7936
  %v7938 = vcombine.low %v7882, %v7914
  %v7939 = vcombine.high %v7882, %v7914
  %v7940 = vcombine.low %v7889, %v7921
  %v7941 = vcombine.high %v7889, %v7921
  %v7942 = vcombine.low %v7898, %v7930
  %v7943 = vcombine.high %v7898, %v7930
  %v7944 = vcombine.low %v7905, %v7937
  %v7945 = vcombine.high %v7905, %v7937
  %v7946 = vcombine.low %v7462, %v7488
  %v7947 = vcombine.high %v7462, %v7488
  %v7949 = vunpack.c.l.s4 1983009808
  %v7950 = vunpack.c.0.s8 %v7949
  %v7951 = vlaneseq
  %v7952 = vshrl.u32 %v7951, 7
  %v7953 = vsub.s32 %v7950, %v7952
  %v7954 = vrot.slane %v7946, %v7953
  %v7956 = vunpack.c.l.s4 1983009808
  %v7957 = vunpack.c.0.s8 %v7956
  %v7958 = vlaneseq
  %v7959 = vshrl.u32 %v7958, 7
  %v7960 = vsub.s32 %v7957, %v7959
  %v7961 = vrot.slane %v7947, %v7960
  %v7962 = vcombine.low %v7476, %v7500
  %v7963 = vcombine.high %v7476, %v7500
  %v7965 = vunpack.c.l.s4 1983009808
  %v7966 = vunpack.c.0.s8 %v7965
  %v7967 = vlaneseq
  %v7968 = vshrl.u32 %v7967, 7
  %v7969 = vsub.s32 %v7966, %v7968
  %v7970 = vrot.slane %v7962, %v7969
  %v7972 = vunpack.c.l.s4 1983009808
  %v7973 = vunpack.c.0.s8 %v7972
  %v7974 = vlaneseq
  %v7975 = vshrl.u32 %v7974, 7
  %v7976 = vsub.s32 %v7973, %v7975
  %v7977 = vrot.slane %v7963, %v7976
  %v7978 = vcombine.low %v7512, %v7536
  %v7979 = vcombine.high %v7512, %v7536
  %v7981 = vunpack.c.l.s4 1983009808
  %v7982 = vunpack.c.0.s8 %v7981
  %v7983 = vlaneseq
  %v7984 = vshrl.u32 %v7983, 7
  %v7985 = vsub.s32 %v7982, %v7984
  %v7986 = vrot.slane %v7978, %v7985
  %v7988 = vunpack.c.l.s4 1983009808
  %v7989 = vunpack.c.0.s8 %v7988
  %v7990 = vlaneseq
  %v7991 = vshrl.u32 %v7990, 7
  %v7992 = vsub.s32 %v7989, %v7991
  %v7993 = vrot.slane %v7979, %v7992
  %v7994 = vcombine.high %v7524, 0.0
  %v7996 = vunpack.c.l.s4 1983009808
  %v7997 = vunpack.c.0.s8 %v7996
  %v7998 = vlaneseq
  %v7999 = vshrl.u32 %v7998, 7
  %v8000 = vsub.s32 %v7997, %v7999
  %v8001 = vrot.slane %v7524, %v8000
  %v8003 = vunpack.c.l.s4 1983009808
  %v8004 = vunpack.c.0.s8 %v8003
  %v8005 = vlaneseq
  %v8006 = vshrl.u32 %v8005, 7
  %v8007 = vsub.s32 %v8004, %v8006
  %v8008 = vrot.slane %v7994, %v8007
  %v8009 = vcombine.low %v7954, %v7970
  %v8010 = vcombine.high %v7954, %v7970
  %v8012 = vunpack.c.l.s4 1934713408
  %v8013 = vunpack.c.0.s8 %v8012
  %v8014 = vlaneseq
  %v8015 = vshrl.u32 %v8014, 7
  %v8016 = vsub.s32 %v8013, %v8015
  %v8017 = vrot.slane %v8009, %v8016
  %v8019 = vunpack.c.l.s4 1934713408
  %v8020 = vunpack.c.0.s8 %v8019
  %v8021 = vlaneseq
  %v8022 = vshrl.u32 %v8021, 7
  %v8023 = vsub.s32 %v8020, %v8022
  %v8024 = vrot.slane %v8010, %v8023
  %v8025 = vcombine.low %v7961, %v7977
  %v8026 = vcombine.high %v7961, %v7977
  %v8028 = vunpack.c.l.s4 1934713408
  %v8029 = vunpack.c.0.s8 %v8028
  %v8030 = vlaneseq
  %v8031 = vshrl.u32 %v8030, 7
  %v8032 = vsub.s32 %v8029, %v8031
  %v8033 = vrot.slane %v8025, %v8032
  %v8035 = vunpack.c.l.s4 1934713408
  %v8036 = vunpack.c.0.s8 %v8035
  %v8037 = vlaneseq
  %v8038 = vshrl.u32 %v8037, 7
  %v8039 = vsub.s32 %v8036, %v8038
  %v8040 = vrot.slane %v8026, %v8039
  %v8041 = vcombine.low %v7986, %v8001
  %v8042 = vcombine.high %v7986, %v8001
  %v8044 = vunpack.c.l.s4 1934713408
  %v8045 = vunpack.c.0.s8 %v8044
  %v8046 = vlaneseq
  %v8047 = vshrl.u32 %v8046, 7
  %v8048 = vsub.s32 %v8045, %v8047
  %v8049 = vrot.slane %v8041, %v8048
  %v8051 = vunpack.c.l.s4 1934713408
  %v8052 = vunpack.c.0.s8 %v8051
  %v8053 = vlaneseq
  %v8054 = vshrl.u32 %v8053, 7
  %v8055 = vsub.s32 %v8052, %v8054
  %v8056 = vrot.slane %v8042, %v8055
  %v8057 = vcombine.low %v7993, %v8008
  %v8058 = vcombine.high %v7993, %v8008
  %v8060 = vunpack.c.l.s4 1934713408
  %v8061 = vunpack.c.0.s8 %v8060
  %v8062 = vlaneseq
  %v8063 = vshrl.u32 %v8062, 7
  %v8064 = vsub.s32 %v8061, %v8063
  %v8065 = vrot.slane %v8057, %v8064
  %v8067 = vunpack.c.l.s4 1934713408
  %v8068 = vunpack.c.0.s8 %v8067
  %v8069 = vlaneseq
  %v8070 = vshrl.u32 %v8069, 7
  %v8071 = vsub.s32 %v8068, %v8070
  %v8072 = vrot.slane %v8058, %v8071
  %v8073 = vcombine.low %v8017, %v8049
  %v8074 = vcombine.high %v8017, %v8049
  %v8075 = vcombine.low %v8024, %v8056
  %v8076 = vcombine.high %v8024, %v8056
  %v8077 = vcombine.low %v8033, %v8065
  %v8078 = vcombine.high %v8033, %v8065
  %v8079 = vcombine.low %v8040, %v8072
  %v8080 = vcombine.high %v8040, %v8072
  %v8081 = vmax.f32 %v7668, 0.0
  %v8082 = vmax.f32 %v7669, 0.0
  %v8083 = vmax.f32 %v7670, 0.0
  %v8084 = vmax.f32 %v7671, 0.0
  %v8085 = vmax.f32 %v7672, 0.0
  %v8086 = vmax.f32 %v7673, 0.0
  %v8087 = vmax.f32 %v7674, 0.0
  %v8088 = vmax.f32 %v7675, 0.0
  %v8089 = vmax.f32 %v7803, 0.0
  %v8090 = vmax.f32 %v7804, 0.0
  %v8091 = vmax.f32 %v7805, 0.0
  %v8092 = vmax.f32 %v7806, 0.0
  %v8093 = vmax.f32 %v7807, 0.0
  %v8094 = vmax.f32 %v7808, 0.0
  %v8095 = vmax.f32 %v7809, 0.0
  %v8096 = vmax.f32 %v7810, 0.0
  %v8097 = vmax.f32 %v7938, 0.0
  %v8098 = vmax.f32 %v7939, 0.0
  %v8099 = vmax.f32 %v7940, 0.0
  %v8100 = vmax.f32 %v7941, 0.0
  %v8101 = vmax.f32 %v7942, 0.0
  %v8102 = vmax.f32 %v7943, 0.0
  %v8103 = vmax.f32 %v7944, 0.0
  %v8104 = vmax.f32 %v7945, 0.0
  %v8105 = vmax.f32 %v8073, 0.0
  %v8106 = vmax.f32 %v8074, 0.0
  %v8107 = vmax.f32 %v8075, 0.0
  %v8108 = vmax.f32 %v8076, 0.0
  %v8109 = vmax.f32 %v8077, 0.0
  %v8110 = vmax.f32 %v8078, 0.0
  %v8111 = vmax.f32 %v8079, 0.0
  %v8112 = vmax.f32 %v8080, 0.0
  %v8113 = vsel %vm2545, %v8081, -inf
  %v8114 = vrot.slane %v8113, 4
  %v8115 = vmax.f32 %v8113, %v8114
  %v8116 = vrot.slane %v8115, 2
  %v8117 = vmax.f32 %v8115, %v8116
  %v8118 = vrot.slane %v8117, 1
  %v8119 = vmax.f32 %v8117, %v8118
  %v8120 = vsel %vm2545, %v8082, -inf
  %v8121 = vrot.slane %v8120, 4
  %v8122 = vmax.f32 %v8120, %v8121
  %v8123 = vrot.slane %v8122, 2
  %v8124 = vmax.f32 %v8122, %v8123
  %v8125 = vrot.slane %v8124, 1
  %v8126 = vmax.f32 %v8124, %v8125
  %v8127 = vsel %vm2545, %v8083, -inf
  %v8128 = vrot.slane %v8127, 4
  %v8129 = vmax.f32 %v8127, %v8128
  %v8130 = vrot.slane %v8129, 2
  %v8131 = vmax.f32 %v8129, %v8130
  %v8132 = vrot.slane %v8131, 1
  %v8133 = vmax.f32 %v8131, %v8132
  %v8134 = vsel %vm2545, %v8084, -inf
  %v8135 = vrot.slane %v8134, 4
  %v8136 = vmax.f32 %v8134, %v8135
  %v8137 = vrot.slane %v8136, 2
  %v8138 = vmax.f32 %v8136, %v8137
  %v8139 = vrot.slane %v8138, 1
  %v8140 = vmax.f32 %v8138, %v8139
  %v8141 = vsel %vm2545, %v8085, -inf
  %v8142 = vrot.slane %v8141, 4
  %v8143 = vmax.f32 %v8141, %v8142
  %v8144 = vrot.slane %v8143, 2
  %v8145 = vmax.f32 %v8143, %v8144
  %v8146 = vrot.slane %v8145, 1
  %v8147 = vmax.f32 %v8145, %v8146
  %v8148 = vsel %vm2545, %v8086, -inf
  %v8149 = vrot.slane %v8148, 4
  %v8150 = vmax.f32 %v8148, %v8149
  %v8151 = vrot.slane %v8150, 2
  %v8152 = vmax.f32 %v8150, %v8151
  %v8153 = vrot.slane %v8152, 1
  %v8154 = vmax.f32 %v8152, %v8153
  %v8155 = vsel %vm2545, %v8087, -inf
  %v8156 = vrot.slane %v8155, 4
  %v8157 = vmax.f32 %v8155, %v8156
  %v8158 = vrot.slane %v8157, 2
  %v8159 = vmax.f32 %v8157, %v8158
  %v8160 = vrot.slane %v8159, 1
  %v8161 = vmax.f32 %v8159, %v8160
  %v8162 = vsel %vm2545, %v8088, -inf
  %v8163 = vrot.slane %v8162, 4
  %v8164 = vmax.f32 %v8162, %v8163
  %v8165 = vrot.slane %v8164, 2
  %v8166 = vmax.f32 %v8164, %v8165
  %v8167 = vrot.slane %v8166, 1
  %v8168 = vmax.f32 %v8166, %v8167
  %v8169 = vsel %vm2545, %v8089, -inf
  %v8170 = vrot.slane %v8169, 4
  %v8171 = vmax.f32 %v8169, %v8170
  %v8172 = vrot.slane %v8171, 2
  %v8173 = vmax.f32 %v8171, %v8172
  %v8174 = vrot.slane %v8173, 1
  %v8175 = vmax.f32 %v8173, %v8174
  %v8176 = vsel %vm2545, %v8090, -inf
  %v8177 = vrot.slane %v8176, 4
  %v8178 = vmax.f32 %v8176, %v8177
  %v8179 = vrot.slane %v8178, 2
  %v8180 = vmax.f32 %v8178, %v8179
  %v8181 = vrot.slane %v8180, 1
  %v8182 = vmax.f32 %v8180, %v8181
  %v8183 = vsel %vm2545, %v8091, -inf
  %v8184 = vrot.slane %v8183, 4
  %v8185 = vmax.f32 %v8183, %v8184
  %v8186 = vrot.slane %v8185, 2
  %v8187 = vmax.f32 %v8185, %v8186
  %v8188 = vrot.slane %v8187, 1
  %v8189 = vmax.f32 %v8187, %v8188
  %v8190 = vsel %vm2545, %v8092, -inf
  %v8191 = vrot.slane %v8190, 4
  %v8192 = vmax.f32 %v8190, %v8191
  %v8193 = vrot.slane %v8192, 2
  %v8194 = vmax.f32 %v8192, %v8193
  %v8195 = vrot.slane %v8194, 1
  %v8196 = vmax.f32 %v8194, %v8195
  %v8197 = vsel %vm2545, %v8093, -inf
  %v8198 = vrot.slane %v8197, 4
  %v8199 = vmax.f32 %v8197, %v8198
  %v8200 = vrot.slane %v8199, 2
  %v8201 = vmax.f32 %v8199, %v8200
  %v8202 = vrot.slane %v8201, 1
  %v8203 = vmax.f32 %v8201, %v8202
  %v8204 = vsel %vm2545, %v8094, -inf
  %v8205 = vrot.slane %v8204, 4
  %v8206 = vmax.f32 %v8204, %v8205
  %v8207 = vrot.slane %v8206, 2
  %v8208 = vmax.f32 %v8206, %v8207
  %v8209 = vrot.slane %v8208, 1
  %v8210 = vmax.f32 %v8208, %v8209
  %v8211 = vsel %vm2545, %v8095, -inf
  %v8212 = vrot.slane %v8211, 4
  %v8213 = vmax.f32 %v8211, %v8212
  %v8214 = vrot.slane %v8213, 2
  %v8215 = vmax.f32 %v8213, %v8214
  %v8216 = vrot.slane %v8215, 1
  %v8217 = vmax.f32 %v8215, %v8216
  %v8218 = vsel %vm2545, %v8096, -inf
  %v8219 = vrot.slane %v8218, 4
  %v8220 = vmax.f32 %v8218, %v8219
  %v8221 = vrot.slane %v8220, 2
  %v8222 = vmax.f32 %v8220, %v8221
  %v8223 = vrot.slane %v8222, 1
  %v8224 = vmax.f32 %v8222, %v8223
  %v8225 = vsel %vm2545, %v8097, -inf
  %v8226 = vrot.slane %v8225, 4
  %v8227 = vmax.f32 %v8225, %v8226
  %v8228 = vrot.slane %v8227, 2
  %v8229 = vmax.f32 %v8227, %v8228
  %v8230 = vrot.slane %v8229, 1
  %v8231 = vmax.f32 %v8229, %v8230
  %v8232 = vsel %vm2545, %v8098, -inf
  %v8233 = vrot.slane %v8232, 4
  %v8234 = vmax.f32 %v8232, %v8233
  %v8235 = vrot.slane %v8234, 2
  %v8236 = vmax.f32 %v8234, %v8235
  %v8237 = vrot.slane %v8236, 1
  %v8238 = vmax.f32 %v8236, %v8237
  %v8239 = vsel %vm2545, %v8099, -inf
  %v8240 = vrot.slane %v8239, 4
  %v8241 = vmax.f32 %v8239, %v8240
  %v8242 = vrot.slane %v8241, 2
  %v8243 = vmax.f32 %v8241, %v8242
  %v8244 = vrot.slane %v8243, 1
  %v8245 = vmax.f32 %v8243, %v8244
  %v8246 = vsel %vm2545, %v8100, -inf
  %v8247 = vrot.slane %v8246, 4
  %v8248 = vmax.f32 %v8246, %v8247
  %v8249 = vrot.slane %v8248, 2
  %v8250 = vmax.f32 %v8248, %v8249
  %v8251 = vrot.slane %v8250, 1
  %v8252 = vmax.f32 %v8250, %v8251
  %v8253 = vsel %vm2545, %v8101, -inf
  %v8254 = vrot.slane %v8253, 4
  %v8255 = vmax.f32 %v8253, %v8254
  %v8256 = vrot.slane %v8255, 2
  %v8257 = vmax.f32 %v8255, %v8256
  %v8258 = vrot.slane %v8257, 1
  %v8259 = vmax.f32 %v8257, %v8258
  %v8260 = vsel %vm2545, %v8102, -inf
  %v8261 = vrot.slane %v8260, 4
  %v8262 = vmax.f32 %v8260, %v8261
  %v8263 = vrot.slane %v8262, 2
  %v8264 = vmax.f32 %v8262, %v8263
  %v8265 = vrot.slane %v8264, 1
  %v8266 = vmax.f32 %v8264, %v8265
  %v8267 = vsel %vm2545, %v8103, -inf
  %v8268 = vrot.slane %v8267, 4
  %v8269 = vmax.f32 %v8267, %v8268
  %v8270 = vrot.slane %v8269, 2
  %v8271 = vmax.f32 %v8269, %v8270
  %v8272 = vrot.slane %v8271, 1
  %v8273 = vmax.f32 %v8271, %v8272
  %v8274 = vsel %vm2545, %v8104, -inf
  %v8275 = vrot.slane %v8274, 4
  %v8276 = vmax.f32 %v8274, %v8275
  %v8277 = vrot.slane %v8276, 2
  %v8278 = vmax.f32 %v8276, %v8277
  %v8279 = vrot.slane %v8278, 1
  %v8280 = vmax.f32 %v8278, %v8279
  %v8281 = vsel %vm2545, %v8105, -inf
  %v8282 = vrot.slane %v8281, 4
  %v8283 = vmax.f32 %v8281, %v8282
  %v8284 = vrot.slane %v8283, 2
  %v8285 = vmax.f32 %v8283, %v8284
  %v8286 = vrot.slane %v8285, 1
  %v8287 = vmax.f32 %v8285, %v8286
  %v8288 = vsel %vm2545, %v8106, -inf
  %v8289 = vrot.slane %v8288, 4
  %v8290 = vmax.f32 %v8288, %v8289
  %v8291 = vrot.slane %v8290, 2
  %v8292 = vmax.f32 %v8290, %v8291
  %v8293 = vrot.slane %v8292, 1
  %v8294 = vmax.f32 %v8292, %v8293
  %v8295 = vsel %vm2545, %v8107, -inf
  %v8296 = vrot.slane %v8295, 4
  %v8297 = vmax.f32 %v8295, %v8296
  %v8298 = vrot.slane %v8297, 2
  %v8299 = vmax.f32 %v8297, %v8298
  %v8300 = vrot.slane %v8299, 1
  %v8301 = vmax.f32 %v8299, %v8300
  %v8302 = vsel %vm2545, %v8108, -inf
  %v8303 = vrot.slane %v8302, 4
  %v8304 = vmax.f32 %v8302, %v8303
  %v8305 = vrot.slane %v8304, 2
  %v8306 = vmax.f32 %v8304, %v8305
  %v8307 = vrot.slane %v8306, 1
  %v8308 = vmax.f32 %v8306, %v8307
  %v8309 = vsel %vm2545, %v8109, -inf
  %v8310 = vrot.slane %v8309, 4
  %v8311 = vmax.f32 %v8309, %v8310
  %v8312 = vrot.slane %v8311, 2
  %v8313 = vmax.f32 %v8311, %v8312
  %v8314 = vrot.slane %v8313, 1
  %v8315 = vmax.f32 %v8313, %v8314
  %v8316 = vsel %vm2545, %v8110, -inf
  %v8317 = vrot.slane %v8316, 4
  %v8318 = vmax.f32 %v8316, %v8317
  %v8319 = vrot.slane %v8318, 2
  %v8320 = vmax.f32 %v8318, %v8319
  %v8321 = vrot.slane %v8320, 1
  %v8322 = vmax.f32 %v8320, %v8321
  %v8323 = vsel %vm2545, %v8111, -inf
  %v8324 = vrot.slane %v8323, 4
  %v8325 = vmax.f32 %v8323, %v8324
  %v8326 = vrot.slane %v8325, 2
  %v8327 = vmax.f32 %v8325, %v8326
  %v8328 = vrot.slane %v8327, 1
  %v8329 = vmax.f32 %v8327, %v8328
  %v8330 = vsel %vm2545, %v8112, -inf
  %v8331 = vrot.slane %v8330, 4
  %v8332 = vmax.f32 %v8330, %v8331
  %v8333 = vrot.slane %v8332, 2
  %v8334 = vmax.f32 %v8332, %v8333
  %v8335 = vrot.slane %v8334, 1
  %v8336 = vmax.f32 %v8334, %v8335
  %v8337 = vld [vmem:[%s7] sm:$0xff]
  %v8338 = vld [vmem:[%s7 + $0x8] sm:$0x3]
  %v8339 = vld [vmem:[%s8] sm:$0xff]
  %v8340 = vld [vmem:[%s8 + $0x8] sm:$0x3]
  %8342 = vset.pattern.permute.xlu0 0
  %8343 = vperm.xlu0 %8342, %v8339
  %v8344 = vpop.permute.xlu0 %8343
  %8347 = vset.pattern.permute.xlu0 0
  %8348 = vperm.xlu0 %8347, %v8340
  %v8349 = vpop.permute.xlu0 %8348
  %vm8383 = vcmask 1041409
  %v8384 = vsel %vm8383, %v8126, %v8119
  %vm8385 = vcmask 1042434
  %v8386 = vsel %vm8385, %v8133, %v8384
  %vm8387 = vcmask 1043459
  %v8388 = vsel %vm8387, %v8140, %v8386
  %vm8389 = vcmask 1044484
  %v8390 = vsel %vm8389, %v8147, %v8388
  %vm8391 = vcmask 1045509
  %v8392 = vsel %vm8391, %v8154, %v8390
  %vm8393 = vcmask 1046534
  %v8394 = vsel %vm8393, %v8161, %v8392
  %vm8395 = vcmask 1047559
  %v8396 = vsel %vm8395, %v8168, %v8394
  %v8397 = vsel %vm8383, %v8182, %v8175
  %v8398 = vsel %vm8385, %v8189, %v8397
  %v8399 = vsel %vm8387, %v8196, %v8398
  %v8400 = vsel %vm8389, %v8203, %v8399
  %v8401 = vsel %vm8391, %v8210, %v8400
  %v8402 = vsel %vm8393, %v8217, %v8401
  %v8403 = vsel %vm8395, %v8224, %v8402
  %v8404 = vsel %vm8383, %v8238, %v8231
  %v8405 = vsel %vm8385, %v8245, %v8404
  %v8406 = vsel %vm8387, %v8252, %v8405
  %v8407 = vsel %vm8389, %v8259, %v8406
  %v8408 = vsel %vm8391, %v8266, %v8407
  %v8409 = vsel %vm8393, %v8273, %v8408
  %v8410 = vsel %vm8395, %v8280, %v8409
  %v8411 = vsel %vm8383, %v8294, %v8287
  %v8412 = vsel %vm8385, %v8301, %v8411
  %v8413 = vsel %vm8387, %v8308, %v8412
  %v8414 = vsel %vm8389, %v8315, %v8413
  %v8415 = vsel %vm8391, %v8322, %v8414
  %v8416 = vsel %vm8393, %v8329, %v8415
  %v8417 = vsel %vm8395, %v8336, %v8416
  %v8423 = vsel %vm1305, %v8337, 0
  %v8426 = vsel %vm1305, %v8338, 0
  %8428 = vmatprep.subr.mxu0 0.0
  %8429 = vmatpush1.msra.mxu0 %v8396
  %8430 = vmatprep.subr.mxu0 0.0
  %8431 = vmatpush1.msra.mxu0 %v8403
  %8432 = vmatprep.subr.mxu0 0.0
  %8433 = vmatpush1.msra.mxu0 %v8410
  %8434 = vmatprep.subr.mxu0 0.0
  %8435 = vmatpush1.msra.mxu0 %v8417
  %8436 = vmatprep.subr.mxu0 0.0
  %8437 = vmatpush1.msra.mxu0 0.0
  %8438 = vmatprep.subr.mxu0 0.0
  %8439 = vmatpush1.msra.mxu0 0.0
  %8440 = vmatprep.subr.mxu0 0.0
  %8441 = vmatpush1.msra.mxu0 0.0
  %8442 = vmatprep.subr.mxu0 0.0
  %8443 = vmatpush1.msra.mxu0 0.0
  %8444 = vmatprep.subr.mxu0 0.0
  %8445 = vmatpush1.msra.mxu0 0.0
  %8446 = vmatprep.subr.mxu0 0.0
  %8447 = vmatpush1.msra.mxu0 0.0
  %8448 = vmatprep.subr.mxu0 0.0
  %8449 = vmatpush1.msra.mxu0 0.0
  %8450 = vmatprep.subr.mxu0 0.0
  %8451 = vmatpush1.msra.mxu0 0.0
  %8452 = vmatprep.subr.mxu0 0.0
  %8453 = vmatpush1.msra.mxu0 0.0
  %8454 = vmatprep.subr.mxu0 0.0
  %8455 = vmatpush1.msra.mxu0 0.0
  %8456 = vmatprep.subr.mxu0 0.0
  %8457 = vmatpush1.msra.mxu0 0.0
  %8458 = vmatprep.subr.mxu0 0.0
  %8459 = vmatpush1.msra.mxu0 0.0
  %8460 = vmatprep.subr.mxu0 0.0
  %8461 = vmatpush1.msra.mxu0 0.0
  %8462 = vmatprep.subr.mxu0 0.0
  %8463 = vmatpush1.msra.mxu0 0.0
  %8464 = vmatprep.subr.mxu0 0.0
  %8465 = vmatpush1.msra.mxu0 0.0
  %8466 = vmatprep.subr.mxu0 0.0
  %8467 = vmatpush1.msra.mxu0 0.0
  %8468 = vmatprep.subr.mxu0 0.0
  %8469 = vmatpush1.msra.mxu0 0.0
  %8470 = vmatprep.subr.mxu0 0.0
  %8471 = vmatpush1.msra.mxu0 0.0
  %8472 = vmatprep.subr.mxu0 0.0
  %8473 = vmatpush1.msra.mxu0 0.0
  %8474 = vmatprep.subr.mxu0 0.0
  %8475 = vmatpush1.msra.mxu0 0.0
  %8476 = vmatprep.subr.mxu0 0.0
  %8477 = vmatpush1.msra.mxu0 0.0
  %8478 = vmatprep.subr.mxu0 0.0
  %8479 = vmatpush1.msra.mxu0 0.0
  %8480 = vmatprep.subr.mxu0 0.0
  %8481 = vmatpush1.msra.mxu0 0.0
  %8482 = vmatprep.subr.mxu0 0.0
  %8483 = vmatpush1.msra.mxu0 0.0
  %8484 = vmatprep.subr.mxu0 0.0
  %8485 = vmatpush1.msra.mxu0 0.0
  %8486 = vmatprep.subr.mxu0 0.0
  %8487 = vmatpush1.msra.mxu0 0.0
  %8488 = vmatprep.subr.mxu0 0.0
  %8489 = vmatpush1.msra.mxu0 0.0
  %8490 = vmatprep.subr.mxu0 0.0
  %8491 = vmatpush1.msra.mxu0 0.0
  %8492 = vmatprep.mubr.f32.mxu0 0.0
  %8493 = vmatmul.mubr.f32.gmra.mrb[0].mxu0 %v8423
  %v8494 = vpop.f32.mrb[0].mxu0
  %v8495 = vadd.f32 %v8344, %v8494
  %v8496 = vpop.f32.mrb[0].mxu0
  %8497 = vmatprep.mubr.f32.mxu0 0.0
  %8498 = vmatmul.mubr.f32.gmra.mrb[0].mxu0 %v8426
  %v8499 = vpop.f32.mrb[0].mxu0
  %v8500 = vadd.f32 %v8349, %v8499
  %v8501 = vpop.f32.mrb[0].mxu0
  %8502 = vdwg.mxu0
  %8503 = vst.msk [vmem:[%s9] sm:$0xff] %vm1260, %v8495
  %vm8504 = vcmask 9216
  %8505 = vst.msk [vmem:[%s9 + $0x8] sm:$0x3] %vm8504, %v8500
  // Predicated region
  $region38: #{tpu_custom_call.1} parent=0 // pred_check
    _
  $region39: #{tpu_custom_call.1} parent=0 // pred_check_branch
    %8507 = sbr.rel (0) target = $region41
  $region40: #{tpu_custom_call.1} parent=0 // pred_region
    _
  $region41: #{tpu_custom_call.1} parent=0 // pred_fallthru
    _
  // Predicated region
  $region42: #{tpu_custom_call.1} parent=0 // pred_check
    _
  $region43: #{tpu_custom_call.1} parent=0 // pred_check_branch
    %8509 = sbr.rel (0) target = $region45
  $region44: #{tpu_custom_call.1} parent=0 // pred_region
    _
  $region45: #{tpu_custom_call.1} parent=0 // pred_fallthru
    _

</llo_original>
